<compile_context>
chip_gen: v7x
topology: tpu7x:2x2x1
jax: 0.10.0
libtpu: 0.0.40
codegen_flags: <defaults>
</compile_context>

<pallas_src>
import functools

import jax
import jax.numpy as jnp
import numpy as np
from jax import lax
from jax.experimental import pallas as pl
from jax.experimental.pallas import tpu as pltpu

LANES = 128      # output-channel lane padding (== conv3 Cout)
M_CHUNK = 128    # conv matmul row chunk (bounds live f32 values -> no spills)


def _round_up(v, m):
    return (v + m - 1) // m * m


# ----------------------------------------------------------------------------
# Fused kernel: conv1->pool1->conv2->pool2->conv3->pool3->fc1->relu->fc2
# (one batch element per grid step)
# ----------------------------------------------------------------------------
def _fused_forward_kernel(x_ref, w1_ref, b1_ref, w2_ref, b2_ref, w3_ref, b3_ref,
                          fw1_ref, fb1_ref, fw2_ref, fb2_ref, o_ref,
                          pad1_ref, pad2_ref, pad3_ref,
                          patch1_ref, patch2_ref, patch3_ref, acc_ref):
    f32 = jnp.float32
    act_dt = pad1_ref.dtype          # bf16 activations feeding the MXU

    def zero_border(pad_ref):
        hp, wp, c = pad_ref.shape
        z_row = jnp.zeros((wp, c), pad_ref.dtype)
        z_col = jnp.zeros((hp, c), pad_ref.dtype)
        pad_ref[0, :, :] = z_row
        pad_ref[hp - 1, :, :] = z_row
        pad_ref[:, 0, :] = z_col
        pad_ref[:, wp - 1, :] = z_col

    # Only the 1-pixel halo border is zeroed (interior is fully overwritten).
    # Re-done every grid step so it is also correct when a parallel grid axis
    # is split across cores (each core has its own scratch).
    zero_border(pad1_ref)
    zero_border(pad2_ref)
    zero_border(pad3_ref)

    # conv1 halo interior <- this batch element's NHWC input (bf16).
    pad1_ref[1:pad1_ref.shape[0] - 1, 1:pad1_ref.shape[1] - 1, :] = x_ref[...]

    def conv_relu_pool(pad_ref, patch_ref, w_ref, b_ref, store_row):
        """3x3 conv (packed-K im2col, bf16 MXU) + bias + ReLU + 2x2/2 maxpool.

        Pooled rows are handed to `store_row(yo, pooled)` one output row at a
        time so no whole-feature-map value is ever live in vregs."""
        hp, wp, cin = pad_ref.shape
        h, w = hp - 2, wp - 2
        m = h * w
        kp = w_ref.shape[0]          # lane-padded packed K (multiple of 128)
        kr = 9 * cin                 # real packed K

        # --- packed-K im2col: tap t occupies columns [t*cin, (t+1)*cin) ------
        for t in range(9):
            dy, dx = divmod(t, 3)
            patch_ref[0:m, t * cin:(t + 1) * cin] = (
                pad_ref[dy:dy + h, dx:dx + w, :].reshape(m, cin))
        if kr < kp:  # keep padded K columns exactly zero (matching weight rows are zero)
            patch_ref[0:m, kr:kp] = jnp.zeros((m, kp - kr), patch_ref.dtype)

        # --- M-chunked matmul (bf16 x bf16 -> f32) + bias + ReLU -> acc ------
        for r0 in range(0, m, M_CHUNK):
            rows = min(M_CHUNK, m - r0)
            a = jnp.dot(patch_ref[r0:r0 + rows, :], w_ref[...],
                        preferred_element_type=f32)
            acc_ref[r0:r0 + rows, :] = jnp.maximum(a + b_ref[...], 0.0)

        # --- 2x2 maxpool via stride-2 sublane loads, one output row at a time
        outs = []
        for yo in range(h // 2):
            q00 = acc_ref[pl.ds(2 * yo * w,           w // 2, stride=2), :]
            q01 = acc_ref[pl.ds(2 * yo * w + 1,       w // 2, stride=2), :]
            q10 = acc_ref[pl.ds((2 * yo + 1) * w,     w // 2, stride=2), :]
            q11 = acc_ref[pl.ds((2 * yo + 1) * w + 1, w // 2, stride=2), :]
            pooled = jnp.maximum(jnp.maximum(q00, q01),
                                 jnp.maximum(q10, q11))      # (w//2, 128) f32
            outs.append(store_row(yo, pooled))
        return outs

    def store_into(pad_next_ref):
        cout = pad_next_ref.shape[-1]

        def store(yo, pooled):
            pad_next_ref[yo + 1, 1:1 + pooled.shape[0], :] = (
                pooled[:, :cout].astype(act_dt))
            return None
        return store

    conv_relu_pool(pad1_ref, patch1_ref, w1_ref, b1_ref, store_into(pad2_ref))
    conv_relu_pool(pad2_ref, patch2_ref, w2_ref, b2_ref, store_into(pad3_ref))
    feat_rows = conv_relu_pool(pad3_ref, patch3_ref, w3_ref, b3_ref,
                               lambda yo, pooled: pooled)

    # fc1 as per-spatial-position accumulated matmuls (fw1 pre-permuted to
    # [r, c, out] so no sublane->lane flatten relayout is needed), then fc2
    # into a lane-padded (1, 128) slab.
    h3p = len(feat_rows)             # H // 8
    w3p = feat_rows[0].shape[0]      # W // 8
    h1 = fb1_ref[...]                # (1, 512) f32
    for yo in range(h3p):
        for xo in range(w3p):
            r = yo * w3p + xo
            row = feat_rows[yo][xo:xo + 1, :].astype(act_dt)   # (1, 128)
            h1 = h1 + jnp.dot(row, fw1_ref[r], preferred_element_type=f32)
    h1 = jnp.maximum(h1, 0.0)
    out = jnp.dot(h1.astype(act_dt), fw2_ref[...],
                  preferred_element_type=f32) + fb2_ref[...]
    o_ref[...] = out.astype(o_ref.dtype)


# ----------------------------------------------------------------------------
# Wrapper
# ----------------------------------------------------------------------------
def santafe_cnn_forward(x_nchw, params, *, num_actions):
    """Forward pass matching SantaFeCNN.forward; x in NCHW, returns (B, num_actions)."""
    B, C, H, W = x_nchw.shape
    assert H % 8 == 0 and W % 8 == 0, "spatial dims must survive three 2x2 pools"
    assert num_actions <= LANES, "num_actions must fit the lane-padded fc2 slab"
    x = jnp.transpose(x_nchw, (0, 2, 3, 1)).astype(jnp.bfloat16)   # NHWC, bf16

    h2, w2 = H // 2, W // 2
    h4, w4 = H // 4, W // 4
    k1p = _round_up(9 * C, LANES)
    k2p = _round_up(9 * 32, LANES)
    k3p = _round_up(9 * 64, LANES)

    def whole(arr):
        nd = arr.ndim
        return pl.BlockSpec(arr.shape, lambda b, _nd=nd: (0,) * _nd)

    flops = 2 * B * (H * W * 9 * C * 32
                     + h2 * w2 * 9 * 32 * 64
                     + h4 * w4 * 9 * 64 * 128
                     + (128 * (H // 8) * (W // 8)) * 512
                     + 512 * num_actions)
    bytes_accessed = (x.size * x.dtype.itemsize
                      + sum(int(p.size) * p.dtype.itemsize for p in params.values())
                      + B * LANES * 4)
    cost = pl.CostEstimate(flops=int(flops), transcendentals=0,
                           bytes_accessed=int(bytes_accessed))

    out_padded = pl.pallas_call(
        _fused_forward_kernel,
        out_shape=jax.ShapeDtypeStruct((B, 1, LANES), jnp.float32),
        grid=(B,),
        in_specs=[
            pl.BlockSpec((None, H, W, C), lambda b: (b, 0, 0, 0)),   # x (per batch elem)
            whole(params["w1"]), whole(params["b1"]),
            whole(params["w2"]), whole(params["b2"]),
            whole(params["w3"]), whole(params["b3"]),
            whole(params["fw1"]), whole(params["fb1"]),
            whole(params["fw2"]), whole(params["fb2"]),
        ],
        out_specs=pl.BlockSpec((None, 1, LANES), lambda b: (b, 0, 0)),
        scratch_shapes=[
            pltpu.VMEM((H + 2, W + 2, C), jnp.bfloat16),             # conv1 halo
            pltpu.VMEM((h2 + 2, w2 + 2, 32), jnp.bfloat16),          # conv2 halo
            pltpu.VMEM((h4 + 2, w4 + 2, 64), jnp.bfloat16),          # conv3 halo
            pltpu.VMEM((H * W, k1p), jnp.bfloat16),                  # conv1 packed patches
            pltpu.VMEM((h2 * w2, k2p), jnp.bfloat16),                # conv2 packed patches
            pltpu.VMEM((h4 * w4, k3p), jnp.bfloat16),                # conv3 packed patches
            pltpu.VMEM((H * W, LANES), jnp.float32),                 # conv acc (post-ReLU)
        ],
        compiler_params=pltpu.CompilerParams(
            dimension_semantics=("parallel",),
            vmem_limit_bytes=32 * 1024 * 1024),
        cost_estimate=cost,
    )(x, params["w1"], params["b1"], params["w2"], params["b2"],
      params["w3"], params["b3"], params["fw1"], params["fb1"],
      params["fw2"], params["fb2"])
    return out_padded[:, 0, :num_actions]


# ----------------------------------------------------------------------------
# Parameters: torch-layout synthetic init + one-time repack to kernel layout
# ----------------------------------------------------------------------------
def init_params(key, channels, height, width, num_actions):
    """Synthetic params with the same layout/semantics as the nn.Module:
    convs as HWIO (3,3,Cin,Cout), linears as (in,out); fc1 rows in torch's
    NCHW-flatten (c, h, w) order."""
    ks = jax.random.split(key, 10)
    flattened = 128 * (height // 8) * (width // 8)

    def conv_w(k, cin, cout):
        return jax.random.normal(k, (3, 3, cin, cout), jnp.float32) / np.sqrt(9.0 * cin)

    def lin_w(k, fin, fout):
        return jax.random.normal(k, (fin, fout), jnp.float32) / np.sqrt(float(fin))

    return {
        "w1": conv_w(ks[0], channels, 32),
        "b1": jax.random.normal(ks[1], (32,), jnp.float32) * 0.01,
        "w2": conv_w(ks[2], 32, 64),
        "b2": jax.random.normal(ks[3], (64,), jnp.float32) * 0.01,
        "w3": conv_w(ks[4], 64, 128),
        "b3": jax.random.normal(ks[5], (128,), jnp.float32) * 0.01,
        "fw1": lin_w(ks[6], flattened, 512),
        "fb1": jax.random.normal(ks[7], (512,), jnp.float32) * 0.01,
        "fw2": lin_w(ks[8], 512, num_actions),
        "fb2": jax.random.normal(ks[9], (num_actions,), jnp.float32) * 0.01,
    }


def prepare_params(raw, height, width, num_actions):
    """One-time host-side repack into kernel-ready, packed-K bf16 buffers."""
    assert num_actions <= LANES
    h8, w8 = height // 8, width // 8

    def conv_pack(w_hwio, b):
        cin, cout = int(w_hwio.shape[2]), int(w_hwio.shape[3])
        kp = _round_up(9 * cin, LANES)
        # packed K: row t*cin + c  <->  patch column t*cin + c (t = dy*3 + dx)
        wp = jnp.zeros((kp, LANES), jnp.float32)
        wp = wp.at[:9 * cin, :cout].set(w_hwio.reshape(9 * cin, cout))
        bp = jnp.zeros((1, LANES), jnp.float32).at[0, :cout].set(b)
        return wp.astype(jnp.bfloat16), bp

    w1, b1 = conv_pack(raw["w1"], raw["b1"])
    w2, b2 = conv_pack(raw["w2"], raw["b2"])
    w3, b3 = conv_pack(raw["w3"], raw["b3"])

    # fc1: torch flattens NCHW (c, y, x); kernel consumes one (1,128) channel row
    # per spatial position -> repack to [r = y*w8 + x, c, out].
    fo = int(raw["fw1"].shape[1])
    fw1 = raw["fw1"].reshape(LANES, h8, w8, fo).transpose(1, 2, 0, 3)
    fw1 = fw1.reshape(h8 * w8, LANES, fo).astype(jnp.bfloat16)
    fb1 = raw["fb1"].reshape(1, fo).astype(jnp.float32)

    # Lane-pad fc2's num_actions output dim to 128 for an unmasked final store.
    fw2 = jnp.zeros((fo, LANES), jnp.float32).at[:, :num_actions].set(raw["fw2"])
    fw2 = fw2.astype(jnp.bfloat16)
    fb2 = jnp.zeros((1, LANES), jnp.float32).at[0, :num_actions].set(raw["fb2"])

    return {"w1": w1, "b1": b1, "w2": w2, "b2": b2, "w3": w3, "b3": b3,
            "fw1": fw1, "fb1": fb1, "fw2": fw2, "fb2": fb2}


# ----------------------------------------------------------------------------
# Pure-JAX reference (exact torch semantics, f32) for a correctness check
# ----------------------------------------------------------------------------
def reference_forward(x_nchw, raw):
    hi = lax.Precision.HIGHEST
    x = jnp.transpose(x_nchw, (0, 2, 3, 1))

    def block(x, w, b):
        y = lax.conv_general_dilated(
            x, w, window_strides=(1, 1), padding=((1, 1), (1, 1)),
            dimension_numbers=("NHWC", "HWIO", "NHWC"), precision=hi)
        y = jnp.maximum(y + b, 0.0)
        return lax.reduce_window(y, -jnp.inf, lax.max,
                                 (1, 2, 2, 1), (1, 2, 2, 1), "VALID")

    y = block(x, raw["w1"], raw["b1"])
    y = block(y, raw["w2"], raw["b2"])
    y = block(y, raw["w3"], raw["b3"])
    feat = jnp.transpose(y, (0, 3, 1, 2)).reshape(x.shape[0], -1)   # torch x.view(B, -1)
    h = jnp.maximum(jnp.dot(feat, raw["fw1"], precision=hi) + raw["fb1"], 0.0)
    return jnp.dot(h, raw["fw2"], precision=hi) + raw["fb2"]


# ----------------------------------------------------------------------------
if __name__ == "__main__":
    B, C, H, W = 2, 4, 16, 16
    NUM_ACTIONS = 4

    key = jax.random.PRNGKey(0)
    k_x, k_p = jax.random.split(key)
    x = jax.random.normal(k_x, (B, C, H, W), jnp.float32)       # NCHW like torch
    raw = init_params(k_p, C, H, W, NUM_ACTIONS)
    params = prepare_params(raw, H, W, NUM_ACTIONS)             # one-time repack

    fwd = jax.jit(functools.partial(santafe_cnn_forward, num_actions=NUM_ACTIONS))
    logits = fwd(x, params)
    jax.block_until_ready(logits)
    assert logits.shape == (B, NUM_ACTIONS), logits.shape

    # Correctness check against the f32 reference of the torch module.
    # Tolerance accounts for bf16 MXU inputs (f32 accumulation) in the kernel.
    ref = jax.jit(reference_forward)(x, raw)
    np.testing.assert_allclose(np.asarray(logits), np.asarray(ref),
                               rtol=5e-2, atol=5e-2)

    print("KERNEL_OK")
</pallas_src>

<mosaic_0001>
module attributes {stable_mosaic.version = 11 : i64} {
  func.func @_fused_forward_kernel(%arg0: i32, %arg1: memref<1x16x16x4xbf16, #tpu.memory_space<vmem>>, %arg2: memref<128x128xbf16, #tpu.memory_space<vmem>>, %arg3: memref<1x128xf32, #tpu.memory_space<vmem>>, %arg4: memref<384x128xbf16, #tpu.memory_space<vmem>>, %arg5: memref<1x128xf32, #tpu.memory_space<vmem>>, %arg6: memref<640x128xbf16, #tpu.memory_space<vmem>>, %arg7: memref<1x128xf32, #tpu.memory_space<vmem>>, %arg8: memref<4x128x512xbf16, #tpu.memory_space<vmem>>, %arg9: memref<1x512xf32, #tpu.memory_space<vmem>>, %arg10: memref<512x128xbf16, #tpu.memory_space<vmem>>, %arg11: memref<1x128xf32, #tpu.memory_space<vmem>>, %arg12: memref<1x1x128xf32, #tpu.memory_space<vmem>>, %arg13: memref<18x18x4xbf16, #tpu.memory_space<vmem>>, %arg14: memref<10x10x32xbf16, #tpu.memory_space<vmem>>, %arg15: memref<6x6x64xbf16, #tpu.memory_space<vmem>>, %arg16: memref<256x128xbf16, #tpu.memory_space<vmem>>, %arg17: memref<64x384xbf16, #tpu.memory_space<vmem>>, %arg18: memref<16x640xbf16, #tpu.memory_space<vmem>>, %arg19: memref<256x128xf32, #tpu.memory_space<vmem>>) attributes {dimension_semantics = [#tpu.dimension_semantics<parallel>], iteration_bounds = array<i64: 2>, scalar_prefetch = 0 : i64, scratch_operands = 7 : i64, tpu.core_type = #tpu.core_type<tc>, window_params = [{transform_indices = @transform_0, window_bounds = array<i64: 1, 16, 16, 4>}, {pipeline_mode = #tpu.pipeline_mode<synchronous>, transform_indices = @transform_1, window_bounds = array<i64: 128, 128>}, {pipeline_mode = #tpu.pipeline_mode<synchronous>, transform_indices = @transform_2, window_bounds = array<i64: 1, 128>}, {pipeline_mode = #tpu.pipeline_mode<synchronous>, transform_indices = @transform_3, window_bounds = array<i64: 384, 128>}, {pipeline_mode = #tpu.pipeline_mode<synchronous>, transform_indices = @transform_4, window_bounds = array<i64: 1, 128>}, {pipeline_mode = #tpu.pipeline_mode<synchronous>, transform_indices = @transform_5, window_bounds = array<i64: 640, 128>}, {pipeline_mode = #tpu.pipeline_mode<synchronous>, transform_indices = @transform_6, window_bounds = array<i64: 1, 128>}, {pipeline_mode = #tpu.pipeline_mode<synchronous>, transform_indices = @transform_7, window_bounds = array<i64: 4, 128, 512>}, {pipeline_mode = #tpu.pipeline_mode<synchronous>, transform_indices = @transform_8, window_bounds = array<i64: 1, 512>}, {pipeline_mode = #tpu.pipeline_mode<synchronous>, transform_indices = @transform_9, window_bounds = array<i64: 512, 128>}, {pipeline_mode = #tpu.pipeline_mode<synchronous>, transform_indices = @transform_10, window_bounds = array<i64: 1, 128>}, {transform_indices = @transform_11, window_bounds = array<i64: 1, 1, 128>}]} {
    %cst = arith.constant 0.000000e+00 : bf16
    %0 = vector.broadcast %cst : bf16 to vector<18x4xbf16>
    %cst_0 = arith.constant 0.000000e+00 : bf16
    %1 = vector.broadcast %cst_0 : bf16 to vector<18x4xbf16>
    %c0 = arith.constant 0 : index
    %c0_1 = arith.constant 0 : index
    %c0_2 = arith.constant 0 : index
    %2 = vector.load %arg13[%c0, %c0_1, %c0_2] : memref<18x18x4xbf16, #tpu.memory_space<vmem>>, vector<1x18x4xbf16>
    %3 = vector.shape_cast %2 : vector<1x18x4xbf16> to vector<18x4xbf16>
    %4 = vector.shape_cast %0 : vector<18x4xbf16> to vector<1x18x4xbf16>
    tpu.vector_store %arg13[%c0, %c0_1, %c0_2], %4 {strides = array<i32>} : memref<18x18x4xbf16, #tpu.memory_space<vmem>>, vector<1x18x4xbf16>,
    %c17 = arith.constant 17 : index
    %c0_3 = arith.constant 0 : index
    %c0_4 = arith.constant 0 : index
    %5 = vector.load %arg13[%c17, %c0_3, %c0_4] : memref<18x18x4xbf16, #tpu.memory_space<vmem>>, vector<1x18x4xbf16>
    %6 = vector.shape_cast %5 : vector<1x18x4xbf16> to vector<18x4xbf16>
    %7 = vector.shape_cast %0 : vector<18x4xbf16> to vector<1x18x4xbf16>
    tpu.vector_store %arg13[%c17, %c0_3, %c0_4], %7 {strides = array<i32>} : memref<18x18x4xbf16, #tpu.memory_space<vmem>>, vector<1x18x4xbf16>,
    %c0_5 = arith.constant 0 : index
    %c0_6 = arith.constant 0 : index
    %c0_7 = arith.constant 0 : index
    %8 = vector.load %arg13[%c0_5, %c0_6, %c0_7] : memref<18x18x4xbf16, #tpu.memory_space<vmem>>, vector<18x1x4xbf16>
    %9 = vector.shape_cast %8 : vector<18x1x4xbf16> to vector<18x4xbf16>
    %10 = vector.shape_cast %1 : vector<18x4xbf16> to vector<18x1x4xbf16>
    tpu.vector_store %arg13[%c0_5, %c0_6, %c0_7], %10 {strides = array<i32>} : memref<18x18x4xbf16, #tpu.memory_space<vmem>>, vector<18x1x4xbf16>,
    %c0_8 = arith.constant 0 : index
    %c17_9 = arith.constant 17 : index
    %c0_10 = arith.constant 0 : index
    %11 = vector.load %arg13[%c0_8, %c17_9, %c0_10] : memref<18x18x4xbf16, #tpu.memory_space<vmem>>, vector<18x1x4xbf16>
    %12 = vector.shape_cast %11 : vector<18x1x4xbf16> to vector<18x4xbf16>
    %13 = vector.shape_cast %1 : vector<18x4xbf16> to vector<18x1x4xbf16>
    tpu.vector_store %arg13[%c0_8, %c17_9, %c0_10], %13 {strides = array<i32>} : memref<18x18x4xbf16, #tpu.memory_space<vmem>>, vector<18x1x4xbf16>,
    %cst_11 = arith.constant 0.000000e+00 : bf16
    %14 = vector.broadcast %cst_11 : bf16 to vector<10x32xbf16>
    %cst_12 = arith.constant 0.000000e+00 : bf16
    %15 = vector.broadcast %cst_12 : bf16 to vector<10x32xbf16>
    %c0_13 = arith.constant 0 : index
    %c0_14 = arith.constant 0 : index
    %c0_15 = arith.constant 0 : index
    %16 = vector.load %arg14[%c0_13, %c0_14, %c0_15] : memref<10x10x32xbf16, #tpu.memory_space<vmem>>, vector<1x10x32xbf16>
    %17 = vector.shape_cast %16 : vector<1x10x32xbf16> to vector<10x32xbf16>
    %18 = vector.shape_cast %14 : vector<10x32xbf16> to vector<1x10x32xbf16>
    tpu.vector_store %arg14[%c0_13, %c0_14, %c0_15], %18 {strides = array<i32>} : memref<10x10x32xbf16, #tpu.memory_space<vmem>>, vector<1x10x32xbf16>,
    %c9 = arith.constant 9 : index
    %c0_16 = arith.constant 0 : index
    %c0_17 = arith.constant 0 : index
    %19 = vector.load %arg14[%c9, %c0_16, %c0_17] : memref<10x10x32xbf16, #tpu.memory_space<vmem>>, vector<1x10x32xbf16>
    %20 = vector.shape_cast %19 : vector<1x10x32xbf16> to vector<10x32xbf16>
    %21 = vector.shape_cast %14 : vector<10x32xbf16> to vector<1x10x32xbf16>
    tpu.vector_store %arg14[%c9, %c0_16, %c0_17], %21 {strides = array<i32>} : memref<10x10x32xbf16, #tpu.memory_space<vmem>>, vector<1x10x32xbf16>,
    %c0_18 = arith.constant 0 : index
    %c0_19 = arith.constant 0 : index
    %c0_20 = arith.constant 0 : index
    %22 = vector.load %arg14[%c0_18, %c0_19, %c0_20] : memref<10x10x32xbf16, #tpu.memory_space<vmem>>, vector<10x1x32xbf16>
    %23 = vector.shape_cast %22 : vector<10x1x32xbf16> to vector<10x32xbf16>
    %24 = vector.shape_cast %15 : vector<10x32xbf16> to vector<10x1x32xbf16>
    tpu.vector_store %arg14[%c0_18, %c0_19, %c0_20], %24 {strides = array<i32>} : memref<10x10x32xbf16, #tpu.memory_space<vmem>>, vector<10x1x32xbf16>,
    %c0_21 = arith.constant 0 : index
    %c9_22 = arith.constant 9 : index
    %c0_23 = arith.constant 0 : index
    %25 = vector.load %arg14[%c0_21, %c9_22, %c0_23] : memref<10x10x32xbf16, #tpu.memory_space<vmem>>, vector<10x1x32xbf16>
    %26 = vector.shape_cast %25 : vector<10x1x32xbf16> to vector<10x32xbf16>
    %27 = vector.shape_cast %15 : vector<10x32xbf16> to vector<10x1x32xbf16>
    tpu.vector_store %arg14[%c0_21, %c9_22, %c0_23], %27 {strides = array<i32>} : memref<10x10x32xbf16, #tpu.memory_space<vmem>>, vector<10x1x32xbf16>,
    %cst_24 = arith.constant 0.000000e+00 : bf16
    %28 = vector.broadcast %cst_24 : bf16 to vector<6x64xbf16>
    %cst_25 = arith.constant 0.000000e+00 : bf16
    %29 = vector.broadcast %cst_25 : bf16 to vector<6x64xbf16>
    %c0_26 = arith.constant 0 : index
    %c0_27 = arith.constant 0 : index
    %c0_28 = arith.constant 0 : index
    %30 = vector.load %arg15[%c0_26, %c0_27, %c0_28] : memref<6x6x64xbf16, #tpu.memory_space<vmem>>, vector<1x6x64xbf16>
    %31 = vector.shape_cast %30 : vector<1x6x64xbf16> to vector<6x64xbf16>
    %32 = vector.shape_cast %28 : vector<6x64xbf16> to vector<1x6x64xbf16>
    tpu.vector_store %arg15[%c0_26, %c0_27, %c0_28], %32 {strides = array<i32>} : memref<6x6x64xbf16, #tpu.memory_space<vmem>>, vector<1x6x64xbf16>,
    %c5 = arith.constant 5 : index
    %c0_29 = arith.constant 0 : index
    %c0_30 = arith.constant 0 : index
    %33 = vector.load %arg15[%c5, %c0_29, %c0_30] : memref<6x6x64xbf16, #tpu.memory_space<vmem>>, vector<1x6x64xbf16>
    %34 = vector.shape_cast %33 : vector<1x6x64xbf16> to vector<6x64xbf16>
    %35 = vector.shape_cast %28 : vector<6x64xbf16> to vector<1x6x64xbf16>
    tpu.vector_store %arg15[%c5, %c0_29, %c0_30], %35 {strides = array<i32>} : memref<6x6x64xbf16, #tpu.memory_space<vmem>>, vector<1x6x64xbf16>,
    %c0_31 = arith.constant 0 : index
    %c0_32 = arith.constant 0 : index
    %c0_33 = arith.constant 0 : index
    %36 = vector.load %arg15[%c0_31, %c0_32, %c0_33] : memref<6x6x64xbf16, #tpu.memory_space<vmem>>, vector<6x1x64xbf16>
    %37 = vector.shape_cast %36 : vector<6x1x64xbf16> to vector<6x64xbf16>
    %38 = vector.shape_cast %29 : vector<6x64xbf16> to vector<6x1x64xbf16>
    tpu.vector_store %arg15[%c0_31, %c0_32, %c0_33], %38 {strides = array<i32>} : memref<6x6x64xbf16, #tpu.memory_space<vmem>>, vector<6x1x64xbf16>,
    %c0_34 = arith.constant 0 : index
    %c5_35 = arith.constant 5 : index
    %c0_36 = arith.constant 0 : index
    %39 = vector.load %arg15[%c0_34, %c5_35, %c0_36] : memref<6x6x64xbf16, #tpu.memory_space<vmem>>, vector<6x1x64xbf16>
    %40 = vector.shape_cast %39 : vector<6x1x64xbf16> to vector<6x64xbf16>
    %41 = vector.shape_cast %29 : vector<6x64xbf16> to vector<6x1x64xbf16>
    tpu.vector_store %arg15[%c0_34, %c5_35, %c0_36], %41 {strides = array<i32>} : memref<6x6x64xbf16, #tpu.memory_space<vmem>>, vector<6x1x64xbf16>,
    %c0_37 = arith.constant 0 : index
    %c0_38 = arith.constant 0 : index
    %c0_39 = arith.constant 0 : index
    %c0_40 = arith.constant 0 : index
    %42 = vector.load %arg1[%c0_37, %c0_38, %c0_39, %c0_40] : memref<1x16x16x4xbf16, #tpu.memory_space<vmem>>, vector<1x16x16x4xbf16>
    %43 = vector.shape_cast %42 : vector<1x16x16x4xbf16> to vector<16x16x4xbf16>
    %c1 = arith.constant 1 : index
    %c1_41 = arith.constant 1 : index
    %c0_42 = arith.constant 0 : index
    %44 = vector.load %arg13[%c1, %c1_41, %c0_42] : memref<18x18x4xbf16, #tpu.memory_space<vmem>>, vector<16x16x4xbf16>
    tpu.vector_store %arg13[%c1, %c1_41, %c0_42], %43 {strides = array<i32>} : memref<18x18x4xbf16, #tpu.memory_space<vmem>>, vector<16x16x4xbf16>,
    %c0_43 = arith.constant 0 : index
    %c0_44 = arith.constant 0 : index
    %c0_45 = arith.constant 0 : index
    %45 = vector.load %arg13[%c0_43, %c0_44, %c0_45] : memref<18x18x4xbf16, #tpu.memory_space<vmem>>, vector<16x16x4xbf16>
    %46 = vector.shape_cast %45 : vector<16x16x4xbf16> to vector<256x4xbf16>
    %c0_46 = arith.constant 0 : index
    %c0_47 = arith.constant 0 : index
    %47 = vector.load %arg16[%c0_46, %c0_47] : memref<256x128xbf16, #tpu.memory_space<vmem>>, vector<256x4xbf16>
    tpu.vector_store %arg16[%c0_46, %c0_47], %46 {strides = array<i32>} : memref<256x128xbf16, #tpu.memory_space<vmem>>, vector<256x4xbf16>,
    %c0_48 = arith.constant 0 : index
    %c1_49 = arith.constant 1 : index
    %c0_50 = arith.constant 0 : index
    %48 = vector.load %arg13[%c0_48, %c1_49, %c0_50] : memref<18x18x4xbf16, #tpu.memory_space<vmem>>, vector<16x16x4xbf16>
    %49 = vector.shape_cast %48 : vector<16x16x4xbf16> to vector<256x4xbf16>
    %c0_51 = arith.constant 0 : index
    %c4 = arith.constant 4 : index
    %50 = vector.load %arg16[%c0_51, %c4] : memref<256x128xbf16, #tpu.memory_space<vmem>>, vector<256x4xbf16>
    tpu.vector_store %arg16[%c0_51, %c4], %49 {strides = array<i32>} : memref<256x128xbf16, #tpu.memory_space<vmem>>, vector<256x4xbf16>,
    %c0_52 = arith.constant 0 : index
    %c2 = arith.constant 2 : index
    %c0_53 = arith.constant 0 : index
    %51 = vector.load %arg13[%c0_52, %c2, %c0_53] : memref<18x18x4xbf16, #tpu.memory_space<vmem>>, vector<16x16x4xbf16>
    %52 = vector.shape_cast %51 : vector<16x16x4xbf16> to vector<256x4xbf16>
    %c0_54 = arith.constant 0 : index
    %c8 = arith.constant 8 : index
    %53 = vector.load %arg16[%c0_54, %c8] : memref<256x128xbf16, #tpu.memory_space<vmem>>, vector<256x4xbf16>
    tpu.vector_store %arg16[%c0_54, %c8], %52 {strides = array<i32>} : memref<256x128xbf16, #tpu.memory_space<vmem>>, vector<256x4xbf16>,
    %c1_55 = arith.constant 1 : index
    %c0_56 = arith.constant 0 : index
    %c0_57 = arith.constant 0 : index
    %54 = vector.load %arg13[%c1_55, %c0_56, %c0_57] : memref<18x18x4xbf16, #tpu.memory_space<vmem>>, vector<16x16x4xbf16>
    %55 = vector.shape_cast %54 : vector<16x16x4xbf16> to vector<256x4xbf16>
    %c0_58 = arith.constant 0 : index
    %c12 = arith.constant 12 : index
    %56 = vector.load %arg16[%c0_58, %c12] : memref<256x128xbf16, #tpu.memory_space<vmem>>, vector<256x4xbf16>
    tpu.vector_store %arg16[%c0_58, %c12], %55 {strides = array<i32>} : memref<256x128xbf16, #tpu.memory_space<vmem>>, vector<256x4xbf16>,
    %c1_59 = arith.constant 1 : index
    %c1_60 = arith.constant 1 : index
    %c0_61 = arith.constant 0 : index
    %57 = vector.load %arg13[%c1_59, %c1_60, %c0_61] : memref<18x18x4xbf16, #tpu.memory_space<vmem>>, vector<16x16x4xbf16>
    %58 = vector.shape_cast %57 : vector<16x16x4xbf16> to vector<256x4xbf16>
    %c0_62 = arith.constant 0 : index
    %c16 = arith.constant 16 : index
    %59 = vector.load %arg16[%c0_62, %c16] : memref<256x128xbf16, #tpu.memory_space<vmem>>, vector<256x4xbf16>
    tpu.vector_store %arg16[%c0_62, %c16], %58 {strides = array<i32>} : memref<256x128xbf16, #tpu.memory_space<vmem>>, vector<256x4xbf16>,
    %c1_63 = arith.constant 1 : index
    %c2_64 = arith.constant 2 : index
    %c0_65 = arith.constant 0 : index
    %60 = vector.load %arg13[%c1_63, %c2_64, %c0_65] : memref<18x18x4xbf16, #tpu.memory_space<vmem>>, vector<16x16x4xbf16>
    %61 = vector.shape_cast %60 : vector<16x16x4xbf16> to vector<256x4xbf16>
    %c0_66 = arith.constant 0 : index
    %c20 = arith.constant 20 : index
    %62 = vector.load %arg16[%c0_66, %c20] : memref<256x128xbf16, #tpu.memory_space<vmem>>, vector<256x4xbf16>
    tpu.vector_store %arg16[%c0_66, %c20], %61 {strides = array<i32>} : memref<256x128xbf16, #tpu.memory_space<vmem>>, vector<256x4xbf16>,
    %c2_67 = arith.constant 2 : index
    %c0_68 = arith.constant 0 : index
    %c0_69 = arith.constant 0 : index
    %63 = vector.load %arg13[%c2_67, %c0_68, %c0_69] : memref<18x18x4xbf16, #tpu.memory_space<vmem>>, vector<16x16x4xbf16>
    %64 = vector.shape_cast %63 : vector<16x16x4xbf16> to vector<256x4xbf16>
    %c0_70 = arith.constant 0 : index
    %c24 = arith.constant 24 : index
    %65 = vector.load %arg16[%c0_70, %c24] : memref<256x128xbf16, #tpu.memory_space<vmem>>, vector<256x4xbf16>
    tpu.vector_store %arg16[%c0_70, %c24], %64 {strides = array<i32>} : memref<256x128xbf16, #tpu.memory_space<vmem>>, vector<256x4xbf16>,
    %c2_71 = arith.constant 2 : index
    %c1_72 = arith.constant 1 : index
    %c0_73 = arith.constant 0 : index
    %66 = vector.load %arg13[%c2_71, %c1_72, %c0_73] : memref<18x18x4xbf16, #tpu.memory_space<vmem>>, vector<16x16x4xbf16>
    %67 = vector.shape_cast %66 : vector<16x16x4xbf16> to vector<256x4xbf16>
    %c0_74 = arith.constant 0 : index
    %c28 = arith.constant 28 : index
    %68 = vector.load %arg16[%c0_74, %c28] : memref<256x128xbf16, #tpu.memory_space<vmem>>, vector<256x4xbf16>
    tpu.vector_store %arg16[%c0_74, %c28], %67 {strides = array<i32>} : memref<256x128xbf16, #tpu.memory_space<vmem>>, vector<256x4xbf16>,
    %c2_75 = arith.constant 2 : index
    %c2_76 = arith.constant 2 : index
    %c0_77 = arith.constant 0 : index
    %69 = vector.load %arg13[%c2_75, %c2_76, %c0_77] : memref<18x18x4xbf16, #tpu.memory_space<vmem>>, vector<16x16x4xbf16>
    %70 = vector.shape_cast %69 : vector<16x16x4xbf16> to vector<256x4xbf16>
    %c0_78 = arith.constant 0 : index
    %c32 = arith.constant 32 : index
    %71 = vector.load %arg16[%c0_78, %c32] : memref<256x128xbf16, #tpu.memory_space<vmem>>, vector<256x4xbf16>
    tpu.vector_store %arg16[%c0_78, %c32], %70 {strides = array<i32>} : memref<256x128xbf16, #tpu.memory_space<vmem>>, vector<256x4xbf16>,
    %cst_79 = arith.constant 0.000000e+00 : bf16
    %72 = vector.broadcast %cst_79 : bf16 to vector<256x92xbf16>
    %c0_80 = arith.constant 0 : index
    %c36 = arith.constant 36 : index
    %73 = vector.load %arg16[%c0_80, %c36] : memref<256x128xbf16, #tpu.memory_space<vmem>>, vector<256x92xbf16>
    tpu.vector_store %arg16[%c0_80, %c36], %72 {strides = array<i32>} : memref<256x128xbf16, #tpu.memory_space<vmem>>, vector<256x92xbf16>,
    %c0_81 = arith.constant 0 : index
    %c0_82 = arith.constant 0 : index
    %74 = vector.load %arg16[%c0_81, %c0_82] : memref<256x128xbf16, #tpu.memory_space<vmem>>, vector<128x128xbf16>
    %c0_83 = arith.constant 0 : index
    %c0_84 = arith.constant 0 : index
    %75 = vector.load %arg2[%c0_83, %c0_84] : memref<128x128xbf16, #tpu.memory_space<vmem>>, vector<128x128xbf16>
    %cst_85 = arith.constant dense<0.000000e+00> : vector<128x128xf32>
    %76 = tpu.matmul %74, %75, %cst_85 {dimension_numbers = #tpu.dot_dimension_numbers<[1], [0], [0], [1], [0, 0, 1, 1], [], []>} : vector<128x128xbf16>, vector<128x128xbf16>, vector<128x128xf32> -> vector<128x128xf32>
    %c0_86 = arith.constant 0 : index
    %c0_87 = arith.constant 0 : index
    %77 = vector.load %arg3[%c0_86, %c0_87] : memref<1x128xf32, #tpu.memory_space<vmem>>, vector<1x128xf32>
    %78 = vector.broadcast %77 : vector<1x128xf32> to vector<128x128xf32>
    %79 = arith.addf %76, %78 : vector<128x128xf32>
    %cst_88 = arith.constant 0.000000e+00 : f32
    %80 = vector.broadcast %cst_88 : f32 to vector<128x128xf32>
    %81 = arith.maximumf %79, %80 : vector<128x128xf32>
    %c0_89 = arith.constant 0 : index
    %c0_90 = arith.constant 0 : index
    %82 = vector.load %arg19[%c0_89, %c0_90] : memref<256x128xf32, #tpu.memory_space<vmem>>, vector<128x128xf32>
    tpu.vector_store %arg19[%c0_89, %c0_90], %81 {strides = array<i32>} : memref<256x128xf32, #tpu.memory_space<vmem>>, vector<128x128xf32>,
    %c128 = arith.constant 128 : index
    %c0_91 = arith.constant 0 : index
    %83 = vector.load %arg16[%c128, %c0_91] : memref<256x128xbf16, #tpu.memory_space<vmem>>, vector<128x128xbf16>
    %c0_92 = arith.constant 0 : index
    %c0_93 = arith.constant 0 : index
    %84 = vector.load %arg2[%c0_92, %c0_93] : memref<128x128xbf16, #tpu.memory_space<vmem>>, vector<128x128xbf16>
    %cst_94 = arith.constant dense<0.000000e+00> : vector<128x128xf32>
    %85 = tpu.matmul %83, %84, %cst_94 {dimension_numbers = #tpu.dot_dimension_numbers<[1], [0], [0], [1], [0, 0, 1, 1], [], []>} : vector<128x128xbf16>, vector<128x128xbf16>, vector<128x128xf32> -> vector<128x128xf32>
    %c0_95 = arith.constant 0 : index
    %c0_96 = arith.constant 0 : index
    %86 = vector.load %arg3[%c0_95, %c0_96] : memref<1x128xf32, #tpu.memory_space<vmem>>, vector<1x128xf32>
    %87 = vector.broadcast %86 : vector<1x128xf32> to vector<128x128xf32>
    %88 = arith.addf %85, %87 : vector<128x128xf32>
    %cst_97 = arith.constant 0.000000e+00 : f32
    %89 = vector.broadcast %cst_97 : f32 to vector<128x128xf32>
    %90 = arith.maximumf %88, %89 : vector<128x128xf32>
    %c128_98 = arith.constant 128 : index
    %c0_99 = arith.constant 0 : index
    %91 = vector.load %arg19[%c128_98, %c0_99] : memref<256x128xf32, #tpu.memory_space<vmem>>, vector<128x128xf32>
    tpu.vector_store %arg19[%c128_98, %c0_99], %90 {strides = array<i32>} : memref<256x128xf32, #tpu.memory_space<vmem>>, vector<128x128xf32>,
    %c0_100 = arith.constant 0 : index
    %c0_101 = arith.constant 0 : index
    %92 = tpu.strided_load %arg19[%c0_100, %c0_101] {strides = array<i32: 2, 1>} : memref<256x128xf32, #tpu.memory_space<vmem>>, vector<8x128xf32>
    %c1_102 = arith.constant 1 : index
    %c0_103 = arith.constant 0 : index
    %93 = tpu.strided_load %arg19[%c1_102, %c0_103] {strides = array<i32: 2, 1>} : memref<256x128xf32, #tpu.memory_space<vmem>>, vector<8x128xf32>
    %c16_104 = arith.constant 16 : index
    %c0_105 = arith.constant 0 : index
    %94 = tpu.strided_load %arg19[%c16_104, %c0_105] {strides = array<i32: 2, 1>} : memref<256x128xf32, #tpu.memory_space<vmem>>, vector<8x128xf32>
    %c17_106 = arith.constant 17 : index
    %c0_107 = arith.constant 0 : index
    %95 = tpu.strided_load %arg19[%c17_106, %c0_107] {strides = array<i32: 2, 1>} : memref<256x128xf32, #tpu.memory_space<vmem>>, vector<8x128xf32>
    %96 = arith.maximumf %92, %93 : vector<8x128xf32>
    %97 = arith.maximumf %94, %95 : vector<8x128xf32>
    %98 = arith.maximumf %96, %97 : vector<8x128xf32>
    %99 = vector.extract_strided_slice %98 {offsets = [0, 0], sizes = [8, 32], strides = [1, 1]} : vector<8x128xf32> to vector<8x32xf32>
    %100 = arith.truncf %99 : vector<8x32xf32> to vector<8x32xbf16>
    %c1_108 = arith.constant 1 : index
    %c1_109 = arith.constant 1 : index
    %c0_110 = arith.constant 0 : index
    %101 = vector.load %arg14[%c1_108, %c1_109, %c0_110] : memref<10x10x32xbf16, #tpu.memory_space<vmem>>, vector<1x8x32xbf16>
    %102 = vector.shape_cast %101 : vector<1x8x32xbf16> to vector<8x32xbf16>
    %103 = vector.shape_cast %100 : vector<8x32xbf16> to vector<1x8x32xbf16>
    tpu.vector_store %arg14[%c1_108, %c1_109, %c0_110], %103 {strides = array<i32>} : memref<10x10x32xbf16, #tpu.memory_space<vmem>>, vector<1x8x32xbf16>,
    %c32_111 = arith.constant 32 : index
    %c0_112 = arith.constant 0 : index
    %104 = tpu.strided_load %arg19[%c32_111, %c0_112] {strides = array<i32: 2, 1>} : memref<256x128xf32, #tpu.memory_space<vmem>>, vector<8x128xf32>
    %c33 = arith.constant 33 : index
    %c0_113 = arith.constant 0 : index
    %105 = tpu.strided_load %arg19[%c33, %c0_113] {strides = array<i32: 2, 1>} : memref<256x128xf32, #tpu.memory_space<vmem>>, vector<8x128xf32>
    %c48 = arith.constant 48 : index
    %c0_114 = arith.constant 0 : index
    %106 = tpu.strided_load %arg19[%c48, %c0_114] {strides = array<i32: 2, 1>} : memref<256x128xf32, #tpu.memory_space<vmem>>, vector<8x128xf32>
    %c49 = arith.constant 49 : index
    %c0_115 = arith.constant 0 : index
    %107 = tpu.strided_load %arg19[%c49, %c0_115] {strides = array<i32: 2, 1>} : memref<256x128xf32, #tpu.memory_space<vmem>>, vector<8x128xf32>
    %108 = arith.maximumf %104, %105 : vector<8x128xf32>
    %109 = arith.maximumf %106, %107 : vector<8x128xf32>
    %110 = arith.maximumf %108, %109 : vector<8x128xf32>
    %111 = vector.extract_strided_slice %110 {offsets = [0, 0], sizes = [8, 32], strides = [1, 1]} : vector<8x128xf32> to vector<8x32xf32>
    %112 = arith.truncf %111 : vector<8x32xf32> to vector<8x32xbf16>
    %c2_116 = arith.constant 2 : index
    %c1_117 = arith.constant 1 : index
    %c0_118 = arith.constant 0 : index
    %113 = vector.load %arg14[%c2_116, %c1_117, %c0_118] : memref<10x10x32xbf16, #tpu.memory_space<vmem>>, vector<1x8x32xbf16>
    %114 = vector.shape_cast %113 : vector<1x8x32xbf16> to vector<8x32xbf16>
    %115 = vector.shape_cast %112 : vector<8x32xbf16> to vector<1x8x32xbf16>
    tpu.vector_store %arg14[%c2_116, %c1_117, %c0_118], %115 {strides = array<i32>} : memref<10x10x32xbf16, #tpu.memory_space<vmem>>, vector<1x8x32xbf16>,
    %c64 = arith.constant 64 : index
    %c0_119 = arith.constant 0 : index
    %116 = tpu.strided_load %arg19[%c64, %c0_119] {strides = array<i32: 2, 1>} : memref<256x128xf32, #tpu.memory_space<vmem>>, vector<8x128xf32>
    %c65 = arith.constant 65 : index
    %c0_120 = arith.constant 0 : index
    %117 = tpu.strided_load %arg19[%c65, %c0_120] {strides = array<i32: 2, 1>} : memref<256x128xf32, #tpu.memory_space<vmem>>, vector<8x128xf32>
    %c80 = arith.constant 80 : index
    %c0_121 = arith.constant 0 : index
    %118 = tpu.strided_load %arg19[%c80, %c0_121] {strides = array<i32: 2, 1>} : memref<256x128xf32, #tpu.memory_space<vmem>>, vector<8x128xf32>
    %c81 = arith.constant 81 : index
    %c0_122 = arith.constant 0 : index
    %119 = tpu.strided_load %arg19[%c81, %c0_122] {strides = array<i32: 2, 1>} : memref<256x128xf32, #tpu.memory_space<vmem>>, vector<8x128xf32>
    %120 = arith.maximumf %116, %117 : vector<8x128xf32>
    %121 = arith.maximumf %118, %119 : vector<8x128xf32>
    %122 = arith.maximumf %120, %121 : vector<8x128xf32>
    %123 = vector.extract_strided_slice %122 {offsets = [0, 0], sizes = [8, 32], strides = [1, 1]} : vector<8x128xf32> to vector<8x32xf32>
    %124 = arith.truncf %123 : vector<8x32xf32> to vector<8x32xbf16>
    %c3 = arith.constant 3 : index
    %c1_123 = arith.constant 1 : index
    %c0_124 = arith.constant 0 : index
    %125 = vector.load %arg14[%c3, %c1_123, %c0_124] : memref<10x10x32xbf16, #tpu.memory_space<vmem>>, vector<1x8x32xbf16>
    %126 = vector.shape_cast %125 : vector<1x8x32xbf16> to vector<8x32xbf16>
    %127 = vector.shape_cast %124 : vector<8x32xbf16> to vector<1x8x32xbf16>
    tpu.vector_store %arg14[%c3, %c1_123, %c0_124], %127 {strides = array<i32>} : memref<10x10x32xbf16, #tpu.memory_space<vmem>>, vector<1x8x32xbf16>,
    %c96 = arith.constant 96 : index
    %c0_125 = arith.constant 0 : index
    %128 = tpu.strided_load %arg19[%c96, %c0_125] {strides = array<i32: 2, 1>} : memref<256x128xf32, #tpu.memory_space<vmem>>, vector<8x128xf32>
    %c97 = arith.constant 97 : index
    %c0_126 = arith.constant 0 : index
    %129 = tpu.strided_load %arg19[%c97, %c0_126] {strides = array<i32: 2, 1>} : memref<256x128xf32, #tpu.memory_space<vmem>>, vector<8x128xf32>
    %c112 = arith.constant 112 : index
    %c0_127 = arith.constant 0 : index
    %130 = tpu.strided_load %arg19[%c112, %c0_127] {strides = array<i32: 2, 1>} : memref<256x128xf32, #tpu.memory_space<vmem>>, vector<8x128xf32>
    %c113 = arith.constant 113 : index
    %c0_128 = arith.constant 0 : index
    %131 = tpu.strided_load %arg19[%c113, %c0_128] {strides = array<i32: 2, 1>} : memref<256x128xf32, #tpu.memory_space<vmem>>, vector<8x128xf32>
    %132 = arith.maximumf %128, %129 : vector<8x128xf32>
    %133 = arith.maximumf %130, %131 : vector<8x128xf32>
    %134 = arith.maximumf %132, %133 : vector<8x128xf32>
    %135 = vector.extract_strided_slice %134 {offsets = [0, 0], sizes = [8, 32], strides = [1, 1]} : vector<8x128xf32> to vector<8x32xf32>
    %136 = arith.truncf %135 : vector<8x32xf32> to vector<8x32xbf16>
    %c4_129 = arith.constant 4 : index
    %c1_130 = arith.constant 1 : index
    %c0_131 = arith.constant 0 : index
    %137 = vector.load %arg14[%c4_129, %c1_130, %c0_131] : memref<10x10x32xbf16, #tpu.memory_space<vmem>>, vector<1x8x32xbf16>
    %138 = vector.shape_cast %137 : vector<1x8x32xbf16> to vector<8x32xbf16>
    %139 = vector.shape_cast %136 : vector<8x32xbf16> to vector<1x8x32xbf16>
    tpu.vector_store %arg14[%c4_129, %c1_130, %c0_131], %139 {strides = array<i32>} : memref<10x10x32xbf16, #tpu.memory_space<vmem>>, vector<1x8x32xbf16>,
    %c128_132 = arith.constant 128 : index
    %c0_133 = arith.constant 0 : index
    %140 = tpu.strided_load %arg19[%c128_132, %c0_133] {strides = array<i32: 2, 1>} : memref<256x128xf32, #tpu.memory_space<vmem>>, vector<8x128xf32>
    %c129 = arith.constant 129 : index
    %c0_134 = arith.constant 0 : index
    %141 = tpu.strided_load %arg19[%c129, %c0_134] {strides = array<i32: 2, 1>} : memref<256x128xf32, #tpu.memory_space<vmem>>, vector<8x128xf32>
    %c144 = arith.constant 144 : index
    %c0_135 = arith.constant 0 : index
    %142 = tpu.strided_load %arg19[%c144, %c0_135] {strides = array<i32: 2, 1>} : memref<256x128xf32, #tpu.memory_space<vmem>>, vector<8x128xf32>
    %c145 = arith.constant 145 : index
    %c0_136 = arith.constant 0 : index
    %143 = tpu.strided_load %arg19[%c145, %c0_136] {strides = array<i32: 2, 1>} : memref<256x128xf32, #tpu.memory_space<vmem>>, vector<8x128xf32>
    %144 = arith.maximumf %140, %141 : vector<8x128xf32>
    %145 = arith.maximumf %142, %143 : vector<8x128xf32>
    %146 = arith.maximumf %144, %145 : vector<8x128xf32>
    %147 = vector.extract_strided_slice %146 {offsets = [0, 0], sizes = [8, 32], strides = [1, 1]} : vector<8x128xf32> to vector<8x32xf32>
    %148 = arith.truncf %147 : vector<8x32xf32> to vector<8x32xbf16>
    %c5_137 = arith.constant 5 : index
    %c1_138 = arith.constant 1 : index
    %c0_139 = arith.constant 0 : index
    %149 = vector.load %arg14[%c5_137, %c1_138, %c0_139] : memref<10x10x32xbf16, #tpu.memory_space<vmem>>, vector<1x8x32xbf16>
    %150 = vector.shape_cast %149 : vector<1x8x32xbf16> to vector<8x32xbf16>
    %151 = vector.shape_cast %148 : vector<8x32xbf16> to vector<1x8x32xbf16>
    tpu.vector_store %arg14[%c5_137, %c1_138, %c0_139], %151 {strides = array<i32>} : memref<10x10x32xbf16, #tpu.memory_space<vmem>>, vector<1x8x32xbf16>,
    %c160 = arith.constant 160 : index
    %c0_140 = arith.constant 0 : index
    %152 = tpu.strided_load %arg19[%c160, %c0_140] {strides = array<i32: 2, 1>} : memref<256x128xf32, #tpu.memory_space<vmem>>, vector<8x128xf32>
    %c161 = arith.constant 161 : index
    %c0_141 = arith.constant 0 : index
    %153 = tpu.strided_load %arg19[%c161, %c0_141] {strides = array<i32: 2, 1>} : memref<256x128xf32, #tpu.memory_space<vmem>>, vector<8x128xf32>
    %c176 = arith.constant 176 : index
    %c0_142 = arith.constant 0 : index
    %154 = tpu.strided_load %arg19[%c176, %c0_142] {strides = array<i32: 2, 1>} : memref<256x128xf32, #tpu.memory_space<vmem>>, vector<8x128xf32>
    %c177 = arith.constant 177 : index
    %c0_143 = arith.constant 0 : index
    %155 = tpu.strided_load %arg19[%c177, %c0_143] {strides = array<i32: 2, 1>} : memref<256x128xf32, #tpu.memory_space<vmem>>, vector<8x128xf32>
    %156 = arith.maximumf %152, %153 : vector<8x128xf32>
    %157 = arith.maximumf %154, %155 : vector<8x128xf32>
    %158 = arith.maximumf %156, %157 : vector<8x128xf32>
    %159 = vector.extract_strided_slice %158 {offsets = [0, 0], sizes = [8, 32], strides = [1, 1]} : vector<8x128xf32> to vector<8x32xf32>
    %160 = arith.truncf %159 : vector<8x32xf32> to vector<8x32xbf16>
    %c6 = arith.constant 6 : index
    %c1_144 = arith.constant 1 : index
    %c0_145 = arith.constant 0 : index
    %161 = vector.load %arg14[%c6, %c1_144, %c0_145] : memref<10x10x32xbf16, #tpu.memory_space<vmem>>, vector<1x8x32xbf16>
    %162 = vector.shape_cast %161 : vector<1x8x32xbf16> to vector<8x32xbf16>
    %163 = vector.shape_cast %160 : vector<8x32xbf16> to vector<1x8x32xbf16>
    tpu.vector_store %arg14[%c6, %c1_144, %c0_145], %163 {strides = array<i32>} : memref<10x10x32xbf16, #tpu.memory_space<vmem>>, vector<1x8x32xbf16>,
    %c192 = arith.constant 192 : index
    %c0_146 = arith.constant 0 : index
    %164 = tpu.strided_load %arg19[%c192, %c0_146] {strides = array<i32: 2, 1>} : memref<256x128xf32, #tpu.memory_space<vmem>>, vector<8x128xf32>
    %c193 = arith.constant 193 : index
    %c0_147 = arith.constant 0 : index
    %165 = tpu.strided_load %arg19[%c193, %c0_147] {strides = array<i32: 2, 1>} : memref<256x128xf32, #tpu.memory_space<vmem>>, vector<8x128xf32>
    %c208 = arith.constant 208 : index
    %c0_148 = arith.constant 0 : index
    %166 = tpu.strided_load %arg19[%c208, %c0_148] {strides = array<i32: 2, 1>} : memref<256x128xf32, #tpu.memory_space<vmem>>, vector<8x128xf32>
    %c209 = arith.constant 209 : index
    %c0_149 = arith.constant 0 : index
    %167 = tpu.strided_load %arg19[%c209, %c0_149] {strides = array<i32: 2, 1>} : memref<256x128xf32, #tpu.memory_space<vmem>>, vector<8x128xf32>
    %168 = arith.maximumf %164, %165 : vector<8x128xf32>
    %169 = arith.maximumf %166, %167 : vector<8x128xf32>
    %170 = arith.maximumf %168, %169 : vector<8x128xf32>
    %171 = vector.extract_strided_slice %170 {offsets = [0, 0], sizes = [8, 32], strides = [1, 1]} : vector<8x128xf32> to vector<8x32xf32>
    %172 = arith.truncf %171 : vector<8x32xf32> to vector<8x32xbf16>
    %c7 = arith.constant 7 : index
    %c1_150 = arith.constant 1 : index
    %c0_151 = arith.constant 0 : index
    %173 = vector.load %arg14[%c7, %c1_150, %c0_151] : memref<10x10x32xbf16, #tpu.memory_space<vmem>>, vector<1x8x32xbf16>
    %174 = vector.shape_cast %173 : vector<1x8x32xbf16> to vector<8x32xbf16>
    %175 = vector.shape_cast %172 : vector<8x32xbf16> to vector<1x8x32xbf16>
    tpu.vector_store %arg14[%c7, %c1_150, %c0_151], %175 {strides = array<i32>} : memref<10x10x32xbf16, #tpu.memory_space<vmem>>, vector<1x8x32xbf16>,
    %c224 = arith.constant 224 : index
    %c0_152 = arith.constant 0 : index
    %176 = tpu.strided_load %arg19[%c224, %c0_152] {strides = array<i32: 2, 1>} : memref<256x128xf32, #tpu.memory_space<vmem>>, vector<8x128xf32>
    %c225 = arith.constant 225 : index
    %c0_153 = arith.constant 0 : index
    %177 = tpu.strided_load %arg19[%c225, %c0_153] {strides = array<i32: 2, 1>} : memref<256x128xf32, #tpu.memory_space<vmem>>, vector<8x128xf32>
    %c240 = arith.constant 240 : index
    %c0_154 = arith.constant 0 : index
    %178 = tpu.strided_load %arg19[%c240, %c0_154] {strides = array<i32: 2, 1>} : memref<256x128xf32, #tpu.memory_space<vmem>>, vector<8x128xf32>
    %c241 = arith.constant 241 : index
    %c0_155 = arith.constant 0 : index
    %179 = tpu.strided_load %arg19[%c241, %c0_155] {strides = array<i32: 2, 1>} : memref<256x128xf32, #tpu.memory_space<vmem>>, vector<8x128xf32>
    %180 = arith.maximumf %176, %177 : vector<8x128xf32>
    %181 = arith.maximumf %178, %179 : vector<8x128xf32>
    %182 = arith.maximumf %180, %181 : vector<8x128xf32>
    %183 = vector.extract_strided_slice %182 {offsets = [0, 0], sizes = [8, 32], strides = [1, 1]} : vector<8x128xf32> to vector<8x32xf32>
    %184 = arith.truncf %183 : vector<8x32xf32> to vector<8x32xbf16>
    %c8_156 = arith.constant 8 : index
    %c1_157 = arith.constant 1 : index
    %c0_158 = arith.constant 0 : index
    %185 = vector.load %arg14[%c8_156, %c1_157, %c0_158] : memref<10x10x32xbf16, #tpu.memory_space<vmem>>, vector<1x8x32xbf16>
    %186 = vector.shape_cast %185 : vector<1x8x32xbf16> to vector<8x32xbf16>
    %187 = vector.shape_cast %184 : vector<8x32xbf16> to vector<1x8x32xbf16>
    tpu.vector_store %arg14[%c8_156, %c1_157, %c0_158], %187 {strides = array<i32>} : memref<10x10x32xbf16, #tpu.memory_space<vmem>>, vector<1x8x32xbf16>,
    %c0_159 = arith.constant 0 : index
    %c0_160 = arith.constant 0 : index
    %c0_161 = arith.constant 0 : index
    %188 = vector.load %arg14[%c0_159, %c0_160, %c0_161] : memref<10x10x32xbf16, #tpu.memory_space<vmem>>, vector<8x8x32xbf16>
    %189 = vector.shape_cast %188 : vector<8x8x32xbf16> to vector<64x32xbf16>
    %c0_162 = arith.constant 0 : index
    %c0_163 = arith.constant 0 : index
    %190 = vector.load %arg17[%c0_162, %c0_163] : memref<64x384xbf16, #tpu.memory_space<vmem>>, vector<64x32xbf16>
    tpu.vector_store %arg17[%c0_162, %c0_163], %189 {strides = array<i32>} : memref<64x384xbf16, #tpu.memory_space<vmem>>, vector<64x32xbf16>,
    %c0_164 = arith.constant 0 : index
    %c1_165 = arith.constant 1 : index
    %c0_166 = arith.constant 0 : index
    %191 = vector.load %arg14[%c0_164, %c1_165, %c0_166] : memref<10x10x32xbf16, #tpu.memory_space<vmem>>, vector<8x8x32xbf16>
    %192 = vector.shape_cast %191 : vector<8x8x32xbf16> to vector<64x32xbf16>
    %c0_167 = arith.constant 0 : index
    %c32_168 = arith.constant 32 : index
    %193 = vector.load %arg17[%c0_167, %c32_168] : memref<64x384xbf16, #tpu.memory_space<vmem>>, vector<64x32xbf16>
    tpu.vector_store %arg17[%c0_167, %c32_168], %192 {strides = array<i32>} : memref<64x384xbf16, #tpu.memory_space<vmem>>, vector<64x32xbf16>,
    %c0_169 = arith.constant 0 : index
    %c2_170 = arith.constant 2 : index
    %c0_171 = arith.constant 0 : index
    %194 = vector.load %arg14[%c0_169, %c2_170, %c0_171] : memref<10x10x32xbf16, #tpu.memory_space<vmem>>, vector<8x8x32xbf16>
    %195 = vector.shape_cast %194 : vector<8x8x32xbf16> to vector<64x32xbf16>
    %c0_172 = arith.constant 0 : index
    %c64_173 = arith.constant 64 : index
    %196 = vector.load %arg17[%c0_172, %c64_173] : memref<64x384xbf16, #tpu.memory_space<vmem>>, vector<64x32xbf16>
    tpu.vector_store %arg17[%c0_172, %c64_173], %195 {strides = array<i32>} : memref<64x384xbf16, #tpu.memory_space<vmem>>, vector<64x32xbf16>,
    %c1_174 = arith.constant 1 : index
    %c0_175 = arith.constant 0 : index
    %c0_176 = arith.constant 0 : index
    %197 = vector.load %arg14[%c1_174, %c0_175, %c0_176] : memref<10x10x32xbf16, #tpu.memory_space<vmem>>, vector<8x8x32xbf16>
    %198 = vector.shape_cast %197 : vector<8x8x32xbf16> to vector<64x32xbf16>
    %c0_177 = arith.constant 0 : index
    %c96_178 = arith.constant 96 : index
    %199 = vector.load %arg17[%c0_177, %c96_178] : memref<64x384xbf16, #tpu.memory_space<vmem>>, vector<64x32xbf16>
    tpu.vector_store %arg17[%c0_177, %c96_178], %198 {strides = array<i32>} : memref<64x384xbf16, #tpu.memory_space<vmem>>, vector<64x32xbf16>,
    %c1_179 = arith.constant 1 : index
    %c1_180 = arith.constant 1 : index
    %c0_181 = arith.constant 0 : index
    %200 = vector.load %arg14[%c1_179, %c1_180, %c0_181] : memref<10x10x32xbf16, #tpu.memory_space<vmem>>, vector<8x8x32xbf16>
    %201 = vector.shape_cast %200 : vector<8x8x32xbf16> to vector<64x32xbf16>
    %c0_182 = arith.constant 0 : index
    %c128_183 = arith.constant 128 : index
    %202 = vector.load %arg17[%c0_182, %c128_183] : memref<64x384xbf16, #tpu.memory_space<vmem>>, vector<64x32xbf16>
    tpu.vector_store %arg17[%c0_182, %c128_183], %201 {strides = array<i32>} : memref<64x384xbf16, #tpu.memory_space<vmem>>, vector<64x32xbf16>,
    %c1_184 = arith.constant 1 : index
    %c2_185 = arith.constant 2 : index
    %c0_186 = arith.constant 0 : index
    %203 = vector.load %arg14[%c1_184, %c2_185, %c0_186] : memref<10x10x32xbf16, #tpu.memory_space<vmem>>, vector<8x8x32xbf16>
    %204 = vector.shape_cast %203 : vector<8x8x32xbf16> to vector<64x32xbf16>
    %c0_187 = arith.constant 0 : index
    %c160_188 = arith.constant 160 : index
    %205 = vector.load %arg17[%c0_187, %c160_188] : memref<64x384xbf16, #tpu.memory_space<vmem>>, vector<64x32xbf16>
    tpu.vector_store %arg17[%c0_187, %c160_188], %204 {strides = array<i32>} : memref<64x384xbf16, #tpu.memory_space<vmem>>, vector<64x32xbf16>,
    %c2_189 = arith.constant 2 : index
    %c0_190 = arith.constant 0 : index
    %c0_191 = arith.constant 0 : index
    %206 = vector.load %arg14[%c2_189, %c0_190, %c0_191] : memref<10x10x32xbf16, #tpu.memory_space<vmem>>, vector<8x8x32xbf16>
    %207 = vector.shape_cast %206 : vector<8x8x32xbf16> to vector<64x32xbf16>
    %c0_192 = arith.constant 0 : index
    %c192_193 = arith.constant 192 : index
    %208 = vector.load %arg17[%c0_192, %c192_193] : memref<64x384xbf16, #tpu.memory_space<vmem>>, vector<64x32xbf16>
    tpu.vector_store %arg17[%c0_192, %c192_193], %207 {strides = array<i32>} : memref<64x384xbf16, #tpu.memory_space<vmem>>, vector<64x32xbf16>,
    %c2_194 = arith.constant 2 : index
    %c1_195 = arith.constant 1 : index
    %c0_196 = arith.constant 0 : index
    %209 = vector.load %arg14[%c2_194, %c1_195, %c0_196] : memref<10x10x32xbf16, #tpu.memory_space<vmem>>, vector<8x8x32xbf16>
    %210 = vector.shape_cast %209 : vector<8x8x32xbf16> to vector<64x32xbf16>
    %c0_197 = arith.constant 0 : index
    %c224_198 = arith.constant 224 : index
    %211 = vector.load %arg17[%c0_197, %c224_198] : memref<64x384xbf16, #tpu.memory_space<vmem>>, vector<64x32xbf16>
    tpu.vector_store %arg17[%c0_197, %c224_198], %210 {strides = array<i32>} : memref<64x384xbf16, #tpu.memory_space<vmem>>, vector<64x32xbf16>,
    %c2_199 = arith.constant 2 : index
    %c2_200 = arith.constant 2 : index
    %c0_201 = arith.constant 0 : index
    %212 = vector.load %arg14[%c2_199, %c2_200, %c0_201] : memref<10x10x32xbf16, #tpu.memory_space<vmem>>, vector<8x8x32xbf16>
    %213 = vector.shape_cast %212 : vector<8x8x32xbf16> to vector<64x32xbf16>
    %c0_202 = arith.constant 0 : index
    %c256 = arith.constant 256 : index
    %214 = vector.load %arg17[%c0_202, %c256] : memref<64x384xbf16, #tpu.memory_space<vmem>>, vector<64x32xbf16>
    tpu.vector_store %arg17[%c0_202, %c256], %213 {strides = array<i32>} : memref<64x384xbf16, #tpu.memory_space<vmem>>, vector<64x32xbf16>,
    %cst_203 = arith.constant 0.000000e+00 : bf16
    %215 = vector.broadcast %cst_203 : bf16 to vector<64x96xbf16>
    %c0_204 = arith.constant 0 : index
    %c288 = arith.constant 288 : index
    %216 = vector.load %arg17[%c0_204, %c288] : memref<64x384xbf16, #tpu.memory_space<vmem>>, vector<64x96xbf16>
    tpu.vector_store %arg17[%c0_204, %c288], %215 {strides = array<i32>} : memref<64x384xbf16, #tpu.memory_space<vmem>>, vector<64x96xbf16>,
    %c0_205 = arith.constant 0 : index
    %c0_206 = arith.constant 0 : index
    %217 = vector.load %arg17[%c0_205, %c0_206] : memref<64x384xbf16, #tpu.memory_space<vmem>>, vector<64x384xbf16>
    %c0_207 = arith.constant 0 : index
    %c0_208 = arith.constant 0 : index
    %218 = vector.load %arg4[%c0_207, %c0_208] : memref<384x128xbf16, #tpu.memory_space<vmem>>, vector<384x128xbf16>
    %cst_209 = arith.constant dense<0.000000e+00> : vector<64x128xf32>
    %219 = tpu.matmul %217, %218, %cst_209 {dimension_numbers = #tpu.dot_dimension_numbers<[1], [0], [0], [1], [0, 0, 1, 1], [], []>} : vector<64x384xbf16>, vector<384x128xbf16>, vector<64x128xf32> -> vector<64x128xf32>
    %c0_210 = arith.constant 0 : index
    %c0_211 = arith.constant 0 : index
    %220 = vector.load %arg5[%c0_210, %c0_211] : memref<1x128xf32, #tpu.memory_space<vmem>>, vector<1x128xf32>
    %221 = vector.broadcast %220 : vector<1x128xf32> to vector<64x128xf32>
    %222 = arith.addf %219, %221 : vector<64x128xf32>
    %cst_212 = arith.constant 0.000000e+00 : f32
    %223 = vector.broadcast %cst_212 : f32 to vector<64x128xf32>
    %224 = arith.maximumf %222, %223 : vector<64x128xf32>
    %c0_213 = arith.constant 0 : index
    %c0_214 = arith.constant 0 : index
    %225 = vector.load %arg19[%c0_213, %c0_214] : memref<256x128xf32, #tpu.memory_space<vmem>>, vector<64x128xf32>
    tpu.vector_store %arg19[%c0_213, %c0_214], %224 {strides = array<i32>} : memref<256x128xf32, #tpu.memory_space<vmem>>, vector<64x128xf32>,
    %c0_215 = arith.constant 0 : index
    %c0_216 = arith.constant 0 : index
    %226 = tpu.strided_load %arg19[%c0_215, %c0_216] {strides = array<i32: 2, 1>} : memref<256x128xf32, #tpu.memory_space<vmem>>, vector<4x128xf32>
    %c1_217 = arith.constant 1 : index
    %c0_218 = arith.constant 0 : index
    %227 = tpu.strided_load %arg19[%c1_217, %c0_218] {strides = array<i32: 2, 1>} : memref<256x128xf32, #tpu.memory_space<vmem>>, vector<4x128xf32>
    %c8_219 = arith.constant 8 : index
    %c0_220 = arith.constant 0 : index
    %228 = tpu.strided_load %arg19[%c8_219, %c0_220] {strides = array<i32: 2, 1>} : memref<256x128xf32, #tpu.memory_space<vmem>>, vector<4x128xf32>
    %c9_221 = arith.constant 9 : index
    %c0_222 = arith.constant 0 : index
    %229 = tpu.strided_load %arg19[%c9_221, %c0_222] {strides = array<i32: 2, 1>} : memref<256x128xf32, #tpu.memory_space<vmem>>, vector<4x128xf32>
    %230 = arith.maximumf %226, %227 : vector<4x128xf32>
    %231 = arith.maximumf %228, %229 : vector<4x128xf32>
    %232 = arith.maximumf %230, %231 : vector<4x128xf32>
    %233 = vector.extract_strided_slice %232 {offsets = [0, 0], sizes = [4, 64], strides = [1, 1]} : vector<4x128xf32> to vector<4x64xf32>
    %234 = arith.truncf %233 : vector<4x64xf32> to vector<4x64xbf16>
    %c1_223 = arith.constant 1 : index
    %c1_224 = arith.constant 1 : index
    %c0_225 = arith.constant 0 : index
    %235 = vector.load %arg15[%c1_223, %c1_224, %c0_225] : memref<6x6x64xbf16, #tpu.memory_space<vmem>>, vector<1x4x64xbf16>
    %236 = vector.shape_cast %235 : vector<1x4x64xbf16> to vector<4x64xbf16>
    %237 = vector.shape_cast %234 : vector<4x64xbf16> to vector<1x4x64xbf16>
    tpu.vector_store %arg15[%c1_223, %c1_224, %c0_225], %237 {strides = array<i32>} : memref<6x6x64xbf16, #tpu.memory_space<vmem>>, vector<1x4x64xbf16>,
    %c16_226 = arith.constant 16 : index
    %c0_227 = arith.constant 0 : index
    %238 = tpu.strided_load %arg19[%c16_226, %c0_227] {strides = array<i32: 2, 1>} : memref<256x128xf32, #tpu.memory_space<vmem>>, vector<4x128xf32>
    %c17_228 = arith.constant 17 : index
    %c0_229 = arith.constant 0 : index
    %239 = tpu.strided_load %arg19[%c17_228, %c0_229] {strides = array<i32: 2, 1>} : memref<256x128xf32, #tpu.memory_space<vmem>>, vector<4x128xf32>
    %c24_230 = arith.constant 24 : index
    %c0_231 = arith.constant 0 : index
    %240 = tpu.strided_load %arg19[%c24_230, %c0_231] {strides = array<i32: 2, 1>} : memref<256x128xf32, #tpu.memory_space<vmem>>, vector<4x128xf32>
    %c25 = arith.constant 25 : index
    %c0_232 = arith.constant 0 : index
    %241 = tpu.strided_load %arg19[%c25, %c0_232] {strides = array<i32: 2, 1>} : memref<256x128xf32, #tpu.memory_space<vmem>>, vector<4x128xf32>
    %242 = arith.maximumf %238, %239 : vector<4x128xf32>
    %243 = arith.maximumf %240, %241 : vector<4x128xf32>
    %244 = arith.maximumf %242, %243 : vector<4x128xf32>
    %245 = vector.extract_strided_slice %244 {offsets = [0, 0], sizes = [4, 64], strides = [1, 1]} : vector<4x128xf32> to vector<4x64xf32>
    %246 = arith.truncf %245 : vector<4x64xf32> to vector<4x64xbf16>
    %c2_233 = arith.constant 2 : index
    %c1_234 = arith.constant 1 : index
    %c0_235 = arith.constant 0 : index
    %247 = vector.load %arg15[%c2_233, %c1_234, %c0_235] : memref<6x6x64xbf16, #tpu.memory_space<vmem>>, vector<1x4x64xbf16>
    %248 = vector.shape_cast %247 : vector<1x4x64xbf16> to vector<4x64xbf16>
    %249 = vector.shape_cast %246 : vector<4x64xbf16> to vector<1x4x64xbf16>
    tpu.vector_store %arg15[%c2_233, %c1_234, %c0_235], %249 {strides = array<i32>} : memref<6x6x64xbf16, #tpu.memory_space<vmem>>, vector<1x4x64xbf16>,
    %c32_236 = arith.constant 32 : index
    %c0_237 = arith.constant 0 : index
    %250 = tpu.strided_load %arg19[%c32_236, %c0_237] {strides = array<i32: 2, 1>} : memref<256x128xf32, #tpu.memory_space<vmem>>, vector<4x128xf32>
    %c33_238 = arith.constant 33 : index
    %c0_239 = arith.constant 0 : index
    %251 = tpu.strided_load %arg19[%c33_238, %c0_239] {strides = array<i32: 2, 1>} : memref<256x128xf32, #tpu.memory_space<vmem>>, vector<4x128xf32>
    %c40 = arith.constant 40 : index
    %c0_240 = arith.constant 0 : index
    %252 = tpu.strided_load %arg19[%c40, %c0_240] {strides = array<i32: 2, 1>} : memref<256x128xf32, #tpu.memory_space<vmem>>, vector<4x128xf32>
    %c41 = arith.constant 41 : index
    %c0_241 = arith.constant 0 : index
    %253 = tpu.strided_load %arg19[%c41, %c0_241] {strides = array<i32: 2, 1>} : memref<256x128xf32, #tpu.memory_space<vmem>>, vector<4x128xf32>
    %254 = arith.maximumf %250, %251 : vector<4x128xf32>
    %255 = arith.maximumf %252, %253 : vector<4x128xf32>
    %256 = arith.maximumf %254, %255 : vector<4x128xf32>
    %257 = vector.extract_strided_slice %256 {offsets = [0, 0], sizes = [4, 64], strides = [1, 1]} : vector<4x128xf32> to vector<4x64xf32>
    %258 = arith.truncf %257 : vector<4x64xf32> to vector<4x64xbf16>
    %c3_242 = arith.constant 3 : index
    %c1_243 = arith.constant 1 : index
    %c0_244 = arith.constant 0 : index
    %259 = vector.load %arg15[%c3_242, %c1_243, %c0_244] : memref<6x6x64xbf16, #tpu.memory_space<vmem>>, vector<1x4x64xbf16>
    %260 = vector.shape_cast %259 : vector<1x4x64xbf16> to vector<4x64xbf16>
    %261 = vector.shape_cast %258 : vector<4x64xbf16> to vector<1x4x64xbf16>
    tpu.vector_store %arg15[%c3_242, %c1_243, %c0_244], %261 {strides = array<i32>} : memref<6x6x64xbf16, #tpu.memory_space<vmem>>, vector<1x4x64xbf16>,
    %c48_245 = arith.constant 48 : index
    %c0_246 = arith.constant 0 : index
    %262 = tpu.strided_load %arg19[%c48_245, %c0_246] {strides = array<i32: 2, 1>} : memref<256x128xf32, #tpu.memory_space<vmem>>, vector<4x128xf32>
    %c49_247 = arith.constant 49 : index
    %c0_248 = arith.constant 0 : index
    %263 = tpu.strided_load %arg19[%c49_247, %c0_248] {strides = array<i32: 2, 1>} : memref<256x128xf32, #tpu.memory_space<vmem>>, vector<4x128xf32>
    %c56 = arith.constant 56 : index
    %c0_249 = arith.constant 0 : index
    %264 = tpu.strided_load %arg19[%c56, %c0_249] {strides = array<i32: 2, 1>} : memref<256x128xf32, #tpu.memory_space<vmem>>, vector<4x128xf32>
    %c57 = arith.constant 57 : index
    %c0_250 = arith.constant 0 : index
    %265 = tpu.strided_load %arg19[%c57, %c0_250] {strides = array<i32: 2, 1>} : memref<256x128xf32, #tpu.memory_space<vmem>>, vector<4x128xf32>
    %266 = arith.maximumf %262, %263 : vector<4x128xf32>
    %267 = arith.maximumf %264, %265 : vector<4x128xf32>
    %268 = arith.maximumf %266, %267 : vector<4x128xf32>
    %269 = vector.extract_strided_slice %268 {offsets = [0, 0], sizes = [4, 64], strides = [1, 1]} : vector<4x128xf32> to vector<4x64xf32>
    %270 = arith.truncf %269 : vector<4x64xf32> to vector<4x64xbf16>
    %c4_251 = arith.constant 4 : index
    %c1_252 = arith.constant 1 : index
    %c0_253 = arith.constant 0 : index
    %271 = vector.load %arg15[%c4_251, %c1_252, %c0_253] : memref<6x6x64xbf16, #tpu.memory_space<vmem>>, vector<1x4x64xbf16>
    %272 = vector.shape_cast %271 : vector<1x4x64xbf16> to vector<4x64xbf16>
    %273 = vector.shape_cast %270 : vector<4x64xbf16> to vector<1x4x64xbf16>
    tpu.vector_store %arg15[%c4_251, %c1_252, %c0_253], %273 {strides = array<i32>} : memref<6x6x64xbf16, #tpu.memory_space<vmem>>, vector<1x4x64xbf16>,
    %c0_254 = arith.constant 0 : index
    %c0_255 = arith.constant 0 : index
    %c0_256 = arith.constant 0 : index
    %274 = vector.load %arg15[%c0_254, %c0_255, %c0_256] : memref<6x6x64xbf16, #tpu.memory_space<vmem>>, vector<4x4x64xbf16>
    %275 = vector.shape_cast %274 : vector<4x4x64xbf16> to vector<16x64xbf16>
    %c0_257 = arith.constant 0 : index
    %c0_258 = arith.constant 0 : index
    %276 = vector.load %arg18[%c0_257, %c0_258] : memref<16x640xbf16, #tpu.memory_space<vmem>>, vector<16x64xbf16>
    tpu.vector_store %arg18[%c0_257, %c0_258], %275 {strides = array<i32>} : memref<16x640xbf16, #tpu.memory_space<vmem>>, vector<16x64xbf16>,
    %c0_259 = arith.constant 0 : index
    %c1_260 = arith.constant 1 : index
    %c0_261 = arith.constant 0 : index
    %277 = vector.load %arg15[%c0_259, %c1_260, %c0_261] : memref<6x6x64xbf16, #tpu.memory_space<vmem>>, vector<4x4x64xbf16>
    %278 = vector.shape_cast %277 : vector<4x4x64xbf16> to vector<16x64xbf16>
    %c0_262 = arith.constant 0 : index
    %c64_263 = arith.constant 64 : index
    %279 = vector.load %arg18[%c0_262, %c64_263] : memref<16x640xbf16, #tpu.memory_space<vmem>>, vector<16x64xbf16>
    tpu.vector_store %arg18[%c0_262, %c64_263], %278 {strides = array<i32>} : memref<16x640xbf16, #tpu.memory_space<vmem>>, vector<16x64xbf16>,
    %c0_264 = arith.constant 0 : index
    %c2_265 = arith.constant 2 : index
    %c0_266 = arith.constant 0 : index
    %280 = vector.load %arg15[%c0_264, %c2_265, %c0_266] : memref<6x6x64xbf16, #tpu.memory_space<vmem>>, vector<4x4x64xbf16>
    %281 = vector.shape_cast %280 : vector<4x4x64xbf16> to vector<16x64xbf16>
    %c0_267 = arith.constant 0 : index
    %c128_268 = arith.constant 128 : index
    %282 = vector.load %arg18[%c0_267, %c128_268] : memref<16x640xbf16, #tpu.memory_space<vmem>>, vector<16x64xbf16>
    tpu.vector_store %arg18[%c0_267, %c128_268], %281 {strides = array<i32>} : memref<16x640xbf16, #tpu.memory_space<vmem>>, vector<16x64xbf16>,
    %c1_269 = arith.constant 1 : index
    %c0_270 = arith.constant 0 : index
    %c0_271 = arith.constant 0 : index
    %283 = vector.load %arg15[%c1_269, %c0_270, %c0_271] : memref<6x6x64xbf16, #tpu.memory_space<vmem>>, vector<4x4x64xbf16>
    %284 = vector.shape_cast %283 : vector<4x4x64xbf16> to vector<16x64xbf16>
    %c0_272 = arith.constant 0 : index
    %c192_273 = arith.constant 192 : index
    %285 = vector.load %arg18[%c0_272, %c192_273] : memref<16x640xbf16, #tpu.memory_space<vmem>>, vector<16x64xbf16>
    tpu.vector_store %arg18[%c0_272, %c192_273], %284 {strides = array<i32>} : memref<16x640xbf16, #tpu.memory_space<vmem>>, vector<16x64xbf16>,
    %c1_274 = arith.constant 1 : index
    %c1_275 = arith.constant 1 : index
    %c0_276 = arith.constant 0 : index
    %286 = vector.load %arg15[%c1_274, %c1_275, %c0_276] : memref<6x6x64xbf16, #tpu.memory_space<vmem>>, vector<4x4x64xbf16>
    %287 = vector.shape_cast %286 : vector<4x4x64xbf16> to vector<16x64xbf16>
    %c0_277 = arith.constant 0 : index
    %c256_278 = arith.constant 256 : index
    %288 = vector.load %arg18[%c0_277, %c256_278] : memref<16x640xbf16, #tpu.memory_space<vmem>>, vector<16x64xbf16>
    tpu.vector_store %arg18[%c0_277, %c256_278], %287 {strides = array<i32>} : memref<16x640xbf16, #tpu.memory_space<vmem>>, vector<16x64xbf16>,
    %c1_279 = arith.constant 1 : index
    %c2_280 = arith.constant 2 : index
    %c0_281 = arith.constant 0 : index
    %289 = vector.load %arg15[%c1_279, %c2_280, %c0_281] : memref<6x6x64xbf16, #tpu.memory_space<vmem>>, vector<4x4x64xbf16>
    %290 = vector.shape_cast %289 : vector<4x4x64xbf16> to vector<16x64xbf16>
    %c0_282 = arith.constant 0 : index
    %c320 = arith.constant 320 : index
    %291 = vector.load %arg18[%c0_282, %c320] : memref<16x640xbf16, #tpu.memory_space<vmem>>, vector<16x64xbf16>
    tpu.vector_store %arg18[%c0_282, %c320], %290 {strides = array<i32>} : memref<16x640xbf16, #tpu.memory_space<vmem>>, vector<16x64xbf16>,
    %c2_283 = arith.constant 2 : index
    %c0_284 = arith.constant 0 : index
    %c0_285 = arith.constant 0 : index
    %292 = vector.load %arg15[%c2_283, %c0_284, %c0_285] : memref<6x6x64xbf16, #tpu.memory_space<vmem>>, vector<4x4x64xbf16>
    %293 = vector.shape_cast %292 : vector<4x4x64xbf16> to vector<16x64xbf16>
    %c0_286 = arith.constant 0 : index
    %c384 = arith.constant 384 : index
    %294 = vector.load %arg18[%c0_286, %c384] : memref<16x640xbf16, #tpu.memory_space<vmem>>, vector<16x64xbf16>
    tpu.vector_store %arg18[%c0_286, %c384], %293 {strides = array<i32>} : memref<16x640xbf16, #tpu.memory_space<vmem>>, vector<16x64xbf16>,
    %c2_287 = arith.constant 2 : index
    %c1_288 = arith.constant 1 : index
    %c0_289 = arith.constant 0 : index
    %295 = vector.load %arg15[%c2_287, %c1_288, %c0_289] : memref<6x6x64xbf16, #tpu.memory_space<vmem>>, vector<4x4x64xbf16>
    %296 = vector.shape_cast %295 : vector<4x4x64xbf16> to vector<16x64xbf16>
    %c0_290 = arith.constant 0 : index
    %c448 = arith.constant 448 : index
    %297 = vector.load %arg18[%c0_290, %c448] : memref<16x640xbf16, #tpu.memory_space<vmem>>, vector<16x64xbf16>
    tpu.vector_store %arg18[%c0_290, %c448], %296 {strides = array<i32>} : memref<16x640xbf16, #tpu.memory_space<vmem>>, vector<16x64xbf16>,
    %c2_291 = arith.constant 2 : index
    %c2_292 = arith.constant 2 : index
    %c0_293 = arith.constant 0 : index
    %298 = vector.load %arg15[%c2_291, %c2_292, %c0_293] : memref<6x6x64xbf16, #tpu.memory_space<vmem>>, vector<4x4x64xbf16>
    %299 = vector.shape_cast %298 : vector<4x4x64xbf16> to vector<16x64xbf16>
    %c0_294 = arith.constant 0 : index
    %c512 = arith.constant 512 : index
    %300 = vector.load %arg18[%c0_294, %c512] : memref<16x640xbf16, #tpu.memory_space<vmem>>, vector<16x64xbf16>
    tpu.vector_store %arg18[%c0_294, %c512], %299 {strides = array<i32>} : memref<16x640xbf16, #tpu.memory_space<vmem>>, vector<16x64xbf16>,
    %cst_295 = arith.constant 0.000000e+00 : bf16
    %301 = vector.broadcast %cst_295 : bf16 to vector<16x64xbf16>
    %c0_296 = arith.constant 0 : index
    %c576 = arith.constant 576 : index
    %302 = vector.load %arg18[%c0_296, %c576] : memref<16x640xbf16, #tpu.memory_space<vmem>>, vector<16x64xbf16>
    tpu.vector_store %arg18[%c0_296, %c576], %301 {strides = array<i32>} : memref<16x640xbf16, #tpu.memory_space<vmem>>, vector<16x64xbf16>,
    %c0_297 = arith.constant 0 : index
    %c0_298 = arith.constant 0 : index
    %303 = vector.load %arg18[%c0_297, %c0_298] : memref<16x640xbf16, #tpu.memory_space<vmem>>, vector<16x640xbf16>
    %c0_299 = arith.constant 0 : index
    %c0_300 = arith.constant 0 : index
    %304 = vector.load %arg6[%c0_299, %c0_300] : memref<640x128xbf16, #tpu.memory_space<vmem>>, vector<640x128xbf16>
    %cst_301 = arith.constant dense<0.000000e+00> : vector<16x128xf32>
    %305 = tpu.matmul %303, %304, %cst_301 {dimension_numbers = #tpu.dot_dimension_numbers<[1], [0], [0], [1], [0, 0, 1, 1], [], []>} : vector<16x640xbf16>, vector<640x128xbf16>, vector<16x128xf32> -> vector<16x128xf32>
    %c0_302 = arith.constant 0 : index
    %c0_303 = arith.constant 0 : index
    %306 = vector.load %arg7[%c0_302, %c0_303] : memref<1x128xf32, #tpu.memory_space<vmem>>, vector<1x128xf32>
    %307 = vector.broadcast %306 : vector<1x128xf32> to vector<16x128xf32>
    %308 = arith.addf %305, %307 : vector<16x128xf32>
    %cst_304 = arith.constant 0.000000e+00 : f32
    %309 = vector.broadcast %cst_304 : f32 to vector<16x128xf32>
    %310 = arith.maximumf %308, %309 : vector<16x128xf32>
    %c0_305 = arith.constant 0 : index
    %c0_306 = arith.constant 0 : index
    %311 = vector.load %arg19[%c0_305, %c0_306] : memref<256x128xf32, #tpu.memory_space<vmem>>, vector<16x128xf32>
    tpu.vector_store %arg19[%c0_305, %c0_306], %310 {strides = array<i32>} : memref<256x128xf32, #tpu.memory_space<vmem>>, vector<16x128xf32>,
    %c0_307 = arith.constant 0 : index
    %c0_308 = arith.constant 0 : index
    %312 = tpu.strided_load %arg19[%c0_307, %c0_308] {strides = array<i32: 2, 1>} : memref<256x128xf32, #tpu.memory_space<vmem>>, vector<2x128xf32>
    %c1_309 = arith.constant 1 : index
    %c0_310 = arith.constant 0 : index
    %313 = tpu.strided_load %arg19[%c1_309, %c0_310] {strides = array<i32: 2, 1>} : memref<256x128xf32, #tpu.memory_space<vmem>>, vector<2x128xf32>
    %c4_311 = arith.constant 4 : index
    %c0_312 = arith.constant 0 : index
    %314 = tpu.strided_load %arg19[%c4_311, %c0_312] {strides = array<i32: 2, 1>} : memref<256x128xf32, #tpu.memory_space<vmem>>, vector<2x128xf32>
    %c5_313 = arith.constant 5 : index
    %c0_314 = arith.constant 0 : index
    %315 = tpu.strided_load %arg19[%c5_313, %c0_314] {strides = array<i32: 2, 1>} : memref<256x128xf32, #tpu.memory_space<vmem>>, vector<2x128xf32>
    %316 = arith.maximumf %312, %313 : vector<2x128xf32>
    %317 = arith.maximumf %314, %315 : vector<2x128xf32>
    %318 = arith.maximumf %316, %317 : vector<2x128xf32>
    %c8_315 = arith.constant 8 : index
    %c0_316 = arith.constant 0 : index
    %319 = tpu.strided_load %arg19[%c8_315, %c0_316] {strides = array<i32: 2, 1>} : memref<256x128xf32, #tpu.memory_space<vmem>>, vector<2x128xf32>
    %c9_317 = arith.constant 9 : index
    %c0_318 = arith.constant 0 : index
    %320 = tpu.strided_load %arg19[%c9_317, %c0_318] {strides = array<i32: 2, 1>} : memref<256x128xf32, #tpu.memory_space<vmem>>, vector<2x128xf32>
    %c12_319 = arith.constant 12 : index
    %c0_320 = arith.constant 0 : index
    %321 = tpu.strided_load %arg19[%c12_319, %c0_320] {strides = array<i32: 2, 1>} : memref<256x128xf32, #tpu.memory_space<vmem>>, vector<2x128xf32>
    %c13 = arith.constant 13 : index
    %c0_321 = arith.constant 0 : index
    %322 = tpu.strided_load %arg19[%c13, %c0_321] {strides = array<i32: 2, 1>} : memref<256x128xf32, #tpu.memory_space<vmem>>, vector<2x128xf32>
    %323 = arith.maximumf %319, %320 : vector<2x128xf32>
    %324 = arith.maximumf %321, %322 : vector<2x128xf32>
    %325 = arith.maximumf %323, %324 : vector<2x128xf32>
    %c0_322 = arith.constant 0 : index
    %c0_323 = arith.constant 0 : index
    %326 = vector.load %arg9[%c0_322, %c0_323] : memref<1x512xf32, #tpu.memory_space<vmem>>, vector<1x512xf32>
    %327 = vector.extract_strided_slice %318 {offsets = [0, 0], sizes = [1, 128], strides = [1, 1]} : vector<2x128xf32> to vector<1x128xf32>
    %328 = arith.truncf %327 : vector<1x128xf32> to vector<1x128xbf16>
    %c0_324 = arith.constant 0 : index
    %c0_325 = arith.constant 0 : index
    %c0_326 = arith.constant 0 : index
    %329 = vector.load %arg8[%c0_324, %c0_325, %c0_326] : memref<4x128x512xbf16, #tpu.memory_space<vmem>>, vector<1x128x512xbf16>
    %330 = vector.shape_cast %329 : vector<1x128x512xbf16> to vector<128x512xbf16>
    %cst_327 = arith.constant dense<0.000000e+00> : vector<1x512xf32>
    %331 = tpu.matmul %328, %330, %cst_327 {dimension_numbers = #tpu.dot_dimension_numbers<[1], [0], [0], [1], [0, 0, 1, 1], [], []>} : vector<1x128xbf16>, vector<128x512xbf16>, vector<1x512xf32> -> vector<1x512xf32>
    %332 = arith.addf %326, %331 : vector<1x512xf32>
    %333 = vector.extract_strided_slice %318 {offsets = [1, 0], sizes = [1, 128], strides = [1, 1]} : vector<2x128xf32> to vector<1x128xf32>
    %334 = arith.truncf %333 : vector<1x128xf32> to vector<1x128xbf16>
    %c1_328 = arith.constant 1 : index
    %c0_329 = arith.constant 0 : index
    %c0_330 = arith.constant 0 : index
    %335 = vector.load %arg8[%c1_328, %c0_329, %c0_330] : memref<4x128x512xbf16, #tpu.memory_space<vmem>>, vector<1x128x512xbf16>
    %336 = vector.shape_cast %335 : vector<1x128x512xbf16> to vector<128x512xbf16>
    %cst_331 = arith.constant dense<0.000000e+00> : vector<1x512xf32>
    %337 = tpu.matmul %334, %336, %cst_331 {dimension_numbers = #tpu.dot_dimension_numbers<[1], [0], [0], [1], [0, 0, 1, 1], [], []>} : vector<1x128xbf16>, vector<128x512xbf16>, vector<1x512xf32> -> vector<1x512xf32>
    %338 = arith.addf %332, %337 : vector<1x512xf32>
    %339 = vector.extract_strided_slice %325 {offsets = [0, 0], sizes = [1, 128], strides = [1, 1]} : vector<2x128xf32> to vector<1x128xf32>
    %340 = arith.truncf %339 : vector<1x128xf32> to vector<1x128xbf16>
    %c2_332 = arith.constant 2 : index
    %c0_333 = arith.constant 0 : index
    %c0_334 = arith.constant 0 : index
    %341 = vector.load %arg8[%c2_332, %c0_333, %c0_334] : memref<4x128x512xbf16, #tpu.memory_space<vmem>>, vector<1x128x512xbf16>
    %342 = vector.shape_cast %341 : vector<1x128x512xbf16> to vector<128x512xbf16>
    %cst_335 = arith.constant dense<0.000000e+00> : vector<1x512xf32>
    %343 = tpu.matmul %340, %342, %cst_335 {dimension_numbers = #tpu.dot_dimension_numbers<[1], [0], [0], [1], [0, 0, 1, 1], [], []>} : vector<1x128xbf16>, vector<128x512xbf16>, vector<1x512xf32> -> vector<1x512xf32>
    %344 = arith.addf %338, %343 : vector<1x512xf32>
    %345 = vector.extract_strided_slice %325 {offsets = [1, 0], sizes = [1, 128], strides = [1, 1]} : vector<2x128xf32> to vector<1x128xf32>
    %346 = arith.truncf %345 : vector<1x128xf32> to vector<1x128xbf16>
    %c3_336 = arith.constant 3 : index
    %c0_337 = arith.constant 0 : index
    %c0_338 = arith.constant 0 : index
    %347 = vector.load %arg8[%c3_336, %c0_337, %c0_338] : memref<4x128x512xbf16, #tpu.memory_space<vmem>>, vector<1x128x512xbf16>
    %348 = vector.shape_cast %347 : vector<1x128x512xbf16> to vector<128x512xbf16>
    %cst_339 = arith.constant dense<0.000000e+00> : vector<1x512xf32>
    %349 = tpu.matmul %346, %348, %cst_339 {dimension_numbers = #tpu.dot_dimension_numbers<[1], [0], [0], [1], [0, 0, 1, 1], [], []>} : vector<1x128xbf16>, vector<128x512xbf16>, vector<1x512xf32> -> vector<1x512xf32>
    %350 = arith.addf %344, %349 : vector<1x512xf32>
    %cst_340 = arith.constant 0.000000e+00 : f32
    %351 = vector.broadcast %cst_340 : f32 to vector<1x512xf32>
    %352 = arith.maximumf %350, %351 : vector<1x512xf32>
    %353 = arith.truncf %352 : vector<1x512xf32> to vector<1x512xbf16>
    %c0_341 = arith.constant 0 : index
    %c0_342 = arith.constant 0 : index
    %354 = vector.load %arg10[%c0_341, %c0_342] : memref<512x128xbf16, #tpu.memory_space<vmem>>, vector<512x128xbf16>
    %cst_343 = arith.constant dense<0.000000e+00> : vector<1x128xf32>
    %355 = tpu.matmul %353, %354, %cst_343 {dimension_numbers = #tpu.dot_dimension_numbers<[1], [0], [0], [1], [0, 0, 1, 1], [], []>} : vector<1x512xbf16>, vector<512x128xbf16>, vector<1x128xf32> -> vector<1x128xf32>
    %c0_344 = arith.constant 0 : index
    %c0_345 = arith.constant 0 : index
    %356 = vector.load %arg11[%c0_344, %c0_345] : memref<1x128xf32, #tpu.memory_space<vmem>>, vector<1x128xf32>
    %357 = arith.addf %355, %356 : vector<1x128xf32>
    %c0_346 = arith.constant 0 : index
    %c0_347 = arith.constant 0 : index
    %c0_348 = arith.constant 0 : index
    %358 = vector.load %arg12[%c0_346, %c0_347, %c0_348] : memref<1x1x128xf32, #tpu.memory_space<vmem>>, vector<1x1x128xf32>
    %359 = vector.shape_cast %358 : vector<1x1x128xf32> to vector<1x128xf32>
    %360 = vector.shape_cast %357 : vector<1x128xf32> to vector<1x1x128xf32>
    tpu.vector_store %arg12[%c0_346, %c0_347, %c0_348], %360 {strides = array<i32>} : memref<1x1x128xf32, #tpu.memory_space<vmem>>, vector<1x1x128xf32>,
    return
  }
  func.func @transform_0(%arg0: i32) -> (i32, i32, i32, i32) {
    %c0_i32 = arith.constant 0 : i32
    %c0_i32_0 = arith.constant 0 : i32
    %c0_i32_1 = arith.constant 0 : i32
    %c0_i32_2 = arith.constant 0 : i32
    return %arg0, %c0_i32, %c0_i32_0, %c0_i32_1 : i32, i32, i32, i32
  }
  func.func @transform_1(%arg0: i32) -> (i32, i32) {
    %c0_i32 = arith.constant 0 : i32
    %c0_i32_0 = arith.constant 0 : i32
    %c0_i32_1 = arith.constant 0 : i32
    return %c0_i32, %c0_i32_0 : i32, i32
  }
  func.func @transform_2(%arg0: i32) -> (i32, i32) {
    %c0_i32 = arith.constant 0 : i32
    %c0_i32_0 = arith.constant 0 : i32
    %c0_i32_1 = arith.constant 0 : i32
    return %c0_i32, %c0_i32_0 : i32, i32
  }
  func.func @transform_3(%arg0: i32) -> (i32, i32) {
    %c0_i32 = arith.constant 0 : i32
    %c0_i32_0 = arith.constant 0 : i32
    %c0_i32_1 = arith.constant 0 : i32
    return %c0_i32, %c0_i32_0 : i32, i32
  }
  func.func @transform_4(%arg0: i32) -> (i32, i32) {
    %c0_i32 = arith.constant 0 : i32
    %c0_i32_0 = arith.constant 0 : i32
    %c0_i32_1 = arith.constant 0 : i32
    return %c0_i32, %c0_i32_0 : i32, i32
  }
  func.func @transform_5(%arg0: i32) -> (i32, i32) {
    %c0_i32 = arith.constant 0 : i32
    %c0_i32_0 = arith.constant 0 : i32
    %c0_i32_1 = arith.constant 0 : i32
    return %c0_i32, %c0_i32_0 : i32, i32
  }
  func.func @transform_6(%arg0: i32) -> (i32, i32) {
    %c0_i32 = arith.constant 0 : i32
    %c0_i32_0 = arith.constant 0 : i32
    %c0_i32_1 = arith.constant 0 : i32
    return %c0_i32, %c0_i32_0 : i32, i32
  }
  func.func @transform_7(%arg0: i32) -> (i32, i32, i32) {
    %c0_i32 = arith.constant 0 : i32
    %c0_i32_0 = arith.constant 0 : i32
    %c0_i32_1 = arith.constant 0 : i32
    %c0_i32_2 = arith.constant 0 : i32
    return %c0_i32, %c0_i32_0, %c0_i32_1 : i32, i32, i32
  }
  func.func @transform_8(%arg0: i32) -> (i32, i32) {
    %c0_i32 = arith.constant 0 : i32
    %c0_i32_0 = arith.constant 0 : i32
    %c0_i32_1 = arith.constant 0 : i32
    return %c0_i32, %c0_i32_0 : i32, i32
  }
  func.func @transform_9(%arg0: i32) -> (i32, i32) {
    %c0_i32 = arith.constant 0 : i32
    %c0_i32_0 = arith.constant 0 : i32
    %c0_i32_1 = arith.constant 0 : i32
    return %c0_i32, %c0_i32_0 : i32, i32
  }
  func.func @transform_10(%arg0: i32) -> (i32, i32) {
    %c0_i32 = arith.constant 0 : i32
    %c0_i32_0 = arith.constant 0 : i32
    %c0_i32_1 = arith.constant 0 : i32
    return %c0_i32, %c0_i32_0 : i32, i32
  }
  func.func @transform_11(%arg0: i32) -> (i32, i32, i32) {
    %c0_i32 = arith.constant 0 : i32
    %c0_i32_0 = arith.constant 0 : i32
    %c0_i32_1 = arith.constant 0 : i32
    return %arg0, %c0_i32, %c0_i32_0 : i32, i32, i32
  }
}

</mosaic_0001>

<llo_original>
// kernel: santafe_cnn_forward.1
$region0: #{santafe_cnn_forward.1}
  #allocation0 [shape = 'u32[]', space=smem, size = 0x4, offset = 0x4, fixed_abs, tag = 'smem constant byte address 0x4 - core index']
  #allocation1 [shape = 'u32[144,128]{1,0:T(1,128)}', space=vmem, size = 0x12000, scoped, tag = 'internal scratch']
  #allocation2 [shape = 'bf16[18,18,4]{2,1,0:T(8,128)(2,1)}', space=vmem, size = 0x1b000, scoped, tag = 'scratch operand']
  #allocation3 [shape = 'bf16[10,10,32]{2,1,0:T(8,128)(2,1)}', space=vmem, size = 0xa000, scoped, tag = 'scratch operand']
  #allocation4 [shape = 'bf16[6,6,64]{2,1,0:T(8,128)(2,1)}', space=vmem, size = 0x3000, scoped, tag = 'scratch operand']
  #allocation5 [shape = 'bf16[256,128]{1,0:T(16,128)(2,1)}', space=vmem, size = 0x10000, scoped, tag = 'scratch operand']
  #allocation6 [shape = 'bf16[64,384]{1,0:T(16,128)(2,1)}', space=vmem, size = 0xc000, scoped, tag = 'scratch operand']
  #allocation7 [shape = 'bf16[16,640]{1,0:T(16,128)(2,1)}', space=vmem, size = 0x5000, scoped, tag = 'scratch operand']
  #allocation8 [shape = 'f32[256,128]{1,0:T(8,128)}', space=vmem, size = 0x20000, scoped, tag = 'scratch operand']
  %s0 = inlined_call_operand.vmem [shape: bf16[2,16,16,4], index: 0, kind: input, shape index: {}]
  %s1 = inlined_call_operand.hbm [shape: bf16[128,128], index: 1, kind: input, shape index: {}]
  %s2 = inlined_call_operand.vmem [shape: f32[1,128], index: 2, kind: input, shape index: {}]
  %s3 = inlined_call_operand.vmem [shape: bf16[384,128], index: 3, kind: input, shape index: {}]
  %s4 = inlined_call_operand.vmem [shape: f32[1,128], index: 4, kind: input, shape index: {}]
  %s5 = inlined_call_operand.vmem [shape: bf16[640,128], index: 5, kind: input, shape index: {}]
  %s6 = inlined_call_operand.vmem [shape: f32[1,128], index: 6, kind: input, shape index: {}]
  %s7 = inlined_call_operand.hbm [shape: bf16[4,128,512], index: 7, kind: input, shape index: {}]
  %s8 = inlined_call_operand.vmem [shape: f32[1,512], index: 8, kind: input, shape index: {}]
  %s9 = inlined_call_operand.hbm [shape: bf16[512,128], index: 9, kind: input, shape index: {}]
  %s10 = inlined_call_operand.vmem [shape: f32[1,128], index: 10, kind: input, shape index: {}]
  %s11 = inlined_call_operand.hbm [shape: f32[2,1,128], index: 11, kind: output, shape index: {}]
  %s12 = sld [smem:[#allocation0]]
  $region89: #{santafe_cnn_forward.1} parent=0
    _
  %s14 = ssub.s32 1, %s12
  %s15 = scalar_select 0, %s14, %s12
  $region1: #{santafe_cnn_forward.1} parent=0
    #allocation9 [shape = 'u8[32768]{0}', space=vmem, size = 0x8000, scoped, tag = 'input window, operand 1, single buffered']
    #allocation10 [shape = 's32[2]{0}', space=sflag, size = 0x8, scoped, tag = 'scoped memory for santafe_cnn_forward.1']
    #allocation11 [shape = 's32[2]{0}', space=sflag, size = 0x8, scoped, tag = 'scoped memory for santafe_cnn_forward.1']
    #allocation12 [shape = 'u8[524288]{0}', space=vmem, size = 0x80000, scoped, tag = 'input window, operand 7, single buffered']
    #allocation13 [shape = 's32[1]{0}', space=sflag, size = 0x4, scoped, tag = 'scoped memory for santafe_cnn_forward.1']
    #allocation14 [shape = 'u8[131072]{0}', space=vmem, size = 0x20000, scoped, tag = 'input window, operand 9, single buffered']
    #allocation15 [shape = 'u8[1024]{0}', space=vmem, size = 0x400, scoped, tag = 'output window, operand 0']
    %16 = vsyncpa [#allocation10], 0
    %17 = vsyncpa [#allocation13], 0
    %18 = vsyncpa [#allocation11], 0
    %s19 = scalar_lea.sflag [#allocation11], 1
    %20 = vsyncpa %s19, 0
    loop: start=0, step=1, limit=4
    $region2: #{santafe_cnn_forward.1} parent=1 // loop_pre_header
      _
    $region3: #{santafe_cnn_forward.1} parent=1 // loop_header
      %s22 = sphi 0, %s26
      %p23 = scmp.ge.s32.totalorder %s22, 4
      %s32 = sphi 0, %s34
      %s35 = sphi 0, %s32
      %s36 = sphi 0, %s35
      %s52 = sphi 0, %s36
      %s56 = sphi 0, %s56
      %s58 = sphi 0, %s56
      %s59 = sphi 0, %s58
      %s73 = sphi 0, %s59
      %s77 = sphi 0, %s77
      %s79 = sphi 0, %s77
      %s80 = sphi 0, %s79
      %s94 = sphi 0, %s80
      %s98 = sphi 0, %s98
      %s100 = sphi 0, %s98
      %s101 = sphi 0, %s100
      %s115 = sphi 0, %s101
      %s119 = sphi 0, %s119
      %s121 = sphi 0, %s119
      %s122 = sphi 0, %s121
      %s136 = sphi 0, %s122
      %s140 = sphi 0, %s140
      %s142 = sphi 0, %s140
      %s143 = sphi 0, %s142
      %s157 = sphi 0, %s143
      %s161 = sphi 0, %s161
      %s163 = sphi 0, %s161
      %s164 = sphi 0, %s163
      %s178 = sphi 0, %s164
      %s182 = sphi 0, %s182
      %s184 = sphi 0, %s182
      %s185 = sphi 0, %s184
      %s199 = sphi 0, %s185
      %s203 = sphi 0, %s203
      %s205 = sphi 0, %s203
      %s206 = sphi 0, %s205
      %s220 = sphi 0, %s206
      %s224 = sphi 0, %s224
      %s226 = sphi 0, %s224
      %s227 = sphi 0, %s226
      %s241 = sphi 0, %s227
      %s245 = sphi 0, %s245
      %s247 = sphi 0, %s245
      %s248 = sphi 0, %s247
      %s262 = sphi 0, %s248
      %s268 = sphi 0, %s270
      %s271 = sphi 0, %s268
      %s272 = sphi 0, %s271
      %s288 = sphi 0, %s272
    $region4: #{santafe_cnn_forward.1} parent=1 // loop_header_branch
      %25 = sbr.rel (%p23) target = $region8
    $region5: #{santafe_cnn_forward.1} parent=1 // loop_body
      %s27 = ssub.s32 %s22, 1
      %s28 = ssub.s32 %s22, 2
      %s29 = sadd.s32 %s22, 1
      %s30 = ssub.s32 %s22, %s29
      %p31 = scmp.eq.s32.totalorder %s30, 0
      %s33 = sadd.s32 %s32, 1
      %s34 = scalar_select %p31, %s32, %s33
      %p37 = pneg %p31
      %p38 = scmp.eq.s32.totalorder %s22, 1
      %p39 = por %p37, %p38
      %p40 = scmp.ne.s32.totalorder %s32, %s35
      %p41 = scmp.eq.s32.totalorder %s22, 0
      %p42 = por %p40, %p41
      %p43 = scmp.ne.s32.totalorder %s32, %s35
      %p44 = scmp.eq.s32.totalorder %s27, 1
      %p45 = por %p43, %p44
      %p46 = scmp.ne.s32.totalorder %s35, %s36
      %p47 = scmp.eq.s32.totalorder %s27, 0
      %p48 = por %p46, %p47
      %p49 = scmp.ne.s32.totalorder %s35, %s36
      %p50 = scmp.eq.s32.totalorder %s28, 1
      %p51 = por %p49, %p50
      %p53 = scmp.ne.s32.totalorder %s36, %s52
      %p54 = scmp.eq.s32.totalorder %s28, 0
      %p55 = por %p53, %p54
      %s57 = sadd.s32 %s56, 1
      %p60 = scmp.eq.s32.totalorder %s22, 1
      %p61 = scmp.ne.s32.totalorder %s56, %s58
      %p62 = scmp.eq.s32.totalorder %s22, 0
      %p63 = por %p61, %p62
      %p64 = scmp.ne.s32.totalorder %s56, %s58
      %p65 = scmp.eq.s32.totalorder %s27, 1
      %p66 = por %p64, %p65
      %p67 = scmp.ne.s32.totalorder %s58, %s59
      %p68 = scmp.eq.s32.totalorder %s27, 0
      %p69 = por %p67, %p68
      %p70 = scmp.ne.s32.totalorder %s58, %s59
      %p71 = scmp.eq.s32.totalorder %s28, 1
      %p72 = por %p70, %p71
      %p74 = scmp.ne.s32.totalorder %s59, %s73
      %p75 = scmp.eq.s32.totalorder %s28, 0
      %p76 = por %p74, %p75
      %s78 = sadd.s32 %s77, 1
      %p81 = scmp.eq.s32.totalorder %s22, 1
      %p82 = scmp.ne.s32.totalorder %s77, %s79
      %p83 = scmp.eq.s32.totalorder %s22, 0
      %p84 = por %p82, %p83
      %p85 = scmp.ne.s32.totalorder %s77, %s79
      %p86 = scmp.eq.s32.totalorder %s27, 1
      %p87 = por %p85, %p86
      %p88 = scmp.ne.s32.totalorder %s79, %s80
      %p89 = scmp.eq.s32.totalorder %s27, 0
      %p90 = por %p88, %p89
      %p91 = scmp.ne.s32.totalorder %s79, %s80
      %p92 = scmp.eq.s32.totalorder %s28, 1
      %p93 = por %p91, %p92
      %p95 = scmp.ne.s32.totalorder %s80, %s94
      %p96 = scmp.eq.s32.totalorder %s28, 0
      %p97 = por %p95, %p96
      %s99 = sadd.s32 %s98, 1
      %p102 = scmp.eq.s32.totalorder %s22, 1
      %p103 = scmp.ne.s32.totalorder %s98, %s100
      %p104 = scmp.eq.s32.totalorder %s22, 0
      %p105 = por %p103, %p104
      %p106 = scmp.ne.s32.totalorder %s98, %s100
      %p107 = scmp.eq.s32.totalorder %s27, 1
      %p108 = por %p106, %p107
      %p109 = scmp.ne.s32.totalorder %s100, %s101
      %p110 = scmp.eq.s32.totalorder %s27, 0
      %p111 = por %p109, %p110
      %p112 = scmp.ne.s32.totalorder %s100, %s101
      %p113 = scmp.eq.s32.totalorder %s28, 1
      %p114 = por %p112, %p113
      %p116 = scmp.ne.s32.totalorder %s101, %s115
      %p117 = scmp.eq.s32.totalorder %s28, 0
      %p118 = por %p116, %p117
      %s120 = sadd.s32 %s119, 1
      %p123 = scmp.eq.s32.totalorder %s22, 1
      %p124 = scmp.ne.s32.totalorder %s119, %s121
      %p125 = scmp.eq.s32.totalorder %s22, 0
      %p126 = por %p124, %p125
      %p127 = scmp.ne.s32.totalorder %s119, %s121
      %p128 = scmp.eq.s32.totalorder %s27, 1
      %p129 = por %p127, %p128
      %p130 = scmp.ne.s32.totalorder %s121, %s122
      %p131 = scmp.eq.s32.totalorder %s27, 0
      %p132 = por %p130, %p131
      %p133 = scmp.ne.s32.totalorder %s121, %s122
      %p134 = scmp.eq.s32.totalorder %s28, 1
      %p135 = por %p133, %p134
      %p137 = scmp.ne.s32.totalorder %s122, %s136
      %p138 = scmp.eq.s32.totalorder %s28, 0
      %p139 = por %p137, %p138
      %s141 = sadd.s32 %s140, 1
      %p144 = scmp.eq.s32.totalorder %s22, 1
      %p145 = scmp.ne.s32.totalorder %s140, %s142
      %p146 = scmp.eq.s32.totalorder %s22, 0
      %p147 = por %p145, %p146
      %p148 = scmp.ne.s32.totalorder %s140, %s142
      %p149 = scmp.eq.s32.totalorder %s27, 1
      %p150 = por %p148, %p149
      %p151 = scmp.ne.s32.totalorder %s142, %s143
      %p152 = scmp.eq.s32.totalorder %s27, 0
      %p153 = por %p151, %p152
      %p154 = scmp.ne.s32.totalorder %s142, %s143
      %p155 = scmp.eq.s32.totalorder %s28, 1
      %p156 = por %p154, %p155
      %p158 = scmp.ne.s32.totalorder %s143, %s157
      %p159 = scmp.eq.s32.totalorder %s28, 0
      %p160 = por %p158, %p159
      %s162 = sadd.s32 %s161, 1
      %p165 = scmp.eq.s32.totalorder %s22, 1
      %p166 = scmp.ne.s32.totalorder %s161, %s163
      %p167 = scmp.eq.s32.totalorder %s22, 0
      %p168 = por %p166, %p167
      %p169 = scmp.ne.s32.totalorder %s161, %s163
      %p170 = scmp.eq.s32.totalorder %s27, 1
      %p171 = por %p169, %p170
      %p172 = scmp.ne.s32.totalorder %s163, %s164
      %p173 = scmp.eq.s32.totalorder %s27, 0
      %p174 = por %p172, %p173
      %p175 = scmp.ne.s32.totalorder %s163, %s164
      %p176 = scmp.eq.s32.totalorder %s28, 1
      %p177 = por %p175, %p176
      %p179 = scmp.ne.s32.totalorder %s164, %s178
      %p180 = scmp.eq.s32.totalorder %s28, 0
      %p181 = por %p179, %p180
      %s183 = sadd.s32 %s182, 1
      %p186 = scmp.eq.s32.totalorder %s22, 1
      %p187 = scmp.ne.s32.totalorder %s182, %s184
      %p188 = scmp.eq.s32.totalorder %s22, 0
      %p189 = por %p187, %p188
      %p190 = scmp.ne.s32.totalorder %s182, %s184
      %p191 = scmp.eq.s32.totalorder %s27, 1
      %p192 = por %p190, %p191
      %p193 = scmp.ne.s32.totalorder %s184, %s185
      %p194 = scmp.eq.s32.totalorder %s27, 0
      %p195 = por %p193, %p194
      %p196 = scmp.ne.s32.totalorder %s184, %s185
      %p197 = scmp.eq.s32.totalorder %s28, 1
      %p198 = por %p196, %p197
      %p200 = scmp.ne.s32.totalorder %s185, %s199
      %p201 = scmp.eq.s32.totalorder %s28, 0
      %p202 = por %p200, %p201
      %s204 = sadd.s32 %s203, 1
      %p207 = scmp.eq.s32.totalorder %s22, 1
      %p208 = scmp.ne.s32.totalorder %s203, %s205
      %p209 = scmp.eq.s32.totalorder %s22, 0
      %p210 = por %p208, %p209
      %p211 = scmp.ne.s32.totalorder %s203, %s205
      %p212 = scmp.eq.s32.totalorder %s27, 1
      %p213 = por %p211, %p212
      %p214 = scmp.ne.s32.totalorder %s205, %s206
      %p215 = scmp.eq.s32.totalorder %s27, 0
      %p216 = por %p214, %p215
      %p217 = scmp.ne.s32.totalorder %s205, %s206
      %p218 = scmp.eq.s32.totalorder %s28, 1
      %p219 = por %p217, %p218
      %p221 = scmp.ne.s32.totalorder %s206, %s220
      %p222 = scmp.eq.s32.totalorder %s28, 0
      %p223 = por %p221, %p222
      %s225 = sadd.s32 %s224, 1
      %p228 = scmp.eq.s32.totalorder %s22, 1
      %p229 = scmp.ne.s32.totalorder %s224, %s226
      %p230 = scmp.eq.s32.totalorder %s22, 0
      %p231 = por %p229, %p230
      %p232 = scmp.ne.s32.totalorder %s224, %s226
      %p233 = scmp.eq.s32.totalorder %s27, 1
      %p234 = por %p232, %p233
      %p235 = scmp.ne.s32.totalorder %s226, %s227
      %p236 = scmp.eq.s32.totalorder %s27, 0
      %p237 = por %p235, %p236
      %p238 = scmp.ne.s32.totalorder %s226, %s227
      %p239 = scmp.eq.s32.totalorder %s28, 1
      %p240 = por %p238, %p239
      %p242 = scmp.ne.s32.totalorder %s227, %s241
      %p243 = scmp.eq.s32.totalorder %s28, 0
      %p244 = por %p242, %p243
      %s246 = sadd.s32 %s245, 1
      %p249 = scmp.eq.s32.totalorder %s22, 1
      %p250 = scmp.ne.s32.totalorder %s245, %s247
      %p251 = scmp.eq.s32.totalorder %s22, 0
      %p252 = por %p250, %p251
      %p253 = scmp.ne.s32.totalorder %s245, %s247
      %p254 = scmp.eq.s32.totalorder %s27, 1
      %p255 = por %p253, %p254
      %p256 = scmp.ne.s32.totalorder %s247, %s248
      %p257 = scmp.eq.s32.totalorder %s27, 0
      %p258 = por %p256, %p257
      %p259 = scmp.ne.s32.totalorder %s247, %s248
      %p260 = scmp.eq.s32.totalorder %s28, 1
      %p261 = por %p259, %p260
      %p263 = scmp.ne.s32.totalorder %s248, %s262
      %p264 = scmp.eq.s32.totalorder %s28, 0
      %p265 = por %p263, %p264
      %s266 = ssub.s32 %s22, %s29
      %p267 = scmp.eq.s32.totalorder %s266, 0
      %s269 = sadd.s32 %s268, 1
      %s270 = scalar_select %p267, %s268, %s269
      %p273 = pneg %p267
      %p274 = scmp.eq.s32.totalorder %s22, 1
      %p275 = por %p273, %p274
      %p276 = scmp.ne.s32.totalorder %s268, %s271
      %p277 = scmp.eq.s32.totalorder %s22, 0
      %p278 = por %p276, %p277
      %p279 = scmp.ne.s32.totalorder %s268, %s271
      %p280 = scmp.eq.s32.totalorder %s27, 1
      %p281 = por %p279, %p280
      %p282 = scmp.ne.s32.totalorder %s271, %s272
      %p283 = scmp.eq.s32.totalorder %s27, 0
      %p284 = por %p282, %p283
      %p285 = scmp.ne.s32.totalorder %s271, %s272
      %p286 = scmp.eq.s32.totalorder %s28, 1
      %p287 = por %p285, %p286
      %p289 = scmp.ne.s32.totalorder %s272, %s288
      %p290 = scmp.eq.s32.totalorder %s28, 0
      %p291 = por %p289, %p290
      %p292 = scmp.le.s32.totalorder 1, %s22
      %p293 = scmp.lt.s32.totalorder %s22, 3
      %p294 = pnand %p292, %p293
      %p295 = pneg %p294
      // Predicated region
      $region9: #{santafe_cnn_forward.1} parent=5 // pred_check
        _
      $region10: #{santafe_cnn_forward.1} parent=5 // pred_check_branch
        %297 = sbr.rel (%p294) target = $region12
      $region11: #{santafe_cnn_forward.1} parent=5 // pred_region
        %s298 = ssub.s32 %s22, 1
        // Predicated region
        $region13: #{santafe_cnn_forward.1} parent=11 // pred_check
          %p299 = pneg %p69
        $region14: #{santafe_cnn_forward.1} parent=11 // pred_check_branch
          %301 = sbr.rel (%p299) target = $region16
        $region15: #{santafe_cnn_forward.1} parent=11 // pred_region
          %s303 = ssub.s32 1024, 1024
          %304 = vsyncadd [#allocation10], %s303
          %s305 = sshll.u32 [#allocation9], 4
          %s306 = int_to_ptr.vmem [resolvable:$true] %s305
          %311 = dma.hbm_to_vmem [thread:$0]  %s1, 1024, %s306, [#allocation10], 64, 64, 4
        $region16: #{santafe_cnn_forward.1} parent=11 // pred_fallthru
          _
        // Predicated region
        $region17: #{santafe_cnn_forward.1} parent=11 // pred_check
          %p312 = pneg %p90
        $region18: #{santafe_cnn_forward.1} parent=11 // pred_check_branch
          %314 = sbr.rel (%p312) target = $region20
        $region19: #{santafe_cnn_forward.1} parent=11 // pred_region
          _
        $region20: #{santafe_cnn_forward.1} parent=11 // pred_fallthru
          _
        // Predicated region
        $region21: #{santafe_cnn_forward.1} parent=11 // pred_check
          %p315 = pneg %p111
        $region22: #{santafe_cnn_forward.1} parent=11 // pred_check_branch
          %317 = sbr.rel (%p315) target = $region24
        $region23: #{santafe_cnn_forward.1} parent=11 // pred_region
          _
        $region24: #{santafe_cnn_forward.1} parent=11 // pred_fallthru
          _
        // Predicated region
        $region25: #{santafe_cnn_forward.1} parent=11 // pred_check
          %p318 = pneg %p132
        $region26: #{santafe_cnn_forward.1} parent=11 // pred_check_branch
          %320 = sbr.rel (%p318) target = $region28
        $region27: #{santafe_cnn_forward.1} parent=11 // pred_region
          _
        $region28: #{santafe_cnn_forward.1} parent=11 // pred_fallthru
          _
        // Predicated region
        $region29: #{santafe_cnn_forward.1} parent=11 // pred_check
          %p321 = pneg %p153
        $region30: #{santafe_cnn_forward.1} parent=11 // pred_check_branch
          %323 = sbr.rel (%p321) target = $region32
        $region31: #{santafe_cnn_forward.1} parent=11 // pred_region
          _
        $region32: #{santafe_cnn_forward.1} parent=11 // pred_fallthru
          _
        // Predicated region
        $region33: #{santafe_cnn_forward.1} parent=11 // pred_check
          %p324 = pneg %p174
        $region34: #{santafe_cnn_forward.1} parent=11 // pred_check_branch
          %326 = sbr.rel (%p324) target = $region36
        $region35: #{santafe_cnn_forward.1} parent=11 // pred_region
          _
        $region36: #{santafe_cnn_forward.1} parent=11 // pred_fallthru
          _
        // Predicated region
        $region37: #{santafe_cnn_forward.1} parent=11 // pred_check
          %p327 = pneg %p195
        $region38: #{santafe_cnn_forward.1} parent=11 // pred_check_branch
          %329 = sbr.rel (%p327) target = $region40
        $region39: #{santafe_cnn_forward.1} parent=11 // pred_region
          %s331 = ssub.s32 16384, 16384
          %332 = vsyncadd [#allocation13], %s331
          %s333 = sshll.u32 [#allocation12], 4
          %s334 = int_to_ptr.vmem [resolvable:$true] %s333
          %339 = dma.hbm_to_vmem [thread:$0]  %s7, 16384, %s334, [#allocation13], 256, 256, 16
        $region40: #{santafe_cnn_forward.1} parent=11 // pred_fallthru
          _
        // Predicated region
        $region41: #{santafe_cnn_forward.1} parent=11 // pred_check
          %p340 = pneg %p216
        $region42: #{santafe_cnn_forward.1} parent=11 // pred_check_branch
          %342 = sbr.rel (%p340) target = $region44
        $region43: #{santafe_cnn_forward.1} parent=11 // pred_region
          _
        $region44: #{santafe_cnn_forward.1} parent=11 // pred_fallthru
          _
        // Predicated region
        $region45: #{santafe_cnn_forward.1} parent=11 // pred_check
          %p343 = pneg %p237
        $region46: #{santafe_cnn_forward.1} parent=11 // pred_check_branch
          %345 = sbr.rel (%p343) target = $region48
        $region47: #{santafe_cnn_forward.1} parent=11 // pred_region
          %s347 = ssub.s32 4096, 4096
          %348 = vsyncadd [#allocation13], %s347
          %s349 = sshll.u32 [#allocation14], 4
          %s350 = int_to_ptr.vmem [resolvable:$true] %s349
          %355 = dma.hbm_to_vmem [thread:$0]  %s9, 4096, %s350, [#allocation13], 64, 64, 4
        $region48: #{santafe_cnn_forward.1} parent=11 // pred_fallthru
          _
        // Predicated region
        $region49: #{santafe_cnn_forward.1} parent=11 // pred_check
          %p356 = pneg %p258
        $region50: #{santafe_cnn_forward.1} parent=11 // pred_check_branch
          %358 = sbr.rel (%p356) target = $region52
        $region51: #{santafe_cnn_forward.1} parent=11 // pred_region
          _
        $region52: #{santafe_cnn_forward.1} parent=11 // pred_fallthru
          _
      $region12: #{santafe_cnn_forward.1} parent=5 // pred_fallthru
        _
      %p359 = scmp.lt.s32.totalorder %s22, 2
      // Predicated region
      $region53: #{santafe_cnn_forward.1} parent=5 // pred_check
        %p360 = pneg %p359
      $region54: #{santafe_cnn_forward.1} parent=5 // pred_check_branch
        %362 = sbr.rel (%p360) target = $region56
      $region55: #{santafe_cnn_forward.1} parent=5 // pred_region
        // Predicated region
        $region57: #{santafe_cnn_forward.1} parent=55 // pred_check
          %p363 = pneg %p42
        $region58: #{santafe_cnn_forward.1} parent=55 // pred_check_branch
          %365 = sbr.rel (%p363) target = $region60
        $region59: #{santafe_cnn_forward.1} parent=55 // pred_region
          %p366 = scmp.lt.s32.totalorder %s22, 1
          %s367 = scalar_select %p366, %s22, 1
          %s368 = smul.addr %s367, 32
          %s369 = smul.addr %s368, 4
          %s370 = scalar_lea.vmem %s0, %s369
        $region60: #{santafe_cnn_forward.1} parent=55 // pred_fallthru
          _
      $region56: #{santafe_cnn_forward.1} parent=5 // pred_fallthru
        _
      %p371 = scmp.le.s32.totalorder 1, %s22
      %p372 = scmp.lt.s32.totalorder %s22, 3
      %p373 = pnand %p371, %p372
      %p374 = pneg %p373
      // Predicated region
      $region61: #{santafe_cnn_forward.1} parent=5 // pred_check
        _
      $region62: #{santafe_cnn_forward.1} parent=5 // pred_check_branch
        %376 = sbr.rel (%p373) target = $region64
      $region63: #{santafe_cnn_forward.1} parent=5 // pred_region
        %s377 = ssub.s32 %s22, 1
        // Predicated region
        $region65: #{santafe_cnn_forward.1} parent=63 // pred_check
          %p378 = pneg %p69
        $region66: #{santafe_cnn_forward.1} parent=63 // pred_check_branch
          %380 = sbr.rel (%p378) target = $region68
        $region67: #{santafe_cnn_forward.1} parent=63 // pred_region
          %381 = dma.done [#allocation10], 1024
        $region68: #{santafe_cnn_forward.1} parent=63 // pred_fallthru
          _
        // Predicated region
        $region69: #{santafe_cnn_forward.1} parent=63 // pred_check
          %p382 = pneg %p195
        $region70: #{santafe_cnn_forward.1} parent=63 // pred_check_branch
          %384 = sbr.rel (%p382) target = $region72
        $region71: #{santafe_cnn_forward.1} parent=63 // pred_region
          %385 = dma.done [#allocation13], 16384
        $region72: #{santafe_cnn_forward.1} parent=63 // pred_fallthru
          _
        // Predicated region
        $region73: #{santafe_cnn_forward.1} parent=63 // pred_check
          %p386 = pneg %p237
        $region74: #{santafe_cnn_forward.1} parent=63 // pred_check_branch
          %388 = sbr.rel (%p386) target = $region76
        $region75: #{santafe_cnn_forward.1} parent=63 // pred_region
          %389 = dma.done [#allocation13], 4096
        $region76: #{santafe_cnn_forward.1} parent=63 // pred_fallthru
          _
        %p390 = scmp.lt.s32.totalorder %s27, 1
        %s391 = scalar_select %p390, %s27, 1
        %s392 = smul.addr %s391, 32
        %s393 = smul.addr %s392, 4
        %s394 = scalar_lea.vmem %s0, %s393
        %p395 = pneg %p48
        %p396 = pneg %p45
        %p397 = pneg %p69
        %p398 = pneg %p66
        %p399 = pneg %p90
        %p400 = pneg %p87
        %p401 = pneg %p111
        %p402 = pneg %p108
        %p403 = pneg %p132
        %p404 = pneg %p129
        %p405 = pneg %p153
        %p406 = pneg %p150
        %p407 = pneg %p174
        %p408 = pneg %p171
        %p409 = pneg %p195
        %p410 = pneg %p192
        %p411 = pneg %p216
        %p412 = pneg %p213
        %p413 = pneg %p237
        %p414 = pneg %p234
        %p415 = pneg %p258
        %p416 = pneg %p255
        %p417 = pneg %p284
        %p418 = pneg %p281
        %s419 = sand.u32 %s271, 1
        %s420 = scalar_lea.sflag [#allocation11], %s419
        %s421 = sand.u32 %s271, 1
        %s422 = scalar_lea.vmem [#allocation15], %s421
        %p423 = scmp.lt.s32.totalorder %s27, 1
        %s424 = scalar_select %p423, %s27, 1
        %s425 = smul.addr %s424, 32
        %s426 = smul.addr %s425, 4
        %s427 = scalar_lea.vmem %s0, %s426
        %vm429 = vcmask 27648
        %430 = vst.msk [vmem:[#allocation2] sm:$0xf] %vm429, 0
        %431 = vst.msk [vmem:[#allocation2 + $0x4] sm:$0xf] %vm429, 0
        %vm432 = vcmask 24576
        %433 = vst.msk [vmem:[#allocation2 + $0x8] sm:$0x1] %vm432, 0
        %s434 = scalar_lea.vmem [#allocation2], 204
        %435 = vst.msk [vmem:[%s434] sm:$0xf] %vm429, 0
        %436 = vst.msk [vmem:[%s434 + $0x4] sm:$0xf] %vm429, 0
        %437 = vst.msk [vmem:[%s434 + $0x8] sm:$0x1] %vm432, 0
        %vm438 = vcmask 24576
        %vm439 = vsmask.f32 256
        %vm440 = vmand %vm438, %vm439
        %v441 = vld [vmem:[#allocation2] sm:$0x1]
        %v442 = vsel %vm440, 0, %v441
        %443 = vst [vmem:[#allocation2] sm:$0x1] %v442
        %v444 = vld [vmem:[#allocation2 + $0xc] sm:$0x1]
        %v445 = vsel %vm440, 0, %v444
        %446 = vst [vmem:[#allocation2 + $0xc] sm:$0x1] %v445
        %v447 = vld [vmem:[#allocation2 + $0x18] sm:$0x1]
        %v448 = vsel %vm440, 0, %v447
        %449 = vst [vmem:[#allocation2 + $0x18] sm:$0x1] %v448
        %v450 = vld [vmem:[#allocation2 + $0x24] sm:$0x1]
        %v451 = vsel %vm440, 0, %v450
        %452 = vst [vmem:[#allocation2 + $0x24] sm:$0x1] %v451
        %v453 = vld [vmem:[#allocation2 + $0x30] sm:$0x1]
        %v454 = vsel %vm440, 0, %v453
        %455 = vst [vmem:[#allocation2 + $0x30] sm:$0x1] %v454
        %v456 = vld [vmem:[#allocation2 + $0x3c] sm:$0x1]
        %v457 = vsel %vm440, 0, %v456
        %458 = vst [vmem:[#allocation2 + $0x3c] sm:$0x1] %v457
        %v459 = vld [vmem:[#allocation2 + $0x48] sm:$0x1]
        %v460 = vsel %vm440, 0, %v459
        %461 = vst [vmem:[#allocation2 + $0x48] sm:$0x1] %v460
        %v462 = vld [vmem:[#allocation2 + $0x54] sm:$0x1]
        %v463 = vsel %vm440, 0, %v462
        %464 = vst [vmem:[#allocation2 + $0x54] sm:$0x1] %v463
        %v465 = vld [vmem:[#allocation2 + $0x60] sm:$0x1]
        %v466 = vsel %vm440, 0, %v465
        %467 = vst [vmem:[#allocation2 + $0x60] sm:$0x1] %v466
        %v468 = vld [vmem:[#allocation2 + $0x6c] sm:$0x1]
        %v469 = vsel %vm440, 0, %v468
        %470 = vst [vmem:[#allocation2 + $0x6c] sm:$0x1] %v469
        %v471 = vld [vmem:[#allocation2 + $0x78] sm:$0x1]
        %v472 = vsel %vm440, 0, %v471
        %473 = vst [vmem:[#allocation2 + $0x78] sm:$0x1] %v472
        %v474 = vld [vmem:[#allocation2 + $0x84] sm:$0x1]
        %v475 = vsel %vm440, 0, %v474
        %476 = vst [vmem:[#allocation2 + $0x84] sm:$0x1] %v475
        %v477 = vld [vmem:[#allocation2 + $0x90] sm:$0x1]
        %v478 = vsel %vm440, 0, %v477
        %479 = vst [vmem:[#allocation2 + $0x90] sm:$0x1] %v478
        %v480 = vld [vmem:[#allocation2 + $0x9c] sm:$0x1]
        %v481 = vsel %vm440, 0, %v480
        %482 = vst [vmem:[#allocation2 + $0x9c] sm:$0x1] %v481
        %v483 = vld [vmem:[#allocation2 + $0xa8] sm:$0x1]
        %v484 = vsel %vm440, 0, %v483
        %485 = vst [vmem:[#allocation2 + $0xa8] sm:$0x1] %v484
        %v486 = vld [vmem:[#allocation2 + $0xb4] sm:$0x1]
        %v487 = vsel %vm440, 0, %v486
        %488 = vst [vmem:[#allocation2 + $0xb4] sm:$0x1] %v487
        %v489 = vld [vmem:[#allocation2 + $0xc0] sm:$0x1]
        %v490 = vsel %vm440, 0, %v489
        %491 = vst [vmem:[#allocation2 + $0xc0] sm:$0x1] %v490
        %v492 = vld [vmem:[#allocation2 + $0xcc] sm:$0x1]
        %v493 = vsel %vm440, 0, %v492
        %494 = vst [vmem:[#allocation2 + $0xcc] sm:$0x1] %v493
        %vm495 = vsmask.f32 7938
        %vm496 = vmand %vm438, %vm495
        %v497 = vld [vmem:[#allocation2 + $0x8] sm:$0x1]
        %v498 = vsel %vm496, 0, %v497
        %499 = vst [vmem:[#allocation2 + $0x8] sm:$0x1] %v498
        %v500 = vld [vmem:[#allocation2 + $0x14] sm:$0x1]
        %v501 = vsel %vm496, 0, %v500
        %502 = vst [vmem:[#allocation2 + $0x14] sm:$0x1] %v501
        %v503 = vld [vmem:[#allocation2 + $0x20] sm:$0x1]
        %v504 = vsel %vm496, 0, %v503
        %505 = vst [vmem:[#allocation2 + $0x20] sm:$0x1] %v504
        %v506 = vld [vmem:[#allocation2 + $0x2c] sm:$0x1]
        %v507 = vsel %vm496, 0, %v506
        %508 = vst [vmem:[#allocation2 + $0x2c] sm:$0x1] %v507
        %v509 = vld [vmem:[#allocation2 + $0x38] sm:$0x1]
        %v510 = vsel %vm496, 0, %v509
        %511 = vst [vmem:[#allocation2 + $0x38] sm:$0x1] %v510
        %v512 = vld [vmem:[#allocation2 + $0x44] sm:$0x1]
        %v513 = vsel %vm496, 0, %v512
        %514 = vst [vmem:[#allocation2 + $0x44] sm:$0x1] %v513
        %v515 = vld [vmem:[#allocation2 + $0x50] sm:$0x1]
        %v516 = vsel %vm496, 0, %v515
        %517 = vst [vmem:[#allocation2 + $0x50] sm:$0x1] %v516
        %v518 = vld [vmem:[#allocation2 + $0x5c] sm:$0x1]
        %v519 = vsel %vm496, 0, %v518
        %520 = vst [vmem:[#allocation2 + $0x5c] sm:$0x1] %v519
        %v521 = vld [vmem:[#allocation2 + $0x68] sm:$0x1]
        %v522 = vsel %vm496, 0, %v521
        %523 = vst [vmem:[#allocation2 + $0x68] sm:$0x1] %v522
        %v524 = vld [vmem:[#allocation2 + $0x74] sm:$0x1]
        %v525 = vsel %vm496, 0, %v524
        %526 = vst [vmem:[#allocation2 + $0x74] sm:$0x1] %v525
        %v527 = vld [vmem:[#allocation2 + $0x80] sm:$0x1]
        %v528 = vsel %vm496, 0, %v527
        %529 = vst [vmem:[#allocation2 + $0x80] sm:$0x1] %v528
        %v530 = vld [vmem:[#allocation2 + $0x8c] sm:$0x1]
        %v531 = vsel %vm496, 0, %v530
        %532 = vst [vmem:[#allocation2 + $0x8c] sm:$0x1] %v531
        %v533 = vld [vmem:[#allocation2 + $0x98] sm:$0x1]
        %v534 = vsel %vm496, 0, %v533
        %535 = vst [vmem:[#allocation2 + $0x98] sm:$0x1] %v534
        %v536 = vld [vmem:[#allocation2 + $0xa4] sm:$0x1]
        %v537 = vsel %vm496, 0, %v536
        %538 = vst [vmem:[#allocation2 + $0xa4] sm:$0x1] %v537
        %v539 = vld [vmem:[#allocation2 + $0xb0] sm:$0x1]
        %v540 = vsel %vm496, 0, %v539
        %541 = vst [vmem:[#allocation2 + $0xb0] sm:$0x1] %v540
        %v542 = vld [vmem:[#allocation2 + $0xbc] sm:$0x1]
        %v543 = vsel %vm496, 0, %v542
        %544 = vst [vmem:[#allocation2 + $0xbc] sm:$0x1] %v543
        %v545 = vld [vmem:[#allocation2 + $0xc8] sm:$0x1]
        %v546 = vsel %vm496, 0, %v545
        %547 = vst [vmem:[#allocation2 + $0xc8] sm:$0x1] %v546
        %v548 = vld [vmem:[#allocation2 + $0xd4] sm:$0x1]
        %v549 = vsel %vm496, 0, %v548
        %550 = vst [vmem:[#allocation2 + $0xd4] sm:$0x1] %v549
        %vm551 = vcmask 257024
        %552 = vst.msk [vmem:[#allocation3] sm:$0xf] %vm551, 0
        %vm553 = vcmask 253952
        %554 = vst.msk [vmem:[#allocation3 + $0x4] sm:$0x1] %vm553, 0
        %s555 = scalar_lea.vmem [#allocation3], 72
        %556 = vst.msk [vmem:[%s555] sm:$0xf] %vm551, 0
        %557 = vst.msk [vmem:[%s555 + $0x4] sm:$0x1] %vm553, 0
        %vm558 = vcmask 253952
        %vm559 = vmand %vm558, %vm439
        %v560 = vld [vmem:[#allocation3] sm:$0x1]
        %v561 = vsel %vm559, 0, %v560
        %562 = vst [vmem:[#allocation3] sm:$0x1] %v561
        %v563 = vld [vmem:[#allocation3 + $0x8] sm:$0x1]
        %v564 = vsel %vm559, 0, %v563
        %565 = vst [vmem:[#allocation3 + $0x8] sm:$0x1] %v564
        %v566 = vld [vmem:[#allocation3 + $0x10] sm:$0x1]
        %v567 = vsel %vm559, 0, %v566
        %568 = vst [vmem:[#allocation3 + $0x10] sm:$0x1] %v567
        %v569 = vld [vmem:[#allocation3 + $0x18] sm:$0x1]
        %v570 = vsel %vm559, 0, %v569
        %571 = vst [vmem:[#allocation3 + $0x18] sm:$0x1] %v570
        %v572 = vld [vmem:[#allocation3 + $0x20] sm:$0x1]
        %v573 = vsel %vm559, 0, %v572
        %574 = vst [vmem:[#allocation3 + $0x20] sm:$0x1] %v573
        %v575 = vld [vmem:[#allocation3 + $0x28] sm:$0x1]
        %v576 = vsel %vm559, 0, %v575
        %577 = vst [vmem:[#allocation3 + $0x28] sm:$0x1] %v576
        %v578 = vld [vmem:[#allocation3 + $0x30] sm:$0x1]
        %v579 = vsel %vm559, 0, %v578
        %580 = vst [vmem:[#allocation3 + $0x30] sm:$0x1] %v579
        %v581 = vld [vmem:[#allocation3 + $0x38] sm:$0x1]
        %v582 = vsel %vm559, 0, %v581
        %583 = vst [vmem:[#allocation3 + $0x38] sm:$0x1] %v582
        %v584 = vld [vmem:[#allocation3 + $0x40] sm:$0x1]
        %v585 = vsel %vm559, 0, %v584
        %586 = vst [vmem:[#allocation3 + $0x40] sm:$0x1] %v585
        %v587 = vld [vmem:[#allocation3 + $0x48] sm:$0x1]
        %v588 = vsel %vm559, 0, %v587
        %589 = vst [vmem:[#allocation3 + $0x48] sm:$0x1] %v588
        %vm590 = vmand %vm558, %vm495
        %v591 = vld [vmem:[#allocation3 + $0x4] sm:$0x1]
        %v592 = vsel %vm590, 0, %v591
        %593 = vst [vmem:[#allocation3 + $0x4] sm:$0x1] %v592
        %v594 = vld [vmem:[#allocation3 + $0xc] sm:$0x1]
        %v595 = vsel %vm590, 0, %v594
        %596 = vst [vmem:[#allocation3 + $0xc] sm:$0x1] %v595
        %v597 = vld [vmem:[#allocation3 + $0x14] sm:$0x1]
        %v598 = vsel %vm590, 0, %v597
        %599 = vst [vmem:[#allocation3 + $0x14] sm:$0x1] %v598
        %v600 = vld [vmem:[#allocation3 + $0x1c] sm:$0x1]
        %v601 = vsel %vm590, 0, %v600
        %602 = vst [vmem:[#allocation3 + $0x1c] sm:$0x1] %v601
        %v603 = vld [vmem:[#allocation3 + $0x24] sm:$0x1]
        %v604 = vsel %vm590, 0, %v603
        %605 = vst [vmem:[#allocation3 + $0x24] sm:$0x1] %v604
        %v606 = vld [vmem:[#allocation3 + $0x2c] sm:$0x1]
        %v607 = vsel %vm590, 0, %v606
        %608 = vst [vmem:[#allocation3 + $0x2c] sm:$0x1] %v607
        %v609 = vld [vmem:[#allocation3 + $0x34] sm:$0x1]
        %v610 = vsel %vm590, 0, %v609
        %611 = vst [vmem:[#allocation3 + $0x34] sm:$0x1] %v610
        %v612 = vld [vmem:[#allocation3 + $0x3c] sm:$0x1]
        %v613 = vsel %vm590, 0, %v612
        %614 = vst [vmem:[#allocation3 + $0x3c] sm:$0x1] %v613
        %v615 = vld [vmem:[#allocation3 + $0x44] sm:$0x1]
        %v616 = vsel %vm590, 0, %v615
        %617 = vst [vmem:[#allocation3 + $0x44] sm:$0x1] %v616
        %v618 = vld [vmem:[#allocation3 + $0x4c] sm:$0x1]
        %v619 = vsel %vm590, 0, %v618
        %620 = vst [vmem:[#allocation3 + $0x4c] sm:$0x1] %v619
        %vm621 = vcmask 518144
        %622 = vst.msk [vmem:[#allocation4] sm:$0x7] %vm621, 0
        %s623 = scalar_lea.vmem [#allocation4], 20
        %624 = vst.msk [vmem:[%s623] sm:$0x7] %vm621, 0
        %vm625 = vcmask 516096
        %vm626 = vmand %vm625, %vm439
        %v627 = vld [vmem:[#allocation4] sm:$0x1]
        %v628 = vsel %vm626, 0, %v627
        %629 = vst [vmem:[#allocation4] sm:$0x1] %v628
        %v630 = vld [vmem:[#allocation4 + $0x4] sm:$0x1]
        %v631 = vsel %vm626, 0, %v630
        %632 = vst [vmem:[#allocation4 + $0x4] sm:$0x1] %v631
        %v633 = vld [vmem:[#allocation4 + $0x8] sm:$0x1]
        %v634 = vsel %vm626, 0, %v633
        %635 = vst [vmem:[#allocation4 + $0x8] sm:$0x1] %v634
        %v636 = vld [vmem:[#allocation4 + $0xc] sm:$0x1]
        %v637 = vsel %vm626, 0, %v636
        %638 = vst [vmem:[#allocation4 + $0xc] sm:$0x1] %v637
        %v639 = vld [vmem:[#allocation4 + $0x10] sm:$0x1]
        %v640 = vsel %vm626, 0, %v639
        %641 = vst [vmem:[#allocation4 + $0x10] sm:$0x1] %v640
        %v642 = vld [vmem:[#allocation4 + $0x14] sm:$0x1]
        %v643 = vsel %vm626, 0, %v642
        %644 = vst [vmem:[#allocation4 + $0x14] sm:$0x1] %v643
        %vm645 = vcmask 518146
        %vm646 = vsmask.f32 7946
        %vm647 = vmand %vm645, %vm646
        %v648 = vld [vmem:[#allocation4] sm:$0x4]
        %v649 = vsel %vm647, 0, %v648
        %650 = vst [vmem:[#allocation4] sm:$0x4] %v649
        %v651 = vld [vmem:[#allocation4 + $0x4] sm:$0x4]
        %v652 = vsel %vm647, 0, %v651
        %653 = vst [vmem:[#allocation4 + $0x4] sm:$0x4] %v652
        %v654 = vld [vmem:[#allocation4 + $0x8] sm:$0x4]
        %v655 = vsel %vm647, 0, %v654
        %656 = vst [vmem:[#allocation4 + $0x8] sm:$0x4] %v655
        %v657 = vld [vmem:[#allocation4 + $0xc] sm:$0x4]
        %v658 = vsel %vm647, 0, %v657
        %659 = vst [vmem:[#allocation4 + $0xc] sm:$0x4] %v658
        %v660 = vld [vmem:[#allocation4 + $0x10] sm:$0x4]
        %v661 = vsel %vm647, 0, %v660
        %662 = vst [vmem:[#allocation4 + $0x10] sm:$0x4] %v661
        %v663 = vld [vmem:[#allocation4 + $0x14] sm:$0x4]
        %v664 = vsel %vm647, 0, %v663
        %665 = vst [vmem:[#allocation4 + $0x14] sm:$0x4] %v664
        %v666 = vld [vmem:[%s427] sm:$0xf]
        %v667 = vld [vmem:[%s427 + $0x4] sm:$0xf]
        %v668 = vld [vmem:[%s427 + $0x8] sm:$0xf]
        %v669 = vld [vmem:[%s427 + $0xc] sm:$0xf]
        %v670 = vld [vmem:[%s427 + $0x10] sm:$0xf]
        %v671 = vld [vmem:[%s427 + $0x14] sm:$0xf]
        %v672 = vld [vmem:[%s427 + $0x18] sm:$0xf]
        %v673 = vld [vmem:[%s427 + $0x1c] sm:$0xf]
        %v674 = vld [vmem:[%s427 + $0x20] sm:$0xf]
        %v675 = vld [vmem:[%s427 + $0x24] sm:$0xf]
        %v676 = vld [vmem:[%s427 + $0x28] sm:$0xf]
        %v677 = vld [vmem:[%s427 + $0x2c] sm:$0xf]
        %v678 = vld [vmem:[%s427 + $0x30] sm:$0xf]
        %v679 = vld [vmem:[%s427 + $0x34] sm:$0xf]
        %v680 = vld [vmem:[%s427 + $0x38] sm:$0xf]
        %v681 = vld [vmem:[%s427 + $0x3c] sm:$0xf]
        %v682 = vld [vmem:[%s427 + $0x40] sm:$0xf]
        %v683 = vld [vmem:[%s427 + $0x44] sm:$0xf]
        %v684 = vld [vmem:[%s427 + $0x48] sm:$0xf]
        %v685 = vld [vmem:[%s427 + $0x4c] sm:$0xf]
        %v686 = vld [vmem:[%s427 + $0x50] sm:$0xf]
        %v687 = vld [vmem:[%s427 + $0x54] sm:$0xf]
        %v688 = vld [vmem:[%s427 + $0x58] sm:$0xf]
        %v689 = vld [vmem:[%s427 + $0x5c] sm:$0xf]
        %v690 = vld [vmem:[%s427 + $0x60] sm:$0xf]
        %v691 = vld [vmem:[%s427 + $0x64] sm:$0xf]
        %v692 = vld [vmem:[%s427 + $0x68] sm:$0xf]
        %v693 = vld [vmem:[%s427 + $0x6c] sm:$0xf]
        %v694 = vld [vmem:[%s427 + $0x70] sm:$0xf]
        %v695 = vld [vmem:[%s427 + $0x74] sm:$0xf]
        %v696 = vld [vmem:[%s427 + $0x78] sm:$0xf]
        %v697 = vld [vmem:[%s427 + $0x7c] sm:$0xf]
        %vm698 = vsmask.f32 4368
        %vm699 = vmor %vm439, %vm698
        %v701 = vshrl.u32 %v666, 16
        %v703 = vrot.slane %v701, 7
        %v704 = vshll.u32 %v666, 16
        %v706 = vor.u32 %v703, %v704
        %v707 = vrot.slane %v703, 4
        %v709 = vshrl.u32 %v667, 16
        %v711 = vrot.slane %v709, 7
        %v712 = vshll.u32 %v667, 16
        %v714 = vor.u32 %v711, %v712
        %v715 = vsel %vm699, %v707, %v714
        %v716 = vrot.slane %v711, 4
        %v718 = vshrl.u32 %v668, 16
        %v720 = vrot.slane %v718, 7
        %v721 = vshll.u32 %v668, 16
        %v723 = vor.u32 %v720, %v721
        %v724 = vrot.slane %v720, 4
        %v726 = vshrl.u32 %v669, 16
        %v728 = vrot.slane %v726, 7
        %v729 = vshll.u32 %v669, 16
        %v731 = vor.u32 %v728, %v729
        %v732 = vsel %vm699, %v724, %v731
        %v733 = vrot.slane %v728, 4
        %v735 = vshrl.u32 %v670, 16
        %v737 = vrot.slane %v735, 7
        %v738 = vshll.u32 %v670, 16
        %v740 = vor.u32 %v737, %v738
        %v741 = vrot.slane %v737, 4
        %v743 = vshrl.u32 %v671, 16
        %v745 = vrot.slane %v743, 7
        %v746 = vshll.u32 %v671, 16
        %v748 = vor.u32 %v745, %v746
        %v749 = vsel %vm699, %v741, %v748
        %v750 = vrot.slane %v745, 4
        %v752 = vshrl.u32 %v672, 16
        %v754 = vrot.slane %v752, 7
        %v755 = vshll.u32 %v672, 16
        %v757 = vor.u32 %v754, %v755
        %v758 = vrot.slane %v754, 4
        %v760 = vshrl.u32 %v673, 16
        %v762 = vrot.slane %v760, 7
        %v763 = vshll.u32 %v673, 16
        %v765 = vor.u32 %v762, %v763
        %v766 = vsel %vm699, %v758, %v765
        %v767 = vrot.slane %v762, 4
        %v769 = vshrl.u32 %v674, 16
        %v771 = vrot.slane %v769, 7
        %v772 = vshll.u32 %v674, 16
        %v774 = vor.u32 %v771, %v772
        %v775 = vrot.slane %v771, 4
        %v777 = vshrl.u32 %v675, 16
        %v779 = vrot.slane %v777, 7
        %v780 = vshll.u32 %v675, 16
        %v782 = vor.u32 %v779, %v780
        %v783 = vsel %vm699, %v775, %v782
        %v784 = vrot.slane %v779, 4
        %v786 = vshrl.u32 %v676, 16
        %v788 = vrot.slane %v786, 7
        %v789 = vshll.u32 %v676, 16
        %v791 = vor.u32 %v788, %v789
        %v792 = vrot.slane %v788, 4
        %v794 = vshrl.u32 %v677, 16
        %v796 = vrot.slane %v794, 7
        %v797 = vshll.u32 %v677, 16
        %v799 = vor.u32 %v796, %v797
        %v800 = vsel %vm699, %v792, %v799
        %v801 = vrot.slane %v796, 4
        %v803 = vshrl.u32 %v678, 16
        %v805 = vrot.slane %v803, 7
        %v806 = vshll.u32 %v678, 16
        %v808 = vor.u32 %v805, %v806
        %v809 = vrot.slane %v805, 4
        %v811 = vshrl.u32 %v679, 16
        %v813 = vrot.slane %v811, 7
        %v814 = vshll.u32 %v679, 16
        %v816 = vor.u32 %v813, %v814
        %v817 = vsel %vm699, %v809, %v816
        %v818 = vrot.slane %v813, 4
        %v820 = vshrl.u32 %v680, 16
        %v822 = vrot.slane %v820, 7
        %v823 = vshll.u32 %v680, 16
        %v825 = vor.u32 %v822, %v823
        %v826 = vrot.slane %v822, 4
        %v828 = vshrl.u32 %v681, 16
        %v830 = vrot.slane %v828, 7
        %v831 = vshll.u32 %v681, 16
        %v833 = vor.u32 %v830, %v831
        %v834 = vsel %vm699, %v826, %v833
        %v835 = vrot.slane %v830, 4
        %v837 = vshrl.u32 %v682, 16
        %v839 = vrot.slane %v837, 7
        %v840 = vshll.u32 %v682, 16
        %v842 = vor.u32 %v839, %v840
        %v843 = vrot.slane %v839, 4
        %v845 = vshrl.u32 %v683, 16
        %v847 = vrot.slane %v845, 7
        %v848 = vshll.u32 %v683, 16
        %v850 = vor.u32 %v847, %v848
        %v851 = vsel %vm699, %v843, %v850
        %v852 = vrot.slane %v847, 4
        %v854 = vshrl.u32 %v684, 16
        %v856 = vrot.slane %v854, 7
        %v857 = vshll.u32 %v684, 16
        %v859 = vor.u32 %v856, %v857
        %v860 = vrot.slane %v856, 4
        %v862 = vshrl.u32 %v685, 16
        %v864 = vrot.slane %v862, 7
        %v865 = vshll.u32 %v685, 16
        %v867 = vor.u32 %v864, %v865
        %v868 = vsel %vm699, %v860, %v867
        %v869 = vrot.slane %v864, 4
        %v871 = vshrl.u32 %v686, 16
        %v873 = vrot.slane %v871, 7
        %v874 = vshll.u32 %v686, 16
        %v876 = vor.u32 %v873, %v874
        %v877 = vrot.slane %v873, 4
        %v879 = vshrl.u32 %v687, 16
        %v881 = vrot.slane %v879, 7
        %v882 = vshll.u32 %v687, 16
        %v884 = vor.u32 %v881, %v882
        %v885 = vsel %vm699, %v877, %v884
        %v886 = vrot.slane %v881, 4
        %v888 = vshrl.u32 %v688, 16
        %v890 = vrot.slane %v888, 7
        %v891 = vshll.u32 %v688, 16
        %v893 = vor.u32 %v890, %v891
        %v894 = vrot.slane %v890, 4
        %v896 = vshrl.u32 %v689, 16
        %v898 = vrot.slane %v896, 7
        %v899 = vshll.u32 %v689, 16
        %v901 = vor.u32 %v898, %v899
        %v902 = vsel %vm699, %v894, %v901
        %v903 = vrot.slane %v898, 4
        %v905 = vshrl.u32 %v690, 16
        %v907 = vrot.slane %v905, 7
        %v908 = vshll.u32 %v690, 16
        %v910 = vor.u32 %v907, %v908
        %v911 = vrot.slane %v907, 4
        %v913 = vshrl.u32 %v691, 16
        %v915 = vrot.slane %v913, 7
        %v916 = vshll.u32 %v691, 16
        %v918 = vor.u32 %v915, %v916
        %v919 = vsel %vm699, %v911, %v918
        %v920 = vrot.slane %v915, 4
        %v922 = vshrl.u32 %v692, 16
        %v924 = vrot.slane %v922, 7
        %v925 = vshll.u32 %v692, 16
        %v927 = vor.u32 %v924, %v925
        %v928 = vrot.slane %v924, 4
        %v930 = vshrl.u32 %v693, 16
        %v932 = vrot.slane %v930, 7
        %v933 = vshll.u32 %v693, 16
        %v935 = vor.u32 %v932, %v933
        %v936 = vsel %vm699, %v928, %v935
        %v937 = vrot.slane %v932, 4
        %v939 = vshrl.u32 %v694, 16
        %v941 = vrot.slane %v939, 7
        %v942 = vshll.u32 %v694, 16
        %v944 = vor.u32 %v941, %v942
        %v945 = vrot.slane %v941, 4
        %v947 = vshrl.u32 %v695, 16
        %v949 = vrot.slane %v947, 7
        %v950 = vshll.u32 %v695, 16
        %v952 = vor.u32 %v949, %v950
        %v953 = vsel %vm699, %v945, %v952
        %v954 = vrot.slane %v949, 4
        %v956 = vshrl.u32 %v696, 16
        %v958 = vrot.slane %v956, 7
        %v959 = vshll.u32 %v696, 16
        %v961 = vor.u32 %v958, %v959
        %v962 = vrot.slane %v958, 4
        %v964 = vshrl.u32 %v697, 16
        %v966 = vrot.slane %v964, 7
        %v967 = vshll.u32 %v697, 16
        %v969 = vor.u32 %v966, %v967
        %v970 = vsel %vm699, %v962, %v969
        %v971 = vrot.slane %v966, 4
        %s1020 = scalar_lea.vmem [#allocation2], 12
        %vm1021 = vcmask 27648
        %vm1022 = vmand %vm1021, %vm495
        %v1023 = vld [vmem:[%s1020] sm:$0xf]
        %v1024 = vsel %vm1022, %v706, %v1023
        %1025 = vst [vmem:[%s1020] sm:$0xf] %v1024
        %1026 = vst.msk [vmem:[%s1020 + $0x4] sm:$0xf] %vm429, %v715
        %v1027 = vld [vmem:[%s1020 + $0x8] sm:$0x1]
        %v1028 = vsel %vm440, %v716, %v1027
        %1029 = vst [vmem:[%s1020 + $0x8] sm:$0x1] %v1028
        %v1030 = vld [vmem:[%s1020 + $0xc] sm:$0xf]
        %v1031 = vsel %vm1022, %v723, %v1030
        %1032 = vst [vmem:[%s1020 + $0xc] sm:$0xf] %v1031
        %1033 = vst.msk [vmem:[%s1020 + $0x10] sm:$0xf] %vm429, %v732
        %v1034 = vld [vmem:[%s1020 + $0x14] sm:$0x1]
        %v1035 = vsel %vm440, %v733, %v1034
        %1036 = vst [vmem:[%s1020 + $0x14] sm:$0x1] %v1035
        %v1037 = vld [vmem:[%s1020 + $0x18] sm:$0xf]
        %v1038 = vsel %vm1022, %v740, %v1037
        %1039 = vst [vmem:[%s1020 + $0x18] sm:$0xf] %v1038
        %1040 = vst.msk [vmem:[%s1020 + $0x1c] sm:$0xf] %vm429, %v749
        %v1041 = vld [vmem:[%s1020 + $0x20] sm:$0x1]
        %v1042 = vsel %vm440, %v750, %v1041
        %1043 = vst [vmem:[%s1020 + $0x20] sm:$0x1] %v1042
        %v1044 = vld [vmem:[%s1020 + $0x24] sm:$0xf]
        %v1045 = vsel %vm1022, %v757, %v1044
        %1046 = vst [vmem:[%s1020 + $0x24] sm:$0xf] %v1045
        %1047 = vst.msk [vmem:[%s1020 + $0x28] sm:$0xf] %vm429, %v766
        %v1048 = vld [vmem:[%s1020 + $0x2c] sm:$0x1]
        %v1049 = vsel %vm440, %v767, %v1048
        %1050 = vst [vmem:[%s1020 + $0x2c] sm:$0x1] %v1049
        %v1051 = vld [vmem:[%s1020 + $0x30] sm:$0xf]
        %v1052 = vsel %vm1022, %v774, %v1051
        %1053 = vst [vmem:[%s1020 + $0x30] sm:$0xf] %v1052
        %1054 = vst.msk [vmem:[%s1020 + $0x34] sm:$0xf] %vm429, %v783
        %v1055 = vld [vmem:[%s1020 + $0x38] sm:$0x1]
        %v1056 = vsel %vm440, %v784, %v1055
        %1057 = vst [vmem:[%s1020 + $0x38] sm:$0x1] %v1056
        %v1058 = vld [vmem:[%s1020 + $0x3c] sm:$0xf]
        %v1059 = vsel %vm1022, %v791, %v1058
        %1060 = vst [vmem:[%s1020 + $0x3c] sm:$0xf] %v1059
        %1061 = vst.msk [vmem:[%s1020 + $0x40] sm:$0xf] %vm429, %v800
        %v1062 = vld [vmem:[%s1020 + $0x44] sm:$0x1]
        %v1063 = vsel %vm440, %v801, %v1062
        %1064 = vst [vmem:[%s1020 + $0x44] sm:$0x1] %v1063
        %v1065 = vld [vmem:[%s1020 + $0x48] sm:$0xf]
        %v1066 = vsel %vm1022, %v808, %v1065
        %1067 = vst [vmem:[%s1020 + $0x48] sm:$0xf] %v1066
        %1068 = vst.msk [vmem:[%s1020 + $0x4c] sm:$0xf] %vm429, %v817
        %v1069 = vld [vmem:[%s1020 + $0x50] sm:$0x1]
        %v1070 = vsel %vm440, %v818, %v1069
        %1071 = vst [vmem:[%s1020 + $0x50] sm:$0x1] %v1070
        %v1072 = vld [vmem:[%s1020 + $0x54] sm:$0xf]
        %v1073 = vsel %vm1022, %v825, %v1072
        %1074 = vst [vmem:[%s1020 + $0x54] sm:$0xf] %v1073
        %1075 = vst.msk [vmem:[%s1020 + $0x58] sm:$0xf] %vm429, %v834
        %v1076 = vld [vmem:[%s1020 + $0x5c] sm:$0x1]
        %v1077 = vsel %vm440, %v835, %v1076
        %1078 = vst [vmem:[%s1020 + $0x5c] sm:$0x1] %v1077
        %v1079 = vld [vmem:[%s1020 + $0x60] sm:$0xf]
        %v1080 = vsel %vm1022, %v842, %v1079
        %1081 = vst [vmem:[%s1020 + $0x60] sm:$0xf] %v1080
        %1082 = vst.msk [vmem:[%s1020 + $0x64] sm:$0xf] %vm429, %v851
        %v1083 = vld [vmem:[%s1020 + $0x68] sm:$0x1]
        %v1084 = vsel %vm440, %v852, %v1083
        %1085 = vst [vmem:[%s1020 + $0x68] sm:$0x1] %v1084
        %v1086 = vld [vmem:[%s1020 + $0x6c] sm:$0xf]
        %v1087 = vsel %vm1022, %v859, %v1086
        %1088 = vst [vmem:[%s1020 + $0x6c] sm:$0xf] %v1087
        %1089 = vst.msk [vmem:[%s1020 + $0x70] sm:$0xf] %vm429, %v868
        %v1090 = vld [vmem:[%s1020 + $0x74] sm:$0x1]
        %v1091 = vsel %vm440, %v869, %v1090
        %1092 = vst [vmem:[%s1020 + $0x74] sm:$0x1] %v1091
        %v1093 = vld [vmem:[%s1020 + $0x78] sm:$0xf]
        %v1094 = vsel %vm1022, %v876, %v1093
        %1095 = vst [vmem:[%s1020 + $0x78] sm:$0xf] %v1094
        %1096 = vst.msk [vmem:[%s1020 + $0x7c] sm:$0xf] %vm429, %v885
        %v1097 = vld [vmem:[%s1020 + $0x80] sm:$0x1]
        %v1098 = vsel %vm440, %v886, %v1097
        %1099 = vst [vmem:[%s1020 + $0x80] sm:$0x1] %v1098
        %v1100 = vld [vmem:[%s1020 + $0x84] sm:$0xf]
        %v1101 = vsel %vm1022, %v893, %v1100
        %1102 = vst [vmem:[%s1020 + $0x84] sm:$0xf] %v1101
        %1103 = vst.msk [vmem:[%s1020 + $0x88] sm:$0xf] %vm429, %v902
        %v1104 = vld [vmem:[%s1020 + $0x8c] sm:$0x1]
        %v1105 = vsel %vm440, %v903, %v1104
        %1106 = vst [vmem:[%s1020 + $0x8c] sm:$0x1] %v1105
        %v1107 = vld [vmem:[%s1020 + $0x90] sm:$0xf]
        %v1108 = vsel %vm1022, %v910, %v1107
        %1109 = vst [vmem:[%s1020 + $0x90] sm:$0xf] %v1108
        %1110 = vst.msk [vmem:[%s1020 + $0x94] sm:$0xf] %vm429, %v919
        %v1111 = vld [vmem:[%s1020 + $0x98] sm:$0x1]
        %v1112 = vsel %vm440, %v920, %v1111
        %1113 = vst [vmem:[%s1020 + $0x98] sm:$0x1] %v1112
        %v1114 = vld [vmem:[%s1020 + $0x9c] sm:$0xf]
        %v1115 = vsel %vm1022, %v927, %v1114
        %1116 = vst [vmem:[%s1020 + $0x9c] sm:$0xf] %v1115
        %1117 = vst.msk [vmem:[%s1020 + $0xa0] sm:$0xf] %vm429, %v936
        %v1118 = vld [vmem:[%s1020 + $0xa4] sm:$0x1]
        %v1119 = vsel %vm440, %v937, %v1118
        %1120 = vst [vmem:[%s1020 + $0xa4] sm:$0x1] %v1119
        %v1121 = vld [vmem:[%s1020 + $0xa8] sm:$0xf]
        %v1122 = vsel %vm1022, %v944, %v1121
        %1123 = vst [vmem:[%s1020 + $0xa8] sm:$0xf] %v1122
        %1124 = vst.msk [vmem:[%s1020 + $0xac] sm:$0xf] %vm429, %v953
        %v1125 = vld [vmem:[%s1020 + $0xb0] sm:$0x1]
        %v1126 = vsel %vm440, %v954, %v1125
        %1127 = vst [vmem:[%s1020 + $0xb0] sm:$0x1] %v1126
        %v1128 = vld [vmem:[%s1020 + $0xb4] sm:$0xf]
        %v1129 = vsel %vm1022, %v961, %v1128
        %1130 = vst [vmem:[%s1020 + $0xb4] sm:$0xf] %v1129
        %1131 = vst.msk [vmem:[%s1020 + $0xb8] sm:$0xf] %vm429, %v970
        %v1132 = vld [vmem:[%s1020 + $0xbc] sm:$0x1]
        %v1133 = vsel %vm440, %v971, %v1132
        %1134 = vst [vmem:[%s1020 + $0xbc] sm:$0x1] %v1133
        %v1135 = vld [vmem:[#allocation2] sm:$0xf]
        %v1136 = vld [vmem:[#allocation2 + $0x4] sm:$0xf]
        %v1137 = vld [vmem:[#allocation2 + $0xc] sm:$0xf]
        %v1138 = vld [vmem:[#allocation2 + $0x10] sm:$0xf]
        %v1139 = vld [vmem:[#allocation2 + $0x18] sm:$0xf]
        %v1140 = vld [vmem:[#allocation2 + $0x1c] sm:$0xf]
        %v1141 = vld [vmem:[#allocation2 + $0x24] sm:$0xf]
        %v1142 = vld [vmem:[#allocation2 + $0x28] sm:$0xf]
        %v1143 = vld [vmem:[#allocation2 + $0x30] sm:$0xf]
        %v1144 = vld [vmem:[#allocation2 + $0x34] sm:$0xf]
        %v1145 = vld [vmem:[#allocation2 + $0x3c] sm:$0xf]
        %v1146 = vld [vmem:[#allocation2 + $0x40] sm:$0xf]
        %v1147 = vld [vmem:[#allocation2 + $0x48] sm:$0xf]
        %v1148 = vld [vmem:[#allocation2 + $0x4c] sm:$0xf]
        %v1149 = vld [vmem:[#allocation2 + $0x54] sm:$0xf]
        %v1150 = vld [vmem:[#allocation2 + $0x58] sm:$0xf]
        %v1151 = vld [vmem:[#allocation2 + $0x60] sm:$0xf]
        %v1152 = vld [vmem:[#allocation2 + $0x64] sm:$0xf]
        %v1153 = vld [vmem:[#allocation2 + $0x6c] sm:$0xf]
        %v1154 = vld [vmem:[#allocation2 + $0x70] sm:$0xf]
        %v1155 = vld [vmem:[#allocation2 + $0x78] sm:$0xf]
        %v1156 = vld [vmem:[#allocation2 + $0x7c] sm:$0xf]
        %v1157 = vld [vmem:[#allocation2 + $0x84] sm:$0xf]
        %v1158 = vld [vmem:[#allocation2 + $0x88] sm:$0xf]
        %v1159 = vld [vmem:[#allocation2 + $0x90] sm:$0xf]
        %v1160 = vld [vmem:[#allocation2 + $0x94] sm:$0xf]
        %v1161 = vld [vmem:[#allocation2 + $0x9c] sm:$0xf]
        %v1162 = vld [vmem:[#allocation2 + $0xa0] sm:$0xf]
        %v1163 = vld [vmem:[#allocation2 + $0xa8] sm:$0xf]
        %v1164 = vld [vmem:[#allocation2 + $0xac] sm:$0xf]
        %v1165 = vld [vmem:[#allocation2 + $0xb4] sm:$0xf]
        %v1166 = vld [vmem:[#allocation2 + $0xb8] sm:$0xf]
        %v1199 = vunpack.c.l.b16 %v1135
        %v1200 = vunpack.c.l.b16 %v1136
        %v1201 = vunpack.c.l.b16 %v1137
        %v1202 = vunpack.c.l.b16 %v1138
        %v1203 = vunpack.c.l.b16 %v1139
        %v1204 = vunpack.c.l.b16 %v1140
        %v1205 = vunpack.c.l.b16 %v1141
        %v1206 = vunpack.c.l.b16 %v1142
        %v1207 = vunpack.c.l.b16 %v1143
        %v1208 = vunpack.c.l.b16 %v1144
        %v1209 = vunpack.c.l.b16 %v1145
        %v1210 = vunpack.c.l.b16 %v1146
        %v1211 = vunpack.c.l.b16 %v1147
        %v1212 = vunpack.c.l.b16 %v1148
        %v1213 = vunpack.c.l.b16 %v1149
        %v1214 = vunpack.c.l.b16 %v1150
        %v1215 = vunpack.c.l.b16 %v1151
        %v1216 = vunpack.c.l.b16 %v1152
        %v1217 = vunpack.c.l.b16 %v1153
        %v1218 = vunpack.c.l.b16 %v1154
        %v1219 = vunpack.c.l.b16 %v1155
        %v1220 = vunpack.c.l.b16 %v1156
        %v1221 = vunpack.c.l.b16 %v1157
        %v1222 = vunpack.c.l.b16 %v1158
        %v1223 = vunpack.c.l.b16 %v1159
        %v1224 = vunpack.c.l.b16 %v1160
        %v1225 = vunpack.c.l.b16 %v1161
        %v1226 = vunpack.c.l.b16 %v1162
        %v1227 = vunpack.c.l.b16 %v1163
        %v1228 = vunpack.c.l.b16 %v1164
        %v1229 = vunpack.c.l.b16 %v1165
        %v1230 = vunpack.c.l.b16 %v1166
        %v1231 = vpack.c.b16 %v1200, %v1199
        %v1232 = vpack.c.b16 %v1202, %v1201
        %v1233 = vpack.c.b16 %v1204, %v1203
        %v1234 = vpack.c.b16 %v1206, %v1205
        %v1235 = vpack.c.b16 %v1208, %v1207
        %v1236 = vpack.c.b16 %v1210, %v1209
        %v1237 = vpack.c.b16 %v1212, %v1211
        %v1238 = vpack.c.b16 %v1214, %v1213
        %v1239 = vpack.c.b16 %v1216, %v1215
        %v1240 = vpack.c.b16 %v1218, %v1217
        %v1241 = vpack.c.b16 %v1220, %v1219
        %v1242 = vpack.c.b16 %v1222, %v1221
        %v1243 = vpack.c.b16 %v1224, %v1223
        %v1244 = vpack.c.b16 %v1226, %v1225
        %v1245 = vpack.c.b16 %v1228, %v1227
        %v1246 = vpack.c.b16 %v1230, %v1229
        %vm1263 = vcmask 31744
        %1264 = vst.msk [vmem:[#allocation5] sm:$0xff] %vm1263, %v1231
        %1265 = vst.msk [vmem:[#allocation5 + $0x8] sm:$0xff] %vm1263, %v1232
        %1266 = vst.msk [vmem:[#allocation5 + $0x10] sm:$0xff] %vm1263, %v1233
        %1267 = vst.msk [vmem:[#allocation5 + $0x18] sm:$0xff] %vm1263, %v1234
        %1268 = vst.msk [vmem:[#allocation5 + $0x20] sm:$0xff] %vm1263, %v1235
        %1269 = vst.msk [vmem:[#allocation5 + $0x28] sm:$0xff] %vm1263, %v1236
        %1270 = vst.msk [vmem:[#allocation5 + $0x30] sm:$0xff] %vm1263, %v1237
        %1271 = vst.msk [vmem:[#allocation5 + $0x38] sm:$0xff] %vm1263, %v1238
        %1272 = vst.msk [vmem:[#allocation5 + $0x40] sm:$0xff] %vm1263, %v1239
        %1273 = vst.msk [vmem:[#allocation5 + $0x48] sm:$0xff] %vm1263, %v1240
        %1274 = vst.msk [vmem:[#allocation5 + $0x50] sm:$0xff] %vm1263, %v1241
        %1275 = vst.msk [vmem:[#allocation5 + $0x58] sm:$0xff] %vm1263, %v1242
        %1276 = vst.msk [vmem:[#allocation5 + $0x60] sm:$0xff] %vm1263, %v1243
        %1277 = vst.msk [vmem:[#allocation5 + $0x68] sm:$0xff] %vm1263, %v1244
        %1278 = vst.msk [vmem:[#allocation5 + $0x70] sm:$0xff] %vm1263, %v1245
        %1279 = vst.msk [vmem:[#allocation5 + $0x78] sm:$0xff] %vm1263, %v1246
        %v1280 = vld [vmem:[#allocation2] sm:$0xf]
        %v1281 = vld [vmem:[#allocation2 + $0x4] sm:$0xf]
        %v1282 = vld [vmem:[#allocation2 + $0x8] sm:$0x1]
        %v1283 = vld [vmem:[#allocation2 + $0xc] sm:$0xf]
        %v1284 = vld [vmem:[#allocation2 + $0x10] sm:$0xf]
        %v1285 = vld [vmem:[#allocation2 + $0x14] sm:$0x1]
        %v1286 = vld [vmem:[#allocation2 + $0x18] sm:$0xf]
        %v1287 = vld [vmem:[#allocation2 + $0x1c] sm:$0xf]
        %v1288 = vld [vmem:[#allocation2 + $0x20] sm:$0x1]
        %v1289 = vld [vmem:[#allocation2 + $0x24] sm:$0xf]
        %v1290 = vld [vmem:[#allocation2 + $0x28] sm:$0xf]
        %v1291 = vld [vmem:[#allocation2 + $0x2c] sm:$0x1]
        %v1292 = vld [vmem:[#allocation2 + $0x30] sm:$0xf]
        %v1293 = vld [vmem:[#allocation2 + $0x34] sm:$0xf]
        %v1294 = vld [vmem:[#allocation2 + $0x38] sm:$0x1]
        %v1295 = vld [vmem:[#allocation2 + $0x3c] sm:$0xf]
        %v1296 = vld [vmem:[#allocation2 + $0x40] sm:$0xf]
        %v1297 = vld [vmem:[#allocation2 + $0x44] sm:$0x1]
        %v1298 = vld [vmem:[#allocation2 + $0x48] sm:$0xf]
        %v1299 = vld [vmem:[#allocation2 + $0x4c] sm:$0xf]
        %v1300 = vld [vmem:[#allocation2 + $0x50] sm:$0x1]
        %v1301 = vld [vmem:[#allocation2 + $0x54] sm:$0xf]
        %v1302 = vld [vmem:[#allocation2 + $0x58] sm:$0xf]
        %v1303 = vld [vmem:[#allocation2 + $0x5c] sm:$0x1]
        %v1304 = vld [vmem:[#allocation2 + $0x60] sm:$0xf]
        %v1305 = vld [vmem:[#allocation2 + $0x64] sm:$0xf]
        %v1306 = vld [vmem:[#allocation2 + $0x68] sm:$0x1]
        %v1307 = vld [vmem:[#allocation2 + $0x6c] sm:$0xf]
        %v1308 = vld [vmem:[#allocation2 + $0x70] sm:$0xf]
        %v1309 = vld [vmem:[#allocation2 + $0x74] sm:$0x1]
        %v1310 = vld [vmem:[#allocation2 + $0x78] sm:$0xf]
        %v1311 = vld [vmem:[#allocation2 + $0x7c] sm:$0xf]
        %v1312 = vld [vmem:[#allocation2 + $0x80] sm:$0x1]
        %v1313 = vld [vmem:[#allocation2 + $0x84] sm:$0xf]
        %v1314 = vld [vmem:[#allocation2 + $0x88] sm:$0xf]
        %v1315 = vld [vmem:[#allocation2 + $0x8c] sm:$0x1]
        %v1316 = vld [vmem:[#allocation2 + $0x90] sm:$0xf]
        %v1317 = vld [vmem:[#allocation2 + $0x94] sm:$0xf]
        %v1318 = vld [vmem:[#allocation2 + $0x98] sm:$0x1]
        %v1319 = vld [vmem:[#allocation2 + $0x9c] sm:$0xf]
        %v1320 = vld [vmem:[#allocation2 + $0xa0] sm:$0xf]
        %v1321 = vld [vmem:[#allocation2 + $0xa4] sm:$0x1]
        %v1322 = vld [vmem:[#allocation2 + $0xa8] sm:$0xf]
        %v1323 = vld [vmem:[#allocation2 + $0xac] sm:$0xf]
        %v1324 = vld [vmem:[#allocation2 + $0xb0] sm:$0x1]
        %v1325 = vld [vmem:[#allocation2 + $0xb4] sm:$0xf]
        %v1326 = vld [vmem:[#allocation2 + $0xb8] sm:$0xf]
        %v1327 = vld [vmem:[#allocation2 + $0xbc] sm:$0x1]
        %vm1328 = vsmask.f32 3328
        %vm1329 = vsmask.f32 7440
        %vm1330 = vmor %vm1328, %vm1329
        %v1332 = vshrl.u32 %v1280, 16
        %v1334 = vrot.slane %v1332, 4
        %v1335 = vshll.u32 %v1280, 16
        %v1337 = vrot.slane %v1335, 5
        %v1338 = vor.u32 %v1334, %v1337
        %v1339 = vrot.slane %v1338, 4
        %v1341 = vshll.u32 %v1281, 16
        %v1343 = vrot.slane %v1341, 5
        %v1344 = vsel %vm1330, %v1339, %v1343
        %v1345 = vshrl.u32 %v1281, 16
        %v1347 = vrot.slane %v1345, 4
        %v1348 = vor.u32 %v1347, %v1343
        %v1349 = vrot.slane %v1348, 4
        %v1351 = vshll.u32 %v1282, 16
        %v1353 = vrot.slane %v1351, 5
        %v1354 = vsel %vm1330, %v1349, %v1353
        %v1356 = vshrl.u32 %v1283, 16
        %v1358 = vrot.slane %v1356, 4
        %v1359 = vshll.u32 %v1283, 16
        %v1361 = vrot.slane %v1359, 5
        %v1362 = vor.u32 %v1358, %v1361
        %v1363 = vrot.slane %v1362, 4
        %v1365 = vshll.u32 %v1284, 16
        %v1367 = vrot.slane %v1365, 5
        %v1368 = vsel %vm1330, %v1363, %v1367
        %v1369 = vshrl.u32 %v1284, 16
        %v1371 = vrot.slane %v1369, 4
        %v1372 = vor.u32 %v1371, %v1367
        %v1373 = vrot.slane %v1372, 4
        %v1375 = vshll.u32 %v1285, 16
        %v1377 = vrot.slane %v1375, 5
        %v1378 = vsel %vm1330, %v1373, %v1377
        %v1380 = vshrl.u32 %v1286, 16
        %v1382 = vrot.slane %v1380, 4
        %v1383 = vshll.u32 %v1286, 16
        %v1385 = vrot.slane %v1383, 5
        %v1386 = vor.u32 %v1382, %v1385
        %v1387 = vrot.slane %v1386, 4
        %v1389 = vshll.u32 %v1287, 16
        %v1391 = vrot.slane %v1389, 5
        %v1392 = vsel %vm1330, %v1387, %v1391
        %v1393 = vshrl.u32 %v1287, 16
        %v1395 = vrot.slane %v1393, 4
        %v1396 = vor.u32 %v1395, %v1391
        %v1397 = vrot.slane %v1396, 4
        %v1399 = vshll.u32 %v1288, 16
        %v1401 = vrot.slane %v1399, 5
        %v1402 = vsel %vm1330, %v1397, %v1401
        %v1404 = vshrl.u32 %v1289, 16
        %v1406 = vrot.slane %v1404, 4
        %v1407 = vshll.u32 %v1289, 16
        %v1409 = vrot.slane %v1407, 5
        %v1410 = vor.u32 %v1406, %v1409
        %v1411 = vrot.slane %v1410, 4
        %v1413 = vshll.u32 %v1290, 16
        %v1415 = vrot.slane %v1413, 5
        %v1416 = vsel %vm1330, %v1411, %v1415
        %v1417 = vshrl.u32 %v1290, 16
        %v1419 = vrot.slane %v1417, 4
        %v1420 = vor.u32 %v1419, %v1415
        %v1421 = vrot.slane %v1420, 4
        %v1423 = vshll.u32 %v1291, 16
        %v1425 = vrot.slane %v1423, 5
        %v1426 = vsel %vm1330, %v1421, %v1425
        %v1428 = vshrl.u32 %v1292, 16
        %v1430 = vrot.slane %v1428, 4
        %v1431 = vshll.u32 %v1292, 16
        %v1433 = vrot.slane %v1431, 5
        %v1434 = vor.u32 %v1430, %v1433
        %v1435 = vrot.slane %v1434, 4
        %v1437 = vshll.u32 %v1293, 16
        %v1439 = vrot.slane %v1437, 5
        %v1440 = vsel %vm1330, %v1435, %v1439
        %v1441 = vshrl.u32 %v1293, 16
        %v1443 = vrot.slane %v1441, 4
        %v1444 = vor.u32 %v1443, %v1439
        %v1445 = vrot.slane %v1444, 4
        %v1447 = vshll.u32 %v1294, 16
        %v1449 = vrot.slane %v1447, 5
        %v1450 = vsel %vm1330, %v1445, %v1449
        %v1452 = vshrl.u32 %v1295, 16
        %v1454 = vrot.slane %v1452, 4
        %v1455 = vshll.u32 %v1295, 16
        %v1457 = vrot.slane %v1455, 5
        %v1458 = vor.u32 %v1454, %v1457
        %v1459 = vrot.slane %v1458, 4
        %v1461 = vshll.u32 %v1296, 16
        %v1463 = vrot.slane %v1461, 5
        %v1464 = vsel %vm1330, %v1459, %v1463
        %v1465 = vshrl.u32 %v1296, 16
        %v1467 = vrot.slane %v1465, 4
        %v1468 = vor.u32 %v1467, %v1463
        %v1469 = vrot.slane %v1468, 4
        %v1471 = vshll.u32 %v1297, 16
        %v1473 = vrot.slane %v1471, 5
        %v1474 = vsel %vm1330, %v1469, %v1473
        %v1476 = vshrl.u32 %v1298, 16
        %v1478 = vrot.slane %v1476, 4
        %v1479 = vshll.u32 %v1298, 16
        %v1481 = vrot.slane %v1479, 5
        %v1482 = vor.u32 %v1478, %v1481
        %v1483 = vrot.slane %v1482, 4
        %v1485 = vshll.u32 %v1299, 16
        %v1487 = vrot.slane %v1485, 5
        %v1488 = vsel %vm1330, %v1483, %v1487
        %v1489 = vshrl.u32 %v1299, 16
        %v1491 = vrot.slane %v1489, 4
        %v1492 = vor.u32 %v1491, %v1487
        %v1493 = vrot.slane %v1492, 4
        %v1495 = vshll.u32 %v1300, 16
        %v1497 = vrot.slane %v1495, 5
        %v1498 = vsel %vm1330, %v1493, %v1497
        %v1500 = vshrl.u32 %v1301, 16
        %v1502 = vrot.slane %v1500, 4
        %v1503 = vshll.u32 %v1301, 16
        %v1505 = vrot.slane %v1503, 5
        %v1506 = vor.u32 %v1502, %v1505
        %v1507 = vrot.slane %v1506, 4
        %v1509 = vshll.u32 %v1302, 16
        %v1511 = vrot.slane %v1509, 5
        %v1512 = vsel %vm1330, %v1507, %v1511
        %v1513 = vshrl.u32 %v1302, 16
        %v1515 = vrot.slane %v1513, 4
        %v1516 = vor.u32 %v1515, %v1511
        %v1517 = vrot.slane %v1516, 4
        %v1519 = vshll.u32 %v1303, 16
        %v1521 = vrot.slane %v1519, 5
        %v1522 = vsel %vm1330, %v1517, %v1521
        %v1524 = vshrl.u32 %v1304, 16
        %v1526 = vrot.slane %v1524, 4
        %v1527 = vshll.u32 %v1304, 16
        %v1529 = vrot.slane %v1527, 5
        %v1530 = vor.u32 %v1526, %v1529
        %v1531 = vrot.slane %v1530, 4
        %v1533 = vshll.u32 %v1305, 16
        %v1535 = vrot.slane %v1533, 5
        %v1536 = vsel %vm1330, %v1531, %v1535
        %v1537 = vshrl.u32 %v1305, 16
        %v1539 = vrot.slane %v1537, 4
        %v1540 = vor.u32 %v1539, %v1535
        %v1541 = vrot.slane %v1540, 4
        %v1543 = vshll.u32 %v1306, 16
        %v1545 = vrot.slane %v1543, 5
        %v1546 = vsel %vm1330, %v1541, %v1545
        %v1548 = vshrl.u32 %v1307, 16
        %v1550 = vrot.slane %v1548, 4
        %v1551 = vshll.u32 %v1307, 16
        %v1553 = vrot.slane %v1551, 5
        %v1554 = vor.u32 %v1550, %v1553
        %v1555 = vrot.slane %v1554, 4
        %v1557 = vshll.u32 %v1308, 16
        %v1559 = vrot.slane %v1557, 5
        %v1560 = vsel %vm1330, %v1555, %v1559
        %v1561 = vshrl.u32 %v1308, 16
        %v1563 = vrot.slane %v1561, 4
        %v1564 = vor.u32 %v1563, %v1559
        %v1565 = vrot.slane %v1564, 4
        %v1567 = vshll.u32 %v1309, 16
        %v1569 = vrot.slane %v1567, 5
        %v1570 = vsel %vm1330, %v1565, %v1569
        %v1572 = vshrl.u32 %v1310, 16
        %v1574 = vrot.slane %v1572, 4
        %v1575 = vshll.u32 %v1310, 16
        %v1577 = vrot.slane %v1575, 5
        %v1578 = vor.u32 %v1574, %v1577
        %v1579 = vrot.slane %v1578, 4
        %v1581 = vshll.u32 %v1311, 16
        %v1583 = vrot.slane %v1581, 5
        %v1584 = vsel %vm1330, %v1579, %v1583
        %v1585 = vshrl.u32 %v1311, 16
        %v1587 = vrot.slane %v1585, 4
        %v1588 = vor.u32 %v1587, %v1583
        %v1589 = vrot.slane %v1588, 4
        %v1591 = vshll.u32 %v1312, 16
        %v1593 = vrot.slane %v1591, 5
        %v1594 = vsel %vm1330, %v1589, %v1593
        %v1596 = vshrl.u32 %v1313, 16
        %v1598 = vrot.slane %v1596, 4
        %v1599 = vshll.u32 %v1313, 16
        %v1601 = vrot.slane %v1599, 5
        %v1602 = vor.u32 %v1598, %v1601
        %v1603 = vrot.slane %v1602, 4
        %v1605 = vshll.u32 %v1314, 16
        %v1607 = vrot.slane %v1605, 5
        %v1608 = vsel %vm1330, %v1603, %v1607
        %v1609 = vshrl.u32 %v1314, 16
        %v1611 = vrot.slane %v1609, 4
        %v1612 = vor.u32 %v1611, %v1607
        %v1613 = vrot.slane %v1612, 4
        %v1615 = vshll.u32 %v1315, 16
        %v1617 = vrot.slane %v1615, 5
        %v1618 = vsel %vm1330, %v1613, %v1617
        %v1620 = vshrl.u32 %v1316, 16
        %v1622 = vrot.slane %v1620, 4
        %v1623 = vshll.u32 %v1316, 16
        %v1625 = vrot.slane %v1623, 5
        %v1626 = vor.u32 %v1622, %v1625
        %v1627 = vrot.slane %v1626, 4
        %v1629 = vshll.u32 %v1317, 16
        %v1631 = vrot.slane %v1629, 5
        %v1632 = vsel %vm1330, %v1627, %v1631
        %v1633 = vshrl.u32 %v1317, 16
        %v1635 = vrot.slane %v1633, 4
        %v1636 = vor.u32 %v1635, %v1631
        %v1637 = vrot.slane %v1636, 4
        %v1639 = vshll.u32 %v1318, 16
        %v1641 = vrot.slane %v1639, 5
        %v1642 = vsel %vm1330, %v1637, %v1641
        %v1644 = vshrl.u32 %v1319, 16
        %v1646 = vrot.slane %v1644, 4
        %v1647 = vshll.u32 %v1319, 16
        %v1649 = vrot.slane %v1647, 5
        %v1650 = vor.u32 %v1646, %v1649
        %v1651 = vrot.slane %v1650, 4
        %v1653 = vshll.u32 %v1320, 16
        %v1655 = vrot.slane %v1653, 5
        %v1656 = vsel %vm1330, %v1651, %v1655
        %v1657 = vshrl.u32 %v1320, 16
        %v1659 = vrot.slane %v1657, 4
        %v1660 = vor.u32 %v1659, %v1655
        %v1661 = vrot.slane %v1660, 4
        %v1663 = vshll.u32 %v1321, 16
        %v1665 = vrot.slane %v1663, 5
        %v1666 = vsel %vm1330, %v1661, %v1665
        %v1668 = vshrl.u32 %v1322, 16
        %v1670 = vrot.slane %v1668, 4
        %v1671 = vshll.u32 %v1322, 16
        %v1673 = vrot.slane %v1671, 5
        %v1674 = vor.u32 %v1670, %v1673
        %v1675 = vrot.slane %v1674, 4
        %v1677 = vshll.u32 %v1323, 16
        %v1679 = vrot.slane %v1677, 5
        %v1680 = vsel %vm1330, %v1675, %v1679
        %v1681 = vshrl.u32 %v1323, 16
        %v1683 = vrot.slane %v1681, 4
        %v1684 = vor.u32 %v1683, %v1679
        %v1685 = vrot.slane %v1684, 4
        %v1687 = vshll.u32 %v1324, 16
        %v1689 = vrot.slane %v1687, 5
        %v1690 = vsel %vm1330, %v1685, %v1689
        %v1692 = vshrl.u32 %v1325, 16
        %v1694 = vrot.slane %v1692, 4
        %v1695 = vshll.u32 %v1325, 16
        %v1697 = vrot.slane %v1695, 5
        %v1698 = vor.u32 %v1694, %v1697
        %v1699 = vrot.slane %v1698, 4
        %v1701 = vshll.u32 %v1326, 16
        %v1703 = vrot.slane %v1701, 5
        %v1704 = vsel %vm1330, %v1699, %v1703
        %v1705 = vshrl.u32 %v1326, 16
        %v1707 = vrot.slane %v1705, 4
        %v1708 = vor.u32 %v1707, %v1703
        %v1709 = vrot.slane %v1708, 4
        %v1711 = vshll.u32 %v1327, 16
        %v1713 = vrot.slane %v1711, 5
        %v1714 = vsel %vm1330, %v1709, %v1713
        %v1715 = vunpack.c.l.b16 %v1344
        %v1716 = vunpack.c.l.b16 %v1354
        %v1717 = vunpack.c.l.b16 %v1368
        %v1718 = vunpack.c.l.b16 %v1378
        %v1719 = vunpack.c.l.b16 %v1392
        %v1720 = vunpack.c.l.b16 %v1402
        %v1721 = vunpack.c.l.b16 %v1416
        %v1722 = vunpack.c.l.b16 %v1426
        %v1723 = vunpack.c.l.b16 %v1440
        %v1724 = vunpack.c.l.b16 %v1450
        %v1725 = vunpack.c.l.b16 %v1464
        %v1726 = vunpack.c.l.b16 %v1474
        %v1727 = vunpack.c.l.b16 %v1488
        %v1728 = vunpack.c.l.b16 %v1498
        %v1729 = vunpack.c.l.b16 %v1512
        %v1730 = vunpack.c.l.b16 %v1522
        %v1731 = vunpack.c.l.b16 %v1536
        %v1732 = vunpack.c.l.b16 %v1546
        %v1733 = vunpack.c.l.b16 %v1560
        %v1734 = vunpack.c.l.b16 %v1570
        %v1735 = vunpack.c.l.b16 %v1584
        %v1736 = vunpack.c.l.b16 %v1594
        %v1737 = vunpack.c.l.b16 %v1608
        %v1738 = vunpack.c.l.b16 %v1618
        %v1739 = vunpack.c.l.b16 %v1632
        %v1740 = vunpack.c.l.b16 %v1642
        %v1741 = vunpack.c.l.b16 %v1656
        %v1742 = vunpack.c.l.b16 %v1666
        %v1743 = vunpack.c.l.b16 %v1680
        %v1744 = vunpack.c.l.b16 %v1690
        %v1745 = vunpack.c.l.b16 %v1704
        %v1746 = vunpack.c.l.b16 %v1714
        %v1747 = vpack.c.b16 %v1716, %v1715
        %v1748 = vpack.c.b16 %v1718, %v1717
        %v1749 = vpack.c.b16 %v1720, %v1719
        %v1750 = vpack.c.b16 %v1722, %v1721
        %v1751 = vpack.c.b16 %v1724, %v1723
        %v1752 = vpack.c.b16 %v1726, %v1725
        %v1753 = vpack.c.b16 %v1728, %v1727
        %v1754 = vpack.c.b16 %v1730, %v1729
        %v1755 = vpack.c.b16 %v1732, %v1731
        %v1756 = vpack.c.b16 %v1734, %v1733
        %v1757 = vpack.c.b16 %v1736, %v1735
        %v1758 = vpack.c.b16 %v1738, %v1737
        %v1759 = vpack.c.b16 %v1740, %v1739
        %v1760 = vpack.c.b16 %v1742, %v1741
        %v1761 = vpack.c.b16 %v1744, %v1743
        %v1762 = vpack.c.b16 %v1746, %v1745
        %1763 = vrot.lane.b32.xlu0 %v1747, 4
        %v1764 = vpop.permute.xlu0 %1763
        %1765 = vrot.lane.b32.xlu0 %v1748, 4
        %v1766 = vpop.permute.xlu0 %1765
        %1767 = vrot.lane.b32.xlu0 %v1749, 4
        %v1768 = vpop.permute.xlu0 %1767
        %1769 = vrot.lane.b32.xlu0 %v1750, 4
        %v1770 = vpop.permute.xlu0 %1769
        %1771 = vrot.lane.b32.xlu0 %v1751, 4
        %v1772 = vpop.permute.xlu0 %1771
        %1773 = vrot.lane.b32.xlu0 %v1752, 4
        %v1774 = vpop.permute.xlu0 %1773
        %1775 = vrot.lane.b32.xlu0 %v1753, 4
        %v1776 = vpop.permute.xlu0 %1775
        %1777 = vrot.lane.b32.xlu0 %v1754, 4
        %v1778 = vpop.permute.xlu0 %1777
        %1779 = vrot.lane.b32.xlu0 %v1755, 4
        %v1780 = vpop.permute.xlu0 %1779
        %1781 = vrot.lane.b32.xlu0 %v1756, 4
        %v1782 = vpop.permute.xlu0 %1781
        %1783 = vrot.lane.b32.xlu0 %v1757, 4
        %v1784 = vpop.permute.xlu0 %1783
        %1785 = vrot.lane.b32.xlu0 %v1758, 4
        %v1786 = vpop.permute.xlu0 %1785
        %1787 = vrot.lane.b32.xlu0 %v1759, 4
        %v1788 = vpop.permute.xlu0 %1787
        %1789 = vrot.lane.b32.xlu0 %v1760, 4
        %v1790 = vpop.permute.xlu0 %1789
        %1791 = vrot.lane.b32.xlu0 %v1761, 4
        %v1792 = vpop.permute.xlu0 %1791
        %1793 = vrot.lane.b32.xlu0 %v1762, 4
        %v1794 = vpop.permute.xlu0 %1793
        %vm1811 = vcmask 64544
        %1812 = vst.msk [vmem:[#allocation5] sm:$0xff] %vm1811, %v1764
        %1813 = vst.msk [vmem:[#allocation5 + $0x8] sm:$0xff] %vm1811, %v1766
        %1814 = vst.msk [vmem:[#allocation5 + $0x10] sm:$0xff] %vm1811, %v1768
        %1815 = vst.msk [vmem:[#allocation5 + $0x18] sm:$0xff] %vm1811, %v1770
        %1816 = vst.msk [vmem:[#allocation5 + $0x20] sm:$0xff] %vm1811, %v1772
        %1817 = vst.msk [vmem:[#allocation5 + $0x28] sm:$0xff] %vm1811, %v1774
        %1818 = vst.msk [vmem:[#allocation5 + $0x30] sm:$0xff] %vm1811, %v1776
        %1819 = vst.msk [vmem:[#allocation5 + $0x38] sm:$0xff] %vm1811, %v1778
        %1820 = vst.msk [vmem:[#allocation5 + $0x40] sm:$0xff] %vm1811, %v1780
        %1821 = vst.msk [vmem:[#allocation5 + $0x48] sm:$0xff] %vm1811, %v1782
        %1822 = vst.msk [vmem:[#allocation5 + $0x50] sm:$0xff] %vm1811, %v1784
        %1823 = vst.msk [vmem:[#allocation5 + $0x58] sm:$0xff] %vm1811, %v1786
        %1824 = vst.msk [vmem:[#allocation5 + $0x60] sm:$0xff] %vm1811, %v1788
        %1825 = vst.msk [vmem:[#allocation5 + $0x68] sm:$0xff] %vm1811, %v1790
        %1826 = vst.msk [vmem:[#allocation5 + $0x70] sm:$0xff] %vm1811, %v1792
        %1827 = vst.msk [vmem:[#allocation5 + $0x78] sm:$0xff] %vm1811, %v1794
        %v1828 = vld [vmem:[#allocation2] sm:$0xe]
        %v1829 = vld [vmem:[#allocation2 + $0x4] sm:$0xf]
        %v1830 = vld [vmem:[#allocation2 + $0x8] sm:$0x1]
        %v1831 = vld [vmem:[#allocation2 + $0xc] sm:$0xe]
        %v1832 = vld [vmem:[#allocation2 + $0x10] sm:$0xf]
        %v1833 = vld [vmem:[#allocation2 + $0x14] sm:$0x1]
        %v1834 = vld [vmem:[#allocation2 + $0x18] sm:$0xe]
        %v1835 = vld [vmem:[#allocation2 + $0x1c] sm:$0xf]
        %v1836 = vld [vmem:[#allocation2 + $0x20] sm:$0x1]
        %v1837 = vld [vmem:[#allocation2 + $0x24] sm:$0xe]
        %v1838 = vld [vmem:[#allocation2 + $0x28] sm:$0xf]
        %v1839 = vld [vmem:[#allocation2 + $0x2c] sm:$0x1]
        %v1840 = vld [vmem:[#allocation2 + $0x30] sm:$0xe]
        %v1841 = vld [vmem:[#allocation2 + $0x34] sm:$0xf]
        %v1842 = vld [vmem:[#allocation2 + $0x38] sm:$0x1]
        %v1843 = vld [vmem:[#allocation2 + $0x3c] sm:$0xe]
        %v1844 = vld [vmem:[#allocation2 + $0x40] sm:$0xf]
        %v1845 = vld [vmem:[#allocation2 + $0x44] sm:$0x1]
        %v1846 = vld [vmem:[#allocation2 + $0x48] sm:$0xe]
        %v1847 = vld [vmem:[#allocation2 + $0x4c] sm:$0xf]
        %v1848 = vld [vmem:[#allocation2 + $0x50] sm:$0x1]
        %v1849 = vld [vmem:[#allocation2 + $0x54] sm:$0xe]
        %v1850 = vld [vmem:[#allocation2 + $0x58] sm:$0xf]
        %v1851 = vld [vmem:[#allocation2 + $0x5c] sm:$0x1]
        %v1852 = vld [vmem:[#allocation2 + $0x60] sm:$0xe]
        %v1853 = vld [vmem:[#allocation2 + $0x64] sm:$0xf]
        %v1854 = vld [vmem:[#allocation2 + $0x68] sm:$0x1]
        %v1855 = vld [vmem:[#allocation2 + $0x6c] sm:$0xe]
        %v1856 = vld [vmem:[#allocation2 + $0x70] sm:$0xf]
        %v1857 = vld [vmem:[#allocation2 + $0x74] sm:$0x1]
        %v1858 = vld [vmem:[#allocation2 + $0x78] sm:$0xe]
        %v1859 = vld [vmem:[#allocation2 + $0x7c] sm:$0xf]
        %v1860 = vld [vmem:[#allocation2 + $0x80] sm:$0x1]
        %v1861 = vld [vmem:[#allocation2 + $0x84] sm:$0xe]
        %v1862 = vld [vmem:[#allocation2 + $0x88] sm:$0xf]
        %v1863 = vld [vmem:[#allocation2 + $0x8c] sm:$0x1]
        %v1864 = vld [vmem:[#allocation2 + $0x90] sm:$0xe]
        %v1865 = vld [vmem:[#allocation2 + $0x94] sm:$0xf]
        %v1866 = vld [vmem:[#allocation2 + $0x98] sm:$0x1]
        %v1867 = vld [vmem:[#allocation2 + $0x9c] sm:$0xe]
        %v1868 = vld [vmem:[#allocation2 + $0xa0] sm:$0xf]
        %v1869 = vld [vmem:[#allocation2 + $0xa4] sm:$0x1]
        %v1870 = vld [vmem:[#allocation2 + $0xa8] sm:$0xe]
        %v1871 = vld [vmem:[#allocation2 + $0xac] sm:$0xf]
        %v1872 = vld [vmem:[#allocation2 + $0xb0] sm:$0x1]
        %v1873 = vld [vmem:[#allocation2 + $0xb4] sm:$0xe]
        %v1874 = vld [vmem:[#allocation2 + $0xb8] sm:$0xf]
        %v1875 = vld [vmem:[#allocation2 + $0xbc] sm:$0x1]
        %vm1924 = vcmask 1042432
        %vm1925 = vcmask 1046532
        %vm1926 = vmor %vm1924, %vm1925
        %v1927 = vrot.slane %v1828, 5
        %v1928 = vrot.slane %v1927, 4
        %v1929 = vrot.slane %v1829, 5
        %v1930 = vsel %vm1926, %v1928, %v1929
        %v1931 = vrot.slane %v1929, 4
        %v1932 = vrot.slane %v1830, 5
        %v1933 = vsel %vm1926, %v1931, %v1932
        %v1934 = vrot.slane %v1831, 5
        %v1935 = vrot.slane %v1934, 4
        %v1936 = vrot.slane %v1832, 5
        %v1937 = vsel %vm1926, %v1935, %v1936
        %v1938 = vrot.slane %v1936, 4
        %v1939 = vrot.slane %v1833, 5
        %v1940 = vsel %vm1926, %v1938, %v1939
        %v1941 = vrot.slane %v1834, 5
        %v1942 = vrot.slane %v1941, 4
        %v1943 = vrot.slane %v1835, 5
        %v1944 = vsel %vm1926, %v1942, %v1943
        %v1945 = vrot.slane %v1943, 4
        %v1946 = vrot.slane %v1836, 5
        %v1947 = vsel %vm1926, %v1945, %v1946
        %v1948 = vrot.slane %v1837, 5
        %v1949 = vrot.slane %v1948, 4
        %v1950 = vrot.slane %v1838, 5
        %v1951 = vsel %vm1926, %v1949, %v1950
        %v1952 = vrot.slane %v1950, 4
        %v1953 = vrot.slane %v1839, 5
        %v1954 = vsel %vm1926, %v1952, %v1953
        %v1955 = vrot.slane %v1840, 5
        %v1956 = vrot.slane %v1955, 4
        %v1957 = vrot.slane %v1841, 5
        %v1958 = vsel %vm1926, %v1956, %v1957
        %v1959 = vrot.slane %v1957, 4
        %v1960 = vrot.slane %v1842, 5
        %v1961 = vsel %vm1926, %v1959, %v1960
        %v1962 = vrot.slane %v1843, 5
        %v1963 = vrot.slane %v1962, 4
        %v1964 = vrot.slane %v1844, 5
        %v1965 = vsel %vm1926, %v1963, %v1964
        %v1966 = vrot.slane %v1964, 4
        %v1967 = vrot.slane %v1845, 5
        %v1968 = vsel %vm1926, %v1966, %v1967
        %v1969 = vrot.slane %v1846, 5
        %v1970 = vrot.slane %v1969, 4
        %v1971 = vrot.slane %v1847, 5
        %v1972 = vsel %vm1926, %v1970, %v1971
        %v1973 = vrot.slane %v1971, 4
        %v1974 = vrot.slane %v1848, 5
        %v1975 = vsel %vm1926, %v1973, %v1974
        %v1976 = vrot.slane %v1849, 5
        %v1977 = vrot.slane %v1976, 4
        %v1978 = vrot.slane %v1850, 5
        %v1979 = vsel %vm1926, %v1977, %v1978
        %v1980 = vrot.slane %v1978, 4
        %v1981 = vrot.slane %v1851, 5
        %v1982 = vsel %vm1926, %v1980, %v1981
        %v1983 = vrot.slane %v1852, 5
        %v1984 = vrot.slane %v1983, 4
        %v1985 = vrot.slane %v1853, 5
        %v1986 = vsel %vm1926, %v1984, %v1985
        %v1987 = vrot.slane %v1985, 4
        %v1988 = vrot.slane %v1854, 5
        %v1989 = vsel %vm1926, %v1987, %v1988
        %v1990 = vrot.slane %v1855, 5
        %v1991 = vrot.slane %v1990, 4
        %v1992 = vrot.slane %v1856, 5
        %v1993 = vsel %vm1926, %v1991, %v1992
        %v1994 = vrot.slane %v1992, 4
        %v1995 = vrot.slane %v1857, 5
        %v1996 = vsel %vm1926, %v1994, %v1995
        %v1997 = vrot.slane %v1858, 5
        %v1998 = vrot.slane %v1997, 4
        %v1999 = vrot.slane %v1859, 5
        %v2000 = vsel %vm1926, %v1998, %v1999
        %v2001 = vrot.slane %v1999, 4
        %v2002 = vrot.slane %v1860, 5
        %v2003 = vsel %vm1926, %v2001, %v2002
        %v2004 = vrot.slane %v1861, 5
        %v2005 = vrot.slane %v2004, 4
        %v2006 = vrot.slane %v1862, 5
        %v2007 = vsel %vm1926, %v2005, %v2006
        %v2008 = vrot.slane %v2006, 4
        %v2009 = vrot.slane %v1863, 5
        %v2010 = vsel %vm1926, %v2008, %v2009
        %v2011 = vrot.slane %v1864, 5
        %v2012 = vrot.slane %v2011, 4
        %v2013 = vrot.slane %v1865, 5
        %v2014 = vsel %vm1926, %v2012, %v2013
        %v2015 = vrot.slane %v2013, 4
        %v2016 = vrot.slane %v1866, 5
        %v2017 = vsel %vm1926, %v2015, %v2016
        %v2018 = vrot.slane %v1867, 5
        %v2019 = vrot.slane %v2018, 4
        %v2020 = vrot.slane %v1868, 5
        %v2021 = vsel %vm1926, %v2019, %v2020
        %v2022 = vrot.slane %v2020, 4
        %v2023 = vrot.slane %v1869, 5
        %v2024 = vsel %vm1926, %v2022, %v2023
        %v2025 = vrot.slane %v1870, 5
        %v2026 = vrot.slane %v2025, 4
        %v2027 = vrot.slane %v1871, 5
        %v2028 = vsel %vm1926, %v2026, %v2027
        %v2029 = vrot.slane %v2027, 4
        %v2030 = vrot.slane %v1872, 5
        %v2031 = vsel %vm1926, %v2029, %v2030
        %v2032 = vrot.slane %v1873, 5
        %v2033 = vrot.slane %v2032, 4
        %v2034 = vrot.slane %v1874, 5
        %v2035 = vsel %vm1926, %v2033, %v2034
        %v2036 = vrot.slane %v2034, 4
        %v2037 = vrot.slane %v1875, 5
        %v2038 = vsel %vm1926, %v2036, %v2037
        %v2039 = vunpack.c.l.b16 %v1930
        %v2040 = vunpack.c.l.b16 %v1933
        %v2041 = vunpack.c.l.b16 %v1937
        %v2042 = vunpack.c.l.b16 %v1940
        %v2043 = vunpack.c.l.b16 %v1944
        %v2044 = vunpack.c.l.b16 %v1947
        %v2045 = vunpack.c.l.b16 %v1951
        %v2046 = vunpack.c.l.b16 %v1954
        %v2047 = vunpack.c.l.b16 %v1958
        %v2048 = vunpack.c.l.b16 %v1961
        %v2049 = vunpack.c.l.b16 %v1965
        %v2050 = vunpack.c.l.b16 %v1968
        %v2051 = vunpack.c.l.b16 %v1972
        %v2052 = vunpack.c.l.b16 %v1975
        %v2053 = vunpack.c.l.b16 %v1979
        %v2054 = vunpack.c.l.b16 %v1982
        %v2055 = vunpack.c.l.b16 %v1986
        %v2056 = vunpack.c.l.b16 %v1989
        %v2057 = vunpack.c.l.b16 %v1993
        %v2058 = vunpack.c.l.b16 %v1996
        %v2059 = vunpack.c.l.b16 %v2000
        %v2060 = vunpack.c.l.b16 %v2003
        %v2061 = vunpack.c.l.b16 %v2007
        %v2062 = vunpack.c.l.b16 %v2010
        %v2063 = vunpack.c.l.b16 %v2014
        %v2064 = vunpack.c.l.b16 %v2017
        %v2065 = vunpack.c.l.b16 %v2021
        %v2066 = vunpack.c.l.b16 %v2024
        %v2067 = vunpack.c.l.b16 %v2028
        %v2068 = vunpack.c.l.b16 %v2031
        %v2069 = vunpack.c.l.b16 %v2035
        %v2070 = vunpack.c.l.b16 %v2038
        %v2071 = vpack.c.b16 %v2040, %v2039
        %v2072 = vpack.c.b16 %v2042, %v2041
        %v2073 = vpack.c.b16 %v2044, %v2043
        %v2074 = vpack.c.b16 %v2046, %v2045
        %v2075 = vpack.c.b16 %v2048, %v2047
        %v2076 = vpack.c.b16 %v2050, %v2049
        %v2077 = vpack.c.b16 %v2052, %v2051
        %v2078 = vpack.c.b16 %v2054, %v2053
        %v2079 = vpack.c.b16 %v2056, %v2055
        %v2080 = vpack.c.b16 %v2058, %v2057
        %v2081 = vpack.c.b16 %v2060, %v2059
        %v2082 = vpack.c.b16 %v2062, %v2061
        %v2083 = vpack.c.b16 %v2064, %v2063
        %v2084 = vpack.c.b16 %v2066, %v2065
        %v2085 = vpack.c.b16 %v2068, %v2067
        %v2086 = vpack.c.b16 %v2070, %v2069
        %2087 = vrot.lane.b32.xlu0 %v2071, 8
        %v2088 = vpop.permute.xlu0 %2087
        %2089 = vrot.lane.b32.xlu0 %v2072, 8
        %v2090 = vpop.permute.xlu0 %2089
        %2091 = vrot.lane.b32.xlu0 %v2073, 8
        %v2092 = vpop.permute.xlu0 %2091
        %2093 = vrot.lane.b32.xlu0 %v2074, 8
        %v2094 = vpop.permute.xlu0 %2093
        %2095 = vrot.lane.b32.xlu0 %v2075, 8
        %v2096 = vpop.permute.xlu0 %2095
        %2097 = vrot.lane.b32.xlu0 %v2076, 8
        %v2098 = vpop.permute.xlu0 %2097
        %2099 = vrot.lane.b32.xlu0 %v2077, 8
        %v2100 = vpop.permute.xlu0 %2099
        %2101 = vrot.lane.b32.xlu0 %v2078, 8
        %v2102 = vpop.permute.xlu0 %2101
        %2103 = vrot.lane.b32.xlu0 %v2079, 8
        %v2104 = vpop.permute.xlu0 %2103
        %2105 = vrot.lane.b32.xlu0 %v2080, 8
        %v2106 = vpop.permute.xlu0 %2105
        %2107 = vrot.lane.b32.xlu0 %v2081, 8
        %v2108 = vpop.permute.xlu0 %2107
        %2109 = vrot.lane.b32.xlu0 %v2082, 8
        %v2110 = vpop.permute.xlu0 %2109
        %2111 = vrot.lane.b32.xlu0 %v2083, 8
        %v2112 = vpop.permute.xlu0 %2111
        %2113 = vrot.lane.b32.xlu0 %v2084, 8
        %v2114 = vpop.permute.xlu0 %2113
        %2115 = vrot.lane.b32.xlu0 %v2085, 8
        %v2116 = vpop.permute.xlu0 %2115
        %2117 = vrot.lane.b32.xlu0 %v2086, 8
        %v2118 = vpop.permute.xlu0 %2117
        %vm2135 = vcmask 97344
        %2136 = vst.msk [vmem:[#allocation5] sm:$0xff] %vm2135, %v2088
        %2137 = vst.msk [vmem:[#allocation5 + $0x8] sm:$0xff] %vm2135, %v2090
        %2138 = vst.msk [vmem:[#allocation5 + $0x10] sm:$0xff] %vm2135, %v2092
        %2139 = vst.msk [vmem:[#allocation5 + $0x18] sm:$0xff] %vm2135, %v2094
        %2140 = vst.msk [vmem:[#allocation5 + $0x20] sm:$0xff] %vm2135, %v2096
        %2141 = vst.msk [vmem:[#allocation5 + $0x28] sm:$0xff] %vm2135, %v2098
        %2142 = vst.msk [vmem:[#allocation5 + $0x30] sm:$0xff] %vm2135, %v2100
        %2143 = vst.msk [vmem:[#allocation5 + $0x38] sm:$0xff] %vm2135, %v2102
        %2144 = vst.msk [vmem:[#allocation5 + $0x40] sm:$0xff] %vm2135, %v2104
        %2145 = vst.msk [vmem:[#allocation5 + $0x48] sm:$0xff] %vm2135, %v2106
        %2146 = vst.msk [vmem:[#allocation5 + $0x50] sm:$0xff] %vm2135, %v2108
        %2147 = vst.msk [vmem:[#allocation5 + $0x58] sm:$0xff] %vm2135, %v2110
        %2148 = vst.msk [vmem:[#allocation5 + $0x60] sm:$0xff] %vm2135, %v2112
        %2149 = vst.msk [vmem:[#allocation5 + $0x68] sm:$0xff] %vm2135, %v2114
        %2150 = vst.msk [vmem:[#allocation5 + $0x70] sm:$0xff] %vm2135, %v2116
        %2151 = vst.msk [vmem:[#allocation5 + $0x78] sm:$0xff] %vm2135, %v2118
        %v2152 = vld [vmem:[%s1020] sm:$0xf]
        %v2153 = vld [vmem:[%s1020 + $0x4] sm:$0xf]
        %v2154 = vld [vmem:[%s1020 + $0xc] sm:$0xf]
        %v2155 = vld [vmem:[%s1020 + $0x10] sm:$0xf]
        %v2156 = vld [vmem:[%s1020 + $0x18] sm:$0xf]
        %v2157 = vld [vmem:[%s1020 + $0x1c] sm:$0xf]
        %v2158 = vld [vmem:[%s1020 + $0x24] sm:$0xf]
        %v2159 = vld [vmem:[%s1020 + $0x28] sm:$0xf]
        %v2160 = vld [vmem:[%s1020 + $0x30] sm:$0xf]
        %v2161 = vld [vmem:[%s1020 + $0x34] sm:$0xf]
        %v2162 = vld [vmem:[%s1020 + $0x3c] sm:$0xf]
        %v2163 = vld [vmem:[%s1020 + $0x40] sm:$0xf]
        %v2164 = vld [vmem:[%s1020 + $0x48] sm:$0xf]
        %v2165 = vld [vmem:[%s1020 + $0x4c] sm:$0xf]
        %v2166 = vld [vmem:[%s1020 + $0x54] sm:$0xf]
        %v2167 = vld [vmem:[%s1020 + $0x58] sm:$0xf]
        %v2168 = vld [vmem:[%s1020 + $0x60] sm:$0xf]
        %v2169 = vld [vmem:[%s1020 + $0x64] sm:$0xf]
        %v2170 = vld [vmem:[%s1020 + $0x6c] sm:$0xf]
        %v2171 = vld [vmem:[%s1020 + $0x70] sm:$0xf]
        %v2172 = vld [vmem:[%s1020 + $0x78] sm:$0xf]
        %v2173 = vld [vmem:[%s1020 + $0x7c] sm:$0xf]
        %v2174 = vld [vmem:[%s1020 + $0x84] sm:$0xf]
        %v2175 = vld [vmem:[%s1020 + $0x88] sm:$0xf]
        %v2176 = vld [vmem:[%s1020 + $0x90] sm:$0xf]
        %v2177 = vld [vmem:[%s1020 + $0x94] sm:$0xf]
        %v2178 = vld [vmem:[%s1020 + $0x9c] sm:$0xf]
        %v2179 = vld [vmem:[%s1020 + $0xa0] sm:$0xf]
        %v2180 = vld [vmem:[%s1020 + $0xa8] sm:$0xf]
        %v2181 = vld [vmem:[%s1020 + $0xac] sm:$0xf]
        %v2182 = vld [vmem:[%s1020 + $0xb4] sm:$0xf]
        %v2183 = vld [vmem:[%s1020 + $0xb8] sm:$0xf]
        %v2216 = vunpack.c.l.b16 %v2152
        %v2217 = vunpack.c.l.b16 %v2153
        %v2218 = vunpack.c.l.b16 %v2154
        %v2219 = vunpack.c.l.b16 %v2155
        %v2220 = vunpack.c.l.b16 %v2156
        %v2221 = vunpack.c.l.b16 %v2157
        %v2222 = vunpack.c.l.b16 %v2158
        %v2223 = vunpack.c.l.b16 %v2159
        %v2224 = vunpack.c.l.b16 %v2160
        %v2225 = vunpack.c.l.b16 %v2161
        %v2226 = vunpack.c.l.b16 %v2162
        %v2227 = vunpack.c.l.b16 %v2163
        %v2228 = vunpack.c.l.b16 %v2164
        %v2229 = vunpack.c.l.b16 %v2165
        %v2230 = vunpack.c.l.b16 %v2166
        %v2231 = vunpack.c.l.b16 %v2167
        %v2232 = vunpack.c.l.b16 %v2168
        %v2233 = vunpack.c.l.b16 %v2169
        %v2234 = vunpack.c.l.b16 %v2170
        %v2235 = vunpack.c.l.b16 %v2171
        %v2236 = vunpack.c.l.b16 %v2172
        %v2237 = vunpack.c.l.b16 %v2173
        %v2238 = vunpack.c.l.b16 %v2174
        %v2239 = vunpack.c.l.b16 %v2175
        %v2240 = vunpack.c.l.b16 %v2176
        %v2241 = vunpack.c.l.b16 %v2177
        %v2242 = vunpack.c.l.b16 %v2178
        %v2243 = vunpack.c.l.b16 %v2179
        %v2244 = vunpack.c.l.b16 %v2180
        %v2245 = vunpack.c.l.b16 %v2181
        %v2246 = vunpack.c.l.b16 %v2182
        %v2247 = vunpack.c.l.b16 %v2183
        %v2248 = vpack.c.b16 %v2217, %v2216
        %v2249 = vpack.c.b16 %v2219, %v2218
        %v2250 = vpack.c.b16 %v2221, %v2220
        %v2251 = vpack.c.b16 %v2223, %v2222
        %v2252 = vpack.c.b16 %v2225, %v2224
        %v2253 = vpack.c.b16 %v2227, %v2226
        %v2254 = vpack.c.b16 %v2229, %v2228
        %v2255 = vpack.c.b16 %v2231, %v2230
        %v2256 = vpack.c.b16 %v2233, %v2232
        %v2257 = vpack.c.b16 %v2235, %v2234
        %v2258 = vpack.c.b16 %v2237, %v2236
        %v2259 = vpack.c.b16 %v2239, %v2238
        %v2260 = vpack.c.b16 %v2241, %v2240
        %v2261 = vpack.c.b16 %v2243, %v2242
        %v2262 = vpack.c.b16 %v2245, %v2244
        %v2263 = vpack.c.b16 %v2247, %v2246
        %2264 = vrot.lane.b32.xlu0 %v2248, 12
        %v2265 = vpop.permute.xlu0 %2264
        %2266 = vrot.lane.b32.xlu0 %v2249, 12
        %v2267 = vpop.permute.xlu0 %2266
        %2268 = vrot.lane.b32.xlu0 %v2250, 12
        %v2269 = vpop.permute.xlu0 %2268
        %2270 = vrot.lane.b32.xlu0 %v2251, 12
        %v2271 = vpop.permute.xlu0 %2270
        %2272 = vrot.lane.b32.xlu0 %v2252, 12
        %v2273 = vpop.permute.xlu0 %2272
        %2274 = vrot.lane.b32.xlu0 %v2253, 12
        %v2275 = vpop.permute.xlu0 %2274
        %2276 = vrot.lane.b32.xlu0 %v2254, 12
        %v2277 = vpop.permute.xlu0 %2276
        %2278 = vrot.lane.b32.xlu0 %v2255, 12
        %v2279 = vpop.permute.xlu0 %2278
        %2280 = vrot.lane.b32.xlu0 %v2256, 12
        %v2281 = vpop.permute.xlu0 %2280
        %2282 = vrot.lane.b32.xlu0 %v2257, 12
        %v2283 = vpop.permute.xlu0 %2282
        %2284 = vrot.lane.b32.xlu0 %v2258, 12
        %v2285 = vpop.permute.xlu0 %2284
        %2286 = vrot.lane.b32.xlu0 %v2259, 12
        %v2287 = vpop.permute.xlu0 %2286
        %2288 = vrot.lane.b32.xlu0 %v2260, 12
        %v2289 = vpop.permute.xlu0 %2288
        %2290 = vrot.lane.b32.xlu0 %v2261, 12
        %v2291 = vpop.permute.xlu0 %2290
        %2292 = vrot.lane.b32.xlu0 %v2262, 12
        %v2293 = vpop.permute.xlu0 %2292
        %2294 = vrot.lane.b32.xlu0 %v2263, 12
        %v2295 = vpop.permute.xlu0 %2294
        %vm2312 = vcmask 130144
        %2313 = vst.msk [vmem:[#allocation5] sm:$0xff] %vm2312, %v2265
        %2314 = vst.msk [vmem:[#allocation5 + $0x8] sm:$0xff] %vm2312, %v2267
        %2315 = vst.msk [vmem:[#allocation5 + $0x10] sm:$0xff] %vm2312, %v2269
        %2316 = vst.msk [vmem:[#allocation5 + $0x18] sm:$0xff] %vm2312, %v2271
        %2317 = vst.msk [vmem:[#allocation5 + $0x20] sm:$0xff] %vm2312, %v2273
        %2318 = vst.msk [vmem:[#allocation5 + $0x28] sm:$0xff] %vm2312, %v2275
        %2319 = vst.msk [vmem:[#allocation5 + $0x30] sm:$0xff] %vm2312, %v2277
        %2320 = vst.msk [vmem:[#allocation5 + $0x38] sm:$0xff] %vm2312, %v2279
        %2321 = vst.msk [vmem:[#allocation5 + $0x40] sm:$0xff] %vm2312, %v2281
        %2322 = vst.msk [vmem:[#allocation5 + $0x48] sm:$0xff] %vm2312, %v2283
        %2323 = vst.msk [vmem:[#allocation5 + $0x50] sm:$0xff] %vm2312, %v2285
        %2324 = vst.msk [vmem:[#allocation5 + $0x58] sm:$0xff] %vm2312, %v2287
        %2325 = vst.msk [vmem:[#allocation5 + $0x60] sm:$0xff] %vm2312, %v2289
        %2326 = vst.msk [vmem:[#allocation5 + $0x68] sm:$0xff] %vm2312, %v2291
        %2327 = vst.msk [vmem:[#allocation5 + $0x70] sm:$0xff] %vm2312, %v2293
        %2328 = vst.msk [vmem:[#allocation5 + $0x78] sm:$0xff] %vm2312, %v2295
        %v2329 = vld [vmem:[%s1020] sm:$0xf]
        %v2330 = vld [vmem:[%s1020 + $0x4] sm:$0xf]
        %v2331 = vld [vmem:[%s1020 + $0x8] sm:$0x1]
        %v2332 = vld [vmem:[%s1020 + $0xc] sm:$0xf]
        %v2333 = vld [vmem:[%s1020 + $0x10] sm:$0xf]
        %v2334 = vld [vmem:[%s1020 + $0x14] sm:$0x1]
        %v2335 = vld [vmem:[%s1020 + $0x18] sm:$0xf]
        %v2336 = vld [vmem:[%s1020 + $0x1c] sm:$0xf]
        %v2337 = vld [vmem:[%s1020 + $0x20] sm:$0x1]
        %v2338 = vld [vmem:[%s1020 + $0x24] sm:$0xf]
        %v2339 = vld [vmem:[%s1020 + $0x28] sm:$0xf]
        %v2340 = vld [vmem:[%s1020 + $0x2c] sm:$0x1]
        %v2341 = vld [vmem:[%s1020 + $0x30] sm:$0xf]
        %v2342 = vld [vmem:[%s1020 + $0x34] sm:$0xf]
        %v2343 = vld [vmem:[%s1020 + $0x38] sm:$0x1]
        %v2344 = vld [vmem:[%s1020 + $0x3c] sm:$0xf]
        %v2345 = vld [vmem:[%s1020 + $0x40] sm:$0xf]
        %v2346 = vld [vmem:[%s1020 + $0x44] sm:$0x1]
        %v2347 = vld [vmem:[%s1020 + $0x48] sm:$0xf]
        %v2348 = vld [vmem:[%s1020 + $0x4c] sm:$0xf]
        %v2349 = vld [vmem:[%s1020 + $0x50] sm:$0x1]
        %v2350 = vld [vmem:[%s1020 + $0x54] sm:$0xf]
        %v2351 = vld [vmem:[%s1020 + $0x58] sm:$0xf]
        %v2352 = vld [vmem:[%s1020 + $0x5c] sm:$0x1]
        %v2353 = vld [vmem:[%s1020 + $0x60] sm:$0xf]
        %v2354 = vld [vmem:[%s1020 + $0x64] sm:$0xf]
        %v2355 = vld [vmem:[%s1020 + $0x68] sm:$0x1]
        %v2356 = vld [vmem:[%s1020 + $0x6c] sm:$0xf]
        %v2357 = vld [vmem:[%s1020 + $0x70] sm:$0xf]
        %v2358 = vld [vmem:[%s1020 + $0x74] sm:$0x1]
        %v2359 = vld [vmem:[%s1020 + $0x78] sm:$0xf]
        %v2360 = vld [vmem:[%s1020 + $0x7c] sm:$0xf]
        %v2361 = vld [vmem:[%s1020 + $0x80] sm:$0x1]
        %v2362 = vld [vmem:[%s1020 + $0x84] sm:$0xf]
        %v2363 = vld [vmem:[%s1020 + $0x88] sm:$0xf]
        %v2364 = vld [vmem:[%s1020 + $0x8c] sm:$0x1]
        %v2365 = vld [vmem:[%s1020 + $0x90] sm:$0xf]
        %v2366 = vld [vmem:[%s1020 + $0x94] sm:$0xf]
        %v2367 = vld [vmem:[%s1020 + $0x98] sm:$0x1]
        %v2368 = vld [vmem:[%s1020 + $0x9c] sm:$0xf]
        %v2369 = vld [vmem:[%s1020 + $0xa0] sm:$0xf]
        %v2370 = vld [vmem:[%s1020 + $0xa4] sm:$0x1]
        %v2371 = vld [vmem:[%s1020 + $0xa8] sm:$0xf]
        %v2372 = vld [vmem:[%s1020 + $0xac] sm:$0xf]
        %v2373 = vld [vmem:[%s1020 + $0xb0] sm:$0x1]
        %v2374 = vld [vmem:[%s1020 + $0xb4] sm:$0xf]
        %v2375 = vld [vmem:[%s1020 + $0xb8] sm:$0xf]
        %v2376 = vld [vmem:[%s1020 + $0xbc] sm:$0x1]
        %v2378 = vshrl.u32 %v2329, 16
        %v2380 = vrot.slane %v2378, 4
        %v2381 = vshll.u32 %v2329, 16
        %v2383 = vrot.slane %v2381, 5
        %v2384 = vor.u32 %v2380, %v2383
        %v2385 = vrot.slane %v2384, 4
        %v2387 = vshll.u32 %v2330, 16
        %v2389 = vrot.slane %v2387, 5
        %v2390 = vsel %vm1330, %v2385, %v2389
        %v2391 = vshrl.u32 %v2330, 16
        %v2393 = vrot.slane %v2391, 4
        %v2394 = vor.u32 %v2393, %v2389
        %v2395 = vrot.slane %v2394, 4
        %v2397 = vshll.u32 %v2331, 16
        %v2399 = vrot.slane %v2397, 5
        %v2400 = vsel %vm1330, %v2395, %v2399
        %v2402 = vshrl.u32 %v2332, 16
        %v2404 = vrot.slane %v2402, 4
        %v2405 = vshll.u32 %v2332, 16
        %v2407 = vrot.slane %v2405, 5
        %v2408 = vor.u32 %v2404, %v2407
        %v2409 = vrot.slane %v2408, 4
        %v2411 = vshll.u32 %v2333, 16
        %v2413 = vrot.slane %v2411, 5
        %v2414 = vsel %vm1330, %v2409, %v2413
        %v2415 = vshrl.u32 %v2333, 16
        %v2417 = vrot.slane %v2415, 4
        %v2418 = vor.u32 %v2417, %v2413
        %v2419 = vrot.slane %v2418, 4
        %v2421 = vshll.u32 %v2334, 16
        %v2423 = vrot.slane %v2421, 5
        %v2424 = vsel %vm1330, %v2419, %v2423
        %v2426 = vshrl.u32 %v2335, 16
        %v2428 = vrot.slane %v2426, 4
        %v2429 = vshll.u32 %v2335, 16
        %v2431 = vrot.slane %v2429, 5
        %v2432 = vor.u32 %v2428, %v2431
        %v2433 = vrot.slane %v2432, 4
        %v2435 = vshll.u32 %v2336, 16
        %v2437 = vrot.slane %v2435, 5
        %v2438 = vsel %vm1330, %v2433, %v2437
        %v2439 = vshrl.u32 %v2336, 16
        %v2441 = vrot.slane %v2439, 4
        %v2442 = vor.u32 %v2441, %v2437
        %v2443 = vrot.slane %v2442, 4
        %v2445 = vshll.u32 %v2337, 16
        %v2447 = vrot.slane %v2445, 5
        %v2448 = vsel %vm1330, %v2443, %v2447
        %v2450 = vshrl.u32 %v2338, 16
        %v2452 = vrot.slane %v2450, 4
        %v2453 = vshll.u32 %v2338, 16
        %v2455 = vrot.slane %v2453, 5
        %v2456 = vor.u32 %v2452, %v2455
        %v2457 = vrot.slane %v2456, 4
        %v2459 = vshll.u32 %v2339, 16
        %v2461 = vrot.slane %v2459, 5
        %v2462 = vsel %vm1330, %v2457, %v2461
        %v2463 = vshrl.u32 %v2339, 16
        %v2465 = vrot.slane %v2463, 4
        %v2466 = vor.u32 %v2465, %v2461
        %v2467 = vrot.slane %v2466, 4
        %v2469 = vshll.u32 %v2340, 16
        %v2471 = vrot.slane %v2469, 5
        %v2472 = vsel %vm1330, %v2467, %v2471
        %v2474 = vshrl.u32 %v2341, 16
        %v2476 = vrot.slane %v2474, 4
        %v2477 = vshll.u32 %v2341, 16
        %v2479 = vrot.slane %v2477, 5
        %v2480 = vor.u32 %v2476, %v2479
        %v2481 = vrot.slane %v2480, 4
        %v2483 = vshll.u32 %v2342, 16
        %v2485 = vrot.slane %v2483, 5
        %v2486 = vsel %vm1330, %v2481, %v2485
        %v2487 = vshrl.u32 %v2342, 16
        %v2489 = vrot.slane %v2487, 4
        %v2490 = vor.u32 %v2489, %v2485
        %v2491 = vrot.slane %v2490, 4
        %v2493 = vshll.u32 %v2343, 16
        %v2495 = vrot.slane %v2493, 5
        %v2496 = vsel %vm1330, %v2491, %v2495
        %v2498 = vshrl.u32 %v2344, 16
        %v2500 = vrot.slane %v2498, 4
        %v2501 = vshll.u32 %v2344, 16
        %v2503 = vrot.slane %v2501, 5
        %v2504 = vor.u32 %v2500, %v2503
        %v2505 = vrot.slane %v2504, 4
        %v2507 = vshll.u32 %v2345, 16
        %v2509 = vrot.slane %v2507, 5
        %v2510 = vsel %vm1330, %v2505, %v2509
        %v2511 = vshrl.u32 %v2345, 16
        %v2513 = vrot.slane %v2511, 4
        %v2514 = vor.u32 %v2513, %v2509
        %v2515 = vrot.slane %v2514, 4
        %v2517 = vshll.u32 %v2346, 16
        %v2519 = vrot.slane %v2517, 5
        %v2520 = vsel %vm1330, %v2515, %v2519
        %v2522 = vshrl.u32 %v2347, 16
        %v2524 = vrot.slane %v2522, 4
        %v2525 = vshll.u32 %v2347, 16
        %v2527 = vrot.slane %v2525, 5
        %v2528 = vor.u32 %v2524, %v2527
        %v2529 = vrot.slane %v2528, 4
        %v2531 = vshll.u32 %v2348, 16
        %v2533 = vrot.slane %v2531, 5
        %v2534 = vsel %vm1330, %v2529, %v2533
        %v2535 = vshrl.u32 %v2348, 16
        %v2537 = vrot.slane %v2535, 4
        %v2538 = vor.u32 %v2537, %v2533
        %v2539 = vrot.slane %v2538, 4
        %v2541 = vshll.u32 %v2349, 16
        %v2543 = vrot.slane %v2541, 5
        %v2544 = vsel %vm1330, %v2539, %v2543
        %v2546 = vshrl.u32 %v2350, 16
        %v2548 = vrot.slane %v2546, 4
        %v2549 = vshll.u32 %v2350, 16
        %v2551 = vrot.slane %v2549, 5
        %v2552 = vor.u32 %v2548, %v2551
        %v2553 = vrot.slane %v2552, 4
        %v2555 = vshll.u32 %v2351, 16
        %v2557 = vrot.slane %v2555, 5
        %v2558 = vsel %vm1330, %v2553, %v2557
        %v2559 = vshrl.u32 %v2351, 16
        %v2561 = vrot.slane %v2559, 4
        %v2562 = vor.u32 %v2561, %v2557
        %v2563 = vrot.slane %v2562, 4
        %v2565 = vshll.u32 %v2352, 16
        %v2567 = vrot.slane %v2565, 5
        %v2568 = vsel %vm1330, %v2563, %v2567
        %v2570 = vshrl.u32 %v2353, 16
        %v2572 = vrot.slane %v2570, 4
        %v2573 = vshll.u32 %v2353, 16
        %v2575 = vrot.slane %v2573, 5
        %v2576 = vor.u32 %v2572, %v2575
        %v2577 = vrot.slane %v2576, 4
        %v2579 = vshll.u32 %v2354, 16
        %v2581 = vrot.slane %v2579, 5
        %v2582 = vsel %vm1330, %v2577, %v2581
        %v2583 = vshrl.u32 %v2354, 16
        %v2585 = vrot.slane %v2583, 4
        %v2586 = vor.u32 %v2585, %v2581
        %v2587 = vrot.slane %v2586, 4
        %v2589 = vshll.u32 %v2355, 16
        %v2591 = vrot.slane %v2589, 5
        %v2592 = vsel %vm1330, %v2587, %v2591
        %v2594 = vshrl.u32 %v2356, 16
        %v2596 = vrot.slane %v2594, 4
        %v2597 = vshll.u32 %v2356, 16
        %v2599 = vrot.slane %v2597, 5
        %v2600 = vor.u32 %v2596, %v2599
        %v2601 = vrot.slane %v2600, 4
        %v2603 = vshll.u32 %v2357, 16
        %v2605 = vrot.slane %v2603, 5
        %v2606 = vsel %vm1330, %v2601, %v2605
        %v2607 = vshrl.u32 %v2357, 16
        %v2609 = vrot.slane %v2607, 4
        %v2610 = vor.u32 %v2609, %v2605
        %v2611 = vrot.slane %v2610, 4
        %v2613 = vshll.u32 %v2358, 16
        %v2615 = vrot.slane %v2613, 5
        %v2616 = vsel %vm1330, %v2611, %v2615
        %v2618 = vshrl.u32 %v2359, 16
        %v2620 = vrot.slane %v2618, 4
        %v2621 = vshll.u32 %v2359, 16
        %v2623 = vrot.slane %v2621, 5
        %v2624 = vor.u32 %v2620, %v2623
        %v2625 = vrot.slane %v2624, 4
        %v2627 = vshll.u32 %v2360, 16
        %v2629 = vrot.slane %v2627, 5
        %v2630 = vsel %vm1330, %v2625, %v2629
        %v2631 = vshrl.u32 %v2360, 16
        %v2633 = vrot.slane %v2631, 4
        %v2634 = vor.u32 %v2633, %v2629
        %v2635 = vrot.slane %v2634, 4
        %v2637 = vshll.u32 %v2361, 16
        %v2639 = vrot.slane %v2637, 5
        %v2640 = vsel %vm1330, %v2635, %v2639
        %v2642 = vshrl.u32 %v2362, 16
        %v2644 = vrot.slane %v2642, 4
        %v2645 = vshll.u32 %v2362, 16
        %v2647 = vrot.slane %v2645, 5
        %v2648 = vor.u32 %v2644, %v2647
        %v2649 = vrot.slane %v2648, 4
        %v2651 = vshll.u32 %v2363, 16
        %v2653 = vrot.slane %v2651, 5
        %v2654 = vsel %vm1330, %v2649, %v2653
        %v2655 = vshrl.u32 %v2363, 16
        %v2657 = vrot.slane %v2655, 4
        %v2658 = vor.u32 %v2657, %v2653
        %v2659 = vrot.slane %v2658, 4
        %v2661 = vshll.u32 %v2364, 16
        %v2663 = vrot.slane %v2661, 5
        %v2664 = vsel %vm1330, %v2659, %v2663
        %v2666 = vshrl.u32 %v2365, 16
        %v2668 = vrot.slane %v2666, 4
        %v2669 = vshll.u32 %v2365, 16
        %v2671 = vrot.slane %v2669, 5
        %v2672 = vor.u32 %v2668, %v2671
        %v2673 = vrot.slane %v2672, 4
        %v2675 = vshll.u32 %v2366, 16
        %v2677 = vrot.slane %v2675, 5
        %v2678 = vsel %vm1330, %v2673, %v2677
        %v2679 = vshrl.u32 %v2366, 16
        %v2681 = vrot.slane %v2679, 4
        %v2682 = vor.u32 %v2681, %v2677
        %v2683 = vrot.slane %v2682, 4
        %v2685 = vshll.u32 %v2367, 16
        %v2687 = vrot.slane %v2685, 5
        %v2688 = vsel %vm1330, %v2683, %v2687
        %v2690 = vshrl.u32 %v2368, 16
        %v2692 = vrot.slane %v2690, 4
        %v2693 = vshll.u32 %v2368, 16
        %v2695 = vrot.slane %v2693, 5
        %v2696 = vor.u32 %v2692, %v2695
        %v2697 = vrot.slane %v2696, 4
        %v2699 = vshll.u32 %v2369, 16
        %v2701 = vrot.slane %v2699, 5
        %v2702 = vsel %vm1330, %v2697, %v2701
        %v2703 = vshrl.u32 %v2369, 16
        %v2705 = vrot.slane %v2703, 4
        %v2706 = vor.u32 %v2705, %v2701
        %v2707 = vrot.slane %v2706, 4
        %v2709 = vshll.u32 %v2370, 16
        %v2711 = vrot.slane %v2709, 5
        %v2712 = vsel %vm1330, %v2707, %v2711
        %v2714 = vshrl.u32 %v2371, 16
        %v2716 = vrot.slane %v2714, 4
        %v2717 = vshll.u32 %v2371, 16
        %v2719 = vrot.slane %v2717, 5
        %v2720 = vor.u32 %v2716, %v2719
        %v2721 = vrot.slane %v2720, 4
        %v2723 = vshll.u32 %v2372, 16
        %v2725 = vrot.slane %v2723, 5
        %v2726 = vsel %vm1330, %v2721, %v2725
        %v2727 = vshrl.u32 %v2372, 16
        %v2729 = vrot.slane %v2727, 4
        %v2730 = vor.u32 %v2729, %v2725
        %v2731 = vrot.slane %v2730, 4
        %v2733 = vshll.u32 %v2373, 16
        %v2735 = vrot.slane %v2733, 5
        %v2736 = vsel %vm1330, %v2731, %v2735
        %v2738 = vshrl.u32 %v2374, 16
        %v2740 = vrot.slane %v2738, 4
        %v2741 = vshll.u32 %v2374, 16
        %v2743 = vrot.slane %v2741, 5
        %v2744 = vor.u32 %v2740, %v2743
        %v2745 = vrot.slane %v2744, 4
        %v2747 = vshll.u32 %v2375, 16
        %v2749 = vrot.slane %v2747, 5
        %v2750 = vsel %vm1330, %v2745, %v2749
        %v2751 = vshrl.u32 %v2375, 16
        %v2753 = vrot.slane %v2751, 4
        %v2754 = vor.u32 %v2753, %v2749
        %v2755 = vrot.slane %v2754, 4
        %v2757 = vshll.u32 %v2376, 16
        %v2759 = vrot.slane %v2757, 5
        %v2760 = vsel %vm1330, %v2755, %v2759
        %v2761 = vunpack.c.l.b16 %v2390
        %v2762 = vunpack.c.l.b16 %v2400
        %v2763 = vunpack.c.l.b16 %v2414
        %v2764 = vunpack.c.l.b16 %v2424
        %v2765 = vunpack.c.l.b16 %v2438
        %v2766 = vunpack.c.l.b16 %v2448
        %v2767 = vunpack.c.l.b16 %v2462
        %v2768 = vunpack.c.l.b16 %v2472
        %v2769 = vunpack.c.l.b16 %v2486
        %v2770 = vunpack.c.l.b16 %v2496
        %v2771 = vunpack.c.l.b16 %v2510
        %v2772 = vunpack.c.l.b16 %v2520
        %v2773 = vunpack.c.l.b16 %v2534
        %v2774 = vunpack.c.l.b16 %v2544
        %v2775 = vunpack.c.l.b16 %v2558
        %v2776 = vunpack.c.l.b16 %v2568
        %v2777 = vunpack.c.l.b16 %v2582
        %v2778 = vunpack.c.l.b16 %v2592
        %v2779 = vunpack.c.l.b16 %v2606
        %v2780 = vunpack.c.l.b16 %v2616
        %v2781 = vunpack.c.l.b16 %v2630
        %v2782 = vunpack.c.l.b16 %v2640
        %v2783 = vunpack.c.l.b16 %v2654
        %v2784 = vunpack.c.l.b16 %v2664
        %v2785 = vunpack.c.l.b16 %v2678
        %v2786 = vunpack.c.l.b16 %v2688
        %v2787 = vunpack.c.l.b16 %v2702
        %v2788 = vunpack.c.l.b16 %v2712
        %v2789 = vunpack.c.l.b16 %v2726
        %v2790 = vunpack.c.l.b16 %v2736
        %v2791 = vunpack.c.l.b16 %v2750
        %v2792 = vunpack.c.l.b16 %v2760
        %v2793 = vpack.c.b16 %v2762, %v2761
        %v2794 = vpack.c.b16 %v2764, %v2763
        %v2795 = vpack.c.b16 %v2766, %v2765
        %v2796 = vpack.c.b16 %v2768, %v2767
        %v2797 = vpack.c.b16 %v2770, %v2769
        %v2798 = vpack.c.b16 %v2772, %v2771
        %v2799 = vpack.c.b16 %v2774, %v2773
        %v2800 = vpack.c.b16 %v2776, %v2775
        %v2801 = vpack.c.b16 %v2778, %v2777
        %v2802 = vpack.c.b16 %v2780, %v2779
        %v2803 = vpack.c.b16 %v2782, %v2781
        %v2804 = vpack.c.b16 %v2784, %v2783
        %v2805 = vpack.c.b16 %v2786, %v2785
        %v2806 = vpack.c.b16 %v2788, %v2787
        %v2807 = vpack.c.b16 %v2790, %v2789
        %v2808 = vpack.c.b16 %v2792, %v2791
        %2809 = vrot.lane.b32.xlu0 %v2793, 16
        %v2810 = vpop.permute.xlu0 %2809
        %2811 = vrot.lane.b32.xlu0 %v2794, 16
        %v2812 = vpop.permute.xlu0 %2811
        %2813 = vrot.lane.b32.xlu0 %v2795, 16
        %v2814 = vpop.permute.xlu0 %2813
        %2815 = vrot.lane.b32.xlu0 %v2796, 16
        %v2816 = vpop.permute.xlu0 %2815
        %2817 = vrot.lane.b32.xlu0 %v2797, 16
        %v2818 = vpop.permute.xlu0 %2817
        %2819 = vrot.lane.b32.xlu0 %v2798, 16
        %v2820 = vpop.permute.xlu0 %2819
        %2821 = vrot.lane.b32.xlu0 %v2799, 16
        %v2822 = vpop.permute.xlu0 %2821
        %2823 = vrot.lane.b32.xlu0 %v2800, 16
        %v2824 = vpop.permute.xlu0 %2823
        %2825 = vrot.lane.b32.xlu0 %v2801, 16
        %v2826 = vpop.permute.xlu0 %2825
        %2827 = vrot.lane.b32.xlu0 %v2802, 16
        %v2828 = vpop.permute.xlu0 %2827
        %2829 = vrot.lane.b32.xlu0 %v2803, 16
        %v2830 = vpop.permute.xlu0 %2829
        %2831 = vrot.lane.b32.xlu0 %v2804, 16
        %v2832 = vpop.permute.xlu0 %2831
        %2833 = vrot.lane.b32.xlu0 %v2805, 16
        %v2834 = vpop.permute.xlu0 %2833
        %2835 = vrot.lane.b32.xlu0 %v2806, 16
        %v2836 = vpop.permute.xlu0 %2835
        %2837 = vrot.lane.b32.xlu0 %v2807, 16
        %v2838 = vpop.permute.xlu0 %2837
        %2839 = vrot.lane.b32.xlu0 %v2808, 16
        %v2840 = vpop.permute.xlu0 %2839
        %vm2857 = vcmask 162944
        %2858 = vst.msk [vmem:[#allocation5] sm:$0xff] %vm2857, %v2810
        %2859 = vst.msk [vmem:[#allocation5 + $0x8] sm:$0xff] %vm2857, %v2812
        %2860 = vst.msk [vmem:[#allocation5 + $0x10] sm:$0xff] %vm2857, %v2814
        %2861 = vst.msk [vmem:[#allocation5 + $0x18] sm:$0xff] %vm2857, %v2816
        %2862 = vst.msk [vmem:[#allocation5 + $0x20] sm:$0xff] %vm2857, %v2818
        %2863 = vst.msk [vmem:[#allocation5 + $0x28] sm:$0xff] %vm2857, %v2820
        %2864 = vst.msk [vmem:[#allocation5 + $0x30] sm:$0xff] %vm2857, %v2822
        %2865 = vst.msk [vmem:[#allocation5 + $0x38] sm:$0xff] %vm2857, %v2824
        %2866 = vst.msk [vmem:[#allocation5 + $0x40] sm:$0xff] %vm2857, %v2826
        %2867 = vst.msk [vmem:[#allocation5 + $0x48] sm:$0xff] %vm2857, %v2828
        %2868 = vst.msk [vmem:[#allocation5 + $0x50] sm:$0xff] %vm2857, %v2830
        %2869 = vst.msk [vmem:[#allocation5 + $0x58] sm:$0xff] %vm2857, %v2832
        %2870 = vst.msk [vmem:[#allocation5 + $0x60] sm:$0xff] %vm2857, %v2834
        %2871 = vst.msk [vmem:[#allocation5 + $0x68] sm:$0xff] %vm2857, %v2836
        %2872 = vst.msk [vmem:[#allocation5 + $0x70] sm:$0xff] %vm2857, %v2838
        %2873 = vst.msk [vmem:[#allocation5 + $0x78] sm:$0xff] %vm2857, %v2840
        %v2874 = vld [vmem:[%s1020] sm:$0xe]
        %v2875 = vld [vmem:[%s1020 + $0x4] sm:$0xf]
        %v2876 = vld [vmem:[%s1020 + $0x8] sm:$0x1]
        %v2877 = vld [vmem:[%s1020 + $0xc] sm:$0xe]
        %v2878 = vld [vmem:[%s1020 + $0x10] sm:$0xf]
        %v2879 = vld [vmem:[%s1020 + $0x14] sm:$0x1]
        %v2880 = vld [vmem:[%s1020 + $0x18] sm:$0xe]
        %v2881 = vld [vmem:[%s1020 + $0x1c] sm:$0xf]
        %v2882 = vld [vmem:[%s1020 + $0x20] sm:$0x1]
        %v2883 = vld [vmem:[%s1020 + $0x24] sm:$0xe]
        %v2884 = vld [vmem:[%s1020 + $0x28] sm:$0xf]
        %v2885 = vld [vmem:[%s1020 + $0x2c] sm:$0x1]
        %v2886 = vld [vmem:[%s1020 + $0x30] sm:$0xe]
        %v2887 = vld [vmem:[%s1020 + $0x34] sm:$0xf]
        %v2888 = vld [vmem:[%s1020 + $0x38] sm:$0x1]
        %v2889 = vld [vmem:[%s1020 + $0x3c] sm:$0xe]
        %v2890 = vld [vmem:[%s1020 + $0x40] sm:$0xf]
        %v2891 = vld [vmem:[%s1020 + $0x44] sm:$0x1]
        %v2892 = vld [vmem:[%s1020 + $0x48] sm:$0xe]
        %v2893 = vld [vmem:[%s1020 + $0x4c] sm:$0xf]
        %v2894 = vld [vmem:[%s1020 + $0x50] sm:$0x1]
        %v2895 = vld [vmem:[%s1020 + $0x54] sm:$0xe]
        %v2896 = vld [vmem:[%s1020 + $0x58] sm:$0xf]
        %v2897 = vld [vmem:[%s1020 + $0x5c] sm:$0x1]
        %v2898 = vld [vmem:[%s1020 + $0x60] sm:$0xe]
        %v2899 = vld [vmem:[%s1020 + $0x64] sm:$0xf]
        %v2900 = vld [vmem:[%s1020 + $0x68] sm:$0x1]
        %v2901 = vld [vmem:[%s1020 + $0x6c] sm:$0xe]
        %v2902 = vld [vmem:[%s1020 + $0x70] sm:$0xf]
        %v2903 = vld [vmem:[%s1020 + $0x74] sm:$0x1]
        %v2904 = vld [vmem:[%s1020 + $0x78] sm:$0xe]
        %v2905 = vld [vmem:[%s1020 + $0x7c] sm:$0xf]
        %v2906 = vld [vmem:[%s1020 + $0x80] sm:$0x1]
        %v2907 = vld [vmem:[%s1020 + $0x84] sm:$0xe]
        %v2908 = vld [vmem:[%s1020 + $0x88] sm:$0xf]
        %v2909 = vld [vmem:[%s1020 + $0x8c] sm:$0x1]
        %v2910 = vld [vmem:[%s1020 + $0x90] sm:$0xe]
        %v2911 = vld [vmem:[%s1020 + $0x94] sm:$0xf]
        %v2912 = vld [vmem:[%s1020 + $0x98] sm:$0x1]
        %v2913 = vld [vmem:[%s1020 + $0x9c] sm:$0xe]
        %v2914 = vld [vmem:[%s1020 + $0xa0] sm:$0xf]
        %v2915 = vld [vmem:[%s1020 + $0xa4] sm:$0x1]
        %v2916 = vld [vmem:[%s1020 + $0xa8] sm:$0xe]
        %v2917 = vld [vmem:[%s1020 + $0xac] sm:$0xf]
        %v2918 = vld [vmem:[%s1020 + $0xb0] sm:$0x1]
        %v2919 = vld [vmem:[%s1020 + $0xb4] sm:$0xe]
        %v2920 = vld [vmem:[%s1020 + $0xb8] sm:$0xf]
        %v2921 = vld [vmem:[%s1020 + $0xbc] sm:$0x1]
        %v2970 = vrot.slane %v2874, 5
        %v2971 = vrot.slane %v2970, 4
        %v2972 = vrot.slane %v2875, 5
        %v2973 = vsel %vm1926, %v2971, %v2972
        %v2974 = vrot.slane %v2972, 4
        %v2975 = vrot.slane %v2876, 5
        %v2976 = vsel %vm1926, %v2974, %v2975
        %v2977 = vrot.slane %v2877, 5
        %v2978 = vrot.slane %v2977, 4
        %v2979 = vrot.slane %v2878, 5
        %v2980 = vsel %vm1926, %v2978, %v2979
        %v2981 = vrot.slane %v2979, 4
        %v2982 = vrot.slane %v2879, 5
        %v2983 = vsel %vm1926, %v2981, %v2982
        %v2984 = vrot.slane %v2880, 5
        %v2985 = vrot.slane %v2984, 4
        %v2986 = vrot.slane %v2881, 5
        %v2987 = vsel %vm1926, %v2985, %v2986
        %v2988 = vrot.slane %v2986, 4
        %v2989 = vrot.slane %v2882, 5
        %v2990 = vsel %vm1926, %v2988, %v2989
        %v2991 = vrot.slane %v2883, 5
        %v2992 = vrot.slane %v2991, 4
        %v2993 = vrot.slane %v2884, 5
        %v2994 = vsel %vm1926, %v2992, %v2993
        %v2995 = vrot.slane %v2993, 4
        %v2996 = vrot.slane %v2885, 5
        %v2997 = vsel %vm1926, %v2995, %v2996
        %v2998 = vrot.slane %v2886, 5
        %v2999 = vrot.slane %v2998, 4
        %v3000 = vrot.slane %v2887, 5
        %v3001 = vsel %vm1926, %v2999, %v3000
        %v3002 = vrot.slane %v3000, 4
        %v3003 = vrot.slane %v2888, 5
        %v3004 = vsel %vm1926, %v3002, %v3003
        %v3005 = vrot.slane %v2889, 5
        %v3006 = vrot.slane %v3005, 4
        %v3007 = vrot.slane %v2890, 5
        %v3008 = vsel %vm1926, %v3006, %v3007
        %v3009 = vrot.slane %v3007, 4
        %v3010 = vrot.slane %v2891, 5
        %v3011 = vsel %vm1926, %v3009, %v3010
        %v3012 = vrot.slane %v2892, 5
        %v3013 = vrot.slane %v3012, 4
        %v3014 = vrot.slane %v2893, 5
        %v3015 = vsel %vm1926, %v3013, %v3014
        %v3016 = vrot.slane %v3014, 4
        %v3017 = vrot.slane %v2894, 5
        %v3018 = vsel %vm1926, %v3016, %v3017
        %v3019 = vrot.slane %v2895, 5
        %v3020 = vrot.slane %v3019, 4
        %v3021 = vrot.slane %v2896, 5
        %v3022 = vsel %vm1926, %v3020, %v3021
        %v3023 = vrot.slane %v3021, 4
        %v3024 = vrot.slane %v2897, 5
        %v3025 = vsel %vm1926, %v3023, %v3024
        %v3026 = vrot.slane %v2898, 5
        %v3027 = vrot.slane %v3026, 4
        %v3028 = vrot.slane %v2899, 5
        %v3029 = vsel %vm1926, %v3027, %v3028
        %v3030 = vrot.slane %v3028, 4
        %v3031 = vrot.slane %v2900, 5
        %v3032 = vsel %vm1926, %v3030, %v3031
        %v3033 = vrot.slane %v2901, 5
        %v3034 = vrot.slane %v3033, 4
        %v3035 = vrot.slane %v2902, 5
        %v3036 = vsel %vm1926, %v3034, %v3035
        %v3037 = vrot.slane %v3035, 4
        %v3038 = vrot.slane %v2903, 5
        %v3039 = vsel %vm1926, %v3037, %v3038
        %v3040 = vrot.slane %v2904, 5
        %v3041 = vrot.slane %v3040, 4
        %v3042 = vrot.slane %v2905, 5
        %v3043 = vsel %vm1926, %v3041, %v3042
        %v3044 = vrot.slane %v3042, 4
        %v3045 = vrot.slane %v2906, 5
        %v3046 = vsel %vm1926, %v3044, %v3045
        %v3047 = vrot.slane %v2907, 5
        %v3048 = vrot.slane %v3047, 4
        %v3049 = vrot.slane %v2908, 5
        %v3050 = vsel %vm1926, %v3048, %v3049
        %v3051 = vrot.slane %v3049, 4
        %v3052 = vrot.slane %v2909, 5
        %v3053 = vsel %vm1926, %v3051, %v3052
        %v3054 = vrot.slane %v2910, 5
        %v3055 = vrot.slane %v3054, 4
        %v3056 = vrot.slane %v2911, 5
        %v3057 = vsel %vm1926, %v3055, %v3056
        %v3058 = vrot.slane %v3056, 4
        %v3059 = vrot.slane %v2912, 5
        %v3060 = vsel %vm1926, %v3058, %v3059
        %v3061 = vrot.slane %v2913, 5
        %v3062 = vrot.slane %v3061, 4
        %v3063 = vrot.slane %v2914, 5
        %v3064 = vsel %vm1926, %v3062, %v3063
        %v3065 = vrot.slane %v3063, 4
        %v3066 = vrot.slane %v2915, 5
        %v3067 = vsel %vm1926, %v3065, %v3066
        %v3068 = vrot.slane %v2916, 5
        %v3069 = vrot.slane %v3068, 4
        %v3070 = vrot.slane %v2917, 5
        %v3071 = vsel %vm1926, %v3069, %v3070
        %v3072 = vrot.slane %v3070, 4
        %v3073 = vrot.slane %v2918, 5
        %v3074 = vsel %vm1926, %v3072, %v3073
        %v3075 = vrot.slane %v2919, 5
        %v3076 = vrot.slane %v3075, 4
        %v3077 = vrot.slane %v2920, 5
        %v3078 = vsel %vm1926, %v3076, %v3077
        %v3079 = vrot.slane %v3077, 4
        %v3080 = vrot.slane %v2921, 5
        %v3081 = vsel %vm1926, %v3079, %v3080
        %v3082 = vunpack.c.l.b16 %v2973
        %v3083 = vunpack.c.l.b16 %v2976
        %v3084 = vunpack.c.l.b16 %v2980
        %v3085 = vunpack.c.l.b16 %v2983
        %v3086 = vunpack.c.l.b16 %v2987
        %v3087 = vunpack.c.l.b16 %v2990
        %v3088 = vunpack.c.l.b16 %v2994
        %v3089 = vunpack.c.l.b16 %v2997
        %v3090 = vunpack.c.l.b16 %v3001
        %v3091 = vunpack.c.l.b16 %v3004
        %v3092 = vunpack.c.l.b16 %v3008
        %v3093 = vunpack.c.l.b16 %v3011
        %v3094 = vunpack.c.l.b16 %v3015
        %v3095 = vunpack.c.l.b16 %v3018
        %v3096 = vunpack.c.l.b16 %v3022
        %v3097 = vunpack.c.l.b16 %v3025
        %v3098 = vunpack.c.l.b16 %v3029
        %v3099 = vunpack.c.l.b16 %v3032
        %v3100 = vunpack.c.l.b16 %v3036
        %v3101 = vunpack.c.l.b16 %v3039
        %v3102 = vunpack.c.l.b16 %v3043
        %v3103 = vunpack.c.l.b16 %v3046
        %v3104 = vunpack.c.l.b16 %v3050
        %v3105 = vunpack.c.l.b16 %v3053
        %v3106 = vunpack.c.l.b16 %v3057
        %v3107 = vunpack.c.l.b16 %v3060
        %v3108 = vunpack.c.l.b16 %v3064
        %v3109 = vunpack.c.l.b16 %v3067
        %v3110 = vunpack.c.l.b16 %v3071
        %v3111 = vunpack.c.l.b16 %v3074
        %v3112 = vunpack.c.l.b16 %v3078
        %v3113 = vunpack.c.l.b16 %v3081
        %v3114 = vpack.c.b16 %v3083, %v3082
        %v3115 = vpack.c.b16 %v3085, %v3084
        %v3116 = vpack.c.b16 %v3087, %v3086
        %v3117 = vpack.c.b16 %v3089, %v3088
        %v3118 = vpack.c.b16 %v3091, %v3090
        %v3119 = vpack.c.b16 %v3093, %v3092
        %v3120 = vpack.c.b16 %v3095, %v3094
        %v3121 = vpack.c.b16 %v3097, %v3096
        %v3122 = vpack.c.b16 %v3099, %v3098
        %v3123 = vpack.c.b16 %v3101, %v3100
        %v3124 = vpack.c.b16 %v3103, %v3102
        %v3125 = vpack.c.b16 %v3105, %v3104
        %v3126 = vpack.c.b16 %v3107, %v3106
        %v3127 = vpack.c.b16 %v3109, %v3108
        %v3128 = vpack.c.b16 %v3111, %v3110
        %v3129 = vpack.c.b16 %v3113, %v3112
        %3130 = vrot.lane.b32.xlu0 %v3114, 20
        %v3131 = vpop.permute.xlu0 %3130
        %3132 = vrot.lane.b32.xlu0 %v3115, 20
        %v3133 = vpop.permute.xlu0 %3132
        %3134 = vrot.lane.b32.xlu0 %v3116, 20
        %v3135 = vpop.permute.xlu0 %3134
        %3136 = vrot.lane.b32.xlu0 %v3117, 20
        %v3137 = vpop.permute.xlu0 %3136
        %3138 = vrot.lane.b32.xlu0 %v3118, 20
        %v3139 = vpop.permute.xlu0 %3138
        %3140 = vrot.lane.b32.xlu0 %v3119, 20
        %v3141 = vpop.permute.xlu0 %3140
        %3142 = vrot.lane.b32.xlu0 %v3120, 20
        %v3143 = vpop.permute.xlu0 %3142
        %3144 = vrot.lane.b32.xlu0 %v3121, 20
        %v3145 = vpop.permute.xlu0 %3144
        %3146 = vrot.lane.b32.xlu0 %v3122, 20
        %v3147 = vpop.permute.xlu0 %3146
        %3148 = vrot.lane.b32.xlu0 %v3123, 20
        %v3149 = vpop.permute.xlu0 %3148
        %3150 = vrot.lane.b32.xlu0 %v3124, 20
        %v3151 = vpop.permute.xlu0 %3150
        %3152 = vrot.lane.b32.xlu0 %v3125, 20
        %v3153 = vpop.permute.xlu0 %3152
        %3154 = vrot.lane.b32.xlu0 %v3126, 20
        %v3155 = vpop.permute.xlu0 %3154
        %3156 = vrot.lane.b32.xlu0 %v3127, 20
        %v3157 = vpop.permute.xlu0 %3156
        %3158 = vrot.lane.b32.xlu0 %v3128, 20
        %v3159 = vpop.permute.xlu0 %3158
        %3160 = vrot.lane.b32.xlu0 %v3129, 20
        %v3161 = vpop.permute.xlu0 %3160
        %vm3178 = vcmask 195744
        %3179 = vst.msk [vmem:[#allocation5] sm:$0xff] %vm3178, %v3131
        %3180 = vst.msk [vmem:[#allocation5 + $0x8] sm:$0xff] %vm3178, %v3133
        %3181 = vst.msk [vmem:[#allocation5 + $0x10] sm:$0xff] %vm3178, %v3135
        %3182 = vst.msk [vmem:[#allocation5 + $0x18] sm:$0xff] %vm3178, %v3137
        %3183 = vst.msk [vmem:[#allocation5 + $0x20] sm:$0xff] %vm3178, %v3139
        %3184 = vst.msk [vmem:[#allocation5 + $0x28] sm:$0xff] %vm3178, %v3141
        %3185 = vst.msk [vmem:[#allocation5 + $0x30] sm:$0xff] %vm3178, %v3143
        %3186 = vst.msk [vmem:[#allocation5 + $0x38] sm:$0xff] %vm3178, %v3145
        %3187 = vst.msk [vmem:[#allocation5 + $0x40] sm:$0xff] %vm3178, %v3147
        %3188 = vst.msk [vmem:[#allocation5 + $0x48] sm:$0xff] %vm3178, %v3149
        %3189 = vst.msk [vmem:[#allocation5 + $0x50] sm:$0xff] %vm3178, %v3151
        %3190 = vst.msk [vmem:[#allocation5 + $0x58] sm:$0xff] %vm3178, %v3153
        %3191 = vst.msk [vmem:[#allocation5 + $0x60] sm:$0xff] %vm3178, %v3155
        %3192 = vst.msk [vmem:[#allocation5 + $0x68] sm:$0xff] %vm3178, %v3157
        %3193 = vst.msk [vmem:[#allocation5 + $0x70] sm:$0xff] %vm3178, %v3159
        %3194 = vst.msk [vmem:[#allocation5 + $0x78] sm:$0xff] %vm3178, %v3161
        %s3195 = scalar_lea.vmem [#allocation2], 24
        %v3196 = vld [vmem:[%s3195] sm:$0xf]
        %v3197 = vld [vmem:[%s3195 + $0x4] sm:$0xf]
        %v3198 = vld [vmem:[%s3195 + $0xc] sm:$0xf]
        %v3199 = vld [vmem:[%s3195 + $0x10] sm:$0xf]
        %v3200 = vld [vmem:[%s3195 + $0x18] sm:$0xf]
        %v3201 = vld [vmem:[%s3195 + $0x1c] sm:$0xf]
        %v3202 = vld [vmem:[%s3195 + $0x24] sm:$0xf]
        %v3203 = vld [vmem:[%s3195 + $0x28] sm:$0xf]
        %v3204 = vld [vmem:[%s3195 + $0x30] sm:$0xf]
        %v3205 = vld [vmem:[%s3195 + $0x34] sm:$0xf]
        %v3206 = vld [vmem:[%s3195 + $0x3c] sm:$0xf]
        %v3207 = vld [vmem:[%s3195 + $0x40] sm:$0xf]
        %v3208 = vld [vmem:[%s3195 + $0x48] sm:$0xf]
        %v3209 = vld [vmem:[%s3195 + $0x4c] sm:$0xf]
        %v3210 = vld [vmem:[%s3195 + $0x54] sm:$0xf]
        %v3211 = vld [vmem:[%s3195 + $0x58] sm:$0xf]
        %v3212 = vld [vmem:[%s3195 + $0x60] sm:$0xf]
        %v3213 = vld [vmem:[%s3195 + $0x64] sm:$0xf]
        %v3214 = vld [vmem:[%s3195 + $0x6c] sm:$0xf]
        %v3215 = vld [vmem:[%s3195 + $0x70] sm:$0xf]
        %v3216 = vld [vmem:[%s3195 + $0x78] sm:$0xf]
        %v3217 = vld [vmem:[%s3195 + $0x7c] sm:$0xf]
        %v3218 = vld [vmem:[%s3195 + $0x84] sm:$0xf]
        %v3219 = vld [vmem:[%s3195 + $0x88] sm:$0xf]
        %v3220 = vld [vmem:[%s3195 + $0x90] sm:$0xf]
        %v3221 = vld [vmem:[%s3195 + $0x94] sm:$0xf]
        %v3222 = vld [vmem:[%s3195 + $0x9c] sm:$0xf]
        %v3223 = vld [vmem:[%s3195 + $0xa0] sm:$0xf]
        %v3224 = vld [vmem:[%s3195 + $0xa8] sm:$0xf]
        %v3225 = vld [vmem:[%s3195 + $0xac] sm:$0xf]
        %v3226 = vld [vmem:[%s3195 + $0xb4] sm:$0xf]
        %v3227 = vld [vmem:[%s3195 + $0xb8] sm:$0xf]
        %v3260 = vunpack.c.l.b16 %v3196
        %v3261 = vunpack.c.l.b16 %v3197
        %v3262 = vunpack.c.l.b16 %v3198
        %v3263 = vunpack.c.l.b16 %v3199
        %v3264 = vunpack.c.l.b16 %v3200
        %v3265 = vunpack.c.l.b16 %v3201
        %v3266 = vunpack.c.l.b16 %v3202
        %v3267 = vunpack.c.l.b16 %v3203
        %v3268 = vunpack.c.l.b16 %v3204
        %v3269 = vunpack.c.l.b16 %v3205
        %v3270 = vunpack.c.l.b16 %v3206
        %v3271 = vunpack.c.l.b16 %v3207
        %v3272 = vunpack.c.l.b16 %v3208
        %v3273 = vunpack.c.l.b16 %v3209
        %v3274 = vunpack.c.l.b16 %v3210
        %v3275 = vunpack.c.l.b16 %v3211
        %v3276 = vunpack.c.l.b16 %v3212
        %v3277 = vunpack.c.l.b16 %v3213
        %v3278 = vunpack.c.l.b16 %v3214
        %v3279 = vunpack.c.l.b16 %v3215
        %v3280 = vunpack.c.l.b16 %v3216
        %v3281 = vunpack.c.l.b16 %v3217
        %v3282 = vunpack.c.l.b16 %v3218
        %v3283 = vunpack.c.l.b16 %v3219
        %v3284 = vunpack.c.l.b16 %v3220
        %v3285 = vunpack.c.l.b16 %v3221
        %v3286 = vunpack.c.l.b16 %v3222
        %v3287 = vunpack.c.l.b16 %v3223
        %v3288 = vunpack.c.l.b16 %v3224
        %v3289 = vunpack.c.l.b16 %v3225
        %v3290 = vunpack.c.l.b16 %v3226
        %v3291 = vunpack.c.l.b16 %v3227
        %v3292 = vpack.c.b16 %v3261, %v3260
        %v3293 = vpack.c.b16 %v3263, %v3262
        %v3294 = vpack.c.b16 %v3265, %v3264
        %v3295 = vpack.c.b16 %v3267, %v3266
        %v3296 = vpack.c.b16 %v3269, %v3268
        %v3297 = vpack.c.b16 %v3271, %v3270
        %v3298 = vpack.c.b16 %v3273, %v3272
        %v3299 = vpack.c.b16 %v3275, %v3274
        %v3300 = vpack.c.b16 %v3277, %v3276
        %v3301 = vpack.c.b16 %v3279, %v3278
        %v3302 = vpack.c.b16 %v3281, %v3280
        %v3303 = vpack.c.b16 %v3283, %v3282
        %v3304 = vpack.c.b16 %v3285, %v3284
        %v3305 = vpack.c.b16 %v3287, %v3286
        %v3306 = vpack.c.b16 %v3289, %v3288
        %v3307 = vpack.c.b16 %v3291, %v3290
        %3308 = vrot.lane.b32.xlu0 %v3292, 24
        %v3309 = vpop.permute.xlu0 %3308
        %3310 = vrot.lane.b32.xlu0 %v3293, 24
        %v3311 = vpop.permute.xlu0 %3310
        %3312 = vrot.lane.b32.xlu0 %v3294, 24
        %v3313 = vpop.permute.xlu0 %3312
        %3314 = vrot.lane.b32.xlu0 %v3295, 24
        %v3315 = vpop.permute.xlu0 %3314
        %3316 = vrot.lane.b32.xlu0 %v3296, 24
        %v3317 = vpop.permute.xlu0 %3316
        %3318 = vrot.lane.b32.xlu0 %v3297, 24
        %v3319 = vpop.permute.xlu0 %3318
        %3320 = vrot.lane.b32.xlu0 %v3298, 24
        %v3321 = vpop.permute.xlu0 %3320
        %3322 = vrot.lane.b32.xlu0 %v3299, 24
        %v3323 = vpop.permute.xlu0 %3322
        %3324 = vrot.lane.b32.xlu0 %v3300, 24
        %v3325 = vpop.permute.xlu0 %3324
        %3326 = vrot.lane.b32.xlu0 %v3301, 24
        %v3327 = vpop.permute.xlu0 %3326
        %3328 = vrot.lane.b32.xlu0 %v3302, 24
        %v3329 = vpop.permute.xlu0 %3328
        %3330 = vrot.lane.b32.xlu0 %v3303, 24
        %v3331 = vpop.permute.xlu0 %3330
        %3332 = vrot.lane.b32.xlu0 %v3304, 24
        %v3333 = vpop.permute.xlu0 %3332
        %3334 = vrot.lane.b32.xlu0 %v3305, 24
        %v3335 = vpop.permute.xlu0 %3334
        %3336 = vrot.lane.b32.xlu0 %v3306, 24
        %v3337 = vpop.permute.xlu0 %3336
        %3338 = vrot.lane.b32.xlu0 %v3307, 24
        %v3339 = vpop.permute.xlu0 %3338
        %vm3356 = vcmask 228544
        %3357 = vst.msk [vmem:[#allocation5] sm:$0xff] %vm3356, %v3309
        %3358 = vst.msk [vmem:[#allocation5 + $0x8] sm:$0xff] %vm3356, %v3311
        %3359 = vst.msk [vmem:[#allocation5 + $0x10] sm:$0xff] %vm3356, %v3313
        %3360 = vst.msk [vmem:[#allocation5 + $0x18] sm:$0xff] %vm3356, %v3315
        %3361 = vst.msk [vmem:[#allocation5 + $0x20] sm:$0xff] %vm3356, %v3317
        %3362 = vst.msk [vmem:[#allocation5 + $0x28] sm:$0xff] %vm3356, %v3319
        %3363 = vst.msk [vmem:[#allocation5 + $0x30] sm:$0xff] %vm3356, %v3321
        %3364 = vst.msk [vmem:[#allocation5 + $0x38] sm:$0xff] %vm3356, %v3323
        %3365 = vst.msk [vmem:[#allocation5 + $0x40] sm:$0xff] %vm3356, %v3325
        %3366 = vst.msk [vmem:[#allocation5 + $0x48] sm:$0xff] %vm3356, %v3327
        %3367 = vst.msk [vmem:[#allocation5 + $0x50] sm:$0xff] %vm3356, %v3329
        %3368 = vst.msk [vmem:[#allocation5 + $0x58] sm:$0xff] %vm3356, %v3331
        %3369 = vst.msk [vmem:[#allocation5 + $0x60] sm:$0xff] %vm3356, %v3333
        %3370 = vst.msk [vmem:[#allocation5 + $0x68] sm:$0xff] %vm3356, %v3335
        %3371 = vst.msk [vmem:[#allocation5 + $0x70] sm:$0xff] %vm3356, %v3337
        %3372 = vst.msk [vmem:[#allocation5 + $0x78] sm:$0xff] %vm3356, %v3339
        %v3373 = vld [vmem:[%s3195] sm:$0xf]
        %v3374 = vld [vmem:[%s3195 + $0x4] sm:$0xf]
        %v3375 = vld [vmem:[%s3195 + $0x8] sm:$0x1]
        %v3376 = vld [vmem:[%s3195 + $0xc] sm:$0xf]
        %v3377 = vld [vmem:[%s3195 + $0x10] sm:$0xf]
        %v3378 = vld [vmem:[%s3195 + $0x14] sm:$0x1]
        %v3379 = vld [vmem:[%s3195 + $0x18] sm:$0xf]
        %v3380 = vld [vmem:[%s3195 + $0x1c] sm:$0xf]
        %v3381 = vld [vmem:[%s3195 + $0x20] sm:$0x1]
        %v3382 = vld [vmem:[%s3195 + $0x24] sm:$0xf]
        %v3383 = vld [vmem:[%s3195 + $0x28] sm:$0xf]
        %v3384 = vld [vmem:[%s3195 + $0x2c] sm:$0x1]
        %v3385 = vld [vmem:[%s3195 + $0x30] sm:$0xf]
        %v3386 = vld [vmem:[%s3195 + $0x34] sm:$0xf]
        %v3387 = vld [vmem:[%s3195 + $0x38] sm:$0x1]
        %v3388 = vld [vmem:[%s3195 + $0x3c] sm:$0xf]
        %v3389 = vld [vmem:[%s3195 + $0x40] sm:$0xf]
        %v3390 = vld [vmem:[%s3195 + $0x44] sm:$0x1]
        %v3391 = vld [vmem:[%s3195 + $0x48] sm:$0xf]
        %v3392 = vld [vmem:[%s3195 + $0x4c] sm:$0xf]
        %v3393 = vld [vmem:[%s3195 + $0x50] sm:$0x1]
        %v3394 = vld [vmem:[%s3195 + $0x54] sm:$0xf]
        %v3395 = vld [vmem:[%s3195 + $0x58] sm:$0xf]
        %v3396 = vld [vmem:[%s3195 + $0x5c] sm:$0x1]
        %v3397 = vld [vmem:[%s3195 + $0x60] sm:$0xf]
        %v3398 = vld [vmem:[%s3195 + $0x64] sm:$0xf]
        %v3399 = vld [vmem:[%s3195 + $0x68] sm:$0x1]
        %v3400 = vld [vmem:[%s3195 + $0x6c] sm:$0xf]
        %v3401 = vld [vmem:[%s3195 + $0x70] sm:$0xf]
        %v3402 = vld [vmem:[%s3195 + $0x74] sm:$0x1]
        %v3403 = vld [vmem:[%s3195 + $0x78] sm:$0xf]
        %v3404 = vld [vmem:[%s3195 + $0x7c] sm:$0xf]
        %v3405 = vld [vmem:[%s3195 + $0x80] sm:$0x1]
        %v3406 = vld [vmem:[%s3195 + $0x84] sm:$0xf]
        %v3407 = vld [vmem:[%s3195 + $0x88] sm:$0xf]
        %v3408 = vld [vmem:[%s3195 + $0x8c] sm:$0x1]
        %v3409 = vld [vmem:[%s3195 + $0x90] sm:$0xf]
        %v3410 = vld [vmem:[%s3195 + $0x94] sm:$0xf]
        %v3411 = vld [vmem:[%s3195 + $0x98] sm:$0x1]
        %v3412 = vld [vmem:[%s3195 + $0x9c] sm:$0xf]
        %v3413 = vld [vmem:[%s3195 + $0xa0] sm:$0xf]
        %v3414 = vld [vmem:[%s3195 + $0xa4] sm:$0x1]
        %v3415 = vld [vmem:[%s3195 + $0xa8] sm:$0xf]
        %v3416 = vld [vmem:[%s3195 + $0xac] sm:$0xf]
        %v3417 = vld [vmem:[%s3195 + $0xb0] sm:$0x1]
        %v3418 = vld [vmem:[%s3195 + $0xb4] sm:$0xf]
        %v3419 = vld [vmem:[%s3195 + $0xb8] sm:$0xf]
        %v3420 = vld [vmem:[%s3195 + $0xbc] sm:$0x1]
        %v3422 = vshrl.u32 %v3373, 16
        %v3424 = vrot.slane %v3422, 4
        %v3425 = vshll.u32 %v3373, 16
        %v3427 = vrot.slane %v3425, 5
        %v3428 = vor.u32 %v3424, %v3427
        %v3429 = vrot.slane %v3428, 4
        %v3431 = vshll.u32 %v3374, 16
        %v3433 = vrot.slane %v3431, 5
        %v3434 = vsel %vm1330, %v3429, %v3433
        %v3435 = vshrl.u32 %v3374, 16
        %v3437 = vrot.slane %v3435, 4
        %v3438 = vor.u32 %v3437, %v3433
        %v3439 = vrot.slane %v3438, 4
        %v3441 = vshll.u32 %v3375, 16
        %v3443 = vrot.slane %v3441, 5
        %v3444 = vsel %vm1330, %v3439, %v3443
        %v3446 = vshrl.u32 %v3376, 16
        %v3448 = vrot.slane %v3446, 4
        %v3449 = vshll.u32 %v3376, 16
        %v3451 = vrot.slane %v3449, 5
        %v3452 = vor.u32 %v3448, %v3451
        %v3453 = vrot.slane %v3452, 4
        %v3455 = vshll.u32 %v3377, 16
        %v3457 = vrot.slane %v3455, 5
        %v3458 = vsel %vm1330, %v3453, %v3457
        %v3459 = vshrl.u32 %v3377, 16
        %v3461 = vrot.slane %v3459, 4
        %v3462 = vor.u32 %v3461, %v3457
        %v3463 = vrot.slane %v3462, 4
        %v3465 = vshll.u32 %v3378, 16
        %v3467 = vrot.slane %v3465, 5
        %v3468 = vsel %vm1330, %v3463, %v3467
        %v3470 = vshrl.u32 %v3379, 16
        %v3472 = vrot.slane %v3470, 4
        %v3473 = vshll.u32 %v3379, 16
        %v3475 = vrot.slane %v3473, 5
        %v3476 = vor.u32 %v3472, %v3475
        %v3477 = vrot.slane %v3476, 4
        %v3479 = vshll.u32 %v3380, 16
        %v3481 = vrot.slane %v3479, 5
        %v3482 = vsel %vm1330, %v3477, %v3481
        %v3483 = vshrl.u32 %v3380, 16
        %v3485 = vrot.slane %v3483, 4
        %v3486 = vor.u32 %v3485, %v3481
        %v3487 = vrot.slane %v3486, 4
        %v3489 = vshll.u32 %v3381, 16
        %v3491 = vrot.slane %v3489, 5
        %v3492 = vsel %vm1330, %v3487, %v3491
        %v3494 = vshrl.u32 %v3382, 16
        %v3496 = vrot.slane %v3494, 4
        %v3497 = vshll.u32 %v3382, 16
        %v3499 = vrot.slane %v3497, 5
        %v3500 = vor.u32 %v3496, %v3499
        %v3501 = vrot.slane %v3500, 4
        %v3503 = vshll.u32 %v3383, 16
        %v3505 = vrot.slane %v3503, 5
        %v3506 = vsel %vm1330, %v3501, %v3505
        %v3507 = vshrl.u32 %v3383, 16
        %v3509 = vrot.slane %v3507, 4
        %v3510 = vor.u32 %v3509, %v3505
        %v3511 = vrot.slane %v3510, 4
        %v3513 = vshll.u32 %v3384, 16
        %v3515 = vrot.slane %v3513, 5
        %v3516 = vsel %vm1330, %v3511, %v3515
        %v3518 = vshrl.u32 %v3385, 16
        %v3520 = vrot.slane %v3518, 4
        %v3521 = vshll.u32 %v3385, 16
        %v3523 = vrot.slane %v3521, 5
        %v3524 = vor.u32 %v3520, %v3523
        %v3525 = vrot.slane %v3524, 4
        %v3527 = vshll.u32 %v3386, 16
        %v3529 = vrot.slane %v3527, 5
        %v3530 = vsel %vm1330, %v3525, %v3529
        %v3531 = vshrl.u32 %v3386, 16
        %v3533 = vrot.slane %v3531, 4
        %v3534 = vor.u32 %v3533, %v3529
        %v3535 = vrot.slane %v3534, 4
        %v3537 = vshll.u32 %v3387, 16
        %v3539 = vrot.slane %v3537, 5
        %v3540 = vsel %vm1330, %v3535, %v3539
        %v3542 = vshrl.u32 %v3388, 16
        %v3544 = vrot.slane %v3542, 4
        %v3545 = vshll.u32 %v3388, 16
        %v3547 = vrot.slane %v3545, 5
        %v3548 = vor.u32 %v3544, %v3547
        %v3549 = vrot.slane %v3548, 4
        %v3551 = vshll.u32 %v3389, 16
        %v3553 = vrot.slane %v3551, 5
        %v3554 = vsel %vm1330, %v3549, %v3553
        %v3555 = vshrl.u32 %v3389, 16
        %v3557 = vrot.slane %v3555, 4
        %v3558 = vor.u32 %v3557, %v3553
        %v3559 = vrot.slane %v3558, 4
        %v3561 = vshll.u32 %v3390, 16
        %v3563 = vrot.slane %v3561, 5
        %v3564 = vsel %vm1330, %v3559, %v3563
        %v3566 = vshrl.u32 %v3391, 16
        %v3568 = vrot.slane %v3566, 4
        %v3569 = vshll.u32 %v3391, 16
        %v3571 = vrot.slane %v3569, 5
        %v3572 = vor.u32 %v3568, %v3571
        %v3573 = vrot.slane %v3572, 4
        %v3575 = vshll.u32 %v3392, 16
        %v3577 = vrot.slane %v3575, 5
        %v3578 = vsel %vm1330, %v3573, %v3577
        %v3579 = vshrl.u32 %v3392, 16
        %v3581 = vrot.slane %v3579, 4
        %v3582 = vor.u32 %v3581, %v3577
        %v3583 = vrot.slane %v3582, 4
        %v3585 = vshll.u32 %v3393, 16
        %v3587 = vrot.slane %v3585, 5
        %v3588 = vsel %vm1330, %v3583, %v3587
        %v3590 = vshrl.u32 %v3394, 16
        %v3592 = vrot.slane %v3590, 4
        %v3593 = vshll.u32 %v3394, 16
        %v3595 = vrot.slane %v3593, 5
        %v3596 = vor.u32 %v3592, %v3595
        %v3597 = vrot.slane %v3596, 4
        %v3599 = vshll.u32 %v3395, 16
        %v3601 = vrot.slane %v3599, 5
        %v3602 = vsel %vm1330, %v3597, %v3601
        %v3603 = vshrl.u32 %v3395, 16
        %v3605 = vrot.slane %v3603, 4
        %v3606 = vor.u32 %v3605, %v3601
        %v3607 = vrot.slane %v3606, 4
        %v3609 = vshll.u32 %v3396, 16
        %v3611 = vrot.slane %v3609, 5
        %v3612 = vsel %vm1330, %v3607, %v3611
        %v3614 = vshrl.u32 %v3397, 16
        %v3616 = vrot.slane %v3614, 4
        %v3617 = vshll.u32 %v3397, 16
        %v3619 = vrot.slane %v3617, 5
        %v3620 = vor.u32 %v3616, %v3619
        %v3621 = vrot.slane %v3620, 4
        %v3623 = vshll.u32 %v3398, 16
        %v3625 = vrot.slane %v3623, 5
        %v3626 = vsel %vm1330, %v3621, %v3625
        %v3627 = vshrl.u32 %v3398, 16
        %v3629 = vrot.slane %v3627, 4
        %v3630 = vor.u32 %v3629, %v3625
        %v3631 = vrot.slane %v3630, 4
        %v3633 = vshll.u32 %v3399, 16
        %v3635 = vrot.slane %v3633, 5
        %v3636 = vsel %vm1330, %v3631, %v3635
        %v3638 = vshrl.u32 %v3400, 16
        %v3640 = vrot.slane %v3638, 4
        %v3641 = vshll.u32 %v3400, 16
        %v3643 = vrot.slane %v3641, 5
        %v3644 = vor.u32 %v3640, %v3643
        %v3645 = vrot.slane %v3644, 4
        %v3647 = vshll.u32 %v3401, 16
        %v3649 = vrot.slane %v3647, 5
        %v3650 = vsel %vm1330, %v3645, %v3649
        %v3651 = vshrl.u32 %v3401, 16
        %v3653 = vrot.slane %v3651, 4
        %v3654 = vor.u32 %v3653, %v3649
        %v3655 = vrot.slane %v3654, 4
        %v3657 = vshll.u32 %v3402, 16
        %v3659 = vrot.slane %v3657, 5
        %v3660 = vsel %vm1330, %v3655, %v3659
        %v3662 = vshrl.u32 %v3403, 16
        %v3664 = vrot.slane %v3662, 4
        %v3665 = vshll.u32 %v3403, 16
        %v3667 = vrot.slane %v3665, 5
        %v3668 = vor.u32 %v3664, %v3667
        %v3669 = vrot.slane %v3668, 4
        %v3671 = vshll.u32 %v3404, 16
        %v3673 = vrot.slane %v3671, 5
        %v3674 = vsel %vm1330, %v3669, %v3673
        %v3675 = vshrl.u32 %v3404, 16
        %v3677 = vrot.slane %v3675, 4
        %v3678 = vor.u32 %v3677, %v3673
        %v3679 = vrot.slane %v3678, 4
        %v3681 = vshll.u32 %v3405, 16
        %v3683 = vrot.slane %v3681, 5
        %v3684 = vsel %vm1330, %v3679, %v3683
        %v3686 = vshrl.u32 %v3406, 16
        %v3688 = vrot.slane %v3686, 4
        %v3689 = vshll.u32 %v3406, 16
        %v3691 = vrot.slane %v3689, 5
        %v3692 = vor.u32 %v3688, %v3691
        %v3693 = vrot.slane %v3692, 4
        %v3695 = vshll.u32 %v3407, 16
        %v3697 = vrot.slane %v3695, 5
        %v3698 = vsel %vm1330, %v3693, %v3697
        %v3699 = vshrl.u32 %v3407, 16
        %v3701 = vrot.slane %v3699, 4
        %v3702 = vor.u32 %v3701, %v3697
        %v3703 = vrot.slane %v3702, 4
        %v3705 = vshll.u32 %v3408, 16
        %v3707 = vrot.slane %v3705, 5
        %v3708 = vsel %vm1330, %v3703, %v3707
        %v3710 = vshrl.u32 %v3409, 16
        %v3712 = vrot.slane %v3710, 4
        %v3713 = vshll.u32 %v3409, 16
        %v3715 = vrot.slane %v3713, 5
        %v3716 = vor.u32 %v3712, %v3715
        %v3717 = vrot.slane %v3716, 4
        %v3719 = vshll.u32 %v3410, 16
        %v3721 = vrot.slane %v3719, 5
        %v3722 = vsel %vm1330, %v3717, %v3721
        %v3723 = vshrl.u32 %v3410, 16
        %v3725 = vrot.slane %v3723, 4
        %v3726 = vor.u32 %v3725, %v3721
        %v3727 = vrot.slane %v3726, 4
        %v3729 = vshll.u32 %v3411, 16
        %v3731 = vrot.slane %v3729, 5
        %v3732 = vsel %vm1330, %v3727, %v3731
        %v3734 = vshrl.u32 %v3412, 16
        %v3736 = vrot.slane %v3734, 4
        %v3737 = vshll.u32 %v3412, 16
        %v3739 = vrot.slane %v3737, 5
        %v3740 = vor.u32 %v3736, %v3739
        %v3741 = vrot.slane %v3740, 4
        %v3743 = vshll.u32 %v3413, 16
        %v3745 = vrot.slane %v3743, 5
        %v3746 = vsel %vm1330, %v3741, %v3745
        %v3747 = vshrl.u32 %v3413, 16
        %v3749 = vrot.slane %v3747, 4
        %v3750 = vor.u32 %v3749, %v3745
        %v3751 = vrot.slane %v3750, 4
        %v3753 = vshll.u32 %v3414, 16
        %v3755 = vrot.slane %v3753, 5
        %v3756 = vsel %vm1330, %v3751, %v3755
        %v3758 = vshrl.u32 %v3415, 16
        %v3760 = vrot.slane %v3758, 4
        %v3761 = vshll.u32 %v3415, 16
        %v3763 = vrot.slane %v3761, 5
        %v3764 = vor.u32 %v3760, %v3763
        %v3765 = vrot.slane %v3764, 4
        %v3767 = vshll.u32 %v3416, 16
        %v3769 = vrot.slane %v3767, 5
        %v3770 = vsel %vm1330, %v3765, %v3769
        %v3771 = vshrl.u32 %v3416, 16
        %v3773 = vrot.slane %v3771, 4
        %v3774 = vor.u32 %v3773, %v3769
        %v3775 = vrot.slane %v3774, 4
        %v3777 = vshll.u32 %v3417, 16
        %v3779 = vrot.slane %v3777, 5
        %v3780 = vsel %vm1330, %v3775, %v3779
        %v3782 = vshrl.u32 %v3418, 16
        %v3784 = vrot.slane %v3782, 4
        %v3785 = vshll.u32 %v3418, 16
        %v3787 = vrot.slane %v3785, 5
        %v3788 = vor.u32 %v3784, %v3787
        %v3789 = vrot.slane %v3788, 4
        %v3791 = vshll.u32 %v3419, 16
        %v3793 = vrot.slane %v3791, 5
        %v3794 = vsel %vm1330, %v3789, %v3793
        %v3795 = vshrl.u32 %v3419, 16
        %v3797 = vrot.slane %v3795, 4
        %v3798 = vor.u32 %v3797, %v3793
        %v3799 = vrot.slane %v3798, 4
        %v3801 = vshll.u32 %v3420, 16
        %v3803 = vrot.slane %v3801, 5
        %v3804 = vsel %vm1330, %v3799, %v3803
        %v3805 = vunpack.c.l.b16 %v3434
        %v3806 = vunpack.c.l.b16 %v3444
        %v3807 = vunpack.c.l.b16 %v3458
        %v3808 = vunpack.c.l.b16 %v3468
        %v3809 = vunpack.c.l.b16 %v3482
        %v3810 = vunpack.c.l.b16 %v3492
        %v3811 = vunpack.c.l.b16 %v3506
        %v3812 = vunpack.c.l.b16 %v3516
        %v3813 = vunpack.c.l.b16 %v3530
        %v3814 = vunpack.c.l.b16 %v3540
        %v3815 = vunpack.c.l.b16 %v3554
        %v3816 = vunpack.c.l.b16 %v3564
        %v3817 = vunpack.c.l.b16 %v3578
        %v3818 = vunpack.c.l.b16 %v3588
        %v3819 = vunpack.c.l.b16 %v3602
        %v3820 = vunpack.c.l.b16 %v3612
        %v3821 = vunpack.c.l.b16 %v3626
        %v3822 = vunpack.c.l.b16 %v3636
        %v3823 = vunpack.c.l.b16 %v3650
        %v3824 = vunpack.c.l.b16 %v3660
        %v3825 = vunpack.c.l.b16 %v3674
        %v3826 = vunpack.c.l.b16 %v3684
        %v3827 = vunpack.c.l.b16 %v3698
        %v3828 = vunpack.c.l.b16 %v3708
        %v3829 = vunpack.c.l.b16 %v3722
        %v3830 = vunpack.c.l.b16 %v3732
        %v3831 = vunpack.c.l.b16 %v3746
        %v3832 = vunpack.c.l.b16 %v3756
        %v3833 = vunpack.c.l.b16 %v3770
        %v3834 = vunpack.c.l.b16 %v3780
        %v3835 = vunpack.c.l.b16 %v3794
        %v3836 = vunpack.c.l.b16 %v3804
        %v3837 = vpack.c.b16 %v3806, %v3805
        %v3838 = vpack.c.b16 %v3808, %v3807
        %v3839 = vpack.c.b16 %v3810, %v3809
        %v3840 = vpack.c.b16 %v3812, %v3811
        %v3841 = vpack.c.b16 %v3814, %v3813
        %v3842 = vpack.c.b16 %v3816, %v3815
        %v3843 = vpack.c.b16 %v3818, %v3817
        %v3844 = vpack.c.b16 %v3820, %v3819
        %v3845 = vpack.c.b16 %v3822, %v3821
        %v3846 = vpack.c.b16 %v3824, %v3823
        %v3847 = vpack.c.b16 %v3826, %v3825
        %v3848 = vpack.c.b16 %v3828, %v3827
        %v3849 = vpack.c.b16 %v3830, %v3829
        %v3850 = vpack.c.b16 %v3832, %v3831
        %v3851 = vpack.c.b16 %v3834, %v3833
        %v3852 = vpack.c.b16 %v3836, %v3835
        %3853 = vrot.lane.b32.xlu0 %v3837, 28
        %v3854 = vpop.permute.xlu0 %3853
        %3855 = vrot.lane.b32.xlu0 %v3838, 28
        %v3856 = vpop.permute.xlu0 %3855
        %3857 = vrot.lane.b32.xlu0 %v3839, 28
        %v3858 = vpop.permute.xlu0 %3857
        %3859 = vrot.lane.b32.xlu0 %v3840, 28
        %v3860 = vpop.permute.xlu0 %3859
        %3861 = vrot.lane.b32.xlu0 %v3841, 28
        %v3862 = vpop.permute.xlu0 %3861
        %3863 = vrot.lane.b32.xlu0 %v3842, 28
        %v3864 = vpop.permute.xlu0 %3863
        %3865 = vrot.lane.b32.xlu0 %v3843, 28
        %v3866 = vpop.permute.xlu0 %3865
        %3867 = vrot.lane.b32.xlu0 %v3844, 28
        %v3868 = vpop.permute.xlu0 %3867
        %3869 = vrot.lane.b32.xlu0 %v3845, 28
        %v3870 = vpop.permute.xlu0 %3869
        %3871 = vrot.lane.b32.xlu0 %v3846, 28
        %v3872 = vpop.permute.xlu0 %3871
        %3873 = vrot.lane.b32.xlu0 %v3847, 28
        %v3874 = vpop.permute.xlu0 %3873
        %3875 = vrot.lane.b32.xlu0 %v3848, 28
        %v3876 = vpop.permute.xlu0 %3875
        %3877 = vrot.lane.b32.xlu0 %v3849, 28
        %v3878 = vpop.permute.xlu0 %3877
        %3879 = vrot.lane.b32.xlu0 %v3850, 28
        %v3880 = vpop.permute.xlu0 %3879
        %3881 = vrot.lane.b32.xlu0 %v3851, 28
        %v3882 = vpop.permute.xlu0 %3881
        %3883 = vrot.lane.b32.xlu0 %v3852, 28
        %v3884 = vpop.permute.xlu0 %3883
        %vm3901 = vcmask 261344
        %3902 = vst.msk [vmem:[#allocation5] sm:$0xff] %vm3901, %v3854
        %3903 = vst.msk [vmem:[#allocation5 + $0x8] sm:$0xff] %vm3901, %v3856
        %3904 = vst.msk [vmem:[#allocation5 + $0x10] sm:$0xff] %vm3901, %v3858
        %3905 = vst.msk [vmem:[#allocation5 + $0x18] sm:$0xff] %vm3901, %v3860
        %3906 = vst.msk [vmem:[#allocation5 + $0x20] sm:$0xff] %vm3901, %v3862
        %3907 = vst.msk [vmem:[#allocation5 + $0x28] sm:$0xff] %vm3901, %v3864
        %3908 = vst.msk [vmem:[#allocation5 + $0x30] sm:$0xff] %vm3901, %v3866
        %3909 = vst.msk [vmem:[#allocation5 + $0x38] sm:$0xff] %vm3901, %v3868
        %3910 = vst.msk [vmem:[#allocation5 + $0x40] sm:$0xff] %vm3901, %v3870
        %3911 = vst.msk [vmem:[#allocation5 + $0x48] sm:$0xff] %vm3901, %v3872
        %3912 = vst.msk [vmem:[#allocation5 + $0x50] sm:$0xff] %vm3901, %v3874
        %3913 = vst.msk [vmem:[#allocation5 + $0x58] sm:$0xff] %vm3901, %v3876
        %3914 = vst.msk [vmem:[#allocation5 + $0x60] sm:$0xff] %vm3901, %v3878
        %3915 = vst.msk [vmem:[#allocation5 + $0x68] sm:$0xff] %vm3901, %v3880
        %3916 = vst.msk [vmem:[#allocation5 + $0x70] sm:$0xff] %vm3901, %v3882
        %3917 = vst.msk [vmem:[#allocation5 + $0x78] sm:$0xff] %vm3901, %v3884
        %v3918 = vld [vmem:[%s3195] sm:$0xe]
        %v3919 = vld [vmem:[%s3195 + $0x4] sm:$0xf]
        %v3920 = vld [vmem:[%s3195 + $0x8] sm:$0x1]
        %v3921 = vld [vmem:[%s3195 + $0xc] sm:$0xe]
        %v3922 = vld [vmem:[%s3195 + $0x10] sm:$0xf]
        %v3923 = vld [vmem:[%s3195 + $0x14] sm:$0x1]
        %v3924 = vld [vmem:[%s3195 + $0x18] sm:$0xe]
        %v3925 = vld [vmem:[%s3195 + $0x1c] sm:$0xf]
        %v3926 = vld [vmem:[%s3195 + $0x20] sm:$0x1]
        %v3927 = vld [vmem:[%s3195 + $0x24] sm:$0xe]
        %v3928 = vld [vmem:[%s3195 + $0x28] sm:$0xf]
        %v3929 = vld [vmem:[%s3195 + $0x2c] sm:$0x1]
        %v3930 = vld [vmem:[%s3195 + $0x30] sm:$0xe]
        %v3931 = vld [vmem:[%s3195 + $0x34] sm:$0xf]
        %v3932 = vld [vmem:[%s3195 + $0x38] sm:$0x1]
        %v3933 = vld [vmem:[%s3195 + $0x3c] sm:$0xe]
        %v3934 = vld [vmem:[%s3195 + $0x40] sm:$0xf]
        %v3935 = vld [vmem:[%s3195 + $0x44] sm:$0x1]
        %v3936 = vld [vmem:[%s3195 + $0x48] sm:$0xe]
        %v3937 = vld [vmem:[%s3195 + $0x4c] sm:$0xf]
        %v3938 = vld [vmem:[%s3195 + $0x50] sm:$0x1]
        %v3939 = vld [vmem:[%s3195 + $0x54] sm:$0xe]
        %v3940 = vld [vmem:[%s3195 + $0x58] sm:$0xf]
        %v3941 = vld [vmem:[%s3195 + $0x5c] sm:$0x1]
        %v3942 = vld [vmem:[%s3195 + $0x60] sm:$0xe]
        %v3943 = vld [vmem:[%s3195 + $0x64] sm:$0xf]
        %v3944 = vld [vmem:[%s3195 + $0x68] sm:$0x1]
        %v3945 = vld [vmem:[%s3195 + $0x6c] sm:$0xe]
        %v3946 = vld [vmem:[%s3195 + $0x70] sm:$0xf]
        %v3947 = vld [vmem:[%s3195 + $0x74] sm:$0x1]
        %v3948 = vld [vmem:[%s3195 + $0x78] sm:$0xe]
        %v3949 = vld [vmem:[%s3195 + $0x7c] sm:$0xf]
        %v3950 = vld [vmem:[%s3195 + $0x80] sm:$0x1]
        %v3951 = vld [vmem:[%s3195 + $0x84] sm:$0xe]
        %v3952 = vld [vmem:[%s3195 + $0x88] sm:$0xf]
        %v3953 = vld [vmem:[%s3195 + $0x8c] sm:$0x1]
        %v3954 = vld [vmem:[%s3195 + $0x90] sm:$0xe]
        %v3955 = vld [vmem:[%s3195 + $0x94] sm:$0xf]
        %v3956 = vld [vmem:[%s3195 + $0x98] sm:$0x1]
        %v3957 = vld [vmem:[%s3195 + $0x9c] sm:$0xe]
        %v3958 = vld [vmem:[%s3195 + $0xa0] sm:$0xf]
        %v3959 = vld [vmem:[%s3195 + $0xa4] sm:$0x1]
        %v3960 = vld [vmem:[%s3195 + $0xa8] sm:$0xe]
        %v3961 = vld [vmem:[%s3195 + $0xac] sm:$0xf]
        %v3962 = vld [vmem:[%s3195 + $0xb0] sm:$0x1]
        %v3963 = vld [vmem:[%s3195 + $0xb4] sm:$0xe]
        %v3964 = vld [vmem:[%s3195 + $0xb8] sm:$0xf]
        %v3965 = vld [vmem:[%s3195 + $0xbc] sm:$0x1]
        %v4014 = vrot.slane %v3918, 5
        %v4015 = vrot.slane %v4014, 4
        %v4016 = vrot.slane %v3919, 5
        %v4017 = vsel %vm1926, %v4015, %v4016
        %v4018 = vrot.slane %v4016, 4
        %v4019 = vrot.slane %v3920, 5
        %v4020 = vsel %vm1926, %v4018, %v4019
        %v4021 = vrot.slane %v3921, 5
        %v4022 = vrot.slane %v4021, 4
        %v4023 = vrot.slane %v3922, 5
        %v4024 = vsel %vm1926, %v4022, %v4023
        %v4025 = vrot.slane %v4023, 4
        %v4026 = vrot.slane %v3923, 5
        %v4027 = vsel %vm1926, %v4025, %v4026
        %v4028 = vrot.slane %v3924, 5
        %v4029 = vrot.slane %v4028, 4
        %v4030 = vrot.slane %v3925, 5
        %v4031 = vsel %vm1926, %v4029, %v4030
        %v4032 = vrot.slane %v4030, 4
        %v4033 = vrot.slane %v3926, 5
        %v4034 = vsel %vm1926, %v4032, %v4033
        %v4035 = vrot.slane %v3927, 5
        %v4036 = vrot.slane %v4035, 4
        %v4037 = vrot.slane %v3928, 5
        %v4038 = vsel %vm1926, %v4036, %v4037
        %v4039 = vrot.slane %v4037, 4
        %v4040 = vrot.slane %v3929, 5
        %v4041 = vsel %vm1926, %v4039, %v4040
        %v4042 = vrot.slane %v3930, 5
        %v4043 = vrot.slane %v4042, 4
        %v4044 = vrot.slane %v3931, 5
        %v4045 = vsel %vm1926, %v4043, %v4044
        %v4046 = vrot.slane %v4044, 4
        %v4047 = vrot.slane %v3932, 5
        %v4048 = vsel %vm1926, %v4046, %v4047
        %v4049 = vrot.slane %v3933, 5
        %v4050 = vrot.slane %v4049, 4
        %v4051 = vrot.slane %v3934, 5
        %v4052 = vsel %vm1926, %v4050, %v4051
        %v4053 = vrot.slane %v4051, 4
        %v4054 = vrot.slane %v3935, 5
        %v4055 = vsel %vm1926, %v4053, %v4054
        %v4056 = vrot.slane %v3936, 5
        %v4057 = vrot.slane %v4056, 4
        %v4058 = vrot.slane %v3937, 5
        %v4059 = vsel %vm1926, %v4057, %v4058
        %v4060 = vrot.slane %v4058, 4
        %v4061 = vrot.slane %v3938, 5
        %v4062 = vsel %vm1926, %v4060, %v4061
        %v4063 = vrot.slane %v3939, 5
        %v4064 = vrot.slane %v4063, 4
        %v4065 = vrot.slane %v3940, 5
        %v4066 = vsel %vm1926, %v4064, %v4065
        %v4067 = vrot.slane %v4065, 4
        %v4068 = vrot.slane %v3941, 5
        %v4069 = vsel %vm1926, %v4067, %v4068
        %v4070 = vrot.slane %v3942, 5
        %v4071 = vrot.slane %v4070, 4
        %v4072 = vrot.slane %v3943, 5
        %v4073 = vsel %vm1926, %v4071, %v4072
        %v4074 = vrot.slane %v4072, 4
        %v4075 = vrot.slane %v3944, 5
        %v4076 = vsel %vm1926, %v4074, %v4075
        %v4077 = vrot.slane %v3945, 5
        %v4078 = vrot.slane %v4077, 4
        %v4079 = vrot.slane %v3946, 5
        %v4080 = vsel %vm1926, %v4078, %v4079
        %v4081 = vrot.slane %v4079, 4
        %v4082 = vrot.slane %v3947, 5
        %v4083 = vsel %vm1926, %v4081, %v4082
        %v4084 = vrot.slane %v3948, 5
        %v4085 = vrot.slane %v4084, 4
        %v4086 = vrot.slane %v3949, 5
        %v4087 = vsel %vm1926, %v4085, %v4086
        %v4088 = vrot.slane %v4086, 4
        %v4089 = vrot.slane %v3950, 5
        %v4090 = vsel %vm1926, %v4088, %v4089
        %v4091 = vrot.slane %v3951, 5
        %v4092 = vrot.slane %v4091, 4
        %v4093 = vrot.slane %v3952, 5
        %v4094 = vsel %vm1926, %v4092, %v4093
        %v4095 = vrot.slane %v4093, 4
        %v4096 = vrot.slane %v3953, 5
        %v4097 = vsel %vm1926, %v4095, %v4096
        %v4098 = vrot.slane %v3954, 5
        %v4099 = vrot.slane %v4098, 4
        %v4100 = vrot.slane %v3955, 5
        %v4101 = vsel %vm1926, %v4099, %v4100
        %v4102 = vrot.slane %v4100, 4
        %v4103 = vrot.slane %v3956, 5
        %v4104 = vsel %vm1926, %v4102, %v4103
        %v4105 = vrot.slane %v3957, 5
        %v4106 = vrot.slane %v4105, 4
        %v4107 = vrot.slane %v3958, 5
        %v4108 = vsel %vm1926, %v4106, %v4107
        %v4109 = vrot.slane %v4107, 4
        %v4110 = vrot.slane %v3959, 5
        %v4111 = vsel %vm1926, %v4109, %v4110
        %v4112 = vrot.slane %v3960, 5
        %v4113 = vrot.slane %v4112, 4
        %v4114 = vrot.slane %v3961, 5
        %v4115 = vsel %vm1926, %v4113, %v4114
        %v4116 = vrot.slane %v4114, 4
        %v4117 = vrot.slane %v3962, 5
        %v4118 = vsel %vm1926, %v4116, %v4117
        %v4119 = vrot.slane %v3963, 5
        %v4120 = vrot.slane %v4119, 4
        %v4121 = vrot.slane %v3964, 5
        %v4122 = vsel %vm1926, %v4120, %v4121
        %v4123 = vrot.slane %v4121, 4
        %v4124 = vrot.slane %v3965, 5
        %v4125 = vsel %vm1926, %v4123, %v4124
        %v4126 = vunpack.c.l.b16 %v4017
        %v4127 = vunpack.c.l.b16 %v4020
        %v4128 = vunpack.c.l.b16 %v4024
        %v4129 = vunpack.c.l.b16 %v4027
        %v4130 = vunpack.c.l.b16 %v4031
        %v4131 = vunpack.c.l.b16 %v4034
        %v4132 = vunpack.c.l.b16 %v4038
        %v4133 = vunpack.c.l.b16 %v4041
        %v4134 = vunpack.c.l.b16 %v4045
        %v4135 = vunpack.c.l.b16 %v4048
        %v4136 = vunpack.c.l.b16 %v4052
        %v4137 = vunpack.c.l.b16 %v4055
        %v4138 = vunpack.c.l.b16 %v4059
        %v4139 = vunpack.c.l.b16 %v4062
        %v4140 = vunpack.c.l.b16 %v4066
        %v4141 = vunpack.c.l.b16 %v4069
        %v4142 = vunpack.c.l.b16 %v4073
        %v4143 = vunpack.c.l.b16 %v4076
        %v4144 = vunpack.c.l.b16 %v4080
        %v4145 = vunpack.c.l.b16 %v4083
        %v4146 = vunpack.c.l.b16 %v4087
        %v4147 = vunpack.c.l.b16 %v4090
        %v4148 = vunpack.c.l.b16 %v4094
        %v4149 = vunpack.c.l.b16 %v4097
        %v4150 = vunpack.c.l.b16 %v4101
        %v4151 = vunpack.c.l.b16 %v4104
        %v4152 = vunpack.c.l.b16 %v4108
        %v4153 = vunpack.c.l.b16 %v4111
        %v4154 = vunpack.c.l.b16 %v4115
        %v4155 = vunpack.c.l.b16 %v4118
        %v4156 = vunpack.c.l.b16 %v4122
        %v4157 = vunpack.c.l.b16 %v4125
        %v4158 = vpack.c.b16 %v4127, %v4126
        %v4159 = vpack.c.b16 %v4129, %v4128
        %v4160 = vpack.c.b16 %v4131, %v4130
        %v4161 = vpack.c.b16 %v4133, %v4132
        %v4162 = vpack.c.b16 %v4135, %v4134
        %v4163 = vpack.c.b16 %v4137, %v4136
        %v4164 = vpack.c.b16 %v4139, %v4138
        %v4165 = vpack.c.b16 %v4141, %v4140
        %v4166 = vpack.c.b16 %v4143, %v4142
        %v4167 = vpack.c.b16 %v4145, %v4144
        %v4168 = vpack.c.b16 %v4147, %v4146
        %v4169 = vpack.c.b16 %v4149, %v4148
        %v4170 = vpack.c.b16 %v4151, %v4150
        %v4171 = vpack.c.b16 %v4153, %v4152
        %v4172 = vpack.c.b16 %v4155, %v4154
        %v4173 = vpack.c.b16 %v4157, %v4156
        %4174 = vrot.lane.b32.xlu0 %v4158, 32
        %v4175 = vpop.permute.xlu0 %4174
        %4176 = vrot.lane.b32.xlu0 %v4159, 32
        %v4177 = vpop.permute.xlu0 %4176
        %4178 = vrot.lane.b32.xlu0 %v4160, 32
        %v4179 = vpop.permute.xlu0 %4178
        %4180 = vrot.lane.b32.xlu0 %v4161, 32
        %v4181 = vpop.permute.xlu0 %4180
        %4182 = vrot.lane.b32.xlu0 %v4162, 32
        %v4183 = vpop.permute.xlu0 %4182
        %4184 = vrot.lane.b32.xlu0 %v4163, 32
        %v4185 = vpop.permute.xlu0 %4184
        %4186 = vrot.lane.b32.xlu0 %v4164, 32
        %v4187 = vpop.permute.xlu0 %4186
        %4188 = vrot.lane.b32.xlu0 %v4165, 32
        %v4189 = vpop.permute.xlu0 %4188
        %4190 = vrot.lane.b32.xlu0 %v4166, 32
        %v4191 = vpop.permute.xlu0 %4190
        %4192 = vrot.lane.b32.xlu0 %v4167, 32
        %v4193 = vpop.permute.xlu0 %4192
        %4194 = vrot.lane.b32.xlu0 %v4168, 32
        %v4195 = vpop.permute.xlu0 %4194
        %4196 = vrot.lane.b32.xlu0 %v4169, 32
        %v4197 = vpop.permute.xlu0 %4196
        %4198 = vrot.lane.b32.xlu0 %v4170, 32
        %v4199 = vpop.permute.xlu0 %4198
        %4200 = vrot.lane.b32.xlu0 %v4171, 32
        %v4201 = vpop.permute.xlu0 %4200
        %4202 = vrot.lane.b32.xlu0 %v4172, 32
        %v4203 = vpop.permute.xlu0 %4202
        %4204 = vrot.lane.b32.xlu0 %v4173, 32
        %v4205 = vpop.permute.xlu0 %4204
        %vm4222 = vcmask 294144
        %4223 = vst.msk [vmem:[#allocation5] sm:$0xff] %vm4222, %v4175
        %4224 = vst.msk [vmem:[#allocation5 + $0x8] sm:$0xff] %vm4222, %v4177
        %4225 = vst.msk [vmem:[#allocation5 + $0x10] sm:$0xff] %vm4222, %v4179
        %4226 = vst.msk [vmem:[#allocation5 + $0x18] sm:$0xff] %vm4222, %v4181
        %4227 = vst.msk [vmem:[#allocation5 + $0x20] sm:$0xff] %vm4222, %v4183
        %4228 = vst.msk [vmem:[#allocation5 + $0x28] sm:$0xff] %vm4222, %v4185
        %4229 = vst.msk [vmem:[#allocation5 + $0x30] sm:$0xff] %vm4222, %v4187
        %4230 = vst.msk [vmem:[#allocation5 + $0x38] sm:$0xff] %vm4222, %v4189
        %4231 = vst.msk [vmem:[#allocation5 + $0x40] sm:$0xff] %vm4222, %v4191
        %4232 = vst.msk [vmem:[#allocation5 + $0x48] sm:$0xff] %vm4222, %v4193
        %4233 = vst.msk [vmem:[#allocation5 + $0x50] sm:$0xff] %vm4222, %v4195
        %4234 = vst.msk [vmem:[#allocation5 + $0x58] sm:$0xff] %vm4222, %v4197
        %4235 = vst.msk [vmem:[#allocation5 + $0x60] sm:$0xff] %vm4222, %v4199
        %4236 = vst.msk [vmem:[#allocation5 + $0x68] sm:$0xff] %vm4222, %v4201
        %4237 = vst.msk [vmem:[#allocation5 + $0x70] sm:$0xff] %vm4222, %v4203
        %4238 = vst.msk [vmem:[#allocation5 + $0x78] sm:$0xff] %vm4222, %v4205
        %vm4239 = vcmask 1047840
        %4240 = vst.msk [vmem:[#allocation5] sm:$0xff] %vm4239, 0
        %4241 = vst.msk [vmem:[#allocation5 + $0x8] sm:$0xff] %vm4239, 0
        %4242 = vst.msk [vmem:[#allocation5 + $0x10] sm:$0xff] %vm4239, 0
        %4243 = vst.msk [vmem:[#allocation5 + $0x18] sm:$0xff] %vm4239, 0
        %4244 = vst.msk [vmem:[#allocation5 + $0x20] sm:$0xff] %vm4239, 0
        %4245 = vst.msk [vmem:[#allocation5 + $0x28] sm:$0xff] %vm4239, 0
        %4246 = vst.msk [vmem:[#allocation5 + $0x30] sm:$0xff] %vm4239, 0
        %4247 = vst.msk [vmem:[#allocation5 + $0x38] sm:$0xff] %vm4239, 0
        %4248 = vst.msk [vmem:[#allocation5 + $0x40] sm:$0xff] %vm4239, 0
        %4249 = vst.msk [vmem:[#allocation5 + $0x48] sm:$0xff] %vm4239, 0
        %4250 = vst.msk [vmem:[#allocation5 + $0x50] sm:$0xff] %vm4239, 0
        %4251 = vst.msk [vmem:[#allocation5 + $0x58] sm:$0xff] %vm4239, 0
        %4252 = vst.msk [vmem:[#allocation5 + $0x60] sm:$0xff] %vm4239, 0
        %4253 = vst.msk [vmem:[#allocation5 + $0x68] sm:$0xff] %vm4239, 0
        %4254 = vst.msk [vmem:[#allocation5 + $0x70] sm:$0xff] %vm4239, 0
        %4255 = vst.msk [vmem:[#allocation5 + $0x78] sm:$0xff] %vm4239, 0
        %v4256 = vld [vmem:[#allocation5] sm:$0xff]
        %v4257 = vld [vmem:[#allocation5 + $0x8] sm:$0xff]
        %v4258 = vld [vmem:[#allocation5 + $0x10] sm:$0xff]
        %v4259 = vld [vmem:[#allocation5 + $0x18] sm:$0xff]
        %v4260 = vld [vmem:[#allocation5 + $0x20] sm:$0xff]
        %v4261 = vld [vmem:[#allocation5 + $0x28] sm:$0xff]
        %v4262 = vld [vmem:[#allocation5 + $0x30] sm:$0xff]
        %v4263 = vld [vmem:[#allocation5 + $0x38] sm:$0xff]
        %v4264 = vld [vmem:[#allocation9] sm:$0xf]
        %v4265 = vld [vmem:[#allocation9 + $0x4] sm:$0xf]
        %v4266 = vld [vmem:[#allocation9 + $0x8] sm:$0xf]
        %v4267 = vld [vmem:[#allocation9 + $0xc] sm:$0xf]
        %v4268 = vld [vmem:[#allocation9 + $0x10] sm:$0xf]
        %v4269 = vld [vmem:[#allocation9 + $0x14] sm:$0xf]
        %v4270 = vld [vmem:[#allocation9 + $0x18] sm:$0xf]
        %v4271 = vld [vmem:[#allocation9 + $0x1c] sm:$0xf]
        %v4272 = vld [vmem:[#allocation9 + $0x20] sm:$0xf]
        %v4273 = vld [vmem:[#allocation9 + $0x24] sm:$0xf]
        %v4274 = vld [vmem:[#allocation9 + $0x28] sm:$0xf]
        %v4275 = vld [vmem:[#allocation9 + $0x2c] sm:$0xf]
        %v4276 = vld [vmem:[#allocation9 + $0x30] sm:$0xf]
        %v4277 = vld [vmem:[#allocation9 + $0x34] sm:$0xf]
        %v4278 = vld [vmem:[#allocation9 + $0x38] sm:$0xf]
        %v4279 = vld [vmem:[#allocation9 + $0x3c] sm:$0xf]
        %v4280 = vld [vmem:[%s2] sm:$0x1]
        %v4282 = vlaneseq
        %v4283 = vshrl.u32 %v4282, 7
        %v4284 = vsub.s32 0, %v4283
        %v4285 = vrot.slane %v4280, %v4284
        %v4303 = vunpack.c.l.b16 %v4264
        %v4304 = vunpack.c.l.b16 %v4265
        %v4305 = vunpack.c.l.b16 %v4266
        %v4306 = vunpack.c.l.b16 %v4267
        %v4307 = vunpack.c.l.b16 %v4268
        %v4308 = vunpack.c.l.b16 %v4269
        %v4309 = vunpack.c.l.b16 %v4270
        %v4310 = vunpack.c.l.b16 %v4271
        %v4311 = vunpack.c.l.b16 %v4272
        %v4312 = vunpack.c.l.b16 %v4273
        %v4313 = vunpack.c.l.b16 %v4274
        %v4314 = vunpack.c.l.b16 %v4275
        %v4315 = vunpack.c.l.b16 %v4276
        %v4316 = vunpack.c.l.b16 %v4277
        %v4317 = vunpack.c.l.b16 %v4278
        %v4318 = vunpack.c.l.b16 %v4279
        %v4319 = vpack.c.b16 %v4304, %v4303
        %v4320 = vpack.c.b16 %v4306, %v4305
        %v4321 = vpack.c.b16 %v4308, %v4307
        %v4322 = vpack.c.b16 %v4310, %v4309
        %v4323 = vpack.c.b16 %v4312, %v4311
        %v4324 = vpack.c.b16 %v4314, %v4313
        %v4325 = vpack.c.b16 %v4316, %v4315
        %v4326 = vpack.c.b16 %v4318, %v4317
        %4335 = vmatprep.subr.bf16.mxu0 0
        %4336 = vmatpush1.bf16.msra.mxu0 %v4319
        %4337 = vmatprep.subr.bf16.mxu0 0
        %4338 = vmatpush1.bf16.msra.mxu0 %v4320
        %4339 = vmatprep.subr.bf16.mxu0 0
        %4340 = vmatpush1.bf16.msra.mxu0 %v4321
        %4341 = vmatprep.subr.bf16.mxu0 0
        %4342 = vmatpush1.bf16.msra.mxu0 %v4322
        %4343 = vmatprep.subr.bf16.mxu0 0
        %4344 = vmatpush1.bf16.msra.mxu0 %v4323
        %4345 = vmatprep.subr.bf16.mxu0 0
        %4346 = vmatpush1.bf16.msra.mxu0 %v4324
        %4347 = vmatprep.subr.bf16.mxu0 0
        %4348 = vmatpush1.bf16.msra.mxu0 %v4325
        %4349 = vmatprep.subr.bf16.mxu0 0
        %4350 = vmatpush1.bf16.msra.mxu0 %v4326
        %4351 = vmatprep.subr.bf16.mxu0 0
        %4352 = vmatpush1.bf16.msra.mxu0 0
        %4353 = vmatprep.subr.bf16.mxu0 0
        %4354 = vmatpush1.bf16.msra.mxu0 0
        %4355 = vmatprep.subr.bf16.mxu0 0
        %4356 = vmatpush1.bf16.msra.mxu0 0
        %4357 = vmatprep.subr.bf16.mxu0 0
        %4358 = vmatpush1.bf16.msra.mxu0 0
        %4359 = vmatprep.subr.bf16.mxu0 0
        %4360 = vmatpush1.bf16.msra.mxu0 0
        %4361 = vmatprep.subr.bf16.mxu0 0
        %4362 = vmatpush1.bf16.msra.mxu0 0
        %4363 = vmatprep.subr.bf16.mxu0 0
        %4364 = vmatpush1.bf16.msra.mxu0 0
        %4365 = vmatprep.subr.bf16.mxu0 0
        %4366 = vmatpush1.bf16.msra.mxu0 0
        %4367 = vmatprep.mubr.bf16.mxu0 0
        %4368 = vmatmul.mubr.bf16.gmra.mrb[0].mxu0 %v4256
        %v4369 = vpop.f32.mrb[0].mxu0
        %v4370 = vadd.f32 %v4285, %v4369
        %v4371 = vpop.f32.mrb[0].mxu0
        %v4372 = vpop.f32.mrb[0].mxu0
        %v4373 = vadd.f32 %v4285, %v4372
        %v4374 = vpop.f32.mrb[0].mxu0
        %4375 = vmatprep.mubr.bf16.mxu0 0
        %4376 = vmatmul.mubr.bf16.gmra.mrb[0].mxu0 %v4257
        %v4377 = vpop.f32.mrb[0].mxu0
        %v4378 = vadd.f32 %v4285, %v4377
        %v4379 = vpop.f32.mrb[0].mxu0
        %v4380 = vpop.f32.mrb[0].mxu0
        %v4381 = vadd.f32 %v4285, %v4380
        %v4382 = vpop.f32.mrb[0].mxu0
        %4383 = vmatprep.mubr.bf16.mxu0 0
        %4384 = vmatmul.mubr.bf16.gmra.mrb[0].mxu0 %v4258
        %v4385 = vpop.f32.mrb[0].mxu0
        %v4386 = vadd.f32 %v4285, %v4385
        %v4387 = vpop.f32.mrb[0].mxu0
        %v4388 = vpop.f32.mrb[0].mxu0
        %v4389 = vadd.f32 %v4285, %v4388
        %v4390 = vpop.f32.mrb[0].mxu0
        %4391 = vmatprep.mubr.bf16.mxu0 0
        %4392 = vmatmul.mubr.bf16.gmra.mrb[0].mxu0 %v4259
        %v4393 = vpop.f32.mrb[0].mxu0
        %v4394 = vadd.f32 %v4285, %v4393
        %v4395 = vpop.f32.mrb[0].mxu0
        %v4396 = vpop.f32.mrb[0].mxu0
        %v4397 = vadd.f32 %v4285, %v4396
        %v4398 = vpop.f32.mrb[0].mxu0
        %4399 = vmatprep.mubr.bf16.mxu0 0
        %4400 = vmatmul.mubr.bf16.gmra.mrb[0].mxu0 %v4260
        %v4401 = vpop.f32.mrb[0].mxu0
        %v4402 = vadd.f32 %v4285, %v4401
        %v4403 = vpop.f32.mrb[0].mxu0
        %v4404 = vpop.f32.mrb[0].mxu0
        %v4405 = vadd.f32 %v4285, %v4404
        %v4406 = vpop.f32.mrb[0].mxu0
        %4407 = vmatprep.mubr.bf16.mxu0 0
        %4408 = vmatmul.mubr.bf16.gmra.mrb[0].mxu0 %v4261
        %v4409 = vpop.f32.mrb[0].mxu0
        %v4410 = vadd.f32 %v4285, %v4409
        %v4411 = vpop.f32.mrb[0].mxu0
        %v4412 = vpop.f32.mrb[0].mxu0
        %v4413 = vadd.f32 %v4285, %v4412
        %v4414 = vpop.f32.mrb[0].mxu0
        %4415 = vmatprep.mubr.bf16.mxu0 0
        %4416 = vmatmul.mubr.bf16.gmra.mrb[0].mxu0 %v4262
        %v4417 = vpop.f32.mrb[0].mxu0
        %v4418 = vadd.f32 %v4285, %v4417
        %v4419 = vpop.f32.mrb[0].mxu0
        %v4420 = vpop.f32.mrb[0].mxu0
        %v4421 = vadd.f32 %v4285, %v4420
        %v4422 = vpop.f32.mrb[0].mxu0
        %4423 = vmatprep.mubr.bf16.mxu0 0
        %4424 = vmatmul.mubr.bf16.gmra.mrb[0].mxu0 %v4263
        %v4425 = vpop.f32.mrb[0].mxu0
        %v4426 = vadd.f32 %v4285, %v4425
        %v4427 = vpop.f32.mrb[0].mxu0
        %v4428 = vpop.f32.mrb[0].mxu0
        %v4429 = vadd.f32 %v4285, %v4428
        %v4430 = vpop.f32.mrb[0].mxu0
        %4431 = vdwg.mxu0
        %v4432 = vmax.f32 %v4370, 0.0
        %v4433 = vmax.f32 %v4373, 0.0
        %v4434 = vmax.f32 %v4378, 0.0
        %v4435 = vmax.f32 %v4381, 0.0
        %v4436 = vmax.f32 %v4386, 0.0
        %v4437 = vmax.f32 %v4389, 0.0
        %v4438 = vmax.f32 %v4394, 0.0
        %v4439 = vmax.f32 %v4397, 0.0
        %v4440 = vmax.f32 %v4402, 0.0
        %v4441 = vmax.f32 %v4405, 0.0
        %v4442 = vmax.f32 %v4410, 0.0
        %v4443 = vmax.f32 %v4413, 0.0
        %v4444 = vmax.f32 %v4418, 0.0
        %v4445 = vmax.f32 %v4421, 0.0
        %v4446 = vmax.f32 %v4426, 0.0
        %v4447 = vmax.f32 %v4429, 0.0
        %4448 = vst [vmem:[#allocation8] sm:$0xff] %v4432
        %4449 = vst [vmem:[#allocation8 + $0x8] sm:$0xff] %v4433
        %4450 = vst [vmem:[#allocation8 + $0x10] sm:$0xff] %v4434
        %4451 = vst [vmem:[#allocation8 + $0x18] sm:$0xff] %v4435
        %4452 = vst [vmem:[#allocation8 + $0x20] sm:$0xff] %v4436
        %4453 = vst [vmem:[#allocation8 + $0x28] sm:$0xff] %v4437
        %4454 = vst [vmem:[#allocation8 + $0x30] sm:$0xff] %v4438
        %4455 = vst [vmem:[#allocation8 + $0x38] sm:$0xff] %v4439
        %4456 = vst [vmem:[#allocation8 + $0x40] sm:$0xff] %v4440
        %4457 = vst [vmem:[#allocation8 + $0x48] sm:$0xff] %v4441
        %4458 = vst [vmem:[#allocation8 + $0x50] sm:$0xff] %v4442
        %4459 = vst [vmem:[#allocation8 + $0x58] sm:$0xff] %v4443
        %4460 = vst [vmem:[#allocation8 + $0x60] sm:$0xff] %v4444
        %4461 = vst [vmem:[#allocation8 + $0x68] sm:$0xff] %v4445
        %4462 = vst [vmem:[#allocation8 + $0x70] sm:$0xff] %v4446
        %4463 = vst [vmem:[#allocation8 + $0x78] sm:$0xff] %v4447
        %v4464 = vld [vmem:[#allocation5 + $0x40] sm:$0xff]
        %v4465 = vld [vmem:[#allocation5 + $0x48] sm:$0xff]
        %v4466 = vld [vmem:[#allocation5 + $0x50] sm:$0xff]
        %v4467 = vld [vmem:[#allocation5 + $0x58] sm:$0xff]
        %v4468 = vld [vmem:[#allocation5 + $0x60] sm:$0xff]
        %v4469 = vld [vmem:[#allocation5 + $0x68] sm:$0xff]
        %v4470 = vld [vmem:[#allocation5 + $0x70] sm:$0xff]
        %v4471 = vld [vmem:[#allocation5 + $0x78] sm:$0xff]
        %v4472 = vld [vmem:[#allocation9] sm:$0xf]
        %v4473 = vld [vmem:[#allocation9 + $0x4] sm:$0xf]
        %v4474 = vld [vmem:[#allocation9 + $0x8] sm:$0xf]
        %v4475 = vld [vmem:[#allocation9 + $0xc] sm:$0xf]
        %v4476 = vld [vmem:[#allocation9 + $0x10] sm:$0xf]
        %v4477 = vld [vmem:[#allocation9 + $0x14] sm:$0xf]
        %v4478 = vld [vmem:[#allocation9 + $0x18] sm:$0xf]
        %v4479 = vld [vmem:[#allocation9 + $0x1c] sm:$0xf]
        %v4480 = vld [vmem:[#allocation9 + $0x20] sm:$0xf]
        %v4481 = vld [vmem:[#allocation9 + $0x24] sm:$0xf]
        %v4482 = vld [vmem:[#allocation9 + $0x28] sm:$0xf]
        %v4483 = vld [vmem:[#allocation9 + $0x2c] sm:$0xf]
        %v4484 = vld [vmem:[#allocation9 + $0x30] sm:$0xf]
        %v4485 = vld [vmem:[#allocation9 + $0x34] sm:$0xf]
        %v4486 = vld [vmem:[#allocation9 + $0x38] sm:$0xf]
        %v4487 = vld [vmem:[#allocation9 + $0x3c] sm:$0xf]
        %v4488 = vld [vmem:[%s2] sm:$0x1]
        %v4490 = vlaneseq
        %v4491 = vshrl.u32 %v4490, 7
        %v4492 = vsub.s32 0, %v4491
        %v4493 = vrot.slane %v4488, %v4492
        %v4511 = vunpack.c.l.b16 %v4472
        %v4512 = vunpack.c.l.b16 %v4473
        %v4513 = vunpack.c.l.b16 %v4474
        %v4514 = vunpack.c.l.b16 %v4475
        %v4515 = vunpack.c.l.b16 %v4476
        %v4516 = vunpack.c.l.b16 %v4477
        %v4517 = vunpack.c.l.b16 %v4478
        %v4518 = vunpack.c.l.b16 %v4479
        %v4519 = vunpack.c.l.b16 %v4480
        %v4520 = vunpack.c.l.b16 %v4481
        %v4521 = vunpack.c.l.b16 %v4482
        %v4522 = vunpack.c.l.b16 %v4483
        %v4523 = vunpack.c.l.b16 %v4484
        %v4524 = vunpack.c.l.b16 %v4485
        %v4525 = vunpack.c.l.b16 %v4486
        %v4526 = vunpack.c.l.b16 %v4487
        %v4527 = vpack.c.b16 %v4512, %v4511
        %v4528 = vpack.c.b16 %v4514, %v4513
        %v4529 = vpack.c.b16 %v4516, %v4515
        %v4530 = vpack.c.b16 %v4518, %v4517
        %v4531 = vpack.c.b16 %v4520, %v4519
        %v4532 = vpack.c.b16 %v4522, %v4521
        %v4533 = vpack.c.b16 %v4524, %v4523
        %v4534 = vpack.c.b16 %v4526, %v4525
        %4543 = vmatprep.subr.bf16.mxu0 0
        %4544 = vmatpush1.bf16.msra.mxu0 %v4527
        %4545 = vmatprep.subr.bf16.mxu0 0
        %4546 = vmatpush1.bf16.msra.mxu0 %v4528
        %4547 = vmatprep.subr.bf16.mxu0 0
        %4548 = vmatpush1.bf16.msra.mxu0 %v4529
        %4549 = vmatprep.subr.bf16.mxu0 0
        %4550 = vmatpush1.bf16.msra.mxu0 %v4530
        %4551 = vmatprep.subr.bf16.mxu0 0
        %4552 = vmatpush1.bf16.msra.mxu0 %v4531
        %4553 = vmatprep.subr.bf16.mxu0 0
        %4554 = vmatpush1.bf16.msra.mxu0 %v4532
        %4555 = vmatprep.subr.bf16.mxu0 0
        %4556 = vmatpush1.bf16.msra.mxu0 %v4533
        %4557 = vmatprep.subr.bf16.mxu0 0
        %4558 = vmatpush1.bf16.msra.mxu0 %v4534
        %4559 = vmatprep.subr.bf16.mxu0 0
        %4560 = vmatpush1.bf16.msra.mxu0 0
        %4561 = vmatprep.subr.bf16.mxu0 0
        %4562 = vmatpush1.bf16.msra.mxu0 0
        %4563 = vmatprep.subr.bf16.mxu0 0
        %4564 = vmatpush1.bf16.msra.mxu0 0
        %4565 = vmatprep.subr.bf16.mxu0 0
        %4566 = vmatpush1.bf16.msra.mxu0 0
        %4567 = vmatprep.subr.bf16.mxu0 0
        %4568 = vmatpush1.bf16.msra.mxu0 0
        %4569 = vmatprep.subr.bf16.mxu0 0
        %4570 = vmatpush1.bf16.msra.mxu0 0
        %4571 = vmatprep.subr.bf16.mxu0 0
        %4572 = vmatpush1.bf16.msra.mxu0 0
        %4573 = vmatprep.subr.bf16.mxu0 0
        %4574 = vmatpush1.bf16.msra.mxu0 0
        %4575 = vmatprep.mubr.bf16.mxu0 0
        %4576 = vmatmul.mubr.bf16.gmra.mrb[0].mxu0 %v4464
        %v4577 = vpop.f32.mrb[0].mxu0
        %v4578 = vadd.f32 %v4493, %v4577
        %v4579 = vpop.f32.mrb[0].mxu0
        %v4580 = vpop.f32.mrb[0].mxu0
        %v4581 = vadd.f32 %v4493, %v4580
        %v4582 = vpop.f32.mrb[0].mxu0
        %4583 = vmatprep.mubr.bf16.mxu0 0
        %4584 = vmatmul.mubr.bf16.gmra.mrb[0].mxu0 %v4465
        %v4585 = vpop.f32.mrb[0].mxu0
        %v4586 = vadd.f32 %v4493, %v4585
        %v4587 = vpop.f32.mrb[0].mxu0
        %v4588 = vpop.f32.mrb[0].mxu0
        %v4589 = vadd.f32 %v4493, %v4588
        %v4590 = vpop.f32.mrb[0].mxu0
        %4591 = vmatprep.mubr.bf16.mxu0 0
        %4592 = vmatmul.mubr.bf16.gmra.mrb[0].mxu0 %v4466
        %v4593 = vpop.f32.mrb[0].mxu0
        %v4594 = vadd.f32 %v4493, %v4593
        %v4595 = vpop.f32.mrb[0].mxu0
        %v4596 = vpop.f32.mrb[0].mxu0
        %v4597 = vadd.f32 %v4493, %v4596
        %v4598 = vpop.f32.mrb[0].mxu0
        %4599 = vmatprep.mubr.bf16.mxu0 0
        %4600 = vmatmul.mubr.bf16.gmra.mrb[0].mxu0 %v4467
        %v4601 = vpop.f32.mrb[0].mxu0
        %v4602 = vadd.f32 %v4493, %v4601
        %v4603 = vpop.f32.mrb[0].mxu0
        %v4604 = vpop.f32.mrb[0].mxu0
        %v4605 = vadd.f32 %v4493, %v4604
        %v4606 = vpop.f32.mrb[0].mxu0
        %4607 = vmatprep.mubr.bf16.mxu0 0
        %4608 = vmatmul.mubr.bf16.gmra.mrb[0].mxu0 %v4468
        %v4609 = vpop.f32.mrb[0].mxu0
        %v4610 = vadd.f32 %v4493, %v4609
        %v4611 = vpop.f32.mrb[0].mxu0
        %v4612 = vpop.f32.mrb[0].mxu0
        %v4613 = vadd.f32 %v4493, %v4612
        %v4614 = vpop.f32.mrb[0].mxu0
        %4615 = vmatprep.mubr.bf16.mxu0 0
        %4616 = vmatmul.mubr.bf16.gmra.mrb[0].mxu0 %v4469
        %v4617 = vpop.f32.mrb[0].mxu0
        %v4618 = vadd.f32 %v4493, %v4617
        %v4619 = vpop.f32.mrb[0].mxu0
        %v4620 = vpop.f32.mrb[0].mxu0
        %v4621 = vadd.f32 %v4493, %v4620
        %v4622 = vpop.f32.mrb[0].mxu0
        %4623 = vmatprep.mubr.bf16.mxu0 0
        %4624 = vmatmul.mubr.bf16.gmra.mrb[0].mxu0 %v4470
        %v4625 = vpop.f32.mrb[0].mxu0
        %v4626 = vadd.f32 %v4493, %v4625
        %v4627 = vpop.f32.mrb[0].mxu0
        %v4628 = vpop.f32.mrb[0].mxu0
        %v4629 = vadd.f32 %v4493, %v4628
        %v4630 = vpop.f32.mrb[0].mxu0
        %4631 = vmatprep.mubr.bf16.mxu0 0
        %4632 = vmatmul.mubr.bf16.gmra.mrb[0].mxu0 %v4471
        %v4633 = vpop.f32.mrb[0].mxu0
        %v4634 = vadd.f32 %v4493, %v4633
        %v4635 = vpop.f32.mrb[0].mxu0
        %v4636 = vpop.f32.mrb[0].mxu0
        %v4637 = vadd.f32 %v4493, %v4636
        %v4638 = vpop.f32.mrb[0].mxu0
        %4639 = vdwg.mxu0
        %v4640 = vmax.f32 %v4578, 0.0
        %v4641 = vmax.f32 %v4581, 0.0
        %v4642 = vmax.f32 %v4586, 0.0
        %v4643 = vmax.f32 %v4589, 0.0
        %v4644 = vmax.f32 %v4594, 0.0
        %v4645 = vmax.f32 %v4597, 0.0
        %v4646 = vmax.f32 %v4602, 0.0
        %v4647 = vmax.f32 %v4605, 0.0
        %v4648 = vmax.f32 %v4610, 0.0
        %v4649 = vmax.f32 %v4613, 0.0
        %v4650 = vmax.f32 %v4618, 0.0
        %v4651 = vmax.f32 %v4621, 0.0
        %v4652 = vmax.f32 %v4626, 0.0
        %v4653 = vmax.f32 %v4629, 0.0
        %v4654 = vmax.f32 %v4634, 0.0
        %v4655 = vmax.f32 %v4637, 0.0
        %4656 = vst [vmem:[#allocation8 + $0x80] sm:$0xff] %v4640
        %4657 = vst [vmem:[#allocation8 + $0x88] sm:$0xff] %v4641
        %4658 = vst [vmem:[#allocation8 + $0x90] sm:$0xff] %v4642
        %4659 = vst [vmem:[#allocation8 + $0x98] sm:$0xff] %v4643
        %4660 = vst [vmem:[#allocation8 + $0xa0] sm:$0xff] %v4644
        %4661 = vst [vmem:[#allocation8 + $0xa8] sm:$0xff] %v4645
        %4662 = vst [vmem:[#allocation8 + $0xb0] sm:$0xff] %v4646
        %4663 = vst [vmem:[#allocation8 + $0xb8] sm:$0xff] %v4647
        %4664 = vst [vmem:[#allocation8 + $0xc0] sm:$0xff] %v4648
        %4665 = vst [vmem:[#allocation8 + $0xc8] sm:$0xff] %v4649
        %4666 = vst [vmem:[#allocation8 + $0xd0] sm:$0xff] %v4650
        %4667 = vst [vmem:[#allocation8 + $0xd8] sm:$0xff] %v4651
        %4668 = vst [vmem:[#allocation8 + $0xe0] sm:$0xff] %v4652
        %4669 = vst [vmem:[#allocation8 + $0xe8] sm:$0xff] %v4653
        %4670 = vst [vmem:[#allocation8 + $0xf0] sm:$0xff] %v4654
        %4671 = vst [vmem:[#allocation8 + $0xf8] sm:$0xff] %v4655
        %v4672 = vld [vmem:[#allocation8] ss:$2 sm:$0xff]
        %s4673 = scalar_lea.vmem [#allocation8], 1
        %v4674 = vld [vmem:[%s4673] ss:$2 sm:$0xff]
        %s4675 = scalar_lea.vmem [#allocation8], 16
        %v4676 = vld [vmem:[%s4675] ss:$2 sm:$0xff]
        %s4677 = scalar_lea.vmem [#allocation8], 17
        %v4678 = vld [vmem:[%s4677] ss:$2 sm:$0xff]
        %v4679 = vmax.f32 %v4672, %v4674
        %v4680 = vmax.f32 %v4676, %v4678
        %v4681 = vmax.f32 %v4679, %v4680
        %v4682 = vpack.c.bf16 %v4681, %v4681
        %v4684 = vunpack.c.l.b16 %v4682
        %v4685 = vpack.c.b16 %v4684, %v4684
        %v4687 = vshrl.u32 %v4685, 16
        %v4689 = vrot.slane %v4687, 7
        %v4690 = vshll.u32 %v4685, 16
        %v4692 = vor.u32 %v4689, %v4690
        %v4693 = vrot.slane %v4689, 4
        %s4696 = scalar_lea.vmem [#allocation3], 8
        %vm4697 = vcmask 257024
        %vm4698 = vmand %vm4697, %vm495
        %v4699 = vld [vmem:[%s4696] sm:$0xf]
        %v4700 = vsel %vm4698, %v4692, %v4699
        %4701 = vst [vmem:[%s4696] sm:$0xf] %v4700
        %v4702 = vld [vmem:[%s4696 + $0x4] sm:$0x1]
        %v4703 = vsel %vm559, %v4693, %v4702
        %4704 = vst [vmem:[%s4696 + $0x4] sm:$0x1] %v4703
        %s4705 = scalar_lea.vmem [#allocation8], 32
        %v4706 = vld [vmem:[%s4705] ss:$2 sm:$0xff]
        %s4707 = scalar_lea.vmem [#allocation8], 33
        %v4708 = vld [vmem:[%s4707] ss:$2 sm:$0xff]
        %s4709 = scalar_lea.vmem [#allocation8], 48
        %v4710 = vld [vmem:[%s4709] ss:$2 sm:$0xff]
        %s4711 = scalar_lea.vmem [#allocation8], 49
        %v4712 = vld [vmem:[%s4711] ss:$2 sm:$0xff]
        %v4713 = vmax.f32 %v4706, %v4708
        %v4714 = vmax.f32 %v4710, %v4712
        %v4715 = vmax.f32 %v4713, %v4714
        %v4716 = vpack.c.bf16 %v4715, %v4715
        %v4718 = vunpack.c.l.b16 %v4716
        %v4719 = vpack.c.b16 %v4718, %v4718
        %v4721 = vshrl.u32 %v4719, 16
        %v4723 = vrot.slane %v4721, 7
        %v4724 = vshll.u32 %v4719, 16
        %v4726 = vor.u32 %v4723, %v4724
        %v4727 = vrot.slane %v4723, 4
        %s4730 = scalar_lea.vmem [#allocation3], 16
        %v4731 = vld [vmem:[%s4730] sm:$0xf]
        %v4732 = vsel %vm4698, %v4726, %v4731
        %4733 = vst [vmem:[%s4730] sm:$0xf] %v4732
        %v4734 = vld [vmem:[%s4730 + $0x4] sm:$0x1]
        %v4735 = vsel %vm559, %v4727, %v4734
        %4736 = vst [vmem:[%s4730 + $0x4] sm:$0x1] %v4735
        %s4737 = scalar_lea.vmem [#allocation8], 64
        %v4738 = vld [vmem:[%s4737] ss:$2 sm:$0xff]
        %s4739 = scalar_lea.vmem [#allocation8], 65
        %v4740 = vld [vmem:[%s4739] ss:$2 sm:$0xff]
        %s4741 = scalar_lea.vmem [#allocation8], 80
        %v4742 = vld [vmem:[%s4741] ss:$2 sm:$0xff]
        %s4743 = scalar_lea.vmem [#allocation8], 81
        %v4744 = vld [vmem:[%s4743] ss:$2 sm:$0xff]
        %v4745 = vmax.f32 %v4738, %v4740
        %v4746 = vmax.f32 %v4742, %v4744
        %v4747 = vmax.f32 %v4745, %v4746
        %v4748 = vpack.c.bf16 %v4747, %v4747
        %v4750 = vunpack.c.l.b16 %v4748
        %v4751 = vpack.c.b16 %v4750, %v4750
        %v4753 = vshrl.u32 %v4751, 16
        %v4755 = vrot.slane %v4753, 7
        %v4756 = vshll.u32 %v4751, 16
        %v4758 = vor.u32 %v4755, %v4756
        %v4759 = vrot.slane %v4755, 4
        %s4762 = scalar_lea.vmem [#allocation3], 24
        %v4763 = vld [vmem:[%s4762] sm:$0xf]
        %v4764 = vsel %vm4698, %v4758, %v4763
        %4765 = vst [vmem:[%s4762] sm:$0xf] %v4764
        %v4766 = vld [vmem:[%s4762 + $0x4] sm:$0x1]
        %v4767 = vsel %vm559, %v4759, %v4766
        %4768 = vst [vmem:[%s4762 + $0x4] sm:$0x1] %v4767
        %s4769 = scalar_lea.vmem [#allocation8], 96
        %v4770 = vld [vmem:[%s4769] ss:$2 sm:$0xff]
        %s4771 = scalar_lea.vmem [#allocation8], 97
        %v4772 = vld [vmem:[%s4771] ss:$2 sm:$0xff]
        %s4773 = scalar_lea.vmem [#allocation8], 112
        %v4774 = vld [vmem:[%s4773] ss:$2 sm:$0xff]
        %s4775 = scalar_lea.vmem [#allocation8], 113
        %v4776 = vld [vmem:[%s4775] ss:$2 sm:$0xff]
        %v4777 = vmax.f32 %v4770, %v4772
        %v4778 = vmax.f32 %v4774, %v4776
        %v4779 = vmax.f32 %v4777, %v4778
        %v4780 = vpack.c.bf16 %v4779, %v4779
        %v4782 = vunpack.c.l.b16 %v4780
        %v4783 = vpack.c.b16 %v4782, %v4782
        %v4785 = vshrl.u32 %v4783, 16
        %v4787 = vrot.slane %v4785, 7
        %v4788 = vshll.u32 %v4783, 16
        %v4790 = vor.u32 %v4787, %v4788
        %v4791 = vrot.slane %v4787, 4
        %s4794 = scalar_lea.vmem [#allocation3], 32
        %v4795 = vld [vmem:[%s4794] sm:$0xf]
        %v4796 = vsel %vm4698, %v4790, %v4795
        %4797 = vst [vmem:[%s4794] sm:$0xf] %v4796
        %v4798 = vld [vmem:[%s4794 + $0x4] sm:$0x1]
        %v4799 = vsel %vm559, %v4791, %v4798
        %4800 = vst [vmem:[%s4794 + $0x4] sm:$0x1] %v4799
        %s4801 = scalar_lea.vmem [#allocation8], 128
        %v4802 = vld [vmem:[%s4801] ss:$2 sm:$0xff]
        %s4803 = scalar_lea.vmem [#allocation8], 129
        %v4804 = vld [vmem:[%s4803] ss:$2 sm:$0xff]
        %s4805 = scalar_lea.vmem [#allocation8], 144
        %v4806 = vld [vmem:[%s4805] ss:$2 sm:$0xff]
        %s4807 = scalar_lea.vmem [#allocation8], 145
        %v4808 = vld [vmem:[%s4807] ss:$2 sm:$0xff]
        %v4809 = vmax.f32 %v4802, %v4804
        %v4810 = vmax.f32 %v4806, %v4808
        %v4811 = vmax.f32 %v4809, %v4810
        %v4812 = vpack.c.bf16 %v4811, %v4811
        %v4814 = vunpack.c.l.b16 %v4812
        %v4815 = vpack.c.b16 %v4814, %v4814
        %v4817 = vshrl.u32 %v4815, 16
        %v4819 = vrot.slane %v4817, 7
        %v4820 = vshll.u32 %v4815, 16
        %v4822 = vor.u32 %v4819, %v4820
        %v4823 = vrot.slane %v4819, 4
        %s4826 = scalar_lea.vmem [#allocation3], 40
        %v4827 = vld [vmem:[%s4826] sm:$0xf]
        %v4828 = vsel %vm4698, %v4822, %v4827
        %4829 = vst [vmem:[%s4826] sm:$0xf] %v4828
        %v4830 = vld [vmem:[%s4826 + $0x4] sm:$0x1]
        %v4831 = vsel %vm559, %v4823, %v4830
        %4832 = vst [vmem:[%s4826 + $0x4] sm:$0x1] %v4831
        %s4833 = scalar_lea.vmem [#allocation8], 160
        %v4834 = vld [vmem:[%s4833] ss:$2 sm:$0xff]
        %s4835 = scalar_lea.vmem [#allocation8], 161
        %v4836 = vld [vmem:[%s4835] ss:$2 sm:$0xff]
        %s4837 = scalar_lea.vmem [#allocation8], 176
        %v4838 = vld [vmem:[%s4837] ss:$2 sm:$0xff]
        %s4839 = scalar_lea.vmem [#allocation8], 177
        %v4840 = vld [vmem:[%s4839] ss:$2 sm:$0xff]
        %v4841 = vmax.f32 %v4834, %v4836
        %v4842 = vmax.f32 %v4838, %v4840
        %v4843 = vmax.f32 %v4841, %v4842
        %v4844 = vpack.c.bf16 %v4843, %v4843
        %v4846 = vunpack.c.l.b16 %v4844
        %v4847 = vpack.c.b16 %v4846, %v4846
        %v4849 = vshrl.u32 %v4847, 16
        %v4851 = vrot.slane %v4849, 7
        %v4852 = vshll.u32 %v4847, 16
        %v4854 = vor.u32 %v4851, %v4852
        %v4855 = vrot.slane %v4851, 4
        %s4858 = scalar_lea.vmem [#allocation3], 48
        %v4859 = vld [vmem:[%s4858] sm:$0xf]
        %v4860 = vsel %vm4698, %v4854, %v4859
        %4861 = vst [vmem:[%s4858] sm:$0xf] %v4860
        %v4862 = vld [vmem:[%s4858 + $0x4] sm:$0x1]
        %v4863 = vsel %vm559, %v4855, %v4862
        %4864 = vst [vmem:[%s4858 + $0x4] sm:$0x1] %v4863
        %s4865 = scalar_lea.vmem [#allocation8], 192
        %v4866 = vld [vmem:[%s4865] ss:$2 sm:$0xff]
        %s4867 = scalar_lea.vmem [#allocation8], 193
        %v4868 = vld [vmem:[%s4867] ss:$2 sm:$0xff]
        %s4869 = scalar_lea.vmem [#allocation8], 208
        %v4870 = vld [vmem:[%s4869] ss:$2 sm:$0xff]
        %s4871 = scalar_lea.vmem [#allocation8], 209
        %v4872 = vld [vmem:[%s4871] ss:$2 sm:$0xff]
        %v4873 = vmax.f32 %v4866, %v4868
        %v4874 = vmax.f32 %v4870, %v4872
        %v4875 = vmax.f32 %v4873, %v4874
        %v4876 = vpack.c.bf16 %v4875, %v4875
        %v4878 = vunpack.c.l.b16 %v4876
        %v4879 = vpack.c.b16 %v4878, %v4878
        %v4881 = vshrl.u32 %v4879, 16
        %v4883 = vrot.slane %v4881, 7
        %v4884 = vshll.u32 %v4879, 16
        %v4886 = vor.u32 %v4883, %v4884
        %v4887 = vrot.slane %v4883, 4
        %s4890 = scalar_lea.vmem [#allocation3], 56
        %v4891 = vld [vmem:[%s4890] sm:$0xf]
        %v4892 = vsel %vm4698, %v4886, %v4891
        %4893 = vst [vmem:[%s4890] sm:$0xf] %v4892
        %v4894 = vld [vmem:[%s4890 + $0x4] sm:$0x1]
        %v4895 = vsel %vm559, %v4887, %v4894
        %4896 = vst [vmem:[%s4890 + $0x4] sm:$0x1] %v4895
        %s4897 = scalar_lea.vmem [#allocation8], 224
        %v4898 = vld [vmem:[%s4897] ss:$2 sm:$0xff]
        %s4899 = scalar_lea.vmem [#allocation8], 225
        %v4900 = vld [vmem:[%s4899] ss:$2 sm:$0xff]
        %s4901 = scalar_lea.vmem [#allocation8], 240
        %v4902 = vld [vmem:[%s4901] ss:$2 sm:$0xff]
        %s4903 = scalar_lea.vmem [#allocation8], 241
        %v4904 = vld [vmem:[%s4903] ss:$2 sm:$0xff]
        %v4905 = vmax.f32 %v4898, %v4900
        %v4906 = vmax.f32 %v4902, %v4904
        %v4907 = vmax.f32 %v4905, %v4906
        %v4908 = vpack.c.bf16 %v4907, %v4907
        %v4910 = vunpack.c.l.b16 %v4908
        %v4911 = vpack.c.b16 %v4910, %v4910
        %v4913 = vshrl.u32 %v4911, 16
        %v4915 = vrot.slane %v4913, 7
        %v4916 = vshll.u32 %v4911, 16
        %v4918 = vor.u32 %v4915, %v4916
        %v4919 = vrot.slane %v4915, 4
        %s4922 = scalar_lea.vmem [#allocation3], 64
        %v4923 = vld [vmem:[%s4922] sm:$0xf]
        %v4924 = vsel %vm4698, %v4918, %v4923
        %4925 = vst [vmem:[%s4922] sm:$0xf] %v4924
        %v4926 = vld [vmem:[%s4922 + $0x4] sm:$0x1]
        %v4927 = vsel %vm559, %v4919, %v4926
        %4928 = vst [vmem:[%s4922 + $0x4] sm:$0x1] %v4927
        %v4929 = vld [vmem:[#allocation3] sm:$0xf]
        %v4930 = vld [vmem:[#allocation3 + $0x8] sm:$0xf]
        %v4931 = vld [vmem:[#allocation3 + $0x10] sm:$0xf]
        %v4932 = vld [vmem:[#allocation3 + $0x18] sm:$0xf]
        %v4933 = vld [vmem:[#allocation3 + $0x20] sm:$0xf]
        %v4934 = vld [vmem:[#allocation3 + $0x28] sm:$0xf]
        %v4935 = vld [vmem:[#allocation3 + $0x30] sm:$0xf]
        %v4936 = vld [vmem:[#allocation3 + $0x38] sm:$0xf]
        %v4945 = vunpack.c.l.b16 %v4929
        %v4946 = vunpack.c.l.b16 %v4930
        %v4947 = vunpack.c.l.b16 %v4931
        %v4948 = vunpack.c.l.b16 %v4932
        %v4949 = vunpack.c.l.b16 %v4933
        %v4950 = vunpack.c.l.b16 %v4934
        %v4951 = vunpack.c.l.b16 %v4935
        %v4952 = vunpack.c.l.b16 %v4936
        %v4953 = vpack.c.b16 %v4946, %v4945
        %v4954 = vpack.c.b16 %v4948, %v4947
        %v4955 = vpack.c.b16 %v4950, %v4949
        %v4956 = vpack.c.b16 %v4952, %v4951
        %vm4961 = vcmask 261120
        %4962 = vst.msk [vmem:[#allocation6] sm:$0xff] %vm4961, %v4953
        %4963 = vst.msk [vmem:[#allocation6 + $0x18] sm:$0xff] %vm4961, %v4954
        %4964 = vst.msk [vmem:[#allocation6 + $0x30] sm:$0xff] %vm4961, %v4955
        %4965 = vst.msk [vmem:[#allocation6 + $0x48] sm:$0xff] %vm4961, %v4956
        %v4966 = vld [vmem:[#allocation3] sm:$0xf]
        %v4967 = vld [vmem:[#allocation3 + $0x4] sm:$0x1]
        %v4968 = vld [vmem:[#allocation3 + $0x8] sm:$0xf]
        %v4969 = vld [vmem:[#allocation3 + $0xc] sm:$0x1]
        %v4970 = vld [vmem:[#allocation3 + $0x10] sm:$0xf]
        %v4971 = vld [vmem:[#allocation3 + $0x14] sm:$0x1]
        %v4972 = vld [vmem:[#allocation3 + $0x18] sm:$0xf]
        %v4973 = vld [vmem:[#allocation3 + $0x1c] sm:$0x1]
        %v4974 = vld [vmem:[#allocation3 + $0x20] sm:$0xf]
        %v4975 = vld [vmem:[#allocation3 + $0x24] sm:$0x1]
        %v4976 = vld [vmem:[#allocation3 + $0x28] sm:$0xf]
        %v4977 = vld [vmem:[#allocation3 + $0x2c] sm:$0x1]
        %v4978 = vld [vmem:[#allocation3 + $0x30] sm:$0xf]
        %v4979 = vld [vmem:[#allocation3 + $0x34] sm:$0x1]
        %v4980 = vld [vmem:[#allocation3 + $0x38] sm:$0xf]
        %v4981 = vld [vmem:[#allocation3 + $0x3c] sm:$0x1]
        %v4983 = vshrl.u32 %v4966, 16
        %v4985 = vrot.slane %v4983, 4
        %v4986 = vshll.u32 %v4966, 16
        %v4988 = vrot.slane %v4986, 5
        %v4989 = vor.u32 %v4985, %v4988
        %v4990 = vrot.slane %v4989, 4
        %v4992 = vshll.u32 %v4967, 16
        %v4994 = vrot.slane %v4992, 5
        %v4995 = vsel %vm1330, %v4990, %v4994
        %v4997 = vshrl.u32 %v4968, 16
        %v4999 = vrot.slane %v4997, 4
        %v5000 = vshll.u32 %v4968, 16
        %v5002 = vrot.slane %v5000, 5
        %v5003 = vor.u32 %v4999, %v5002
        %v5004 = vrot.slane %v5003, 4
        %v5006 = vshll.u32 %v4969, 16
        %v5008 = vrot.slane %v5006, 5
        %v5009 = vsel %vm1330, %v5004, %v5008
        %v5011 = vshrl.u32 %v4970, 16
        %v5013 = vrot.slane %v5011, 4
        %v5014 = vshll.u32 %v4970, 16
        %v5016 = vrot.slane %v5014, 5
        %v5017 = vor.u32 %v5013, %v5016
        %v5018 = vrot.slane %v5017, 4
        %v5020 = vshll.u32 %v4971, 16
        %v5022 = vrot.slane %v5020, 5
        %v5023 = vsel %vm1330, %v5018, %v5022
        %v5025 = vshrl.u32 %v4972, 16
        %v5027 = vrot.slane %v5025, 4
        %v5028 = vshll.u32 %v4972, 16
        %v5030 = vrot.slane %v5028, 5
        %v5031 = vor.u32 %v5027, %v5030
        %v5032 = vrot.slane %v5031, 4
        %v5034 = vshll.u32 %v4973, 16
        %v5036 = vrot.slane %v5034, 5
        %v5037 = vsel %vm1330, %v5032, %v5036
        %v5039 = vshrl.u32 %v4974, 16
        %v5041 = vrot.slane %v5039, 4
        %v5042 = vshll.u32 %v4974, 16
        %v5044 = vrot.slane %v5042, 5
        %v5045 = vor.u32 %v5041, %v5044
        %v5046 = vrot.slane %v5045, 4
        %v5048 = vshll.u32 %v4975, 16
        %v5050 = vrot.slane %v5048, 5
        %v5051 = vsel %vm1330, %v5046, %v5050
        %v5053 = vshrl.u32 %v4976, 16
        %v5055 = vrot.slane %v5053, 4
        %v5056 = vshll.u32 %v4976, 16
        %v5058 = vrot.slane %v5056, 5
        %v5059 = vor.u32 %v5055, %v5058
        %v5060 = vrot.slane %v5059, 4
        %v5062 = vshll.u32 %v4977, 16
        %v5064 = vrot.slane %v5062, 5
        %v5065 = vsel %vm1330, %v5060, %v5064
        %v5067 = vshrl.u32 %v4978, 16
        %v5069 = vrot.slane %v5067, 4
        %v5070 = vshll.u32 %v4978, 16
        %v5072 = vrot.slane %v5070, 5
        %v5073 = vor.u32 %v5069, %v5072
        %v5074 = vrot.slane %v5073, 4
        %v5076 = vshll.u32 %v4979, 16
        %v5078 = vrot.slane %v5076, 5
        %v5079 = vsel %vm1330, %v5074, %v5078
        %v5081 = vshrl.u32 %v4980, 16
        %v5083 = vrot.slane %v5081, 4
        %v5084 = vshll.u32 %v4980, 16
        %v5086 = vrot.slane %v5084, 5
        %v5087 = vor.u32 %v5083, %v5086
        %v5088 = vrot.slane %v5087, 4
        %v5090 = vshll.u32 %v4981, 16
        %v5092 = vrot.slane %v5090, 5
        %v5093 = vsel %vm1330, %v5088, %v5092
        %v5094 = vunpack.c.l.b16 %v4995
        %v5095 = vunpack.c.l.b16 %v5009
        %v5096 = vunpack.c.l.b16 %v5023
        %v5097 = vunpack.c.l.b16 %v5037
        %v5098 = vunpack.c.l.b16 %v5051
        %v5099 = vunpack.c.l.b16 %v5065
        %v5100 = vunpack.c.l.b16 %v5079
        %v5101 = vunpack.c.l.b16 %v5093
        %v5102 = vpack.c.b16 %v5095, %v5094
        %v5103 = vpack.c.b16 %v5097, %v5096
        %v5104 = vpack.c.b16 %v5099, %v5098
        %v5105 = vpack.c.b16 %v5101, %v5100
        %5106 = vrot.lane.b32.xlu0 %v5102, 32
        %v5107 = vpop.permute.xlu0 %5106
        %5108 = vrot.lane.b32.xlu0 %v5103, 32
        %v5109 = vpop.permute.xlu0 %5108
        %5110 = vrot.lane.b32.xlu0 %v5104, 32
        %v5111 = vpop.permute.xlu0 %5110
        %5112 = vrot.lane.b32.xlu0 %v5105, 32
        %v5113 = vpop.permute.xlu0 %5112
        %vm5118 = vcmask 523520
        %5119 = vst.msk [vmem:[#allocation6] sm:$0xff] %vm5118, %v5107
        %5120 = vst.msk [vmem:[#allocation6 + $0x18] sm:$0xff] %vm5118, %v5109
        %5121 = vst.msk [vmem:[#allocation6 + $0x30] sm:$0xff] %vm5118, %v5111
        %5122 = vst.msk [vmem:[#allocation6 + $0x48] sm:$0xff] %vm5118, %v5113
        %v5123 = vld [vmem:[#allocation3] sm:$0xe]
        %v5124 = vld [vmem:[#allocation3 + $0x4] sm:$0x1]
        %v5125 = vld [vmem:[#allocation3 + $0x8] sm:$0xe]
        %v5126 = vld [vmem:[#allocation3 + $0xc] sm:$0x1]
        %v5127 = vld [vmem:[#allocation3 + $0x10] sm:$0xe]
        %v5128 = vld [vmem:[#allocation3 + $0x14] sm:$0x1]
        %v5129 = vld [vmem:[#allocation3 + $0x18] sm:$0xe]
        %v5130 = vld [vmem:[#allocation3 + $0x1c] sm:$0x1]
        %v5131 = vld [vmem:[#allocation3 + $0x20] sm:$0xe]
        %v5132 = vld [vmem:[#allocation3 + $0x24] sm:$0x1]
        %v5133 = vld [vmem:[#allocation3 + $0x28] sm:$0xe]
        %v5134 = vld [vmem:[#allocation3 + $0x2c] sm:$0x1]
        %v5135 = vld [vmem:[#allocation3 + $0x30] sm:$0xe]
        %v5136 = vld [vmem:[#allocation3 + $0x34] sm:$0x1]
        %v5137 = vld [vmem:[#allocation3 + $0x38] sm:$0xe]
        %v5138 = vld [vmem:[#allocation3 + $0x3c] sm:$0x1]
        %v5155 = vrot.slane %v5123, 5
        %v5156 = vrot.slane %v5155, 4
        %v5157 = vrot.slane %v5124, 5
        %v5158 = vsel %vm1926, %v5156, %v5157
        %v5159 = vrot.slane %v5125, 5
        %v5160 = vrot.slane %v5159, 4
        %v5161 = vrot.slane %v5126, 5
        %v5162 = vsel %vm1926, %v5160, %v5161
        %v5163 = vrot.slane %v5127, 5
        %v5164 = vrot.slane %v5163, 4
        %v5165 = vrot.slane %v5128, 5
        %v5166 = vsel %vm1926, %v5164, %v5165
        %v5167 = vrot.slane %v5129, 5
        %v5168 = vrot.slane %v5167, 4
        %v5169 = vrot.slane %v5130, 5
        %v5170 = vsel %vm1926, %v5168, %v5169
        %v5171 = vrot.slane %v5131, 5
        %v5172 = vrot.slane %v5171, 4
        %v5173 = vrot.slane %v5132, 5
        %v5174 = vsel %vm1926, %v5172, %v5173
        %v5175 = vrot.slane %v5133, 5
        %v5176 = vrot.slane %v5175, 4
        %v5177 = vrot.slane %v5134, 5
        %v5178 = vsel %vm1926, %v5176, %v5177
        %v5179 = vrot.slane %v5135, 5
        %v5180 = vrot.slane %v5179, 4
        %v5181 = vrot.slane %v5136, 5
        %v5182 = vsel %vm1926, %v5180, %v5181
        %v5183 = vrot.slane %v5137, 5
        %v5184 = vrot.slane %v5183, 4
        %v5185 = vrot.slane %v5138, 5
        %v5186 = vsel %vm1926, %v5184, %v5185
        %v5187 = vunpack.c.l.b16 %v5158
        %v5188 = vunpack.c.l.b16 %v5162
        %v5189 = vunpack.c.l.b16 %v5166
        %v5190 = vunpack.c.l.b16 %v5170
        %v5191 = vunpack.c.l.b16 %v5174
        %v5192 = vunpack.c.l.b16 %v5178
        %v5193 = vunpack.c.l.b16 %v5182
        %v5194 = vunpack.c.l.b16 %v5186
        %v5195 = vpack.c.b16 %v5188, %v5187
        %v5196 = vpack.c.b16 %v5190, %v5189
        %v5197 = vpack.c.b16 %v5192, %v5191
        %v5198 = vpack.c.b16 %v5194, %v5193
        %5199 = vrot.lane.b32.xlu0 %v5195, 64
        %v5200 = vpop.permute.xlu0 %5199
        %5201 = vrot.lane.b32.xlu0 %v5196, 64
        %v5202 = vpop.permute.xlu0 %5201
        %5203 = vrot.lane.b32.xlu0 %v5197, 64
        %v5204 = vpop.permute.xlu0 %5203
        %5205 = vrot.lane.b32.xlu0 %v5198, 64
        %v5206 = vpop.permute.xlu0 %5205
        %vm5211 = vcmask 785920
        %5212 = vst.msk [vmem:[#allocation6] sm:$0xff] %vm5211, %v5200
        %5213 = vst.msk [vmem:[#allocation6 + $0x18] sm:$0xff] %vm5211, %v5202
        %5214 = vst.msk [vmem:[#allocation6 + $0x30] sm:$0xff] %vm5211, %v5204
        %5215 = vst.msk [vmem:[#allocation6 + $0x48] sm:$0xff] %vm5211, %v5206
        %v5216 = vld [vmem:[%s4696] sm:$0xf]
        %v5217 = vld [vmem:[%s4696 + $0x8] sm:$0xf]
        %v5218 = vld [vmem:[%s4696 + $0x10] sm:$0xf]
        %v5219 = vld [vmem:[%s4696 + $0x18] sm:$0xf]
        %v5220 = vld [vmem:[%s4696 + $0x20] sm:$0xf]
        %v5221 = vld [vmem:[%s4696 + $0x28] sm:$0xf]
        %v5222 = vld [vmem:[%s4696 + $0x30] sm:$0xf]
        %v5223 = vld [vmem:[%s4696 + $0x38] sm:$0xf]
        %v5232 = vunpack.c.l.b16 %v5216
        %v5233 = vunpack.c.l.b16 %v5217
        %v5234 = vunpack.c.l.b16 %v5218
        %v5235 = vunpack.c.l.b16 %v5219
        %v5236 = vunpack.c.l.b16 %v5220
        %v5237 = vunpack.c.l.b16 %v5221
        %v5238 = vunpack.c.l.b16 %v5222
        %v5239 = vunpack.c.l.b16 %v5223
        %v5240 = vpack.c.b16 %v5233, %v5232
        %v5241 = vpack.c.b16 %v5235, %v5234
        %v5242 = vpack.c.b16 %v5237, %v5236
        %v5243 = vpack.c.b16 %v5239, %v5238
        %5244 = vrot.lane.b32.xlu0 %v5240, 96
        %v5245 = vpop.permute.xlu0 %5244
        %5246 = vrot.lane.b32.xlu0 %v5241, 96
        %v5247 = vpop.permute.xlu0 %5246
        %5248 = vrot.lane.b32.xlu0 %v5242, 96
        %v5249 = vpop.permute.xlu0 %5248
        %5250 = vrot.lane.b32.xlu0 %v5243, 96
        %v5251 = vpop.permute.xlu0 %5250
        %vm5256 = vcmask 1048320
        %5257 = vst.msk [vmem:[#allocation6] sm:$0xff] %vm5256, %v5245
        %5258 = vst.msk [vmem:[#allocation6 + $0x18] sm:$0xff] %vm5256, %v5247
        %5259 = vst.msk [vmem:[#allocation6 + $0x30] sm:$0xff] %vm5256, %v5249
        %5260 = vst.msk [vmem:[#allocation6 + $0x48] sm:$0xff] %vm5256, %v5251
        %v5261 = vld [vmem:[%s4696] sm:$0xf]
        %v5262 = vld [vmem:[%s4696 + $0x4] sm:$0x1]
        %v5263 = vld [vmem:[%s4696 + $0x8] sm:$0xf]
        %v5264 = vld [vmem:[%s4696 + $0xc] sm:$0x1]
        %v5265 = vld [vmem:[%s4696 + $0x10] sm:$0xf]
        %v5266 = vld [vmem:[%s4696 + $0x14] sm:$0x1]
        %v5267 = vld [vmem:[%s4696 + $0x18] sm:$0xf]
        %v5268 = vld [vmem:[%s4696 + $0x1c] sm:$0x1]
        %v5269 = vld [vmem:[%s4696 + $0x20] sm:$0xf]
        %v5270 = vld [vmem:[%s4696 + $0x24] sm:$0x1]
        %v5271 = vld [vmem:[%s4696 + $0x28] sm:$0xf]
        %v5272 = vld [vmem:[%s4696 + $0x2c] sm:$0x1]
        %v5273 = vld [vmem:[%s4696 + $0x30] sm:$0xf]
        %v5274 = vld [vmem:[%s4696 + $0x34] sm:$0x1]
        %v5275 = vld [vmem:[%s4696 + $0x38] sm:$0xf]
        %v5276 = vld [vmem:[%s4696 + $0x3c] sm:$0x1]
        %v5278 = vshrl.u32 %v5261, 16
        %v5280 = vrot.slane %v5278, 4
        %v5281 = vshll.u32 %v5261, 16
        %v5283 = vrot.slane %v5281, 5
        %v5284 = vor.u32 %v5280, %v5283
        %v5285 = vrot.slane %v5284, 4
        %v5287 = vshll.u32 %v5262, 16
        %v5289 = vrot.slane %v5287, 5
        %v5290 = vsel %vm1330, %v5285, %v5289
        %v5292 = vshrl.u32 %v5263, 16
        %v5294 = vrot.slane %v5292, 4
        %v5295 = vshll.u32 %v5263, 16
        %v5297 = vrot.slane %v5295, 5
        %v5298 = vor.u32 %v5294, %v5297
        %v5299 = vrot.slane %v5298, 4
        %v5301 = vshll.u32 %v5264, 16
        %v5303 = vrot.slane %v5301, 5
        %v5304 = vsel %vm1330, %v5299, %v5303
        %v5306 = vshrl.u32 %v5265, 16
        %v5308 = vrot.slane %v5306, 4
        %v5309 = vshll.u32 %v5265, 16
        %v5311 = vrot.slane %v5309, 5
        %v5312 = vor.u32 %v5308, %v5311
        %v5313 = vrot.slane %v5312, 4
        %v5315 = vshll.u32 %v5266, 16
        %v5317 = vrot.slane %v5315, 5
        %v5318 = vsel %vm1330, %v5313, %v5317
        %v5320 = vshrl.u32 %v5267, 16
        %v5322 = vrot.slane %v5320, 4
        %v5323 = vshll.u32 %v5267, 16
        %v5325 = vrot.slane %v5323, 5
        %v5326 = vor.u32 %v5322, %v5325
        %v5327 = vrot.slane %v5326, 4
        %v5329 = vshll.u32 %v5268, 16
        %v5331 = vrot.slane %v5329, 5
        %v5332 = vsel %vm1330, %v5327, %v5331
        %v5334 = vshrl.u32 %v5269, 16
        %v5336 = vrot.slane %v5334, 4
        %v5337 = vshll.u32 %v5269, 16
        %v5339 = vrot.slane %v5337, 5
        %v5340 = vor.u32 %v5336, %v5339
        %v5341 = vrot.slane %v5340, 4
        %v5343 = vshll.u32 %v5270, 16
        %v5345 = vrot.slane %v5343, 5
        %v5346 = vsel %vm1330, %v5341, %v5345
        %v5348 = vshrl.u32 %v5271, 16
        %v5350 = vrot.slane %v5348, 4
        %v5351 = vshll.u32 %v5271, 16
        %v5353 = vrot.slane %v5351, 5
        %v5354 = vor.u32 %v5350, %v5353
        %v5355 = vrot.slane %v5354, 4
        %v5357 = vshll.u32 %v5272, 16
        %v5359 = vrot.slane %v5357, 5
        %v5360 = vsel %vm1330, %v5355, %v5359
        %v5362 = vshrl.u32 %v5273, 16
        %v5364 = vrot.slane %v5362, 4
        %v5365 = vshll.u32 %v5273, 16
        %v5367 = vrot.slane %v5365, 5
        %v5368 = vor.u32 %v5364, %v5367
        %v5369 = vrot.slane %v5368, 4
        %v5371 = vshll.u32 %v5274, 16
        %v5373 = vrot.slane %v5371, 5
        %v5374 = vsel %vm1330, %v5369, %v5373
        %v5376 = vshrl.u32 %v5275, 16
        %v5378 = vrot.slane %v5376, 4
        %v5379 = vshll.u32 %v5275, 16
        %v5381 = vrot.slane %v5379, 5
        %v5382 = vor.u32 %v5378, %v5381
        %v5383 = vrot.slane %v5382, 4
        %v5385 = vshll.u32 %v5276, 16
        %v5387 = vrot.slane %v5385, 5
        %v5388 = vsel %vm1330, %v5383, %v5387
        %v5389 = vunpack.c.l.b16 %v5290
        %v5390 = vunpack.c.l.b16 %v5304
        %v5391 = vunpack.c.l.b16 %v5318
        %v5392 = vunpack.c.l.b16 %v5332
        %v5393 = vunpack.c.l.b16 %v5346
        %v5394 = vunpack.c.l.b16 %v5360
        %v5395 = vunpack.c.l.b16 %v5374
        %v5396 = vunpack.c.l.b16 %v5388
        %v5397 = vpack.c.b16 %v5390, %v5389
        %v5398 = vpack.c.b16 %v5392, %v5391
        %v5399 = vpack.c.b16 %v5394, %v5393
        %v5400 = vpack.c.b16 %v5396, %v5395
        %5405 = vst.msk [vmem:[#allocation6 + $0x8] sm:$0xff] %vm4961, %v5397
        %5406 = vst.msk [vmem:[#allocation6 + $0x20] sm:$0xff] %vm4961, %v5398
        %5407 = vst.msk [vmem:[#allocation6 + $0x38] sm:$0xff] %vm4961, %v5399
        %5408 = vst.msk [vmem:[#allocation6 + $0x50] sm:$0xff] %vm4961, %v5400
        %v5409 = vld [vmem:[%s4696] sm:$0xe]
        %v5410 = vld [vmem:[%s4696 + $0x4] sm:$0x1]
        %v5411 = vld [vmem:[%s4696 + $0x8] sm:$0xe]
        %v5412 = vld [vmem:[%s4696 + $0xc] sm:$0x1]
        %v5413 = vld [vmem:[%s4696 + $0x10] sm:$0xe]
        %v5414 = vld [vmem:[%s4696 + $0x14] sm:$0x1]
        %v5415 = vld [vmem:[%s4696 + $0x18] sm:$0xe]
        %v5416 = vld [vmem:[%s4696 + $0x1c] sm:$0x1]
        %v5417 = vld [vmem:[%s4696 + $0x20] sm:$0xe]
        %v5418 = vld [vmem:[%s4696 + $0x24] sm:$0x1]
        %v5419 = vld [vmem:[%s4696 + $0x28] sm:$0xe]
        %v5420 = vld [vmem:[%s4696 + $0x2c] sm:$0x1]
        %v5421 = vld [vmem:[%s4696 + $0x30] sm:$0xe]
        %v5422 = vld [vmem:[%s4696 + $0x34] sm:$0x1]
        %v5423 = vld [vmem:[%s4696 + $0x38] sm:$0xe]
        %v5424 = vld [vmem:[%s4696 + $0x3c] sm:$0x1]
        %v5441 = vrot.slane %v5409, 5
        %v5442 = vrot.slane %v5441, 4
        %v5443 = vrot.slane %v5410, 5
        %v5444 = vsel %vm1926, %v5442, %v5443
        %v5445 = vrot.slane %v5411, 5
        %v5446 = vrot.slane %v5445, 4
        %v5447 = vrot.slane %v5412, 5
        %v5448 = vsel %vm1926, %v5446, %v5447
        %v5449 = vrot.slane %v5413, 5
        %v5450 = vrot.slane %v5449, 4
        %v5451 = vrot.slane %v5414, 5
        %v5452 = vsel %vm1926, %v5450, %v5451
        %v5453 = vrot.slane %v5415, 5
        %v5454 = vrot.slane %v5453, 4
        %v5455 = vrot.slane %v5416, 5
        %v5456 = vsel %vm1926, %v5454, %v5455
        %v5457 = vrot.slane %v5417, 5
        %v5458 = vrot.slane %v5457, 4
        %v5459 = vrot.slane %v5418, 5
        %v5460 = vsel %vm1926, %v5458, %v5459
        %v5461 = vrot.slane %v5419, 5
        %v5462 = vrot.slane %v5461, 4
        %v5463 = vrot.slane %v5420, 5
        %v5464 = vsel %vm1926, %v5462, %v5463
        %v5465 = vrot.slane %v5421, 5
        %v5466 = vrot.slane %v5465, 4
        %v5467 = vrot.slane %v5422, 5
        %v5468 = vsel %vm1926, %v5466, %v5467
        %v5469 = vrot.slane %v5423, 5
        %v5470 = vrot.slane %v5469, 4
        %v5471 = vrot.slane %v5424, 5
        %v5472 = vsel %vm1926, %v5470, %v5471
        %v5473 = vunpack.c.l.b16 %v5444
        %v5474 = vunpack.c.l.b16 %v5448
        %v5475 = vunpack.c.l.b16 %v5452
        %v5476 = vunpack.c.l.b16 %v5456
        %v5477 = vunpack.c.l.b16 %v5460
        %v5478 = vunpack.c.l.b16 %v5464
        %v5479 = vunpack.c.l.b16 %v5468
        %v5480 = vunpack.c.l.b16 %v5472
        %v5481 = vpack.c.b16 %v5474, %v5473
        %v5482 = vpack.c.b16 %v5476, %v5475
        %v5483 = vpack.c.b16 %v5478, %v5477
        %v5484 = vpack.c.b16 %v5480, %v5479
        %5485 = vrot.lane.b32.xlu0 %v5481, 32
        %v5486 = vpop.permute.xlu0 %5485
        %5487 = vrot.lane.b32.xlu0 %v5482, 32
        %v5488 = vpop.permute.xlu0 %5487
        %5489 = vrot.lane.b32.xlu0 %v5483, 32
        %v5490 = vpop.permute.xlu0 %5489
        %5491 = vrot.lane.b32.xlu0 %v5484, 32
        %v5492 = vpop.permute.xlu0 %5491
        %5497 = vst.msk [vmem:[#allocation6 + $0x8] sm:$0xff] %vm5118, %v5486
        %5498 = vst.msk [vmem:[#allocation6 + $0x20] sm:$0xff] %vm5118, %v5488
        %5499 = vst.msk [vmem:[#allocation6 + $0x38] sm:$0xff] %vm5118, %v5490
        %5500 = vst.msk [vmem:[#allocation6 + $0x50] sm:$0xff] %vm5118, %v5492
        %v5501 = vld [vmem:[%s4730] sm:$0xf]
        %v5502 = vld [vmem:[%s4730 + $0x8] sm:$0xf]
        %v5503 = vld [vmem:[%s4730 + $0x10] sm:$0xf]
        %v5504 = vld [vmem:[%s4730 + $0x18] sm:$0xf]
        %v5505 = vld [vmem:[%s4730 + $0x20] sm:$0xf]
        %v5506 = vld [vmem:[%s4730 + $0x28] sm:$0xf]
        %v5507 = vld [vmem:[%s4730 + $0x30] sm:$0xf]
        %v5508 = vld [vmem:[%s4730 + $0x38] sm:$0xf]
        %v5517 = vunpack.c.l.b16 %v5501
        %v5518 = vunpack.c.l.b16 %v5502
        %v5519 = vunpack.c.l.b16 %v5503
        %v5520 = vunpack.c.l.b16 %v5504
        %v5521 = vunpack.c.l.b16 %v5505
        %v5522 = vunpack.c.l.b16 %v5506
        %v5523 = vunpack.c.l.b16 %v5507
        %v5524 = vunpack.c.l.b16 %v5508
        %v5525 = vpack.c.b16 %v5518, %v5517
        %v5526 = vpack.c.b16 %v5520, %v5519
        %v5527 = vpack.c.b16 %v5522, %v5521
        %v5528 = vpack.c.b16 %v5524, %v5523
        %5529 = vrot.lane.b32.xlu0 %v5525, 64
        %v5530 = vpop.permute.xlu0 %5529
        %5531 = vrot.lane.b32.xlu0 %v5526, 64
        %v5532 = vpop.permute.xlu0 %5531
        %5533 = vrot.lane.b32.xlu0 %v5527, 64
        %v5534 = vpop.permute.xlu0 %5533
        %5535 = vrot.lane.b32.xlu0 %v5528, 64
        %v5536 = vpop.permute.xlu0 %5535
        %5541 = vst.msk [vmem:[#allocation6 + $0x8] sm:$0xff] %vm5211, %v5530
        %5542 = vst.msk [vmem:[#allocation6 + $0x20] sm:$0xff] %vm5211, %v5532
        %5543 = vst.msk [vmem:[#allocation6 + $0x38] sm:$0xff] %vm5211, %v5534
        %5544 = vst.msk [vmem:[#allocation6 + $0x50] sm:$0xff] %vm5211, %v5536
        %v5545 = vld [vmem:[%s4730] sm:$0xf]
        %v5546 = vld [vmem:[%s4730 + $0x4] sm:$0x1]
        %v5547 = vld [vmem:[%s4730 + $0x8] sm:$0xf]
        %v5548 = vld [vmem:[%s4730 + $0xc] sm:$0x1]
        %v5549 = vld [vmem:[%s4730 + $0x10] sm:$0xf]
        %v5550 = vld [vmem:[%s4730 + $0x14] sm:$0x1]
        %v5551 = vld [vmem:[%s4730 + $0x18] sm:$0xf]
        %v5552 = vld [vmem:[%s4730 + $0x1c] sm:$0x1]
        %v5553 = vld [vmem:[%s4730 + $0x20] sm:$0xf]
        %v5554 = vld [vmem:[%s4730 + $0x24] sm:$0x1]
        %v5555 = vld [vmem:[%s4730 + $0x28] sm:$0xf]
        %v5556 = vld [vmem:[%s4730 + $0x2c] sm:$0x1]
        %v5557 = vld [vmem:[%s4730 + $0x30] sm:$0xf]
        %v5558 = vld [vmem:[%s4730 + $0x34] sm:$0x1]
        %v5559 = vld [vmem:[%s4730 + $0x38] sm:$0xf]
        %v5560 = vld [vmem:[%s4730 + $0x3c] sm:$0x1]
        %v5562 = vshrl.u32 %v5545, 16
        %v5564 = vrot.slane %v5562, 4
        %v5565 = vshll.u32 %v5545, 16
        %v5567 = vrot.slane %v5565, 5
        %v5568 = vor.u32 %v5564, %v5567
        %v5569 = vrot.slane %v5568, 4
        %v5571 = vshll.u32 %v5546, 16
        %v5573 = vrot.slane %v5571, 5
        %v5574 = vsel %vm1330, %v5569, %v5573
        %v5576 = vshrl.u32 %v5547, 16
        %v5578 = vrot.slane %v5576, 4
        %v5579 = vshll.u32 %v5547, 16
        %v5581 = vrot.slane %v5579, 5
        %v5582 = vor.u32 %v5578, %v5581
        %v5583 = vrot.slane %v5582, 4
        %v5585 = vshll.u32 %v5548, 16
        %v5587 = vrot.slane %v5585, 5
        %v5588 = vsel %vm1330, %v5583, %v5587
        %v5590 = vshrl.u32 %v5549, 16
        %v5592 = vrot.slane %v5590, 4
        %v5593 = vshll.u32 %v5549, 16
        %v5595 = vrot.slane %v5593, 5
        %v5596 = vor.u32 %v5592, %v5595
        %v5597 = vrot.slane %v5596, 4
        %v5599 = vshll.u32 %v5550, 16
        %v5601 = vrot.slane %v5599, 5
        %v5602 = vsel %vm1330, %v5597, %v5601
        %v5604 = vshrl.u32 %v5551, 16
        %v5606 = vrot.slane %v5604, 4
        %v5607 = vshll.u32 %v5551, 16
        %v5609 = vrot.slane %v5607, 5
        %v5610 = vor.u32 %v5606, %v5609
        %v5611 = vrot.slane %v5610, 4
        %v5613 = vshll.u32 %v5552, 16
        %v5615 = vrot.slane %v5613, 5
        %v5616 = vsel %vm1330, %v5611, %v5615
        %v5618 = vshrl.u32 %v5553, 16
        %v5620 = vrot.slane %v5618, 4
        %v5621 = vshll.u32 %v5553, 16
        %v5623 = vrot.slane %v5621, 5
        %v5624 = vor.u32 %v5620, %v5623
        %v5625 = vrot.slane %v5624, 4
        %v5627 = vshll.u32 %v5554, 16
        %v5629 = vrot.slane %v5627, 5
        %v5630 = vsel %vm1330, %v5625, %v5629
        %v5632 = vshrl.u32 %v5555, 16
        %v5634 = vrot.slane %v5632, 4
        %v5635 = vshll.u32 %v5555, 16
        %v5637 = vrot.slane %v5635, 5
        %v5638 = vor.u32 %v5634, %v5637
        %v5639 = vrot.slane %v5638, 4
        %v5641 = vshll.u32 %v5556, 16
        %v5643 = vrot.slane %v5641, 5
        %v5644 = vsel %vm1330, %v5639, %v5643
        %v5646 = vshrl.u32 %v5557, 16
        %v5648 = vrot.slane %v5646, 4
        %v5649 = vshll.u32 %v5557, 16
        %v5651 = vrot.slane %v5649, 5
        %v5652 = vor.u32 %v5648, %v5651
        %v5653 = vrot.slane %v5652, 4
        %v5655 = vshll.u32 %v5558, 16
        %v5657 = vrot.slane %v5655, 5
        %v5658 = vsel %vm1330, %v5653, %v5657
        %v5660 = vshrl.u32 %v5559, 16
        %v5662 = vrot.slane %v5660, 4
        %v5663 = vshll.u32 %v5559, 16
        %v5665 = vrot.slane %v5663, 5
        %v5666 = vor.u32 %v5662, %v5665
        %v5667 = vrot.slane %v5666, 4
        %v5669 = vshll.u32 %v5560, 16
        %v5671 = vrot.slane %v5669, 5
        %v5672 = vsel %vm1330, %v5667, %v5671
        %v5673 = vunpack.c.l.b16 %v5574
        %v5674 = vunpack.c.l.b16 %v5588
        %v5675 = vunpack.c.l.b16 %v5602
        %v5676 = vunpack.c.l.b16 %v5616
        %v5677 = vunpack.c.l.b16 %v5630
        %v5678 = vunpack.c.l.b16 %v5644
        %v5679 = vunpack.c.l.b16 %v5658
        %v5680 = vunpack.c.l.b16 %v5672
        %v5681 = vpack.c.b16 %v5674, %v5673
        %v5682 = vpack.c.b16 %v5676, %v5675
        %v5683 = vpack.c.b16 %v5678, %v5677
        %v5684 = vpack.c.b16 %v5680, %v5679
        %5685 = vrot.lane.b32.xlu0 %v5681, 96
        %v5686 = vpop.permute.xlu0 %5685
        %5687 = vrot.lane.b32.xlu0 %v5682, 96
        %v5688 = vpop.permute.xlu0 %5687
        %5689 = vrot.lane.b32.xlu0 %v5683, 96
        %v5690 = vpop.permute.xlu0 %5689
        %5691 = vrot.lane.b32.xlu0 %v5684, 96
        %v5692 = vpop.permute.xlu0 %5691
        %5697 = vst.msk [vmem:[#allocation6 + $0x8] sm:$0xff] %vm5256, %v5686
        %5698 = vst.msk [vmem:[#allocation6 + $0x20] sm:$0xff] %vm5256, %v5688
        %5699 = vst.msk [vmem:[#allocation6 + $0x38] sm:$0xff] %vm5256, %v5690
        %5700 = vst.msk [vmem:[#allocation6 + $0x50] sm:$0xff] %vm5256, %v5692
        %v5701 = vld [vmem:[%s4730] sm:$0xe]
        %v5702 = vld [vmem:[%s4730 + $0x4] sm:$0x1]
        %v5703 = vld [vmem:[%s4730 + $0x8] sm:$0xe]
        %v5704 = vld [vmem:[%s4730 + $0xc] sm:$0x1]
        %v5705 = vld [vmem:[%s4730 + $0x10] sm:$0xe]
        %v5706 = vld [vmem:[%s4730 + $0x14] sm:$0x1]
        %v5707 = vld [vmem:[%s4730 + $0x18] sm:$0xe]
        %v5708 = vld [vmem:[%s4730 + $0x1c] sm:$0x1]
        %v5709 = vld [vmem:[%s4730 + $0x20] sm:$0xe]
        %v5710 = vld [vmem:[%s4730 + $0x24] sm:$0x1]
        %v5711 = vld [vmem:[%s4730 + $0x28] sm:$0xe]
        %v5712 = vld [vmem:[%s4730 + $0x2c] sm:$0x1]
        %v5713 = vld [vmem:[%s4730 + $0x30] sm:$0xe]
        %v5714 = vld [vmem:[%s4730 + $0x34] sm:$0x1]
        %v5715 = vld [vmem:[%s4730 + $0x38] sm:$0xe]
        %v5716 = vld [vmem:[%s4730 + $0x3c] sm:$0x1]
        %v5733 = vrot.slane %v5701, 5
        %v5734 = vrot.slane %v5733, 4
        %v5735 = vrot.slane %v5702, 5
        %v5736 = vsel %vm1926, %v5734, %v5735
        %v5737 = vrot.slane %v5703, 5
        %v5738 = vrot.slane %v5737, 4
        %v5739 = vrot.slane %v5704, 5
        %v5740 = vsel %vm1926, %v5738, %v5739
        %v5741 = vrot.slane %v5705, 5
        %v5742 = vrot.slane %v5741, 4
        %v5743 = vrot.slane %v5706, 5
        %v5744 = vsel %vm1926, %v5742, %v5743
        %v5745 = vrot.slane %v5707, 5
        %v5746 = vrot.slane %v5745, 4
        %v5747 = vrot.slane %v5708, 5
        %v5748 = vsel %vm1926, %v5746, %v5747
        %v5749 = vrot.slane %v5709, 5
        %v5750 = vrot.slane %v5749, 4
        %v5751 = vrot.slane %v5710, 5
        %v5752 = vsel %vm1926, %v5750, %v5751
        %v5753 = vrot.slane %v5711, 5
        %v5754 = vrot.slane %v5753, 4
        %v5755 = vrot.slane %v5712, 5
        %v5756 = vsel %vm1926, %v5754, %v5755
        %v5757 = vrot.slane %v5713, 5
        %v5758 = vrot.slane %v5757, 4
        %v5759 = vrot.slane %v5714, 5
        %v5760 = vsel %vm1926, %v5758, %v5759
        %v5761 = vrot.slane %v5715, 5
        %v5762 = vrot.slane %v5761, 4
        %v5763 = vrot.slane %v5716, 5
        %v5764 = vsel %vm1926, %v5762, %v5763
        %v5765 = vunpack.c.l.b16 %v5736
        %v5766 = vunpack.c.l.b16 %v5740
        %v5767 = vunpack.c.l.b16 %v5744
        %v5768 = vunpack.c.l.b16 %v5748
        %v5769 = vunpack.c.l.b16 %v5752
        %v5770 = vunpack.c.l.b16 %v5756
        %v5771 = vunpack.c.l.b16 %v5760
        %v5772 = vunpack.c.l.b16 %v5764
        %v5773 = vpack.c.b16 %v5766, %v5765
        %v5774 = vpack.c.b16 %v5768, %v5767
        %v5775 = vpack.c.b16 %v5770, %v5769
        %v5776 = vpack.c.b16 %v5772, %v5771
        %5781 = vst.msk [vmem:[#allocation6 + $0x10] sm:$0xff] %vm4961, %v5773
        %5782 = vst.msk [vmem:[#allocation6 + $0x28] sm:$0xff] %vm4961, %v5774
        %5783 = vst.msk [vmem:[#allocation6 + $0x40] sm:$0xff] %vm4961, %v5775
        %5784 = vst.msk [vmem:[#allocation6 + $0x58] sm:$0xff] %vm4961, %v5776
        %vm5785 = vcmask 1047808
        %5786 = vst.msk [vmem:[#allocation6 + $0x10] sm:$0xff] %vm5785, 0
        %5787 = vst.msk [vmem:[#allocation6 + $0x28] sm:$0xff] %vm5785, 0
        %5788 = vst.msk [vmem:[#allocation6 + $0x40] sm:$0xff] %vm5785, 0
        %5789 = vst.msk [vmem:[#allocation6 + $0x58] sm:$0xff] %vm5785, 0
        %v5790 = vld [vmem:[#allocation6] sm:$0xff]
        %v5791 = vld [vmem:[#allocation6 + $0x8] sm:$0xff]
        %v5792 = vld [vmem:[#allocation6 + $0x10] sm:$0xff]
        %v5793 = vld [vmem:[#allocation6 + $0x18] sm:$0xff]
        %v5794 = vld [vmem:[#allocation6 + $0x20] sm:$0xff]
        %v5795 = vld [vmem:[#allocation6 + $0x28] sm:$0xff]
        %v5796 = vld [vmem:[#allocation6 + $0x30] sm:$0xff]
        %v5797 = vld [vmem:[#allocation6 + $0x38] sm:$0xff]
        %v5798 = vld [vmem:[#allocation6 + $0x40] sm:$0xff]
        %v5799 = vld [vmem:[#allocation6 + $0x48] sm:$0xff]
        %v5800 = vld [vmem:[#allocation6 + $0x50] sm:$0xff]
        %v5801 = vld [vmem:[#allocation6 + $0x58] sm:$0xff]
        %v5802 = vld [vmem:[%s3] sm:$0xf]
        %v5803 = vld [vmem:[%s3 + $0x4] sm:$0xf]
        %v5804 = vld [vmem:[%s3 + $0x8] sm:$0xf]
        %v5805 = vld [vmem:[%s3 + $0xc] sm:$0xf]
        %v5806 = vld [vmem:[%s3 + $0x10] sm:$0xf]
        %v5807 = vld [vmem:[%s3 + $0x14] sm:$0xf]
        %v5808 = vld [vmem:[%s3 + $0x18] sm:$0xf]
        %v5809 = vld [vmem:[%s3 + $0x1c] sm:$0xf]
        %v5810 = vld [vmem:[%s3 + $0x20] sm:$0xf]
        %v5811 = vld [vmem:[%s3 + $0x24] sm:$0xf]
        %v5812 = vld [vmem:[%s3 + $0x28] sm:$0xf]
        %v5813 = vld [vmem:[%s3 + $0x2c] sm:$0xf]
        %v5814 = vld [vmem:[%s3 + $0x30] sm:$0xf]
        %v5815 = vld [vmem:[%s3 + $0x34] sm:$0xf]
        %v5816 = vld [vmem:[%s3 + $0x38] sm:$0xf]
        %v5817 = vld [vmem:[%s3 + $0x3c] sm:$0xf]
        %v5818 = vld [vmem:[%s3 + $0x40] sm:$0xf]
        %v5819 = vld [vmem:[%s3 + $0x44] sm:$0xf]
        %v5820 = vld [vmem:[%s3 + $0x48] sm:$0xf]
        %v5821 = vld [vmem:[%s3 + $0x4c] sm:$0xf]
        %v5822 = vld [vmem:[%s3 + $0x50] sm:$0xf]
        %v5823 = vld [vmem:[%s3 + $0x54] sm:$0xf]
        %v5824 = vld [vmem:[%s3 + $0x58] sm:$0xf]
        %v5825 = vld [vmem:[%s3 + $0x5c] sm:$0xf]
        %v5826 = vld [vmem:[%s3 + $0x60] sm:$0xf]
        %v5827 = vld [vmem:[%s3 + $0x64] sm:$0xf]
        %v5828 = vld [vmem:[%s3 + $0x68] sm:$0xf]
        %v5829 = vld [vmem:[%s3 + $0x6c] sm:$0xf]
        %v5830 = vld [vmem:[%s3 + $0x70] sm:$0xf]
        %v5831 = vld [vmem:[%s3 + $0x74] sm:$0xf]
        %v5832 = vld [vmem:[%s3 + $0x78] sm:$0xf]
        %v5833 = vld [vmem:[%s3 + $0x7c] sm:$0xf]
        %v5834 = vld [vmem:[%s3 + $0x80] sm:$0xf]
        %v5835 = vld [vmem:[%s3 + $0x84] sm:$0xf]
        %v5836 = vld [vmem:[%s3 + $0x88] sm:$0xf]
        %v5837 = vld [vmem:[%s3 + $0x8c] sm:$0xf]
        %v5838 = vld [vmem:[%s3 + $0x90] sm:$0xf]
        %v5839 = vld [vmem:[%s3 + $0x94] sm:$0xf]
        %v5840 = vld [vmem:[%s3 + $0x98] sm:$0xf]
        %v5841 = vld [vmem:[%s3 + $0x9c] sm:$0xf]
        %v5842 = vld [vmem:[%s3 + $0xa0] sm:$0xf]
        %v5843 = vld [vmem:[%s3 + $0xa4] sm:$0xf]
        %v5844 = vld [vmem:[%s3 + $0xa8] sm:$0xf]
        %v5845 = vld [vmem:[%s3 + $0xac] sm:$0xf]
        %v5846 = vld [vmem:[%s3 + $0xb0] sm:$0xf]
        %v5847 = vld [vmem:[%s3 + $0xb4] sm:$0xf]
        %v5848 = vld [vmem:[%s3 + $0xb8] sm:$0xf]
        %v5849 = vld [vmem:[%s3 + $0xbc] sm:$0xf]
        %v5850 = vld [vmem:[%s4] sm:$0x1]
        %v5852 = vlaneseq
        %v5853 = vshrl.u32 %v5852, 7
        %v5854 = vsub.s32 0, %v5853
        %v5855 = vrot.slane %v5850, %v5854
        %v5905 = vunpack.c.l.b16 %v5802
        %v5906 = vunpack.c.l.b16 %v5803
        %v5907 = vunpack.c.l.b16 %v5804
        %v5908 = vunpack.c.l.b16 %v5805
        %v5909 = vunpack.c.l.b16 %v5806
        %v5910 = vunpack.c.l.b16 %v5807
        %v5911 = vunpack.c.l.b16 %v5808
        %v5912 = vunpack.c.l.b16 %v5809
        %v5913 = vunpack.c.l.b16 %v5810
        %v5914 = vunpack.c.l.b16 %v5811
        %v5915 = vunpack.c.l.b16 %v5812
        %v5916 = vunpack.c.l.b16 %v5813
        %v5917 = vunpack.c.l.b16 %v5814
        %v5918 = vunpack.c.l.b16 %v5815
        %v5919 = vunpack.c.l.b16 %v5816
        %v5920 = vunpack.c.l.b16 %v5817
        %v5921 = vunpack.c.l.b16 %v5818
        %v5922 = vunpack.c.l.b16 %v5819
        %v5923 = vunpack.c.l.b16 %v5820
        %v5924 = vunpack.c.l.b16 %v5821
        %v5925 = vunpack.c.l.b16 %v5822
        %v5926 = vunpack.c.l.b16 %v5823
        %v5927 = vunpack.c.l.b16 %v5824
        %v5928 = vunpack.c.l.b16 %v5825
        %v5929 = vunpack.c.l.b16 %v5826
        %v5930 = vunpack.c.l.b16 %v5827
        %v5931 = vunpack.c.l.b16 %v5828
        %v5932 = vunpack.c.l.b16 %v5829
        %v5933 = vunpack.c.l.b16 %v5830
        %v5934 = vunpack.c.l.b16 %v5831
        %v5935 = vunpack.c.l.b16 %v5832
        %v5936 = vunpack.c.l.b16 %v5833
        %v5937 = vunpack.c.l.b16 %v5834
        %v5938 = vunpack.c.l.b16 %v5835
        %v5939 = vunpack.c.l.b16 %v5836
        %v5940 = vunpack.c.l.b16 %v5837
        %v5941 = vunpack.c.l.b16 %v5838
        %v5942 = vunpack.c.l.b16 %v5839
        %v5943 = vunpack.c.l.b16 %v5840
        %v5944 = vunpack.c.l.b16 %v5841
        %v5945 = vunpack.c.l.b16 %v5842
        %v5946 = vunpack.c.l.b16 %v5843
        %v5947 = vunpack.c.l.b16 %v5844
        %v5948 = vunpack.c.l.b16 %v5845
        %v5949 = vunpack.c.l.b16 %v5846
        %v5950 = vunpack.c.l.b16 %v5847
        %v5951 = vunpack.c.l.b16 %v5848
        %v5952 = vunpack.c.l.b16 %v5849
        %v5953 = vpack.c.b16 %v5906, %v5905
        %v5954 = vpack.c.b16 %v5908, %v5907
        %v5955 = vpack.c.b16 %v5910, %v5909
        %v5956 = vpack.c.b16 %v5912, %v5911
        %v5957 = vpack.c.b16 %v5914, %v5913
        %v5958 = vpack.c.b16 %v5916, %v5915
        %v5959 = vpack.c.b16 %v5918, %v5917
        %v5960 = vpack.c.b16 %v5920, %v5919
        %v5961 = vpack.c.b16 %v5922, %v5921
        %v5962 = vpack.c.b16 %v5924, %v5923
        %v5963 = vpack.c.b16 %v5926, %v5925
        %v5964 = vpack.c.b16 %v5928, %v5927
        %v5965 = vpack.c.b16 %v5930, %v5929
        %v5966 = vpack.c.b16 %v5932, %v5931
        %v5967 = vpack.c.b16 %v5934, %v5933
        %v5968 = vpack.c.b16 %v5936, %v5935
        %v5969 = vpack.c.b16 %v5938, %v5937
        %v5970 = vpack.c.b16 %v5940, %v5939
        %v5971 = vpack.c.b16 %v5942, %v5941
        %v5972 = vpack.c.b16 %v5944, %v5943
        %v5973 = vpack.c.b16 %v5946, %v5945
        %v5974 = vpack.c.b16 %v5948, %v5947
        %v5975 = vpack.c.b16 %v5950, %v5949
        %v5976 = vpack.c.b16 %v5952, %v5951
        %6001 = vmatprep.subr.bf16.mxu0 0
        %6002 = vmatpush1.bf16.msra.mxu0 %v5953
        %6003 = vmatprep.subr.bf16.mxu0 0
        %6004 = vmatpush1.bf16.msra.mxu0 %v5954
        %6005 = vmatprep.subr.bf16.mxu0 0
        %6006 = vmatpush1.bf16.msra.mxu0 %v5955
        %6007 = vmatprep.subr.bf16.mxu0 0
        %6008 = vmatpush1.bf16.msra.mxu0 %v5956
        %6009 = vmatprep.subr.bf16.mxu0 0
        %6010 = vmatpush1.bf16.msra.mxu0 %v5957
        %6011 = vmatprep.subr.bf16.mxu0 0
        %6012 = vmatpush1.bf16.msra.mxu0 %v5958
        %6013 = vmatprep.subr.bf16.mxu0 0
        %6014 = vmatpush1.bf16.msra.mxu0 %v5959
        %6015 = vmatprep.subr.bf16.mxu0 0
        %6016 = vmatpush1.bf16.msra.mxu0 %v5960
        %6017 = vmatprep.subr.bf16.mxu0 0
        %6018 = vmatpush1.bf16.msra.mxu0 %v5961
        %6019 = vmatprep.subr.bf16.mxu0 0
        %6020 = vmatpush1.bf16.msra.mxu0 %v5962
        %6021 = vmatprep.subr.bf16.mxu0 0
        %6022 = vmatpush1.bf16.msra.mxu0 %v5963
        %6023 = vmatprep.subr.bf16.mxu0 0
        %6024 = vmatpush1.bf16.msra.mxu0 %v5964
        %6025 = vmatprep.subr.bf16.mxu0 0
        %6026 = vmatpush1.bf16.msra.mxu0 %v5965
        %6027 = vmatprep.subr.bf16.mxu0 0
        %6028 = vmatpush1.bf16.msra.mxu0 %v5966
        %6029 = vmatprep.subr.bf16.mxu0 0
        %6030 = vmatpush1.bf16.msra.mxu0 %v5967
        %6031 = vmatprep.subr.bf16.mxu0 0
        %6032 = vmatpush1.bf16.msra.mxu0 %v5968
        %6033 = vmatprep.mubr.bf16.mxu0 %v5791
        %6034 = vmatmul.mubr.bf16.gmra.mrb[0].mxu0 %v5790
        %v6035 = vpop.f32.mrb[0].mxu0
        %v6036 = vadd.f32 %v5855, %v6035
        %v6037 = vpop.f32.mrb[0].mxu0
        %v6038 = vpop.f32.mrb[0].mxu0
        %v6039 = vadd.f32 %v5855, %v6038
        %v6040 = vpop.f32.mrb[0].mxu0
        %6041 = vmatprep.mubr.bf16.mxu0 %v5794
        %6042 = vmatmul.mubr.bf16.gmra.mrb[0].mxu0 %v5793
        %v6043 = vpop.f32.mrb[0].mxu0
        %v6044 = vadd.f32 %v5855, %v6043
        %v6045 = vpop.f32.mrb[0].mxu0
        %v6046 = vpop.f32.mrb[0].mxu0
        %v6047 = vadd.f32 %v5855, %v6046
        %v6048 = vpop.f32.mrb[0].mxu0
        %6049 = vmatprep.mubr.bf16.mxu0 %v5797
        %6050 = vmatmul.mubr.bf16.gmra.mrb[0].mxu0 %v5796
        %v6051 = vpop.f32.mrb[0].mxu0
        %v6052 = vadd.f32 %v5855, %v6051
        %v6053 = vpop.f32.mrb[0].mxu0
        %v6054 = vpop.f32.mrb[0].mxu0
        %v6055 = vadd.f32 %v5855, %v6054
        %v6056 = vpop.f32.mrb[0].mxu0
        %6057 = vmatprep.mubr.bf16.mxu0 %v5800
        %6058 = vmatmul.mubr.bf16.gmra.mrb[0].mxu0 %v5799
        %v6059 = vpop.f32.mrb[0].mxu0
        %v6060 = vadd.f32 %v5855, %v6059
        %v6061 = vpop.f32.mrb[0].mxu0
        %v6062 = vpop.f32.mrb[0].mxu0
        %v6063 = vadd.f32 %v5855, %v6062
        %v6064 = vpop.f32.mrb[0].mxu0
        %6065 = vdwg.mxu0
        %6066 = vmatprep.subr.bf16.mxu0 0
        %6067 = vmatpush1.bf16.msra.mxu0 %v5969
        %6068 = vmatprep.subr.bf16.mxu0 0
        %6069 = vmatpush1.bf16.msra.mxu0 %v5970
        %6070 = vmatprep.subr.bf16.mxu0 0
        %6071 = vmatpush1.bf16.msra.mxu0 %v5971
        %6072 = vmatprep.subr.bf16.mxu0 0
        %6073 = vmatpush1.bf16.msra.mxu0 %v5972
        %6074 = vmatprep.subr.bf16.mxu0 0
        %6075 = vmatpush1.bf16.msra.mxu0 %v5973
        %6076 = vmatprep.subr.bf16.mxu0 0
        %6077 = vmatpush1.bf16.msra.mxu0 %v5974
        %6078 = vmatprep.subr.bf16.mxu0 0
        %6079 = vmatpush1.bf16.msra.mxu0 %v5975
        %6080 = vmatprep.subr.bf16.mxu0 0
        %6081 = vmatpush1.bf16.msra.mxu0 %v5976
        %6082 = vmatprep.subr.bf16.mxu0 0
        %6083 = vmatpush1.bf16.msra.mxu0 0
        %6084 = vmatprep.subr.bf16.mxu0 0
        %6085 = vmatpush1.bf16.msra.mxu0 0
        %6086 = vmatprep.subr.bf16.mxu0 0
        %6087 = vmatpush1.bf16.msra.mxu0 0
        %6088 = vmatprep.subr.bf16.mxu0 0
        %6089 = vmatpush1.bf16.msra.mxu0 0
        %6090 = vmatprep.subr.bf16.mxu0 0
        %6091 = vmatpush1.bf16.msra.mxu0 0
        %6092 = vmatprep.subr.bf16.mxu0 0
        %6093 = vmatpush1.bf16.msra.mxu0 0
        %6094 = vmatprep.subr.bf16.mxu0 0
        %6095 = vmatpush1.bf16.msra.mxu0 0
        %6096 = vmatprep.subr.bf16.mxu0 0
        %6097 = vmatpush1.bf16.msra.mxu0 0
        %6098 = vmatprep.mubr.bf16.mxu0 0
        %6099 = vmatmul.mubr.bf16.gmra.mrb[0].mxu0 %v5792
        %v6100 = vpop.f32.mrb[0].mxu0
        %v6101 = vadd.f32 %v6036, %v6100
        %v6102 = vpop.f32.mrb[0].mxu0
        %v6103 = vpop.f32.mrb[0].mxu0
        %v6104 = vadd.f32 %v6039, %v6103
        %v6105 = vpop.f32.mrb[0].mxu0
        %6106 = vmatprep.mubr.bf16.mxu0 0
        %6107 = vmatmul.mubr.bf16.gmra.mrb[0].mxu0 %v5795
        %v6108 = vpop.f32.mrb[0].mxu0
        %v6109 = vadd.f32 %v6044, %v6108
        %v6110 = vpop.f32.mrb[0].mxu0
        %v6111 = vpop.f32.mrb[0].mxu0
        %v6112 = vadd.f32 %v6047, %v6111
        %v6113 = vpop.f32.mrb[0].mxu0
        %6114 = vmatprep.mubr.bf16.mxu0 0
        %6115 = vmatmul.mubr.bf16.gmra.mrb[0].mxu0 %v5798
        %v6116 = vpop.f32.mrb[0].mxu0
        %v6117 = vadd.f32 %v6052, %v6116
        %v6118 = vpop.f32.mrb[0].mxu0
        %v6119 = vpop.f32.mrb[0].mxu0
        %v6120 = vadd.f32 %v6055, %v6119
        %v6121 = vpop.f32.mrb[0].mxu0
        %6122 = vmatprep.mubr.bf16.mxu0 0
        %6123 = vmatmul.mubr.bf16.gmra.mrb[0].mxu0 %v5801
        %v6124 = vpop.f32.mrb[0].mxu0
        %v6125 = vadd.f32 %v6060, %v6124
        %v6126 = vpop.f32.mrb[0].mxu0
        %v6127 = vpop.f32.mrb[0].mxu0
        %v6128 = vadd.f32 %v6063, %v6127
        %v6129 = vpop.f32.mrb[0].mxu0
        %6130 = vdwg.mxu0
        %v6131 = vmax.f32 %v6101, 0.0
        %v6132 = vmax.f32 %v6104, 0.0
        %v6133 = vmax.f32 %v6109, 0.0
        %v6134 = vmax.f32 %v6112, 0.0
        %v6135 = vmax.f32 %v6117, 0.0
        %v6136 = vmax.f32 %v6120, 0.0
        %v6137 = vmax.f32 %v6125, 0.0
        %v6138 = vmax.f32 %v6128, 0.0
        %6139 = vst [vmem:[#allocation8] sm:$0xff] %v6131
        %6140 = vst [vmem:[#allocation8 + $0x8] sm:$0xff] %v6132
        %6141 = vst [vmem:[#allocation8 + $0x10] sm:$0xff] %v6133
        %6142 = vst [vmem:[#allocation8 + $0x18] sm:$0xff] %v6134
        %6143 = vst [vmem:[#allocation8 + $0x20] sm:$0xff] %v6135
        %6144 = vst [vmem:[#allocation8 + $0x28] sm:$0xff] %v6136
        %6145 = vst [vmem:[#allocation8 + $0x30] sm:$0xff] %v6137
        %6146 = vst [vmem:[#allocation8 + $0x38] sm:$0xff] %v6138
        %v6147 = vld [vmem:[#allocation8] ss:$2 sm:$0xf]
        %v6148 = vld [vmem:[%s4673] ss:$2 sm:$0xf]
        %s6149 = scalar_lea.vmem [#allocation8], 8
        %v6150 = vld [vmem:[%s6149] ss:$2 sm:$0xf]
        %s6151 = scalar_lea.vmem [#allocation8], 9
        %v6152 = vld [vmem:[%s6151] ss:$2 sm:$0xf]
        %v6153 = vmax.f32 %v6147, %v6148
        %v6154 = vmax.f32 %v6150, %v6152
        %v6155 = vmax.f32 %v6153, %v6154
        %v6156 = vpack.c.bf16 %v6155, %v6155
        %v6158 = vunpack.c.l.b16 %v6156
        %v6159 = vpack.c.b16 %v6158, %v6158
        %v6161 = vshrl.u32 %v6159, 16
        %v6163 = vrot.slane %v6161, 7
        %v6164 = vshll.u32 %v6159, 16
        %v6166 = vor.u32 %v6163, %v6164
        %s6168 = scalar_lea.vmem [#allocation4], 4
        %vm6169 = vcmask 518144
        %vm6170 = vsmask.f32 2306
        %vm6171 = vmand %vm6169, %vm6170
        %v6172 = vld [vmem:[%s6168] sm:$0x7]
        %v6173 = vsel %vm6171, %v6166, %v6172
        %6174 = vst [vmem:[%s6168] sm:$0x7] %v6173
        %v6175 = vld [vmem:[%s4675] ss:$2 sm:$0xf]
        %v6176 = vld [vmem:[%s4677] ss:$2 sm:$0xf]
        %s6177 = scalar_lea.vmem [#allocation8], 24
        %v6178 = vld [vmem:[%s6177] ss:$2 sm:$0xf]
        %s6179 = scalar_lea.vmem [#allocation8], 25
        %v6180 = vld [vmem:[%s6179] ss:$2 sm:$0xf]
        %v6181 = vmax.f32 %v6175, %v6176
        %v6182 = vmax.f32 %v6178, %v6180
        %v6183 = vmax.f32 %v6181, %v6182
        %v6184 = vpack.c.bf16 %v6183, %v6183
        %v6186 = vunpack.c.l.b16 %v6184
        %v6187 = vpack.c.b16 %v6186, %v6186
        %v6189 = vshrl.u32 %v6187, 16
        %v6191 = vrot.slane %v6189, 7
        %v6192 = vshll.u32 %v6187, 16
        %v6194 = vor.u32 %v6191, %v6192
        %s6196 = scalar_lea.vmem [#allocation4], 8
        %v6197 = vld [vmem:[%s6196] sm:$0x7]
        %v6198 = vsel %vm6171, %v6194, %v6197
        %6199 = vst [vmem:[%s6196] sm:$0x7] %v6198
        %v6200 = vld [vmem:[%s4705] ss:$2 sm:$0xf]
        %v6201 = vld [vmem:[%s4707] ss:$2 sm:$0xf]
        %s6202 = scalar_lea.vmem [#allocation8], 40
        %v6203 = vld [vmem:[%s6202] ss:$2 sm:$0xf]
        %s6204 = scalar_lea.vmem [#allocation8], 41
        %v6205 = vld [vmem:[%s6204] ss:$2 sm:$0xf]
        %v6206 = vmax.f32 %v6200, %v6201
        %v6207 = vmax.f32 %v6203, %v6205
        %v6208 = vmax.f32 %v6206, %v6207
        %v6209 = vpack.c.bf16 %v6208, %v6208
        %v6211 = vunpack.c.l.b16 %v6209
        %v6212 = vpack.c.b16 %v6211, %v6211
        %v6214 = vshrl.u32 %v6212, 16
        %v6216 = vrot.slane %v6214, 7
        %v6217 = vshll.u32 %v6212, 16
        %v6219 = vor.u32 %v6216, %v6217
        %s6221 = scalar_lea.vmem [#allocation4], 12
        %v6222 = vld [vmem:[%s6221] sm:$0x7]
        %v6223 = vsel %vm6171, %v6219, %v6222
        %6224 = vst [vmem:[%s6221] sm:$0x7] %v6223
        %v6225 = vld [vmem:[%s4709] ss:$2 sm:$0xf]
        %v6226 = vld [vmem:[%s4711] ss:$2 sm:$0xf]
        %s6227 = scalar_lea.vmem [#allocation8], 56
        %v6228 = vld [vmem:[%s6227] ss:$2 sm:$0xf]
        %s6229 = scalar_lea.vmem [#allocation8], 57
        %v6230 = vld [vmem:[%s6229] ss:$2 sm:$0xf]
        %v6231 = vmax.f32 %v6225, %v6226
        %v6232 = vmax.f32 %v6228, %v6230
        %v6233 = vmax.f32 %v6231, %v6232
        %v6234 = vpack.c.bf16 %v6233, %v6233
        %v6236 = vunpack.c.l.b16 %v6234
        %v6237 = vpack.c.b16 %v6236, %v6236
        %v6239 = vshrl.u32 %v6237, 16
        %v6241 = vrot.slane %v6239, 7
        %v6242 = vshll.u32 %v6237, 16
        %v6244 = vor.u32 %v6241, %v6242
        %s6246 = scalar_lea.vmem [#allocation4], 16
        %v6247 = vld [vmem:[%s6246] sm:$0x7]
        %v6248 = vsel %vm6171, %v6244, %v6247
        %6249 = vst [vmem:[%s6246] sm:$0x7] %v6248
        %v6250 = vld [vmem:[#allocation4] sm:$0x3]
        %v6251 = vld [vmem:[#allocation4 + $0x4] sm:$0x3]
        %v6252 = vld [vmem:[#allocation4 + $0x8] sm:$0x3]
        %v6253 = vld [vmem:[#allocation4 + $0xc] sm:$0x3]
        %v6258 = vcombine.low %v6250, %v6251
        %v6259 = vcombine.low %v6252, %v6253
        %v6261 = vunpack.c.l.s4 1983009808
        %v6262 = vunpack.c.0.s8 %v6261
        %v6263 = vlaneseq
        %v6264 = vshrl.u32 %v6263, 7
        %v6265 = vsub.s32 %v6262, %v6264
        %v6266 = vrot.slane %v6258, %v6265
        %v6268 = vunpack.c.l.s4 1983009808
        %v6269 = vunpack.c.0.s8 %v6268
        %v6270 = vlaneseq
        %v6271 = vshrl.u32 %v6270, 7
        %v6272 = vsub.s32 %v6269, %v6271
        %v6273 = vrot.slane %v6259, %v6272
        %v6274 = vcombine.low %v6266, %v6273
        %vm6276 = vcmask 523264
        %6277 = vst.msk [vmem:[#allocation7] sm:$0xff] %vm6276, %v6274
        %v6278 = vld [vmem:[#allocation4] sm:$0x7]
        %v6279 = vld [vmem:[#allocation4 + $0x4] sm:$0x7]
        %v6280 = vld [vmem:[#allocation4 + $0x8] sm:$0x7]
        %v6281 = vld [vmem:[#allocation4 + $0xc] sm:$0x7]
        %v6287 = vunpack.c.l.s4 1983009808
        %v6288 = vunpack.c.0.s8 %v6287
        %v6289 = vlaneseq
        %v6290 = vshrl.u32 %v6289, 7
        %v6291 = vsub.s32 %v6288, %v6290
        %v6292 = vrot.slane %v6278, %v6291
        %v6293 = vcombine.high %v6292, %v6292
        %v6295 = vunpack.c.l.s4 1983009808
        %v6296 = vunpack.c.0.s8 %v6295
        %v6297 = vlaneseq
        %v6298 = vshrl.u32 %v6297, 7
        %v6299 = vsub.s32 %v6296, %v6298
        %v6300 = vrot.slane %v6279, %v6299
        %v6301 = vcombine.high %v6300, %v6300
        %v6303 = vunpack.c.l.s4 1983009808
        %v6304 = vunpack.c.0.s8 %v6303
        %v6305 = vlaneseq
        %v6306 = vshrl.u32 %v6305, 7
        %v6307 = vsub.s32 %v6304, %v6306
        %v6308 = vrot.slane %v6280, %v6307
        %v6309 = vcombine.high %v6308, %v6308
        %v6311 = vunpack.c.l.s4 1983009808
        %v6312 = vunpack.c.0.s8 %v6311
        %v6313 = vlaneseq
        %v6314 = vshrl.u32 %v6313, 7
        %v6315 = vsub.s32 %v6312, %v6314
        %v6316 = vrot.slane %v6281, %v6315
        %v6317 = vcombine.high %v6316, %v6316
        %vm6318 = vsmask.f32 1280
        %vm6319 = vsmask.f32 3336
        %vm6320 = vmor %vm6318, %vm6319
        %vm6321 = vsmask.f32 5392
        %vm6322 = vmor %vm6320, %vm6321
        %vm6323 = vsmask.f32 7448
        %vm6324 = vmor %vm6322, %vm6323
        %v6326 = vshrl.u32 %v6292, 16
        %v6328 = vrot.slane %v6326, 6
        %v6329 = vshll.u32 %v6292, 16
        %v6331 = vrot.slane %v6329, 7
        %v6332 = vor.u32 %v6328, %v6331
        %v6333 = vrot.slane %v6332, 2
        %v6335 = vshll.u32 %v6293, 16
        %v6337 = vrot.slane %v6335, 7
        %v6338 = vsel %vm6324, %v6333, %v6337
        %v6340 = vshrl.u32 %v6300, 16
        %v6342 = vrot.slane %v6340, 6
        %v6343 = vshll.u32 %v6300, 16
        %v6345 = vrot.slane %v6343, 7
        %v6346 = vor.u32 %v6342, %v6345
        %v6347 = vrot.slane %v6346, 2
        %v6349 = vshll.u32 %v6301, 16
        %v6351 = vrot.slane %v6349, 7
        %v6352 = vsel %vm6324, %v6347, %v6351
        %v6354 = vshrl.u32 %v6308, 16
        %v6356 = vrot.slane %v6354, 6
        %v6357 = vshll.u32 %v6308, 16
        %v6359 = vrot.slane %v6357, 7
        %v6360 = vor.u32 %v6356, %v6359
        %v6361 = vrot.slane %v6360, 2
        %v6363 = vshll.u32 %v6309, 16
        %v6365 = vrot.slane %v6363, 7
        %v6366 = vsel %vm6324, %v6361, %v6365
        %v6368 = vshrl.u32 %v6316, 16
        %v6370 = vrot.slane %v6368, 6
        %v6371 = vshll.u32 %v6316, 16
        %v6373 = vrot.slane %v6371, 7
        %v6374 = vor.u32 %v6370, %v6373
        %v6375 = vrot.slane %v6374, 2
        %v6377 = vshll.u32 %v6317, 16
        %v6379 = vrot.slane %v6377, 7
        %v6380 = vsel %vm6324, %v6375, %v6379
        %v6381 = vcombine.low %v6338, %v6352
        %v6382 = vcombine.low %v6366, %v6380
        %v6384 = vunpack.c.l.s4 1983009808
        %v6385 = vunpack.c.0.s8 %v6384
        %v6386 = vlaneseq
        %v6387 = vshrl.u32 %v6386, 7
        %v6388 = vsub.s32 %v6385, %v6387
        %v6389 = vrot.slane %v6381, %v6388
        %v6391 = vunpack.c.l.s4 1983009808
        %v6392 = vunpack.c.0.s8 %v6391
        %v6393 = vlaneseq
        %v6394 = vshrl.u32 %v6393, 7
        %v6395 = vsub.s32 %v6392, %v6394
        %v6396 = vrot.slane %v6382, %v6395
        %v6397 = vcombine.low %v6389, %v6396
        %6398 = vrot.lane.b32.xlu0 %v6397, 64
        %v6399 = vpop.permute.xlu0 %6398
        %vm6401 = vcmask 1048064
        %6402 = vst.msk [vmem:[#allocation7] sm:$0xff] %vm6401, %v6399
        %v6403 = vld [vmem:[#allocation4] sm:$0x6]
        %v6404 = vld [vmem:[#allocation4 + $0x4] sm:$0x6]
        %v6405 = vld [vmem:[#allocation4 + $0x8] sm:$0x6]
        %v6406 = vld [vmem:[#allocation4 + $0xc] sm:$0x6]
        %v6412 = vunpack.c.l.s4 1983009808
        %v6413 = vunpack.c.0.s8 %v6412
        %v6414 = vlaneseq
        %v6415 = vshrl.u32 %v6414, 7
        %v6416 = vsub.s32 %v6413, %v6415
        %v6417 = vrot.slane %v6403, %v6416
        %v6418 = vcombine.high %v6417, %v6417
        %v6420 = vunpack.c.l.s4 1983009808
        %v6421 = vunpack.c.0.s8 %v6420
        %v6422 = vlaneseq
        %v6423 = vshrl.u32 %v6422, 7
        %v6424 = vsub.s32 %v6421, %v6423
        %v6425 = vrot.slane %v6404, %v6424
        %v6426 = vcombine.high %v6425, %v6425
        %v6428 = vunpack.c.l.s4 1983009808
        %v6429 = vunpack.c.0.s8 %v6428
        %v6430 = vlaneseq
        %v6431 = vshrl.u32 %v6430, 7
        %v6432 = vsub.s32 %v6429, %v6431
        %v6433 = vrot.slane %v6405, %v6432
        %v6434 = vcombine.high %v6433, %v6433
        %v6436 = vunpack.c.l.s4 1983009808
        %v6437 = vunpack.c.0.s8 %v6436
        %v6438 = vlaneseq
        %v6439 = vshrl.u32 %v6438, 7
        %v6440 = vsub.s32 %v6437, %v6439
        %v6441 = vrot.slane %v6406, %v6440
        %v6442 = vcombine.high %v6441, %v6441
        %vm6443 = vcmask 1040384
        %vm6444 = vcmask 1042434
        %vm6445 = vmor %vm6443, %vm6444
        %vm6446 = vcmask 1044484
        %vm6447 = vmor %vm6445, %vm6446
        %vm6448 = vcmask 1046534
        %vm6449 = vmor %vm6447, %vm6448
        %v6450 = vrot.slane %v6417, 7
        %v6451 = vrot.slane %v6450, 2
        %v6452 = vrot.slane %v6418, 7
        %v6453 = vsel %vm6449, %v6451, %v6452
        %v6454 = vrot.slane %v6425, 7
        %v6455 = vrot.slane %v6454, 2
        %v6456 = vrot.slane %v6426, 7
        %v6457 = vsel %vm6449, %v6455, %v6456
        %v6458 = vrot.slane %v6433, 7
        %v6459 = vrot.slane %v6458, 2
        %v6460 = vrot.slane %v6434, 7
        %v6461 = vsel %vm6449, %v6459, %v6460
        %v6462 = vrot.slane %v6441, 7
        %v6463 = vrot.slane %v6462, 2
        %v6464 = vrot.slane %v6442, 7
        %v6465 = vsel %vm6449, %v6463, %v6464
        %v6466 = vcombine.low %v6453, %v6457
        %v6467 = vcombine.low %v6461, %v6465
        %v6469 = vunpack.c.l.s4 1983009808
        %v6470 = vunpack.c.0.s8 %v6469
        %v6471 = vlaneseq
        %v6472 = vshrl.u32 %v6471, 7
        %v6473 = vsub.s32 %v6470, %v6472
        %v6474 = vrot.slane %v6466, %v6473
        %v6476 = vunpack.c.l.s4 1983009808
        %v6477 = vunpack.c.0.s8 %v6476
        %v6478 = vlaneseq
        %v6479 = vshrl.u32 %v6478, 7
        %v6480 = vsub.s32 %v6477, %v6479
        %v6481 = vrot.slane %v6467, %v6480
        %v6482 = vcombine.low %v6474, %v6481
        %6484 = vst.msk [vmem:[#allocation7 + $0x8] sm:$0xff] %vm6276, %v6482
        %v6485 = vld [vmem:[%s6168] sm:$0x3]
        %v6486 = vld [vmem:[%s6168 + $0x4] sm:$0x3]
        %v6487 = vld [vmem:[%s6168 + $0x8] sm:$0x3]
        %v6488 = vld [vmem:[%s6168 + $0xc] sm:$0x3]
        %v6493 = vcombine.low %v6485, %v6486
        %v6494 = vcombine.low %v6487, %v6488
        %v6496 = vunpack.c.l.s4 1983009808
        %v6497 = vunpack.c.0.s8 %v6496
        %v6498 = vlaneseq
        %v6499 = vshrl.u32 %v6498, 7
        %v6500 = vsub.s32 %v6497, %v6499
        %v6501 = vrot.slane %v6493, %v6500
        %v6503 = vunpack.c.l.s4 1983009808
        %v6504 = vunpack.c.0.s8 %v6503
        %v6505 = vlaneseq
        %v6506 = vshrl.u32 %v6505, 7
        %v6507 = vsub.s32 %v6504, %v6506
        %v6508 = vrot.slane %v6494, %v6507
        %v6509 = vcombine.low %v6501, %v6508
        %6510 = vrot.lane.b32.xlu0 %v6509, 64
        %v6511 = vpop.permute.xlu0 %6510
        %6513 = vst.msk [vmem:[#allocation7 + $0x8] sm:$0xff] %vm6401, %v6511
        %v6514 = vld [vmem:[%s6168] sm:$0x7]
        %v6515 = vld [vmem:[%s6168 + $0x4] sm:$0x7]
        %v6516 = vld [vmem:[%s6168 + $0x8] sm:$0x7]
        %v6517 = vld [vmem:[%s6168 + $0xc] sm:$0x7]
        %v6523 = vunpack.c.l.s4 1983009808
        %v6524 = vunpack.c.0.s8 %v6523
        %v6525 = vlaneseq
        %v6526 = vshrl.u32 %v6525, 7
        %v6527 = vsub.s32 %v6524, %v6526
        %v6528 = vrot.slane %v6514, %v6527
        %v6529 = vcombine.high %v6528, %v6528
        %v6531 = vunpack.c.l.s4 1983009808
        %v6532 = vunpack.c.0.s8 %v6531
        %v6533 = vlaneseq
        %v6534 = vshrl.u32 %v6533, 7
        %v6535 = vsub.s32 %v6532, %v6534
        %v6536 = vrot.slane %v6515, %v6535
        %v6537 = vcombine.high %v6536, %v6536
        %v6539 = vunpack.c.l.s4 1983009808
        %v6540 = vunpack.c.0.s8 %v6539
        %v6541 = vlaneseq
        %v6542 = vshrl.u32 %v6541, 7
        %v6543 = vsub.s32 %v6540, %v6542
        %v6544 = vrot.slane %v6516, %v6543
        %v6545 = vcombine.high %v6544, %v6544
        %v6547 = vunpack.c.l.s4 1983009808
        %v6548 = vunpack.c.0.s8 %v6547
        %v6549 = vlaneseq
        %v6550 = vshrl.u32 %v6549, 7
        %v6551 = vsub.s32 %v6548, %v6550
        %v6552 = vrot.slane %v6517, %v6551
        %v6553 = vcombine.high %v6552, %v6552
        %v6555 = vshrl.u32 %v6528, 16
        %v6557 = vrot.slane %v6555, 6
        %v6558 = vshll.u32 %v6528, 16
        %v6560 = vrot.slane %v6558, 7
        %v6561 = vor.u32 %v6557, %v6560
        %v6562 = vrot.slane %v6561, 2
        %v6564 = vshll.u32 %v6529, 16
        %v6566 = vrot.slane %v6564, 7
        %v6567 = vsel %vm6324, %v6562, %v6566
        %v6569 = vshrl.u32 %v6536, 16
        %v6571 = vrot.slane %v6569, 6
        %v6572 = vshll.u32 %v6536, 16
        %v6574 = vrot.slane %v6572, 7
        %v6575 = vor.u32 %v6571, %v6574
        %v6576 = vrot.slane %v6575, 2
        %v6578 = vshll.u32 %v6537, 16
        %v6580 = vrot.slane %v6578, 7
        %v6581 = vsel %vm6324, %v6576, %v6580
        %v6583 = vshrl.u32 %v6544, 16
        %v6585 = vrot.slane %v6583, 6
        %v6586 = vshll.u32 %v6544, 16
        %v6588 = vrot.slane %v6586, 7
        %v6589 = vor.u32 %v6585, %v6588
        %v6590 = vrot.slane %v6589, 2
        %v6592 = vshll.u32 %v6545, 16
        %v6594 = vrot.slane %v6592, 7
        %v6595 = vsel %vm6324, %v6590, %v6594
        %v6597 = vshrl.u32 %v6552, 16
        %v6599 = vrot.slane %v6597, 6
        %v6600 = vshll.u32 %v6552, 16
        %v6602 = vrot.slane %v6600, 7
        %v6603 = vor.u32 %v6599, %v6602
        %v6604 = vrot.slane %v6603, 2
        %v6606 = vshll.u32 %v6553, 16
        %v6608 = vrot.slane %v6606, 7
        %v6609 = vsel %vm6324, %v6604, %v6608
        %v6610 = vcombine.low %v6567, %v6581
        %v6611 = vcombine.low %v6595, %v6609
        %v6613 = vunpack.c.l.s4 1983009808
        %v6614 = vunpack.c.0.s8 %v6613
        %v6615 = vlaneseq
        %v6616 = vshrl.u32 %v6615, 7
        %v6617 = vsub.s32 %v6614, %v6616
        %v6618 = vrot.slane %v6610, %v6617
        %v6620 = vunpack.c.l.s4 1983009808
        %v6621 = vunpack.c.0.s8 %v6620
        %v6622 = vlaneseq
        %v6623 = vshrl.u32 %v6622, 7
        %v6624 = vsub.s32 %v6621, %v6623
        %v6625 = vrot.slane %v6611, %v6624
        %v6626 = vcombine.low %v6618, %v6625
        %6628 = vst.msk [vmem:[#allocation7 + $0x10] sm:$0xff] %vm6276, %v6626
        %v6629 = vld [vmem:[%s6168] sm:$0x6]
        %v6630 = vld [vmem:[%s6168 + $0x4] sm:$0x6]
        %v6631 = vld [vmem:[%s6168 + $0x8] sm:$0x6]
        %v6632 = vld [vmem:[%s6168 + $0xc] sm:$0x6]
        %v6638 = vunpack.c.l.s4 1983009808
        %v6639 = vunpack.c.0.s8 %v6638
        %v6640 = vlaneseq
        %v6641 = vshrl.u32 %v6640, 7
        %v6642 = vsub.s32 %v6639, %v6641
        %v6643 = vrot.slane %v6629, %v6642
        %v6644 = vcombine.high %v6643, %v6643
        %v6646 = vunpack.c.l.s4 1983009808
        %v6647 = vunpack.c.0.s8 %v6646
        %v6648 = vlaneseq
        %v6649 = vshrl.u32 %v6648, 7
        %v6650 = vsub.s32 %v6647, %v6649
        %v6651 = vrot.slane %v6630, %v6650
        %v6652 = vcombine.high %v6651, %v6651
        %v6654 = vunpack.c.l.s4 1983009808
        %v6655 = vunpack.c.0.s8 %v6654
        %v6656 = vlaneseq
        %v6657 = vshrl.u32 %v6656, 7
        %v6658 = vsub.s32 %v6655, %v6657
        %v6659 = vrot.slane %v6631, %v6658
        %v6660 = vcombine.high %v6659, %v6659
        %v6662 = vunpack.c.l.s4 1983009808
        %v6663 = vunpack.c.0.s8 %v6662
        %v6664 = vlaneseq
        %v6665 = vshrl.u32 %v6664, 7
        %v6666 = vsub.s32 %v6663, %v6665
        %v6667 = vrot.slane %v6632, %v6666
        %v6668 = vcombine.high %v6667, %v6667
        %v6669 = vrot.slane %v6643, 7
        %v6670 = vrot.slane %v6669, 2
        %v6671 = vrot.slane %v6644, 7
        %v6672 = vsel %vm6449, %v6670, %v6671
        %v6673 = vrot.slane %v6651, 7
        %v6674 = vrot.slane %v6673, 2
        %v6675 = vrot.slane %v6652, 7
        %v6676 = vsel %vm6449, %v6674, %v6675
        %v6677 = vrot.slane %v6659, 7
        %v6678 = vrot.slane %v6677, 2
        %v6679 = vrot.slane %v6660, 7
        %v6680 = vsel %vm6449, %v6678, %v6679
        %v6681 = vrot.slane %v6667, 7
        %v6682 = vrot.slane %v6681, 2
        %v6683 = vrot.slane %v6668, 7
        %v6684 = vsel %vm6449, %v6682, %v6683
        %v6685 = vcombine.low %v6672, %v6676
        %v6686 = vcombine.low %v6680, %v6684
        %v6688 = vunpack.c.l.s4 1983009808
        %v6689 = vunpack.c.0.s8 %v6688
        %v6690 = vlaneseq
        %v6691 = vshrl.u32 %v6690, 7
        %v6692 = vsub.s32 %v6689, %v6691
        %v6693 = vrot.slane %v6685, %v6692
        %v6695 = vunpack.c.l.s4 1983009808
        %v6696 = vunpack.c.0.s8 %v6695
        %v6697 = vlaneseq
        %v6698 = vshrl.u32 %v6697, 7
        %v6699 = vsub.s32 %v6696, %v6698
        %v6700 = vrot.slane %v6686, %v6699
        %v6701 = vcombine.low %v6693, %v6700
        %6702 = vrot.lane.b32.xlu0 %v6701, 64
        %v6703 = vpop.permute.xlu0 %6702
        %6705 = vst.msk [vmem:[#allocation7 + $0x10] sm:$0xff] %vm6401, %v6703
        %v6706 = vld [vmem:[%s6196] sm:$0x3]
        %v6707 = vld [vmem:[%s6196 + $0x4] sm:$0x3]
        %v6708 = vld [vmem:[%s6196 + $0x8] sm:$0x3]
        %v6709 = vld [vmem:[%s6196 + $0xc] sm:$0x3]
        %v6714 = vcombine.low %v6706, %v6707
        %v6715 = vcombine.low %v6708, %v6709
        %v6717 = vunpack.c.l.s4 1983009808
        %v6718 = vunpack.c.0.s8 %v6717
        %v6719 = vlaneseq
        %v6720 = vshrl.u32 %v6719, 7
        %v6721 = vsub.s32 %v6718, %v6720
        %v6722 = vrot.slane %v6714, %v6721
        %v6724 = vunpack.c.l.s4 1983009808
        %v6725 = vunpack.c.0.s8 %v6724
        %v6726 = vlaneseq
        %v6727 = vshrl.u32 %v6726, 7
        %v6728 = vsub.s32 %v6725, %v6727
        %v6729 = vrot.slane %v6715, %v6728
        %v6730 = vcombine.low %v6722, %v6729
        %6732 = vst.msk [vmem:[#allocation7 + $0x18] sm:$0xff] %vm6276, %v6730
        %v6733 = vld [vmem:[%s6196] sm:$0x7]
        %v6734 = vld [vmem:[%s6196 + $0x4] sm:$0x7]
        %v6735 = vld [vmem:[%s6196 + $0x8] sm:$0x7]
        %v6736 = vld [vmem:[%s6196 + $0xc] sm:$0x7]
        %v6742 = vunpack.c.l.s4 1983009808
        %v6743 = vunpack.c.0.s8 %v6742
        %v6744 = vlaneseq
        %v6745 = vshrl.u32 %v6744, 7
        %v6746 = vsub.s32 %v6743, %v6745
        %v6747 = vrot.slane %v6733, %v6746
        %v6748 = vcombine.high %v6747, %v6747
        %v6750 = vunpack.c.l.s4 1983009808
        %v6751 = vunpack.c.0.s8 %v6750
        %v6752 = vlaneseq
        %v6753 = vshrl.u32 %v6752, 7
        %v6754 = vsub.s32 %v6751, %v6753
        %v6755 = vrot.slane %v6734, %v6754
        %v6756 = vcombine.high %v6755, %v6755
        %v6758 = vunpack.c.l.s4 1983009808
        %v6759 = vunpack.c.0.s8 %v6758
        %v6760 = vlaneseq
        %v6761 = vshrl.u32 %v6760, 7
        %v6762 = vsub.s32 %v6759, %v6761
        %v6763 = vrot.slane %v6735, %v6762
        %v6764 = vcombine.high %v6763, %v6763
        %v6766 = vunpack.c.l.s4 1983009808
        %v6767 = vunpack.c.0.s8 %v6766
        %v6768 = vlaneseq
        %v6769 = vshrl.u32 %v6768, 7
        %v6770 = vsub.s32 %v6767, %v6769
        %v6771 = vrot.slane %v6736, %v6770
        %v6772 = vcombine.high %v6771, %v6771
        %v6774 = vshrl.u32 %v6747, 16
        %v6776 = vrot.slane %v6774, 6
        %v6777 = vshll.u32 %v6747, 16
        %v6779 = vrot.slane %v6777, 7
        %v6780 = vor.u32 %v6776, %v6779
        %v6781 = vrot.slane %v6780, 2
        %v6783 = vshll.u32 %v6748, 16
        %v6785 = vrot.slane %v6783, 7
        %v6786 = vsel %vm6324, %v6781, %v6785
        %v6788 = vshrl.u32 %v6755, 16
        %v6790 = vrot.slane %v6788, 6
        %v6791 = vshll.u32 %v6755, 16
        %v6793 = vrot.slane %v6791, 7
        %v6794 = vor.u32 %v6790, %v6793
        %v6795 = vrot.slane %v6794, 2
        %v6797 = vshll.u32 %v6756, 16
        %v6799 = vrot.slane %v6797, 7
        %v6800 = vsel %vm6324, %v6795, %v6799
        %v6802 = vshrl.u32 %v6763, 16
        %v6804 = vrot.slane %v6802, 6
        %v6805 = vshll.u32 %v6763, 16
        %v6807 = vrot.slane %v6805, 7
        %v6808 = vor.u32 %v6804, %v6807
        %v6809 = vrot.slane %v6808, 2
        %v6811 = vshll.u32 %v6764, 16
        %v6813 = vrot.slane %v6811, 7
        %v6814 = vsel %vm6324, %v6809, %v6813
        %v6816 = vshrl.u32 %v6771, 16
        %v6818 = vrot.slane %v6816, 6
        %v6819 = vshll.u32 %v6771, 16
        %v6821 = vrot.slane %v6819, 7
        %v6822 = vor.u32 %v6818, %v6821
        %v6823 = vrot.slane %v6822, 2
        %v6825 = vshll.u32 %v6772, 16
        %v6827 = vrot.slane %v6825, 7
        %v6828 = vsel %vm6324, %v6823, %v6827
        %v6829 = vcombine.low %v6786, %v6800
        %v6830 = vcombine.low %v6814, %v6828
        %v6832 = vunpack.c.l.s4 1983009808
        %v6833 = vunpack.c.0.s8 %v6832
        %v6834 = vlaneseq
        %v6835 = vshrl.u32 %v6834, 7
        %v6836 = vsub.s32 %v6833, %v6835
        %v6837 = vrot.slane %v6829, %v6836
        %v6839 = vunpack.c.l.s4 1983009808
        %v6840 = vunpack.c.0.s8 %v6839
        %v6841 = vlaneseq
        %v6842 = vshrl.u32 %v6841, 7
        %v6843 = vsub.s32 %v6840, %v6842
        %v6844 = vrot.slane %v6830, %v6843
        %v6845 = vcombine.low %v6837, %v6844
        %6846 = vrot.lane.b32.xlu0 %v6845, 64
        %v6847 = vpop.permute.xlu0 %6846
        %6849 = vst.msk [vmem:[#allocation7 + $0x18] sm:$0xff] %vm6401, %v6847
        %v6850 = vld [vmem:[%s6196] sm:$0x6]
        %v6851 = vld [vmem:[%s6196 + $0x4] sm:$0x6]
        %v6852 = vld [vmem:[%s6196 + $0x8] sm:$0x6]
        %v6853 = vld [vmem:[%s6196 + $0xc] sm:$0x6]
        %v6859 = vunpack.c.l.s4 1983009808
        %v6860 = vunpack.c.0.s8 %v6859
        %v6861 = vlaneseq
        %v6862 = vshrl.u32 %v6861, 7
        %v6863 = vsub.s32 %v6860, %v6862
        %v6864 = vrot.slane %v6850, %v6863
        %v6865 = vcombine.high %v6864, %v6864
        %v6867 = vunpack.c.l.s4 1983009808
        %v6868 = vunpack.c.0.s8 %v6867
        %v6869 = vlaneseq
        %v6870 = vshrl.u32 %v6869, 7
        %v6871 = vsub.s32 %v6868, %v6870
        %v6872 = vrot.slane %v6851, %v6871
        %v6873 = vcombine.high %v6872, %v6872
        %v6875 = vunpack.c.l.s4 1983009808
        %v6876 = vunpack.c.0.s8 %v6875
        %v6877 = vlaneseq
        %v6878 = vshrl.u32 %v6877, 7
        %v6879 = vsub.s32 %v6876, %v6878
        %v6880 = vrot.slane %v6852, %v6879
        %v6881 = vcombine.high %v6880, %v6880
        %v6883 = vunpack.c.l.s4 1983009808
        %v6884 = vunpack.c.0.s8 %v6883
        %v6885 = vlaneseq
        %v6886 = vshrl.u32 %v6885, 7
        %v6887 = vsub.s32 %v6884, %v6886
        %v6888 = vrot.slane %v6853, %v6887
        %v6889 = vcombine.high %v6888, %v6888
        %v6890 = vrot.slane %v6864, 7
        %v6891 = vrot.slane %v6890, 2
        %v6892 = vrot.slane %v6865, 7
        %v6893 = vsel %vm6449, %v6891, %v6892
        %v6894 = vrot.slane %v6872, 7
        %v6895 = vrot.slane %v6894, 2
        %v6896 = vrot.slane %v6873, 7
        %v6897 = vsel %vm6449, %v6895, %v6896
        %v6898 = vrot.slane %v6880, 7
        %v6899 = vrot.slane %v6898, 2
        %v6900 = vrot.slane %v6881, 7
        %v6901 = vsel %vm6449, %v6899, %v6900
        %v6902 = vrot.slane %v6888, 7
        %v6903 = vrot.slane %v6902, 2
        %v6904 = vrot.slane %v6889, 7
        %v6905 = vsel %vm6449, %v6903, %v6904
        %v6906 = vcombine.low %v6893, %v6897
        %v6907 = vcombine.low %v6901, %v6905
        %v6909 = vunpack.c.l.s4 1983009808
        %v6910 = vunpack.c.0.s8 %v6909
        %v6911 = vlaneseq
        %v6912 = vshrl.u32 %v6911, 7
        %v6913 = vsub.s32 %v6910, %v6912
        %v6914 = vrot.slane %v6906, %v6913
        %v6916 = vunpack.c.l.s4 1983009808
        %v6917 = vunpack.c.0.s8 %v6916
        %v6918 = vlaneseq
        %v6919 = vshrl.u32 %v6918, 7
        %v6920 = vsub.s32 %v6917, %v6919
        %v6921 = vrot.slane %v6907, %v6920
        %v6922 = vcombine.low %v6914, %v6921
        %6924 = vst.msk [vmem:[#allocation7 + $0x20] sm:$0xff] %vm6276, %v6922
        %6925 = vst.msk [vmem:[#allocation7 + $0x20] sm:$0xff] %vm6401, 0
        %v6926 = vld [vmem:[#allocation7] sm:$0xff]
        %v6927 = vld [vmem:[#allocation7 + $0x8] sm:$0xff]
        %v6928 = vld [vmem:[#allocation7 + $0x10] sm:$0xff]
        %v6929 = vld [vmem:[#allocation7 + $0x18] sm:$0xff]
        %v6930 = vld [vmem:[#allocation7 + $0x20] sm:$0xff]
        %v6931 = vld [vmem:[%s5] sm:$0xf]
        %v6932 = vld [vmem:[%s5 + $0x4] sm:$0xf]
        %v6933 = vld [vmem:[%s5 + $0x8] sm:$0xf]
        %v6934 = vld [vmem:[%s5 + $0xc] sm:$0xf]
        %v6935 = vld [vmem:[%s5 + $0x10] sm:$0xf]
        %v6936 = vld [vmem:[%s5 + $0x14] sm:$0xf]
        %v6937 = vld [vmem:[%s5 + $0x18] sm:$0xf]
        %v6938 = vld [vmem:[%s5 + $0x1c] sm:$0xf]
        %v6939 = vld [vmem:[%s5 + $0x20] sm:$0xf]
        %v6940 = vld [vmem:[%s5 + $0x24] sm:$0xf]
        %v6941 = vld [vmem:[%s5 + $0x28] sm:$0xf]
        %v6942 = vld [vmem:[%s5 + $0x2c] sm:$0xf]
        %v6943 = vld [vmem:[%s5 + $0x30] sm:$0xf]
        %v6944 = vld [vmem:[%s5 + $0x34] sm:$0xf]
        %v6945 = vld [vmem:[%s5 + $0x38] sm:$0xf]
        %v6946 = vld [vmem:[%s5 + $0x3c] sm:$0xf]
        %v6947 = vld [vmem:[%s5 + $0x40] sm:$0xf]
        %v6948 = vld [vmem:[%s5 + $0x44] sm:$0xf]
        %v6949 = vld [vmem:[%s5 + $0x48] sm:$0xf]
        %v6950 = vld [vmem:[%s5 + $0x4c] sm:$0xf]
        %v6951 = vld [vmem:[%s5 + $0x50] sm:$0xf]
        %v6952 = vld [vmem:[%s5 + $0x54] sm:$0xf]
        %v6953 = vld [vmem:[%s5 + $0x58] sm:$0xf]
        %v6954 = vld [vmem:[%s5 + $0x5c] sm:$0xf]
        %v6955 = vld [vmem:[%s5 + $0x60] sm:$0xf]
        %v6956 = vld [vmem:[%s5 + $0x64] sm:$0xf]
        %v6957 = vld [vmem:[%s5 + $0x68] sm:$0xf]
        %v6958 = vld [vmem:[%s5 + $0x6c] sm:$0xf]
        %v6959 = vld [vmem:[%s5 + $0x70] sm:$0xf]
        %v6960 = vld [vmem:[%s5 + $0x74] sm:$0xf]
        %v6961 = vld [vmem:[%s5 + $0x78] sm:$0xf]
        %v6962 = vld [vmem:[%s5 + $0x7c] sm:$0xf]
        %v6963 = vld [vmem:[%s5 + $0x80] sm:$0xf]
        %v6964 = vld [vmem:[%s5 + $0x84] sm:$0xf]
        %v6965 = vld [vmem:[%s5 + $0x88] sm:$0xf]
        %v6966 = vld [vmem:[%s5 + $0x8c] sm:$0xf]
        %v6967 = vld [vmem:[%s5 + $0x90] sm:$0xf]
        %v6968 = vld [vmem:[%s5 + $0x94] sm:$0xf]
        %v6969 = vld [vmem:[%s5 + $0x98] sm:$0xf]
        %v6970 = vld [vmem:[%s5 + $0x9c] sm:$0xf]
        %v6971 = vld [vmem:[%s5 + $0xa0] sm:$0xf]
        %v6972 = vld [vmem:[%s5 + $0xa4] sm:$0xf]
        %v6973 = vld [vmem:[%s5 + $0xa8] sm:$0xf]
        %v6974 = vld [vmem:[%s5 + $0xac] sm:$0xf]
        %v6975 = vld [vmem:[%s5 + $0xb0] sm:$0xf]
        %v6976 = vld [vmem:[%s5 + $0xb4] sm:$0xf]
        %v6977 = vld [vmem:[%s5 + $0xb8] sm:$0xf]
        %v6978 = vld [vmem:[%s5 + $0xbc] sm:$0xf]
        %v6979 = vld [vmem:[%s5 + $0xc0] sm:$0xf]
        %v6980 = vld [vmem:[%s5 + $0xc4] sm:$0xf]
        %v6981 = vld [vmem:[%s5 + $0xc8] sm:$0xf]
        %v6982 = vld [vmem:[%s5 + $0xcc] sm:$0xf]
        %v6983 = vld [vmem:[%s5 + $0xd0] sm:$0xf]
        %v6984 = vld [vmem:[%s5 + $0xd4] sm:$0xf]
        %v6985 = vld [vmem:[%s5 + $0xd8] sm:$0xf]
        %v6986 = vld [vmem:[%s5 + $0xdc] sm:$0xf]
        %v6987 = vld [vmem:[%s5 + $0xe0] sm:$0xf]
        %v6988 = vld [vmem:[%s5 + $0xe4] sm:$0xf]
        %v6989 = vld [vmem:[%s5 + $0xe8] sm:$0xf]
        %v6990 = vld [vmem:[%s5 + $0xec] sm:$0xf]
        %v6991 = vld [vmem:[%s5 + $0xf0] sm:$0xf]
        %v6992 = vld [vmem:[%s5 + $0xf4] sm:$0xf]
        %v6993 = vld [vmem:[%s5 + $0xf8] sm:$0xf]
        %v6994 = vld [vmem:[%s5 + $0xfc] sm:$0xf]
        %v6995 = vld [vmem:[%s5 + $0x100] sm:$0xf]
        %v6996 = vld [vmem:[%s5 + $0x104] sm:$0xf]
        %v6997 = vld [vmem:[%s5 + $0x108] sm:$0xf]
        %v6998 = vld [vmem:[%s5 + $0x10c] sm:$0xf]
        %v6999 = vld [vmem:[%s5 + $0x110] sm:$0xf]
        %v7000 = vld [vmem:[%s5 + $0x114] sm:$0xf]
        %v7001 = vld [vmem:[%s5 + $0x118] sm:$0xf]
        %v7002 = vld [vmem:[%s5 + $0x11c] sm:$0xf]
        %v7003 = vld [vmem:[%s5 + $0x120] sm:$0xf]
        %v7004 = vld [vmem:[%s5 + $0x124] sm:$0xf]
        %v7005 = vld [vmem:[%s5 + $0x128] sm:$0xf]
        %v7006 = vld [vmem:[%s5 + $0x12c] sm:$0xf]
        %v7007 = vld [vmem:[%s5 + $0x130] sm:$0xf]
        %v7008 = vld [vmem:[%s5 + $0x134] sm:$0xf]
        %v7009 = vld [vmem:[%s5 + $0x138] sm:$0xf]
        %v7010 = vld [vmem:[%s5 + $0x13c] sm:$0xf]
        %v7011 = vld [vmem:[%s6] sm:$0x1]
        %v7013 = vlaneseq
        %v7014 = vshrl.u32 %v7013, 7
        %v7015 = vsub.s32 0, %v7014
        %v7016 = vrot.slane %v7011, %v7015
        %v7098 = vunpack.c.l.b16 %v6931
        %v7099 = vunpack.c.l.b16 %v6932
        %v7100 = vunpack.c.l.b16 %v6933
        %v7101 = vunpack.c.l.b16 %v6934
        %v7102 = vunpack.c.l.b16 %v6935
        %v7103 = vunpack.c.l.b16 %v6936
        %v7104 = vunpack.c.l.b16 %v6937
        %v7105 = vunpack.c.l.b16 %v6938
        %v7106 = vunpack.c.l.b16 %v6939
        %v7107 = vunpack.c.l.b16 %v6940
        %v7108 = vunpack.c.l.b16 %v6941
        %v7109 = vunpack.c.l.b16 %v6942
        %v7110 = vunpack.c.l.b16 %v6943
        %v7111 = vunpack.c.l.b16 %v6944
        %v7112 = vunpack.c.l.b16 %v6945
        %v7113 = vunpack.c.l.b16 %v6946
        %v7114 = vunpack.c.l.b16 %v6947
        %v7115 = vunpack.c.l.b16 %v6948
        %v7116 = vunpack.c.l.b16 %v6949
        %v7117 = vunpack.c.l.b16 %v6950
        %v7118 = vunpack.c.l.b16 %v6951
        %v7119 = vunpack.c.l.b16 %v6952
        %v7120 = vunpack.c.l.b16 %v6953
        %v7121 = vunpack.c.l.b16 %v6954
        %v7122 = vunpack.c.l.b16 %v6955
        %v7123 = vunpack.c.l.b16 %v6956
        %v7124 = vunpack.c.l.b16 %v6957
        %v7125 = vunpack.c.l.b16 %v6958
        %v7126 = vunpack.c.l.b16 %v6959
        %v7127 = vunpack.c.l.b16 %v6960
        %v7128 = vunpack.c.l.b16 %v6961
        %v7129 = vunpack.c.l.b16 %v6962
        %v7130 = vunpack.c.l.b16 %v6963
        %v7131 = vunpack.c.l.b16 %v6964
        %v7132 = vunpack.c.l.b16 %v6965
        %v7133 = vunpack.c.l.b16 %v6966
        %v7134 = vunpack.c.l.b16 %v6967
        %v7135 = vunpack.c.l.b16 %v6968
        %v7136 = vunpack.c.l.b16 %v6969
        %v7137 = vunpack.c.l.b16 %v6970
        %v7138 = vunpack.c.l.b16 %v6971
        %v7139 = vunpack.c.l.b16 %v6972
        %v7140 = vunpack.c.l.b16 %v6973
        %v7141 = vunpack.c.l.b16 %v6974
        %v7142 = vunpack.c.l.b16 %v6975
        %v7143 = vunpack.c.l.b16 %v6976
        %v7144 = vunpack.c.l.b16 %v6977
        %v7145 = vunpack.c.l.b16 %v6978
        %v7146 = vunpack.c.l.b16 %v6979
        %v7147 = vunpack.c.l.b16 %v6980
        %v7148 = vunpack.c.l.b16 %v6981
        %v7149 = vunpack.c.l.b16 %v6982
        %v7150 = vunpack.c.l.b16 %v6983
        %v7151 = vunpack.c.l.b16 %v6984
        %v7152 = vunpack.c.l.b16 %v6985
        %v7153 = vunpack.c.l.b16 %v6986
        %v7154 = vunpack.c.l.b16 %v6987
        %v7155 = vunpack.c.l.b16 %v6988
        %v7156 = vunpack.c.l.b16 %v6989
        %v7157 = vunpack.c.l.b16 %v6990
        %v7158 = vunpack.c.l.b16 %v6991
        %v7159 = vunpack.c.l.b16 %v6992
        %v7160 = vunpack.c.l.b16 %v6993
        %v7161 = vunpack.c.l.b16 %v6994
        %v7162 = vunpack.c.l.b16 %v6995
        %v7163 = vunpack.c.l.b16 %v6996
        %v7164 = vunpack.c.l.b16 %v6997
        %v7165 = vunpack.c.l.b16 %v6998
        %v7166 = vunpack.c.l.b16 %v6999
        %v7167 = vunpack.c.l.b16 %v7000
        %v7168 = vunpack.c.l.b16 %v7001
        %v7169 = vunpack.c.l.b16 %v7002
        %v7170 = vunpack.c.l.b16 %v7003
        %v7171 = vunpack.c.l.b16 %v7004
        %v7172 = vunpack.c.l.b16 %v7005
        %v7173 = vunpack.c.l.b16 %v7006
        %v7174 = vunpack.c.l.b16 %v7007
        %v7175 = vunpack.c.l.b16 %v7008
        %v7176 = vunpack.c.l.b16 %v7009
        %v7177 = vunpack.c.l.b16 %v7010
        %v7178 = vpack.c.b16 %v7099, %v7098
        %v7179 = vpack.c.b16 %v7101, %v7100
        %v7180 = vpack.c.b16 %v7103, %v7102
        %v7181 = vpack.c.b16 %v7105, %v7104
        %v7182 = vpack.c.b16 %v7107, %v7106
        %v7183 = vpack.c.b16 %v7109, %v7108
        %v7184 = vpack.c.b16 %v7111, %v7110
        %v7185 = vpack.c.b16 %v7113, %v7112
        %v7186 = vpack.c.b16 %v7115, %v7114
        %v7187 = vpack.c.b16 %v7117, %v7116
        %v7188 = vpack.c.b16 %v7119, %v7118
        %v7189 = vpack.c.b16 %v7121, %v7120
        %v7190 = vpack.c.b16 %v7123, %v7122
        %v7191 = vpack.c.b16 %v7125, %v7124
        %v7192 = vpack.c.b16 %v7127, %v7126
        %v7193 = vpack.c.b16 %v7129, %v7128
        %v7194 = vpack.c.b16 %v7131, %v7130
        %v7195 = vpack.c.b16 %v7133, %v7132
        %v7196 = vpack.c.b16 %v7135, %v7134
        %v7197 = vpack.c.b16 %v7137, %v7136
        %v7198 = vpack.c.b16 %v7139, %v7138
        %v7199 = vpack.c.b16 %v7141, %v7140
        %v7200 = vpack.c.b16 %v7143, %v7142
        %v7201 = vpack.c.b16 %v7145, %v7144
        %v7202 = vpack.c.b16 %v7147, %v7146
        %v7203 = vpack.c.b16 %v7149, %v7148
        %v7204 = vpack.c.b16 %v7151, %v7150
        %v7205 = vpack.c.b16 %v7153, %v7152
        %v7206 = vpack.c.b16 %v7155, %v7154
        %v7207 = vpack.c.b16 %v7157, %v7156
        %v7208 = vpack.c.b16 %v7159, %v7158
        %v7209 = vpack.c.b16 %v7161, %v7160
        %v7210 = vpack.c.b16 %v7163, %v7162
        %v7211 = vpack.c.b16 %v7165, %v7164
        %v7212 = vpack.c.b16 %v7167, %v7166
        %v7213 = vpack.c.b16 %v7169, %v7168
        %v7214 = vpack.c.b16 %v7171, %v7170
        %v7215 = vpack.c.b16 %v7173, %v7172
        %v7216 = vpack.c.b16 %v7175, %v7174
        %v7217 = vpack.c.b16 %v7177, %v7176
        %7258 = vmatprep.subr.bf16.mxu0 0
        %7259 = vmatpush1.bf16.msra.mxu0 %v7178
        %7260 = vmatprep.subr.bf16.mxu0 0
        %7261 = vmatpush1.bf16.msra.mxu0 %v7179
        %7262 = vmatprep.subr.bf16.mxu0 0
        %7263 = vmatpush1.bf16.msra.mxu0 %v7180
        %7264 = vmatprep.subr.bf16.mxu0 0
        %7265 = vmatpush1.bf16.msra.mxu0 %v7181
        %7266 = vmatprep.subr.bf16.mxu0 0
        %7267 = vmatpush1.bf16.msra.mxu0 %v7182
        %7268 = vmatprep.subr.bf16.mxu0 0
        %7269 = vmatpush1.bf16.msra.mxu0 %v7183
        %7270 = vmatprep.subr.bf16.mxu0 0
        %7271 = vmatpush1.bf16.msra.mxu0 %v7184
        %7272 = vmatprep.subr.bf16.mxu0 0
        %7273 = vmatpush1.bf16.msra.mxu0 %v7185
        %7274 = vmatprep.subr.bf16.mxu0 0
        %7275 = vmatpush1.bf16.msra.mxu0 %v7186
        %7276 = vmatprep.subr.bf16.mxu0 0
        %7277 = vmatpush1.bf16.msra.mxu0 %v7187
        %7278 = vmatprep.subr.bf16.mxu0 0
        %7279 = vmatpush1.bf16.msra.mxu0 %v7188
        %7280 = vmatprep.subr.bf16.mxu0 0
        %7281 = vmatpush1.bf16.msra.mxu0 %v7189
        %7282 = vmatprep.subr.bf16.mxu0 0
        %7283 = vmatpush1.bf16.msra.mxu0 %v7190
        %7284 = vmatprep.subr.bf16.mxu0 0
        %7285 = vmatpush1.bf16.msra.mxu0 %v7191
        %7286 = vmatprep.subr.bf16.mxu0 0
        %7287 = vmatpush1.bf16.msra.mxu0 %v7192
        %7288 = vmatprep.subr.bf16.mxu0 0
        %7289 = vmatpush1.bf16.msra.mxu0 %v7193
        %7290 = vmatprep.mubr.bf16.mxu0 %v6927
        %7291 = vmatmul.mubr.bf16.gmra.mrb[0].mxu0 %v6926
        %v7292 = vpop.f32.mrb[0].mxu0
        %v7293 = vadd.f32 %v7016, %v7292
        %v7294 = vpop.f32.mrb[0].mxu0
        %v7295 = vpop.f32.mrb[0].mxu0
        %v7296 = vadd.f32 %v7016, %v7295
        %v7297 = vpop.f32.mrb[0].mxu0
        %7298 = vdwg.mxu0
        %7299 = vmatprep.subr.bf16.mxu0 0
        %7300 = vmatpush1.bf16.msra.mxu0 %v7194
        %7301 = vmatprep.subr.bf16.mxu0 0
        %7302 = vmatpush1.bf16.msra.mxu0 %v7195
        %7303 = vmatprep.subr.bf16.mxu0 0
        %7304 = vmatpush1.bf16.msra.mxu0 %v7196
        %7305 = vmatprep.subr.bf16.mxu0 0
        %7306 = vmatpush1.bf16.msra.mxu0 %v7197
        %7307 = vmatprep.subr.bf16.mxu0 0
        %7308 = vmatpush1.bf16.msra.mxu0 %v7198
        %7309 = vmatprep.subr.bf16.mxu0 0
        %7310 = vmatpush1.bf16.msra.mxu0 %v7199
        %7311 = vmatprep.subr.bf16.mxu0 0
        %7312 = vmatpush1.bf16.msra.mxu0 %v7200
        %7313 = vmatprep.subr.bf16.mxu0 0
        %7314 = vmatpush1.bf16.msra.mxu0 %v7201
        %7315 = vmatprep.subr.bf16.mxu0 0
        %7316 = vmatpush1.bf16.msra.mxu0 %v7202
        %7317 = vmatprep.subr.bf16.mxu0 0
        %7318 = vmatpush1.bf16.msra.mxu0 %v7203
        %7319 = vmatprep.subr.bf16.mxu0 0
        %7320 = vmatpush1.bf16.msra.mxu0 %v7204
        %7321 = vmatprep.subr.bf16.mxu0 0
        %7322 = vmatpush1.bf16.msra.mxu0 %v7205
        %7323 = vmatprep.subr.bf16.mxu0 0
        %7324 = vmatpush1.bf16.msra.mxu0 %v7206
        %7325 = vmatprep.subr.bf16.mxu0 0
        %7326 = vmatpush1.bf16.msra.mxu0 %v7207
        %7327 = vmatprep.subr.bf16.mxu0 0
        %7328 = vmatpush1.bf16.msra.mxu0 %v7208
        %7329 = vmatprep.subr.bf16.mxu0 0
        %7330 = vmatpush1.bf16.msra.mxu0 %v7209
        %7331 = vmatprep.mubr.bf16.mxu0 %v6929
        %7332 = vmatmul.mubr.bf16.gmra.mrb[0].mxu0 %v6928
        %v7333 = vpop.f32.mrb[0].mxu0
        %v7334 = vadd.f32 %v7293, %v7333
        %v7335 = vpop.f32.mrb[0].mxu0
        %v7336 = vpop.f32.mrb[0].mxu0
        %v7337 = vadd.f32 %v7296, %v7336
        %v7338 = vpop.f32.mrb[0].mxu0
        %7339 = vdwg.mxu0
        %7340 = vmatprep.subr.bf16.mxu0 0
        %7341 = vmatpush1.bf16.msra.mxu0 %v7210
        %7342 = vmatprep.subr.bf16.mxu0 0
        %7343 = vmatpush1.bf16.msra.mxu0 %v7211
        %7344 = vmatprep.subr.bf16.mxu0 0
        %7345 = vmatpush1.bf16.msra.mxu0 %v7212
        %7346 = vmatprep.subr.bf16.mxu0 0
        %7347 = vmatpush1.bf16.msra.mxu0 %v7213
        %7348 = vmatprep.subr.bf16.mxu0 0
        %7349 = vmatpush1.bf16.msra.mxu0 %v7214
        %7350 = vmatprep.subr.bf16.mxu0 0
        %7351 = vmatpush1.bf16.msra.mxu0 %v7215
        %7352 = vmatprep.subr.bf16.mxu0 0
        %7353 = vmatpush1.bf16.msra.mxu0 %v7216
        %7354 = vmatprep.subr.bf16.mxu0 0
        %7355 = vmatpush1.bf16.msra.mxu0 %v7217
        %7356 = vmatprep.subr.bf16.mxu0 0
        %7357 = vmatpush1.bf16.msra.mxu0 0
        %7358 = vmatprep.subr.bf16.mxu0 0
        %7359 = vmatpush1.bf16.msra.mxu0 0
        %7360 = vmatprep.subr.bf16.mxu0 0
        %7361 = vmatpush1.bf16.msra.mxu0 0
        %7362 = vmatprep.subr.bf16.mxu0 0
        %7363 = vmatpush1.bf16.msra.mxu0 0
        %7364 = vmatprep.subr.bf16.mxu0 0
        %7365 = vmatpush1.bf16.msra.mxu0 0
        %7366 = vmatprep.subr.bf16.mxu0 0
        %7367 = vmatpush1.bf16.msra.mxu0 0
        %7368 = vmatprep.subr.bf16.mxu0 0
        %7369 = vmatpush1.bf16.msra.mxu0 0
        %7370 = vmatprep.subr.bf16.mxu0 0
        %7371 = vmatpush1.bf16.msra.mxu0 0
        %7372 = vmatprep.mubr.bf16.mxu0 0
        %7373 = vmatmul.mubr.bf16.gmra.mrb[0].mxu0 %v6930
        %v7374 = vpop.f32.mrb[0].mxu0
        %v7375 = vadd.f32 %v7334, %v7374
        %v7376 = vpop.f32.mrb[0].mxu0
        %v7377 = vpop.f32.mrb[0].mxu0
        %v7378 = vadd.f32 %v7337, %v7377
        %v7379 = vpop.f32.mrb[0].mxu0
        %7380 = vdwg.mxu0
        %v7381 = vmax.f32 %v7375, 0.0
        %v7382 = vmax.f32 %v7378, 0.0
        %7383 = vst [vmem:[#allocation8] sm:$0xff] %v7381
        %7384 = vst [vmem:[#allocation8 + $0x8] sm:$0xff] %v7382
        %v7385 = vld [vmem:[#allocation8] ss:$2 sm:$0x3]
        %v7386 = vld [vmem:[%s4673] ss:$2 sm:$0x3]
        %s7387 = scalar_lea.vmem [#allocation8], 4
        %v7388 = vld [vmem:[%s7387] ss:$2 sm:$0x3]
        %s7389 = scalar_lea.vmem [#allocation8], 5
        %v7390 = vld [vmem:[%s7389] ss:$2 sm:$0x3]
        %v7391 = vmax.f32 %v7385, %v7386
        %v7392 = vmax.f32 %v7388, %v7390
        %v7393 = vmax.f32 %v7391, %v7392
        %v7394 = vld [vmem:[%s6149] ss:$2 sm:$0x3]
        %v7395 = vld [vmem:[%s6151] ss:$2 sm:$0x3]
        %s7396 = scalar_lea.vmem [#allocation8], 12
        %v7397 = vld [vmem:[%s7396] ss:$2 sm:$0x3]
        %s7398 = scalar_lea.vmem [#allocation8], 13
        %v7399 = vld [vmem:[%s7398] ss:$2 sm:$0x3]
        %v7400 = vmax.f32 %v7394, %v7395
        %v7401 = vmax.f32 %v7397, %v7399
        %v7402 = vmax.f32 %v7400, %v7401
        %v7403 = vld [vmem:[%s8] sm:$0xf]
        %v7404 = vpack.c.bf16 %v7393, %v7393
        %v7405 = vld [vmem:[#allocation12] sm:$0xff]
        %v7406 = vld [vmem:[#allocation12 + $0x8] sm:$0xff]
        %v7407 = vld [vmem:[#allocation12 + $0x10] sm:$0xff]
        %v7408 = vld [vmem:[#allocation12 + $0x18] sm:$0xff]
        %v7409 = vld [vmem:[#allocation12 + $0x20] sm:$0xff]
        %v7410 = vld [vmem:[#allocation12 + $0x28] sm:$0xff]
        %v7411 = vld [vmem:[#allocation12 + $0x30] sm:$0xff]
        %v7412 = vld [vmem:[#allocation12 + $0x38] sm:$0xff]
        %v7413 = vld [vmem:[#allocation12 + $0x40] sm:$0xff]
        %v7414 = vld [vmem:[#allocation12 + $0x48] sm:$0xff]
        %v7415 = vld [vmem:[#allocation12 + $0x50] sm:$0xff]
        %v7416 = vld [vmem:[#allocation12 + $0x58] sm:$0xff]
        %v7417 = vld [vmem:[#allocation12 + $0x60] sm:$0xff]
        %v7418 = vld [vmem:[#allocation12 + $0x68] sm:$0xff]
        %v7419 = vld [vmem:[#allocation12 + $0x70] sm:$0xff]
        %v7420 = vld [vmem:[#allocation12 + $0x78] sm:$0xff]
        %v7421 = vld [vmem:[#allocation12 + $0x80] sm:$0xff]
        %v7422 = vld [vmem:[#allocation12 + $0x88] sm:$0xff]
        %v7423 = vld [vmem:[#allocation12 + $0x90] sm:$0xff]
        %v7424 = vld [vmem:[#allocation12 + $0x98] sm:$0xff]
        %v7425 = vld [vmem:[#allocation12 + $0xa0] sm:$0xff]
        %v7426 = vld [vmem:[#allocation12 + $0xa8] sm:$0xff]
        %v7427 = vld [vmem:[#allocation12 + $0xb0] sm:$0xff]
        %v7428 = vld [vmem:[#allocation12 + $0xb8] sm:$0xff]
        %v7429 = vld [vmem:[#allocation12 + $0xc0] sm:$0xff]
        %v7430 = vld [vmem:[#allocation12 + $0xc8] sm:$0xff]
        %v7431 = vld [vmem:[#allocation12 + $0xd0] sm:$0xff]
        %v7432 = vld [vmem:[#allocation12 + $0xd8] sm:$0xff]
        %v7433 = vld [vmem:[#allocation12 + $0xe0] sm:$0xff]
        %v7434 = vld [vmem:[#allocation12 + $0xe8] sm:$0xff]
        %v7435 = vld [vmem:[#allocation12 + $0xf0] sm:$0xff]
        %v7436 = vld [vmem:[#allocation12 + $0xf8] sm:$0xff]
        %v7469 = vunpack.c.l.b16 %v7405
        %v7470 = vunpack.c.h.b16 %v7405
        %v7471 = vunpack.c.l.b16 %v7406
        %v7472 = vunpack.c.h.b16 %v7406
        %v7473 = vunpack.c.l.b16 %v7407
        %v7474 = vunpack.c.h.b16 %v7407
        %v7475 = vunpack.c.l.b16 %v7408
        %v7476 = vunpack.c.h.b16 %v7408
        %v7477 = vunpack.c.l.b16 %v7409
        %v7478 = vunpack.c.h.b16 %v7409
        %v7479 = vunpack.c.l.b16 %v7410
        %v7480 = vunpack.c.h.b16 %v7410
        %v7481 = vunpack.c.l.b16 %v7411
        %v7482 = vunpack.c.h.b16 %v7411
        %v7483 = vunpack.c.l.b16 %v7412
        %v7484 = vunpack.c.h.b16 %v7412
        %v7485 = vunpack.c.l.b16 %v7413
        %v7486 = vunpack.c.h.b16 %v7413
        %v7487 = vunpack.c.l.b16 %v7414
        %v7488 = vunpack.c.h.b16 %v7414
        %v7489 = vunpack.c.l.b16 %v7415
        %v7490 = vunpack.c.h.b16 %v7415
        %v7491 = vunpack.c.l.b16 %v7416
        %v7492 = vunpack.c.h.b16 %v7416
        %v7493 = vunpack.c.l.b16 %v7417
        %v7494 = vunpack.c.h.b16 %v7417
        %v7495 = vunpack.c.l.b16 %v7418
        %v7496 = vunpack.c.h.b16 %v7418
        %v7497 = vunpack.c.l.b16 %v7419
        %v7498 = vunpack.c.h.b16 %v7419
        %v7499 = vunpack.c.l.b16 %v7420
        %v7500 = vunpack.c.h.b16 %v7420
        %v7501 = vunpack.c.l.b16 %v7421
        %v7502 = vunpack.c.h.b16 %v7421
        %v7503 = vunpack.c.l.b16 %v7422
        %v7504 = vunpack.c.h.b16 %v7422
        %v7505 = vunpack.c.l.b16 %v7423
        %v7506 = vunpack.c.h.b16 %v7423
        %v7507 = vunpack.c.l.b16 %v7424
        %v7508 = vunpack.c.h.b16 %v7424
        %v7509 = vunpack.c.l.b16 %v7425
        %v7510 = vunpack.c.h.b16 %v7425
        %v7511 = vunpack.c.l.b16 %v7426
        %v7512 = vunpack.c.h.b16 %v7426
        %v7513 = vunpack.c.l.b16 %v7427
        %v7514 = vunpack.c.h.b16 %v7427
        %v7515 = vunpack.c.l.b16 %v7428
        %v7516 = vunpack.c.h.b16 %v7428
        %v7517 = vunpack.c.l.b16 %v7429
        %v7518 = vunpack.c.h.b16 %v7429
        %v7519 = vunpack.c.l.b16 %v7430
        %v7520 = vunpack.c.h.b16 %v7430
        %v7521 = vunpack.c.l.b16 %v7431
        %v7522 = vunpack.c.h.b16 %v7431
        %v7523 = vunpack.c.l.b16 %v7432
        %v7524 = vunpack.c.h.b16 %v7432
        %v7525 = vunpack.c.l.b16 %v7433
        %v7526 = vunpack.c.h.b16 %v7433
        %v7527 = vunpack.c.l.b16 %v7434
        %v7528 = vunpack.c.h.b16 %v7434
        %v7529 = vunpack.c.l.b16 %v7435
        %v7530 = vunpack.c.h.b16 %v7435
        %v7531 = vunpack.c.l.b16 %v7436
        %v7532 = vunpack.c.h.b16 %v7436
        %v7533 = vpack.c.b16 %v7473, %v7469
        %v7534 = vpack.c.b16 %v7474, %v7470
        %v7535 = vpack.c.b16 %v7475, %v7471
        %v7536 = vpack.c.b16 %v7476, %v7472
        %v7537 = vpack.c.b16 %v7481, %v7477
        %v7538 = vpack.c.b16 %v7482, %v7478
        %v7539 = vpack.c.b16 %v7483, %v7479
        %v7540 = vpack.c.b16 %v7484, %v7480
        %v7541 = vpack.c.b16 %v7489, %v7485
        %v7542 = vpack.c.b16 %v7490, %v7486
        %v7543 = vpack.c.b16 %v7491, %v7487
        %v7544 = vpack.c.b16 %v7492, %v7488
        %v7545 = vpack.c.b16 %v7497, %v7493
        %v7546 = vpack.c.b16 %v7498, %v7494
        %v7547 = vpack.c.b16 %v7499, %v7495
        %v7548 = vpack.c.b16 %v7500, %v7496
        %v7549 = vpack.c.b16 %v7505, %v7501
        %v7550 = vpack.c.b16 %v7506, %v7502
        %v7551 = vpack.c.b16 %v7507, %v7503
        %v7552 = vpack.c.b16 %v7508, %v7504
        %v7553 = vpack.c.b16 %v7513, %v7509
        %v7554 = vpack.c.b16 %v7514, %v7510
        %v7555 = vpack.c.b16 %v7515, %v7511
        %v7556 = vpack.c.b16 %v7516, %v7512
        %v7557 = vpack.c.b16 %v7521, %v7517
        %v7558 = vpack.c.b16 %v7522, %v7518
        %v7559 = vpack.c.b16 %v7523, %v7519
        %v7560 = vpack.c.b16 %v7524, %v7520
        %v7561 = vpack.c.b16 %v7529, %v7525
        %v7562 = vpack.c.b16 %v7530, %v7526
        %v7563 = vpack.c.b16 %v7531, %v7527
        %v7564 = vpack.c.b16 %v7532, %v7528
        %7597 = vmatprep.subr.bf16.mxu0 %v7534
        %7598 = vmatpush1.bf16.msra.mxu0 %v7533
        %7599 = vmatprep.subr.bf16.mxu0 %v7538
        %7600 = vmatpush1.bf16.msra.mxu0 %v7537
        %7601 = vmatprep.subr.bf16.mxu0 %v7542
        %7602 = vmatpush1.bf16.msra.mxu0 %v7541
        %7603 = vmatprep.subr.bf16.mxu0 %v7546
        %7604 = vmatpush1.bf16.msra.mxu0 %v7545
        %7605 = vmatprep.subr.bf16.mxu0 %v7550
        %7606 = vmatpush1.bf16.msra.mxu0 %v7549
        %7607 = vmatprep.subr.bf16.mxu0 %v7554
        %7608 = vmatpush1.bf16.msra.mxu0 %v7553
        %7609 = vmatprep.subr.bf16.mxu0 %v7558
        %7610 = vmatpush1.bf16.msra.mxu0 %v7557
        %7611 = vmatprep.subr.bf16.mxu0 %v7562
        %7612 = vmatpush1.bf16.msra.mxu0 %v7561
        %7613 = vmatprep.subr.bf16.mxu0 0
        %7614 = vmatpush1.bf16.msra.mxu0 0
        %7615 = vmatprep.subr.bf16.mxu0 0
        %7616 = vmatpush1.bf16.msra.mxu0 0
        %7617 = vmatprep.subr.bf16.mxu0 0
        %7618 = vmatpush1.bf16.msra.mxu0 0
        %7619 = vmatprep.subr.bf16.mxu0 0
        %7620 = vmatpush1.bf16.msra.mxu0 0
        %7621 = vmatprep.subr.bf16.mxu0 0
        %7622 = vmatpush1.bf16.msra.mxu0 0
        %7623 = vmatprep.subr.bf16.mxu0 0
        %7624 = vmatpush1.bf16.msra.mxu0 0
        %7625 = vmatprep.subr.bf16.mxu0 0
        %7626 = vmatpush1.bf16.msra.mxu0 0
        %7627 = vmatprep.subr.bf16.mxu0 0
        %7628 = vmatpush1.bf16.msra.mxu0 0
        %7629 = vmatprep.mubr.bf16.mxu0 0
        %7630 = vmatmul.mubr.bf16.gmra.mrb[0].mxu0 %v7404
        %v7631 = vpop.f32.mrb[0].mxu0
        %v7632 = vadd.f32 0.0, %v7631
        %v7633 = vpop.f32.mrb[0].mxu0
        %v7634 = vadd.f32 0.0, %v7633
        %v7635 = vpop.f32.mrb[0].mxu0
        %v7636 = vpop.f32.mrb[0].mxu0
        %7637 = vdwg.mxu0
        %7638 = vmatprep.subr.bf16.mxu0 %v7536
        %7639 = vmatpush1.bf16.msra.mxu0 %v7535
        %7640 = vmatprep.subr.bf16.mxu0 %v7540
        %7641 = vmatpush1.bf16.msra.mxu0 %v7539
        %7642 = vmatprep.subr.bf16.mxu0 %v7544
        %7643 = vmatpush1.bf16.msra.mxu0 %v7543
        %7644 = vmatprep.subr.bf16.mxu0 %v7548
        %7645 = vmatpush1.bf16.msra.mxu0 %v7547
        %7646 = vmatprep.subr.bf16.mxu0 %v7552
        %7647 = vmatpush1.bf16.msra.mxu0 %v7551
        %7648 = vmatprep.subr.bf16.mxu0 %v7556
        %7649 = vmatpush1.bf16.msra.mxu0 %v7555
        %7650 = vmatprep.subr.bf16.mxu0 %v7560
        %7651 = vmatpush1.bf16.msra.mxu0 %v7559
        %7652 = vmatprep.subr.bf16.mxu0 %v7564
        %7653 = vmatpush1.bf16.msra.mxu0 %v7563
        %7654 = vmatprep.subr.bf16.mxu0 0
        %7655 = vmatpush1.bf16.msra.mxu0 0
        %7656 = vmatprep.subr.bf16.mxu0 0
        %7657 = vmatpush1.bf16.msra.mxu0 0
        %7658 = vmatprep.subr.bf16.mxu0 0
        %7659 = vmatpush1.bf16.msra.mxu0 0
        %7660 = vmatprep.subr.bf16.mxu0 0
        %7661 = vmatpush1.bf16.msra.mxu0 0
        %7662 = vmatprep.subr.bf16.mxu0 0
        %7663 = vmatpush1.bf16.msra.mxu0 0
        %7664 = vmatprep.subr.bf16.mxu0 0
        %7665 = vmatpush1.bf16.msra.mxu0 0
        %7666 = vmatprep.subr.bf16.mxu0 0
        %7667 = vmatpush1.bf16.msra.mxu0 0
        %7668 = vmatprep.subr.bf16.mxu0 0
        %7669 = vmatpush1.bf16.msra.mxu0 0
        %7670 = vmatprep.mubr.bf16.mxu0 0
        %7671 = vmatmul.mubr.bf16.gmra.mrb[0].mxu0 %v7404
        %v7672 = vpop.f32.mrb[0].mxu0
        %v7673 = vadd.f32 0.0, %v7672
        %v7674 = vpop.f32.mrb[0].mxu0
        %v7675 = vadd.f32 0.0, %v7674
        %v7676 = vpop.f32.mrb[0].mxu0
        %v7677 = vpop.f32.mrb[0].mxu0
        %7678 = vdwg.mxu0
        %v7683 = vcombine.low %v7632, %v7634
        %v7684 = vcombine.low %v7673, %v7675
        %v7686 = vunpack.c.l.s4 1966171168
        %v7687 = vunpack.c.0.s8 %v7686
        %v7688 = vlaneseq
        %v7689 = vshrl.u32 %v7688, 7
        %v7690 = vsub.s32 %v7687, %v7689
        %v7691 = vrot.slane %v7683, %v7690
        %v7693 = vunpack.c.l.s4 1966171168
        %v7694 = vunpack.c.0.s8 %v7693
        %v7695 = vlaneseq
        %v7696 = vshrl.u32 %v7695, 7
        %v7697 = vsub.s32 %v7694, %v7696
        %v7698 = vrot.slane %v7684, %v7697
        %v7699 = vcombine.low %v7691, %v7698
        %v7701 = vunpack.c.l.s4 1966171168
        %v7702 = vunpack.c.0.s8 %v7701
        %v7703 = vlaneseq
        %v7704 = vshrl.u32 %v7703, 7
        %v7705 = vsub.s32 %v7702, %v7704
        %v7706 = vrot.slane %v7699, %v7705
        %v7708 = vadd.f32 %v7403, %v7706
        %s7709 = scalar_lea.vmem [#allocation12], 256
        %v7710 = vld [vmem:[%s7709] sm:$0xff]
        %v7711 = vld [vmem:[%s7709 + $0x8] sm:$0xff]
        %v7712 = vld [vmem:[%s7709 + $0x10] sm:$0xff]
        %v7713 = vld [vmem:[%s7709 + $0x18] sm:$0xff]
        %v7714 = vld [vmem:[%s7709 + $0x20] sm:$0xff]
        %v7715 = vld [vmem:[%s7709 + $0x28] sm:$0xff]
        %v7716 = vld [vmem:[%s7709 + $0x30] sm:$0xff]
        %v7717 = vld [vmem:[%s7709 + $0x38] sm:$0xff]
        %v7718 = vld [vmem:[%s7709 + $0x40] sm:$0xff]
        %v7719 = vld [vmem:[%s7709 + $0x48] sm:$0xff]
        %v7720 = vld [vmem:[%s7709 + $0x50] sm:$0xff]
        %v7721 = vld [vmem:[%s7709 + $0x58] sm:$0xff]
        %v7722 = vld [vmem:[%s7709 + $0x60] sm:$0xff]
        %v7723 = vld [vmem:[%s7709 + $0x68] sm:$0xff]
        %v7724 = vld [vmem:[%s7709 + $0x70] sm:$0xff]
        %v7725 = vld [vmem:[%s7709 + $0x78] sm:$0xff]
        %v7726 = vld [vmem:[%s7709 + $0x80] sm:$0xff]
        %v7727 = vld [vmem:[%s7709 + $0x88] sm:$0xff]
        %v7728 = vld [vmem:[%s7709 + $0x90] sm:$0xff]
        %v7729 = vld [vmem:[%s7709 + $0x98] sm:$0xff]
        %v7730 = vld [vmem:[%s7709 + $0xa0] sm:$0xff]
        %v7731 = vld [vmem:[%s7709 + $0xa8] sm:$0xff]
        %v7732 = vld [vmem:[%s7709 + $0xb0] sm:$0xff]
        %v7733 = vld [vmem:[%s7709 + $0xb8] sm:$0xff]
        %v7734 = vld [vmem:[%s7709 + $0xc0] sm:$0xff]
        %v7735 = vld [vmem:[%s7709 + $0xc8] sm:$0xff]
        %v7736 = vld [vmem:[%s7709 + $0xd0] sm:$0xff]
        %v7737 = vld [vmem:[%s7709 + $0xd8] sm:$0xff]
        %v7738 = vld [vmem:[%s7709 + $0xe0] sm:$0xff]
        %v7739 = vld [vmem:[%s7709 + $0xe8] sm:$0xff]
        %v7740 = vld [vmem:[%s7709 + $0xf0] sm:$0xff]
        %v7741 = vld [vmem:[%s7709 + $0xf8] sm:$0xff]
        %v7743 = vshrl.u32 %v7404, 16
        %v7778 = vunpack.c.l.b16 %v7710
        %v7779 = vunpack.c.h.b16 %v7710
        %v7780 = vunpack.c.l.b16 %v7711
        %v7781 = vunpack.c.h.b16 %v7711
        %v7782 = vunpack.c.l.b16 %v7712
        %v7783 = vunpack.c.h.b16 %v7712
        %v7784 = vunpack.c.l.b16 %v7713
        %v7785 = vunpack.c.h.b16 %v7713
        %v7786 = vunpack.c.l.b16 %v7714
        %v7787 = vunpack.c.h.b16 %v7714
        %v7788 = vunpack.c.l.b16 %v7715
        %v7789 = vunpack.c.h.b16 %v7715
        %v7790 = vunpack.c.l.b16 %v7716
        %v7791 = vunpack.c.h.b16 %v7716
        %v7792 = vunpack.c.l.b16 %v7717
        %v7793 = vunpack.c.h.b16 %v7717
        %v7794 = vunpack.c.l.b16 %v7718
        %v7795 = vunpack.c.h.b16 %v7718
        %v7796 = vunpack.c.l.b16 %v7719
        %v7797 = vunpack.c.h.b16 %v7719
        %v7798 = vunpack.c.l.b16 %v7720
        %v7799 = vunpack.c.h.b16 %v7720
        %v7800 = vunpack.c.l.b16 %v7721
        %v7801 = vunpack.c.h.b16 %v7721
        %v7802 = vunpack.c.l.b16 %v7722
        %v7803 = vunpack.c.h.b16 %v7722
        %v7804 = vunpack.c.l.b16 %v7723
        %v7805 = vunpack.c.h.b16 %v7723
        %v7806 = vunpack.c.l.b16 %v7724
        %v7807 = vunpack.c.h.b16 %v7724
        %v7808 = vunpack.c.l.b16 %v7725
        %v7809 = vunpack.c.h.b16 %v7725
        %v7810 = vunpack.c.l.b16 %v7726
        %v7811 = vunpack.c.h.b16 %v7726
        %v7812 = vunpack.c.l.b16 %v7727
        %v7813 = vunpack.c.h.b16 %v7727
        %v7814 = vunpack.c.l.b16 %v7728
        %v7815 = vunpack.c.h.b16 %v7728
        %v7816 = vunpack.c.l.b16 %v7729
        %v7817 = vunpack.c.h.b16 %v7729
        %v7818 = vunpack.c.l.b16 %v7730
        %v7819 = vunpack.c.h.b16 %v7730
        %v7820 = vunpack.c.l.b16 %v7731
        %v7821 = vunpack.c.h.b16 %v7731
        %v7822 = vunpack.c.l.b16 %v7732
        %v7823 = vunpack.c.h.b16 %v7732
        %v7824 = vunpack.c.l.b16 %v7733
        %v7825 = vunpack.c.h.b16 %v7733
        %v7826 = vunpack.c.l.b16 %v7734
        %v7827 = vunpack.c.h.b16 %v7734
        %v7828 = vunpack.c.l.b16 %v7735
        %v7829 = vunpack.c.h.b16 %v7735
        %v7830 = vunpack.c.l.b16 %v7736
        %v7831 = vunpack.c.h.b16 %v7736
        %v7832 = vunpack.c.l.b16 %v7737
        %v7833 = vunpack.c.h.b16 %v7737
        %v7834 = vunpack.c.l.b16 %v7738
        %v7835 = vunpack.c.h.b16 %v7738
        %v7836 = vunpack.c.l.b16 %v7739
        %v7837 = vunpack.c.h.b16 %v7739
        %v7838 = vunpack.c.l.b16 %v7740
        %v7839 = vunpack.c.h.b16 %v7740
        %v7840 = vunpack.c.l.b16 %v7741
        %v7841 = vunpack.c.h.b16 %v7741
        %v7842 = vpack.c.b16 %v7782, %v7778
        %v7843 = vpack.c.b16 %v7783, %v7779
        %v7844 = vpack.c.b16 %v7784, %v7780
        %v7845 = vpack.c.b16 %v7785, %v7781
        %v7846 = vpack.c.b16 %v7790, %v7786
        %v7847 = vpack.c.b16 %v7791, %v7787
        %v7848 = vpack.c.b16 %v7792, %v7788
        %v7849 = vpack.c.b16 %v7793, %v7789
        %v7850 = vpack.c.b16 %v7798, %v7794
        %v7851 = vpack.c.b16 %v7799, %v7795
        %v7852 = vpack.c.b16 %v7800, %v7796
        %v7853 = vpack.c.b16 %v7801, %v7797
        %v7854 = vpack.c.b16 %v7806, %v7802
        %v7855 = vpack.c.b16 %v7807, %v7803
        %v7856 = vpack.c.b16 %v7808, %v7804
        %v7857 = vpack.c.b16 %v7809, %v7805
        %v7858 = vpack.c.b16 %v7814, %v7810
        %v7859 = vpack.c.b16 %v7815, %v7811
        %v7860 = vpack.c.b16 %v7816, %v7812
        %v7861 = vpack.c.b16 %v7817, %v7813
        %v7862 = vpack.c.b16 %v7822, %v7818
        %v7863 = vpack.c.b16 %v7823, %v7819
        %v7864 = vpack.c.b16 %v7824, %v7820
        %v7865 = vpack.c.b16 %v7825, %v7821
        %v7866 = vpack.c.b16 %v7830, %v7826
        %v7867 = vpack.c.b16 %v7831, %v7827
        %v7868 = vpack.c.b16 %v7832, %v7828
        %v7869 = vpack.c.b16 %v7833, %v7829
        %v7870 = vpack.c.b16 %v7838, %v7834
        %v7871 = vpack.c.b16 %v7839, %v7835
        %v7872 = vpack.c.b16 %v7840, %v7836
        %v7873 = vpack.c.b16 %v7841, %v7837
        %7906 = vmatprep.subr.bf16.mxu0 %v7843
        %7907 = vmatpush1.bf16.msra.mxu0 %v7842
        %7908 = vmatprep.subr.bf16.mxu0 %v7847
        %7909 = vmatpush1.bf16.msra.mxu0 %v7846
        %7910 = vmatprep.subr.bf16.mxu0 %v7851
        %7911 = vmatpush1.bf16.msra.mxu0 %v7850
        %7912 = vmatprep.subr.bf16.mxu0 %v7855
        %7913 = vmatpush1.bf16.msra.mxu0 %v7854
        %7914 = vmatprep.subr.bf16.mxu0 %v7859
        %7915 = vmatpush1.bf16.msra.mxu0 %v7858
        %7916 = vmatprep.subr.bf16.mxu0 %v7863
        %7917 = vmatpush1.bf16.msra.mxu0 %v7862
        %7918 = vmatprep.subr.bf16.mxu0 %v7867
        %7919 = vmatpush1.bf16.msra.mxu0 %v7866
        %7920 = vmatprep.subr.bf16.mxu0 %v7871
        %7921 = vmatpush1.bf16.msra.mxu0 %v7870
        %7922 = vmatprep.subr.bf16.mxu0 0
        %7923 = vmatpush1.bf16.msra.mxu0 0
        %7924 = vmatprep.subr.bf16.mxu0 0
        %7925 = vmatpush1.bf16.msra.mxu0 0
        %7926 = vmatprep.subr.bf16.mxu0 0
        %7927 = vmatpush1.bf16.msra.mxu0 0
        %7928 = vmatprep.subr.bf16.mxu0 0
        %7929 = vmatpush1.bf16.msra.mxu0 0
        %7930 = vmatprep.subr.bf16.mxu0 0
        %7931 = vmatpush1.bf16.msra.mxu0 0
        %7932 = vmatprep.subr.bf16.mxu0 0
        %7933 = vmatpush1.bf16.msra.mxu0 0
        %7934 = vmatprep.subr.bf16.mxu0 0
        %7935 = vmatpush1.bf16.msra.mxu0 0
        %7936 = vmatprep.subr.bf16.mxu0 0
        %7937 = vmatpush1.bf16.msra.mxu0 0
        %7938 = vmatprep.mubr.bf16.mxu0 0
        %7939 = vmatmul.mubr.bf16.gmra.mrb[0].mxu0 %v7743
        %v7940 = vpop.f32.mrb[0].mxu0
        %v7941 = vadd.f32 0.0, %v7940
        %v7942 = vpop.f32.mrb[0].mxu0
        %v7943 = vadd.f32 0.0, %v7942
        %v7944 = vpop.f32.mrb[0].mxu0
        %v7945 = vpop.f32.mrb[0].mxu0
        %7946 = vdwg.mxu0
        %7947 = vmatprep.subr.bf16.mxu0 %v7845
        %7948 = vmatpush1.bf16.msra.mxu0 %v7844
        %7949 = vmatprep.subr.bf16.mxu0 %v7849
        %7950 = vmatpush1.bf16.msra.mxu0 %v7848
        %7951 = vmatprep.subr.bf16.mxu0 %v7853
        %7952 = vmatpush1.bf16.msra.mxu0 %v7852
        %7953 = vmatprep.subr.bf16.mxu0 %v7857
        %7954 = vmatpush1.bf16.msra.mxu0 %v7856
        %7955 = vmatprep.subr.bf16.mxu0 %v7861
        %7956 = vmatpush1.bf16.msra.mxu0 %v7860
        %7957 = vmatprep.subr.bf16.mxu0 %v7865
        %7958 = vmatpush1.bf16.msra.mxu0 %v7864
        %7959 = vmatprep.subr.bf16.mxu0 %v7869
        %7960 = vmatpush1.bf16.msra.mxu0 %v7868
        %7961 = vmatprep.subr.bf16.mxu0 %v7873
        %7962 = vmatpush1.bf16.msra.mxu0 %v7872
        %7963 = vmatprep.subr.bf16.mxu0 0
        %7964 = vmatpush1.bf16.msra.mxu0 0
        %7965 = vmatprep.subr.bf16.mxu0 0
        %7966 = vmatpush1.bf16.msra.mxu0 0
        %7967 = vmatprep.subr.bf16.mxu0 0
        %7968 = vmatpush1.bf16.msra.mxu0 0
        %7969 = vmatprep.subr.bf16.mxu0 0
        %7970 = vmatpush1.bf16.msra.mxu0 0
        %7971 = vmatprep.subr.bf16.mxu0 0
        %7972 = vmatpush1.bf16.msra.mxu0 0
        %7973 = vmatprep.subr.bf16.mxu0 0
        %7974 = vmatpush1.bf16.msra.mxu0 0
        %7975 = vmatprep.subr.bf16.mxu0 0
        %7976 = vmatpush1.bf16.msra.mxu0 0
        %7977 = vmatprep.subr.bf16.mxu0 0
        %7978 = vmatpush1.bf16.msra.mxu0 0
        %7979 = vmatprep.mubr.bf16.mxu0 0
        %7980 = vmatmul.mubr.bf16.gmra.mrb[0].mxu0 %v7743
        %v7981 = vpop.f32.mrb[0].mxu0
        %v7982 = vadd.f32 0.0, %v7981
        %v7983 = vpop.f32.mrb[0].mxu0
        %v7984 = vadd.f32 0.0, %v7983
        %v7985 = vpop.f32.mrb[0].mxu0
        %v7986 = vpop.f32.mrb[0].mxu0
        %7987 = vdwg.mxu0
        %v7992 = vcombine.low %v7941, %v7943
        %v7993 = vcombine.low %v7982, %v7984
        %v7995 = vunpack.c.l.s4 1966171168
        %v7996 = vunpack.c.0.s8 %v7995
        %v7997 = vlaneseq
        %v7998 = vshrl.u32 %v7997, 7
        %v7999 = vsub.s32 %v7996, %v7998
        %v8000 = vrot.slane %v7992, %v7999
        %v8002 = vunpack.c.l.s4 1966171168
        %v8003 = vunpack.c.0.s8 %v8002
        %v8004 = vlaneseq
        %v8005 = vshrl.u32 %v8004, 7
        %v8006 = vsub.s32 %v8003, %v8005
        %v8007 = vrot.slane %v7993, %v8006
        %v8008 = vcombine.low %v8000, %v8007
        %v8010 = vunpack.c.l.s4 1966171168
        %v8011 = vunpack.c.0.s8 %v8010
        %v8012 = vlaneseq
        %v8013 = vshrl.u32 %v8012, 7
        %v8014 = vsub.s32 %v8011, %v8013
        %v8015 = vrot.slane %v8008, %v8014
        %v8017 = vadd.f32 %v7708, %v8015
        %v8018 = vpack.c.bf16 %v7402, %v7402
        %s8019 = scalar_lea.vmem [#allocation12], 512
        %v8020 = vld [vmem:[%s8019] sm:$0xff]
        %v8021 = vld [vmem:[%s8019 + $0x8] sm:$0xff]
        %v8022 = vld [vmem:[%s8019 + $0x10] sm:$0xff]
        %v8023 = vld [vmem:[%s8019 + $0x18] sm:$0xff]
        %v8024 = vld [vmem:[%s8019 + $0x20] sm:$0xff]
        %v8025 = vld [vmem:[%s8019 + $0x28] sm:$0xff]
        %v8026 = vld [vmem:[%s8019 + $0x30] sm:$0xff]
        %v8027 = vld [vmem:[%s8019 + $0x38] sm:$0xff]
        %v8028 = vld [vmem:[%s8019 + $0x40] sm:$0xff]
        %v8029 = vld [vmem:[%s8019 + $0x48] sm:$0xff]
        %v8030 = vld [vmem:[%s8019 + $0x50] sm:$0xff]
        %v8031 = vld [vmem:[%s8019 + $0x58] sm:$0xff]
        %v8032 = vld [vmem:[%s8019 + $0x60] sm:$0xff]
        %v8033 = vld [vmem:[%s8019 + $0x68] sm:$0xff]
        %v8034 = vld [vmem:[%s8019 + $0x70] sm:$0xff]
        %v8035 = vld [vmem:[%s8019 + $0x78] sm:$0xff]
        %v8036 = vld [vmem:[%s8019 + $0x80] sm:$0xff]
        %v8037 = vld [vmem:[%s8019 + $0x88] sm:$0xff]
        %v8038 = vld [vmem:[%s8019 + $0x90] sm:$0xff]
        %v8039 = vld [vmem:[%s8019 + $0x98] sm:$0xff]
        %v8040 = vld [vmem:[%s8019 + $0xa0] sm:$0xff]
        %v8041 = vld [vmem:[%s8019 + $0xa8] sm:$0xff]
        %v8042 = vld [vmem:[%s8019 + $0xb0] sm:$0xff]
        %v8043 = vld [vmem:[%s8019 + $0xb8] sm:$0xff]
        %v8044 = vld [vmem:[%s8019 + $0xc0] sm:$0xff]
        %v8045 = vld [vmem:[%s8019 + $0xc8] sm:$0xff]
        %v8046 = vld [vmem:[%s8019 + $0xd0] sm:$0xff]
        %v8047 = vld [vmem:[%s8019 + $0xd8] sm:$0xff]
        %v8048 = vld [vmem:[%s8019 + $0xe0] sm:$0xff]
        %v8049 = vld [vmem:[%s8019 + $0xe8] sm:$0xff]
        %v8050 = vld [vmem:[%s8019 + $0xf0] sm:$0xff]
        %v8051 = vld [vmem:[%s8019 + $0xf8] sm:$0xff]
        %v8084 = vunpack.c.l.b16 %v8020
        %v8085 = vunpack.c.h.b16 %v8020
        %v8086 = vunpack.c.l.b16 %v8021
        %v8087 = vunpack.c.h.b16 %v8021
        %v8088 = vunpack.c.l.b16 %v8022
        %v8089 = vunpack.c.h.b16 %v8022
        %v8090 = vunpack.c.l.b16 %v8023
        %v8091 = vunpack.c.h.b16 %v8023
        %v8092 = vunpack.c.l.b16 %v8024
        %v8093 = vunpack.c.h.b16 %v8024
        %v8094 = vunpack.c.l.b16 %v8025
        %v8095 = vunpack.c.h.b16 %v8025
        %v8096 = vunpack.c.l.b16 %v8026
        %v8097 = vunpack.c.h.b16 %v8026
        %v8098 = vunpack.c.l.b16 %v8027
        %v8099 = vunpack.c.h.b16 %v8027
        %v8100 = vunpack.c.l.b16 %v8028
        %v8101 = vunpack.c.h.b16 %v8028
        %v8102 = vunpack.c.l.b16 %v8029
        %v8103 = vunpack.c.h.b16 %v8029
        %v8104 = vunpack.c.l.b16 %v8030
        %v8105 = vunpack.c.h.b16 %v8030
        %v8106 = vunpack.c.l.b16 %v8031
        %v8107 = vunpack.c.h.b16 %v8031
        %v8108 = vunpack.c.l.b16 %v8032
        %v8109 = vunpack.c.h.b16 %v8032
        %v8110 = vunpack.c.l.b16 %v8033
        %v8111 = vunpack.c.h.b16 %v8033
        %v8112 = vunpack.c.l.b16 %v8034
        %v8113 = vunpack.c.h.b16 %v8034
        %v8114 = vunpack.c.l.b16 %v8035
        %v8115 = vunpack.c.h.b16 %v8035
        %v8116 = vunpack.c.l.b16 %v8036
        %v8117 = vunpack.c.h.b16 %v8036
        %v8118 = vunpack.c.l.b16 %v8037
        %v8119 = vunpack.c.h.b16 %v8037
        %v8120 = vunpack.c.l.b16 %v8038
        %v8121 = vunpack.c.h.b16 %v8038
        %v8122 = vunpack.c.l.b16 %v8039
        %v8123 = vunpack.c.h.b16 %v8039
        %v8124 = vunpack.c.l.b16 %v8040
        %v8125 = vunpack.c.h.b16 %v8040
        %v8126 = vunpack.c.l.b16 %v8041
        %v8127 = vunpack.c.h.b16 %v8041
        %v8128 = vunpack.c.l.b16 %v8042
        %v8129 = vunpack.c.h.b16 %v8042
        %v8130 = vunpack.c.l.b16 %v8043
        %v8131 = vunpack.c.h.b16 %v8043
        %v8132 = vunpack.c.l.b16 %v8044
        %v8133 = vunpack.c.h.b16 %v8044
        %v8134 = vunpack.c.l.b16 %v8045
        %v8135 = vunpack.c.h.b16 %v8045
        %v8136 = vunpack.c.l.b16 %v8046
        %v8137 = vunpack.c.h.b16 %v8046
        %v8138 = vunpack.c.l.b16 %v8047
        %v8139 = vunpack.c.h.b16 %v8047
        %v8140 = vunpack.c.l.b16 %v8048
        %v8141 = vunpack.c.h.b16 %v8048
        %v8142 = vunpack.c.l.b16 %v8049
        %v8143 = vunpack.c.h.b16 %v8049
        %v8144 = vunpack.c.l.b16 %v8050
        %v8145 = vunpack.c.h.b16 %v8050
        %v8146 = vunpack.c.l.b16 %v8051
        %v8147 = vunpack.c.h.b16 %v8051
        %v8148 = vpack.c.b16 %v8088, %v8084
        %v8149 = vpack.c.b16 %v8089, %v8085
        %v8150 = vpack.c.b16 %v8090, %v8086
        %v8151 = vpack.c.b16 %v8091, %v8087
        %v8152 = vpack.c.b16 %v8096, %v8092
        %v8153 = vpack.c.b16 %v8097, %v8093
        %v8154 = vpack.c.b16 %v8098, %v8094
        %v8155 = vpack.c.b16 %v8099, %v8095
        %v8156 = vpack.c.b16 %v8104, %v8100
        %v8157 = vpack.c.b16 %v8105, %v8101
        %v8158 = vpack.c.b16 %v8106, %v8102
        %v8159 = vpack.c.b16 %v8107, %v8103
        %v8160 = vpack.c.b16 %v8112, %v8108
        %v8161 = vpack.c.b16 %v8113, %v8109
        %v8162 = vpack.c.b16 %v8114, %v8110
        %v8163 = vpack.c.b16 %v8115, %v8111
        %v8164 = vpack.c.b16 %v8120, %v8116
        %v8165 = vpack.c.b16 %v8121, %v8117
        %v8166 = vpack.c.b16 %v8122, %v8118
        %v8167 = vpack.c.b16 %v8123, %v8119
        %v8168 = vpack.c.b16 %v8128, %v8124
        %v8169 = vpack.c.b16 %v8129, %v8125
        %v8170 = vpack.c.b16 %v8130, %v8126
        %v8171 = vpack.c.b16 %v8131, %v8127
        %v8172 = vpack.c.b16 %v8136, %v8132
        %v8173 = vpack.c.b16 %v8137, %v8133
        %v8174 = vpack.c.b16 %v8138, %v8134
        %v8175 = vpack.c.b16 %v8139, %v8135
        %v8176 = vpack.c.b16 %v8144, %v8140
        %v8177 = vpack.c.b16 %v8145, %v8141
        %v8178 = vpack.c.b16 %v8146, %v8142
        %v8179 = vpack.c.b16 %v8147, %v8143
        %8212 = vmatprep.subr.bf16.mxu0 %v8149
        %8213 = vmatpush1.bf16.msra.mxu0 %v8148
        %8214 = vmatprep.subr.bf16.mxu0 %v8153
        %8215 = vmatpush1.bf16.msra.mxu0 %v8152
        %8216 = vmatprep.subr.bf16.mxu0 %v8157
        %8217 = vmatpush1.bf16.msra.mxu0 %v8156
        %8218 = vmatprep.subr.bf16.mxu0 %v8161
        %8219 = vmatpush1.bf16.msra.mxu0 %v8160
        %8220 = vmatprep.subr.bf16.mxu0 %v8165
        %8221 = vmatpush1.bf16.msra.mxu0 %v8164
        %8222 = vmatprep.subr.bf16.mxu0 %v8169
        %8223 = vmatpush1.bf16.msra.mxu0 %v8168
        %8224 = vmatprep.subr.bf16.mxu0 %v8173
        %8225 = vmatpush1.bf16.msra.mxu0 %v8172
        %8226 = vmatprep.subr.bf16.mxu0 %v8177
        %8227 = vmatpush1.bf16.msra.mxu0 %v8176
        %8228 = vmatprep.subr.bf16.mxu0 0
        %8229 = vmatpush1.bf16.msra.mxu0 0
        %8230 = vmatprep.subr.bf16.mxu0 0
        %8231 = vmatpush1.bf16.msra.mxu0 0
        %8232 = vmatprep.subr.bf16.mxu0 0
        %8233 = vmatpush1.bf16.msra.mxu0 0
        %8234 = vmatprep.subr.bf16.mxu0 0
        %8235 = vmatpush1.bf16.msra.mxu0 0
        %8236 = vmatprep.subr.bf16.mxu0 0
        %8237 = vmatpush1.bf16.msra.mxu0 0
        %8238 = vmatprep.subr.bf16.mxu0 0
        %8239 = vmatpush1.bf16.msra.mxu0 0
        %8240 = vmatprep.subr.bf16.mxu0 0
        %8241 = vmatpush1.bf16.msra.mxu0 0
        %8242 = vmatprep.subr.bf16.mxu0 0
        %8243 = vmatpush1.bf16.msra.mxu0 0
        %8244 = vmatprep.mubr.bf16.mxu0 0
        %8245 = vmatmul.mubr.bf16.gmra.mrb[0].mxu0 %v8018
        %v8246 = vpop.f32.mrb[0].mxu0
        %v8247 = vadd.f32 0.0, %v8246
        %v8248 = vpop.f32.mrb[0].mxu0
        %v8249 = vadd.f32 0.0, %v8248
        %v8250 = vpop.f32.mrb[0].mxu0
        %v8251 = vpop.f32.mrb[0].mxu0
        %8252 = vdwg.mxu0
        %8253 = vmatprep.subr.bf16.mxu0 %v8151
        %8254 = vmatpush1.bf16.msra.mxu0 %v8150
        %8255 = vmatprep.subr.bf16.mxu0 %v8155
        %8256 = vmatpush1.bf16.msra.mxu0 %v8154
        %8257 = vmatprep.subr.bf16.mxu0 %v8159
        %8258 = vmatpush1.bf16.msra.mxu0 %v8158
        %8259 = vmatprep.subr.bf16.mxu0 %v8163
        %8260 = vmatpush1.bf16.msra.mxu0 %v8162
        %8261 = vmatprep.subr.bf16.mxu0 %v8167
        %8262 = vmatpush1.bf16.msra.mxu0 %v8166
        %8263 = vmatprep.subr.bf16.mxu0 %v8171
        %8264 = vmatpush1.bf16.msra.mxu0 %v8170
        %8265 = vmatprep.subr.bf16.mxu0 %v8175
        %8266 = vmatpush1.bf16.msra.mxu0 %v8174
        %8267 = vmatprep.subr.bf16.mxu0 %v8179
        %8268 = vmatpush1.bf16.msra.mxu0 %v8178
        %8269 = vmatprep.subr.bf16.mxu0 0
        %8270 = vmatpush1.bf16.msra.mxu0 0
        %8271 = vmatprep.subr.bf16.mxu0 0
        %8272 = vmatpush1.bf16.msra.mxu0 0
        %8273 = vmatprep.subr.bf16.mxu0 0
        %8274 = vmatpush1.bf16.msra.mxu0 0
        %8275 = vmatprep.subr.bf16.mxu0 0
        %8276 = vmatpush1.bf16.msra.mxu0 0
        %8277 = vmatprep.subr.bf16.mxu0 0
        %8278 = vmatpush1.bf16.msra.mxu0 0
        %8279 = vmatprep.subr.bf16.mxu0 0
        %8280 = vmatpush1.bf16.msra.mxu0 0
        %8281 = vmatprep.subr.bf16.mxu0 0
        %8282 = vmatpush1.bf16.msra.mxu0 0
        %8283 = vmatprep.subr.bf16.mxu0 0
        %8284 = vmatpush1.bf16.msra.mxu0 0
        %8285 = vmatprep.mubr.bf16.mxu0 0
        %8286 = vmatmul.mubr.bf16.gmra.mrb[0].mxu0 %v8018
        %v8287 = vpop.f32.mrb[0].mxu0
        %v8288 = vadd.f32 0.0, %v8287
        %v8289 = vpop.f32.mrb[0].mxu0
        %v8290 = vadd.f32 0.0, %v8289
        %v8291 = vpop.f32.mrb[0].mxu0
        %v8292 = vpop.f32.mrb[0].mxu0
        %8293 = vdwg.mxu0
        %v8298 = vcombine.low %v8247, %v8249
        %v8299 = vcombine.low %v8288, %v8290
        %v8301 = vunpack.c.l.s4 1966171168
        %v8302 = vunpack.c.0.s8 %v8301
        %v8303 = vlaneseq
        %v8304 = vshrl.u32 %v8303, 7
        %v8305 = vsub.s32 %v8302, %v8304
        %v8306 = vrot.slane %v8298, %v8305
        %v8308 = vunpack.c.l.s4 1966171168
        %v8309 = vunpack.c.0.s8 %v8308
        %v8310 = vlaneseq
        %v8311 = vshrl.u32 %v8310, 7
        %v8312 = vsub.s32 %v8309, %v8311
        %v8313 = vrot.slane %v8299, %v8312
        %v8314 = vcombine.low %v8306, %v8313
        %v8316 = vunpack.c.l.s4 1966171168
        %v8317 = vunpack.c.0.s8 %v8316
        %v8318 = vlaneseq
        %v8319 = vshrl.u32 %v8318, 7
        %v8320 = vsub.s32 %v8317, %v8319
        %v8321 = vrot.slane %v8314, %v8320
        %v8323 = vadd.f32 %v8017, %v8321
        %s8324 = scalar_lea.vmem [#allocation12], 768
        %v8325 = vld [vmem:[%s8324] sm:$0xff]
        %v8326 = vld [vmem:[%s8324 + $0x8] sm:$0xff]
        %v8327 = vld [vmem:[%s8324 + $0x10] sm:$0xff]
        %v8328 = vld [vmem:[%s8324 + $0x18] sm:$0xff]
        %v8329 = vld [vmem:[%s8324 + $0x20] sm:$0xff]
        %v8330 = vld [vmem:[%s8324 + $0x28] sm:$0xff]
        %v8331 = vld [vmem:[%s8324 + $0x30] sm:$0xff]
        %v8332 = vld [vmem:[%s8324 + $0x38] sm:$0xff]
        %v8333 = vld [vmem:[%s8324 + $0x40] sm:$0xff]
        %v8334 = vld [vmem:[%s8324 + $0x48] sm:$0xff]
        %v8335 = vld [vmem:[%s8324 + $0x50] sm:$0xff]
        %v8336 = vld [vmem:[%s8324 + $0x58] sm:$0xff]
        %v8337 = vld [vmem:[%s8324 + $0x60] sm:$0xff]
        %v8338 = vld [vmem:[%s8324 + $0x68] sm:$0xff]
        %v8339 = vld [vmem:[%s8324 + $0x70] sm:$0xff]
        %v8340 = vld [vmem:[%s8324 + $0x78] sm:$0xff]
        %v8341 = vld [vmem:[%s8324 + $0x80] sm:$0xff]
        %v8342 = vld [vmem:[%s8324 + $0x88] sm:$0xff]
        %v8343 = vld [vmem:[%s8324 + $0x90] sm:$0xff]
        %v8344 = vld [vmem:[%s8324 + $0x98] sm:$0xff]
        %v8345 = vld [vmem:[%s8324 + $0xa0] sm:$0xff]
        %v8346 = vld [vmem:[%s8324 + $0xa8] sm:$0xff]
        %v8347 = vld [vmem:[%s8324 + $0xb0] sm:$0xff]
        %v8348 = vld [vmem:[%s8324 + $0xb8] sm:$0xff]
        %v8349 = vld [vmem:[%s8324 + $0xc0] sm:$0xff]
        %v8350 = vld [vmem:[%s8324 + $0xc8] sm:$0xff]
        %v8351 = vld [vmem:[%s8324 + $0xd0] sm:$0xff]
        %v8352 = vld [vmem:[%s8324 + $0xd8] sm:$0xff]
        %v8353 = vld [vmem:[%s8324 + $0xe0] sm:$0xff]
        %v8354 = vld [vmem:[%s8324 + $0xe8] sm:$0xff]
        %v8355 = vld [vmem:[%s8324 + $0xf0] sm:$0xff]
        %v8356 = vld [vmem:[%s8324 + $0xf8] sm:$0xff]
        %v8358 = vshrl.u32 %v8018, 16
        %v8393 = vunpack.c.l.b16 %v8325
        %v8394 = vunpack.c.h.b16 %v8325
        %v8395 = vunpack.c.l.b16 %v8326
        %v8396 = vunpack.c.h.b16 %v8326
        %v8397 = vunpack.c.l.b16 %v8327
        %v8398 = vunpack.c.h.b16 %v8327
        %v8399 = vunpack.c.l.b16 %v8328
        %v8400 = vunpack.c.h.b16 %v8328
        %v8401 = vunpack.c.l.b16 %v8329
        %v8402 = vunpack.c.h.b16 %v8329
        %v8403 = vunpack.c.l.b16 %v8330
        %v8404 = vunpack.c.h.b16 %v8330
        %v8405 = vunpack.c.l.b16 %v8331
        %v8406 = vunpack.c.h.b16 %v8331
        %v8407 = vunpack.c.l.b16 %v8332
        %v8408 = vunpack.c.h.b16 %v8332
        %v8409 = vunpack.c.l.b16 %v8333
        %v8410 = vunpack.c.h.b16 %v8333
        %v8411 = vunpack.c.l.b16 %v8334
        %v8412 = vunpack.c.h.b16 %v8334
        %v8413 = vunpack.c.l.b16 %v8335
        %v8414 = vunpack.c.h.b16 %v8335
        %v8415 = vunpack.c.l.b16 %v8336
        %v8416 = vunpack.c.h.b16 %v8336
        %v8417 = vunpack.c.l.b16 %v8337
        %v8418 = vunpack.c.h.b16 %v8337
        %v8419 = vunpack.c.l.b16 %v8338
        %v8420 = vunpack.c.h.b16 %v8338
        %v8421 = vunpack.c.l.b16 %v8339
        %v8422 = vunpack.c.h.b16 %v8339
        %v8423 = vunpack.c.l.b16 %v8340
        %v8424 = vunpack.c.h.b16 %v8340
        %v8425 = vunpack.c.l.b16 %v8341
        %v8426 = vunpack.c.h.b16 %v8341
        %v8427 = vunpack.c.l.b16 %v8342
        %v8428 = vunpack.c.h.b16 %v8342
        %v8429 = vunpack.c.l.b16 %v8343
        %v8430 = vunpack.c.h.b16 %v8343
        %v8431 = vunpack.c.l.b16 %v8344
        %v8432 = vunpack.c.h.b16 %v8344
        %v8433 = vunpack.c.l.b16 %v8345
        %v8434 = vunpack.c.h.b16 %v8345
        %v8435 = vunpack.c.l.b16 %v8346
        %v8436 = vunpack.c.h.b16 %v8346
        %v8437 = vunpack.c.l.b16 %v8347
        %v8438 = vunpack.c.h.b16 %v8347
        %v8439 = vunpack.c.l.b16 %v8348
        %v8440 = vunpack.c.h.b16 %v8348
        %v8441 = vunpack.c.l.b16 %v8349
        %v8442 = vunpack.c.h.b16 %v8349
        %v8443 = vunpack.c.l.b16 %v8350
        %v8444 = vunpack.c.h.b16 %v8350
        %v8445 = vunpack.c.l.b16 %v8351
        %v8446 = vunpack.c.h.b16 %v8351
        %v8447 = vunpack.c.l.b16 %v8352
        %v8448 = vunpack.c.h.b16 %v8352
        %v8449 = vunpack.c.l.b16 %v8353
        %v8450 = vunpack.c.h.b16 %v8353
        %v8451 = vunpack.c.l.b16 %v8354
        %v8452 = vunpack.c.h.b16 %v8354
        %v8453 = vunpack.c.l.b16 %v8355
        %v8454 = vunpack.c.h.b16 %v8355
        %v8455 = vunpack.c.l.b16 %v8356
        %v8456 = vunpack.c.h.b16 %v8356
        %v8457 = vpack.c.b16 %v8397, %v8393
        %v8458 = vpack.c.b16 %v8398, %v8394
        %v8459 = vpack.c.b16 %v8399, %v8395
        %v8460 = vpack.c.b16 %v8400, %v8396
        %v8461 = vpack.c.b16 %v8405, %v8401
        %v8462 = vpack.c.b16 %v8406, %v8402
        %v8463 = vpack.c.b16 %v8407, %v8403
        %v8464 = vpack.c.b16 %v8408, %v8404
        %v8465 = vpack.c.b16 %v8413, %v8409
        %v8466 = vpack.c.b16 %v8414, %v8410
        %v8467 = vpack.c.b16 %v8415, %v8411
        %v8468 = vpack.c.b16 %v8416, %v8412
        %v8469 = vpack.c.b16 %v8421, %v8417
        %v8470 = vpack.c.b16 %v8422, %v8418
        %v8471 = vpack.c.b16 %v8423, %v8419
        %v8472 = vpack.c.b16 %v8424, %v8420
        %v8473 = vpack.c.b16 %v8429, %v8425
        %v8474 = vpack.c.b16 %v8430, %v8426
        %v8475 = vpack.c.b16 %v8431, %v8427
        %v8476 = vpack.c.b16 %v8432, %v8428
        %v8477 = vpack.c.b16 %v8437, %v8433
        %v8478 = vpack.c.b16 %v8438, %v8434
        %v8479 = vpack.c.b16 %v8439, %v8435
        %v8480 = vpack.c.b16 %v8440, %v8436
        %v8481 = vpack.c.b16 %v8445, %v8441
        %v8482 = vpack.c.b16 %v8446, %v8442
        %v8483 = vpack.c.b16 %v8447, %v8443
        %v8484 = vpack.c.b16 %v8448, %v8444
        %v8485 = vpack.c.b16 %v8453, %v8449
        %v8486 = vpack.c.b16 %v8454, %v8450
        %v8487 = vpack.c.b16 %v8455, %v8451
        %v8488 = vpack.c.b16 %v8456, %v8452
        %8521 = vmatprep.subr.bf16.mxu0 %v8458
        %8522 = vmatpush1.bf16.msra.mxu0 %v8457
        %8523 = vmatprep.subr.bf16.mxu0 %v8462
        %8524 = vmatpush1.bf16.msra.mxu0 %v8461
        %8525 = vmatprep.subr.bf16.mxu0 %v8466
        %8526 = vmatpush1.bf16.msra.mxu0 %v8465
        %8527 = vmatprep.subr.bf16.mxu0 %v8470
        %8528 = vmatpush1.bf16.msra.mxu0 %v8469
        %8529 = vmatprep.subr.bf16.mxu0 %v8474
        %8530 = vmatpush1.bf16.msra.mxu0 %v8473
        %8531 = vmatprep.subr.bf16.mxu0 %v8478
        %8532 = vmatpush1.bf16.msra.mxu0 %v8477
        %8533 = vmatprep.subr.bf16.mxu0 %v8482
        %8534 = vmatpush1.bf16.msra.mxu0 %v8481
        %8535 = vmatprep.subr.bf16.mxu0 %v8486
        %8536 = vmatpush1.bf16.msra.mxu0 %v8485
        %8537 = vmatprep.subr.bf16.mxu0 0
        %8538 = vmatpush1.bf16.msra.mxu0 0
        %8539 = vmatprep.subr.bf16.mxu0 0
        %8540 = vmatpush1.bf16.msra.mxu0 0
        %8541 = vmatprep.subr.bf16.mxu0 0
        %8542 = vmatpush1.bf16.msra.mxu0 0
        %8543 = vmatprep.subr.bf16.mxu0 0
        %8544 = vmatpush1.bf16.msra.mxu0 0
        %8545 = vmatprep.subr.bf16.mxu0 0
        %8546 = vmatpush1.bf16.msra.mxu0 0
        %8547 = vmatprep.subr.bf16.mxu0 0
        %8548 = vmatpush1.bf16.msra.mxu0 0
        %8549 = vmatprep.subr.bf16.mxu0 0
        %8550 = vmatpush1.bf16.msra.mxu0 0
        %8551 = vmatprep.subr.bf16.mxu0 0
        %8552 = vmatpush1.bf16.msra.mxu0 0
        %8553 = vmatprep.mubr.bf16.mxu0 0
        %8554 = vmatmul.mubr.bf16.gmra.mrb[0].mxu0 %v8358
        %v8555 = vpop.f32.mrb[0].mxu0
        %v8556 = vadd.f32 0.0, %v8555
        %v8557 = vpop.f32.mrb[0].mxu0
        %v8558 = vadd.f32 0.0, %v8557
        %v8559 = vpop.f32.mrb[0].mxu0
        %v8560 = vpop.f32.mrb[0].mxu0
        %8561 = vdwg.mxu0
        %8562 = vmatprep.subr.bf16.mxu0 %v8460
        %8563 = vmatpush1.bf16.msra.mxu0 %v8459
        %8564 = vmatprep.subr.bf16.mxu0 %v8464
        %8565 = vmatpush1.bf16.msra.mxu0 %v8463
        %8566 = vmatprep.subr.bf16.mxu0 %v8468
        %8567 = vmatpush1.bf16.msra.mxu0 %v8467
        %8568 = vmatprep.subr.bf16.mxu0 %v8472
        %8569 = vmatpush1.bf16.msra.mxu0 %v8471
        %8570 = vmatprep.subr.bf16.mxu0 %v8476
        %8571 = vmatpush1.bf16.msra.mxu0 %v8475
        %8572 = vmatprep.subr.bf16.mxu0 %v8480
        %8573 = vmatpush1.bf16.msra.mxu0 %v8479
        %8574 = vmatprep.subr.bf16.mxu0 %v8484
        %8575 = vmatpush1.bf16.msra.mxu0 %v8483
        %8576 = vmatprep.subr.bf16.mxu0 %v8488
        %8577 = vmatpush1.bf16.msra.mxu0 %v8487
        %8578 = vmatprep.subr.bf16.mxu0 0
        %8579 = vmatpush1.bf16.msra.mxu0 0
        %8580 = vmatprep.subr.bf16.mxu0 0
        %8581 = vmatpush1.bf16.msra.mxu0 0
        %8582 = vmatprep.subr.bf16.mxu0 0
        %8583 = vmatpush1.bf16.msra.mxu0 0
        %8584 = vmatprep.subr.bf16.mxu0 0
        %8585 = vmatpush1.bf16.msra.mxu0 0
        %8586 = vmatprep.subr.bf16.mxu0 0
        %8587 = vmatpush1.bf16.msra.mxu0 0
        %8588 = vmatprep.subr.bf16.mxu0 0
        %8589 = vmatpush1.bf16.msra.mxu0 0
        %8590 = vmatprep.subr.bf16.mxu0 0
        %8591 = vmatpush1.bf16.msra.mxu0 0
        %8592 = vmatprep.subr.bf16.mxu0 0
        %8593 = vmatpush1.bf16.msra.mxu0 0
        %8594 = vmatprep.mubr.bf16.mxu0 0
        %8595 = vmatmul.mubr.bf16.gmra.mrb[0].mxu0 %v8358
        %v8596 = vpop.f32.mrb[0].mxu0
        %v8597 = vadd.f32 0.0, %v8596
        %v8598 = vpop.f32.mrb[0].mxu0
        %v8599 = vadd.f32 0.0, %v8598
        %v8600 = vpop.f32.mrb[0].mxu0
        %v8601 = vpop.f32.mrb[0].mxu0
        %8602 = vdwg.mxu0
        %v8607 = vcombine.low %v8556, %v8558
        %v8608 = vcombine.low %v8597, %v8599
        %v8610 = vunpack.c.l.s4 1966171168
        %v8611 = vunpack.c.0.s8 %v8610
        %v8612 = vlaneseq
        %v8613 = vshrl.u32 %v8612, 7
        %v8614 = vsub.s32 %v8611, %v8613
        %v8615 = vrot.slane %v8607, %v8614
        %v8617 = vunpack.c.l.s4 1966171168
        %v8618 = vunpack.c.0.s8 %v8617
        %v8619 = vlaneseq
        %v8620 = vshrl.u32 %v8619, 7
        %v8621 = vsub.s32 %v8618, %v8620
        %v8622 = vrot.slane %v8608, %v8621
        %v8623 = vcombine.low %v8615, %v8622
        %v8625 = vunpack.c.l.s4 1966171168
        %v8626 = vunpack.c.0.s8 %v8625
        %v8627 = vlaneseq
        %v8628 = vshrl.u32 %v8627, 7
        %v8629 = vsub.s32 %v8626, %v8628
        %v8630 = vrot.slane %v8623, %v8629
        %v8632 = vadd.f32 %v8323, %v8630
        %v8633 = vmax.f32 %v8632, 0.0
        %v8635 = vlaneseq
        %v8636 = vshrl.u32 %v8635, 7
        %v8637 = vsub.s32 0, %v8636
        %v8638 = vrot.slane %v8633, %v8637
        %v8639 = vlaneseq
        %v8640 = vshrl.u32 %v8639, 7
        %v8641 = vsub.s32 1, %v8640
        %v8642 = vrot.slane %v8633, %v8641
        %v8643 = vlaneseq
        %v8644 = vshrl.u32 %v8643, 7
        %v8645 = vsub.s32 2, %v8644
        %v8646 = vrot.slane %v8633, %v8645
        %v8647 = vlaneseq
        %v8648 = vshrl.u32 %v8647, 7
        %v8649 = vsub.s32 3, %v8648
        %v8650 = vrot.slane %v8633, %v8649
        %v8655 = vpack.c.bf16 %v8638, %v8638
        %v8656 = vpack.c.bf16 %v8642, %v8642
        %v8657 = vpack.c.bf16 %v8646, %v8646
        %v8658 = vpack.c.bf16 %v8650, %v8650
        %v8659 = vld [vmem:[#allocation14] sm:$0xf]
        %v8660 = vld [vmem:[#allocation14 + $0x4] sm:$0xf]
        %v8661 = vld [vmem:[#allocation14 + $0x8] sm:$0xf]
        %v8662 = vld [vmem:[#allocation14 + $0xc] sm:$0xf]
        %v8663 = vld [vmem:[#allocation14 + $0x10] sm:$0xf]
        %v8664 = vld [vmem:[#allocation14 + $0x14] sm:$0xf]
        %v8665 = vld [vmem:[#allocation14 + $0x18] sm:$0xf]
        %v8666 = vld [vmem:[#allocation14 + $0x1c] sm:$0xf]
        %v8667 = vld [vmem:[#allocation14 + $0x20] sm:$0xf]
        %v8668 = vld [vmem:[#allocation14 + $0x24] sm:$0xf]
        %v8669 = vld [vmem:[#allocation14 + $0x28] sm:$0xf]
        %v8670 = vld [vmem:[#allocation14 + $0x2c] sm:$0xf]
        %v8671 = vld [vmem:[#allocation14 + $0x30] sm:$0xf]
        %v8672 = vld [vmem:[#allocation14 + $0x34] sm:$0xf]
        %v8673 = vld [vmem:[#allocation14 + $0x38] sm:$0xf]
        %v8674 = vld [vmem:[#allocation14 + $0x3c] sm:$0xf]
        %v8675 = vld [vmem:[#allocation14 + $0x40] sm:$0xf]
        %v8676 = vld [vmem:[#allocation14 + $0x44] sm:$0xf]
        %v8677 = vld [vmem:[#allocation14 + $0x48] sm:$0xf]
        %v8678 = vld [vmem:[#allocation14 + $0x4c] sm:$0xf]
        %v8679 = vld [vmem:[#allocation14 + $0x50] sm:$0xf]
        %v8680 = vld [vmem:[#allocation14 + $0x54] sm:$0xf]
        %v8681 = vld [vmem:[#allocation14 + $0x58] sm:$0xf]
        %v8682 = vld [vmem:[#allocation14 + $0x5c] sm:$0xf]
        %v8683 = vld [vmem:[#allocation14 + $0x60] sm:$0xf]
        %v8684 = vld [vmem:[#allocation14 + $0x64] sm:$0xf]
        %v8685 = vld [vmem:[#allocation14 + $0x68] sm:$0xf]
        %v8686 = vld [vmem:[#allocation14 + $0x6c] sm:$0xf]
        %v8687 = vld [vmem:[#allocation14 + $0x70] sm:$0xf]
        %v8688 = vld [vmem:[#allocation14 + $0x74] sm:$0xf]
        %v8689 = vld [vmem:[#allocation14 + $0x78] sm:$0xf]
        %v8690 = vld [vmem:[#allocation14 + $0x7c] sm:$0xf]
        %v8691 = vld [vmem:[#allocation14 + $0x80] sm:$0xf]
        %v8692 = vld [vmem:[#allocation14 + $0x84] sm:$0xf]
        %v8693 = vld [vmem:[#allocation14 + $0x88] sm:$0xf]
        %v8694 = vld [vmem:[#allocation14 + $0x8c] sm:$0xf]
        %v8695 = vld [vmem:[#allocation14 + $0x90] sm:$0xf]
        %v8696 = vld [vmem:[#allocation14 + $0x94] sm:$0xf]
        %v8697 = vld [vmem:[#allocation14 + $0x98] sm:$0xf]
        %v8698 = vld [vmem:[#allocation14 + $0x9c] sm:$0xf]
        %v8699 = vld [vmem:[#allocation14 + $0xa0] sm:$0xf]
        %v8700 = vld [vmem:[#allocation14 + $0xa4] sm:$0xf]
        %v8701 = vld [vmem:[#allocation14 + $0xa8] sm:$0xf]
        %v8702 = vld [vmem:[#allocation14 + $0xac] sm:$0xf]
        %v8703 = vld [vmem:[#allocation14 + $0xb0] sm:$0xf]
        %v8704 = vld [vmem:[#allocation14 + $0xb4] sm:$0xf]
        %v8705 = vld [vmem:[#allocation14 + $0xb8] sm:$0xf]
        %v8706 = vld [vmem:[#allocation14 + $0xbc] sm:$0xf]
        %v8707 = vld [vmem:[#allocation14 + $0xc0] sm:$0xf]
        %v8708 = vld [vmem:[#allocation14 + $0xc4] sm:$0xf]
        %v8709 = vld [vmem:[#allocation14 + $0xc8] sm:$0xf]
        %v8710 = vld [vmem:[#allocation14 + $0xcc] sm:$0xf]
        %v8711 = vld [vmem:[#allocation14 + $0xd0] sm:$0xf]
        %v8712 = vld [vmem:[#allocation14 + $0xd4] sm:$0xf]
        %v8713 = vld [vmem:[#allocation14 + $0xd8] sm:$0xf]
        %v8714 = vld [vmem:[#allocation14 + $0xdc] sm:$0xf]
        %v8715 = vld [vmem:[#allocation14 + $0xe0] sm:$0xf]
        %v8716 = vld [vmem:[#allocation14 + $0xe4] sm:$0xf]
        %v8717 = vld [vmem:[#allocation14 + $0xe8] sm:$0xf]
        %v8718 = vld [vmem:[#allocation14 + $0xec] sm:$0xf]
        %v8719 = vld [vmem:[#allocation14 + $0xf0] sm:$0xf]
        %v8720 = vld [vmem:[#allocation14 + $0xf4] sm:$0xf]
        %v8721 = vld [vmem:[#allocation14 + $0xf8] sm:$0xf]
        %v8722 = vld [vmem:[#allocation14 + $0xfc] sm:$0xf]
        %v8723 = vld [vmem:[%s10] sm:$0x1]
        %v8788 = vunpack.c.l.b16 %v8659
        %v8789 = vunpack.c.l.b16 %v8660
        %v8790 = vunpack.c.l.b16 %v8661
        %v8791 = vunpack.c.l.b16 %v8662
        %v8792 = vunpack.c.l.b16 %v8663
        %v8793 = vunpack.c.l.b16 %v8664
        %v8794 = vunpack.c.l.b16 %v8665
        %v8795 = vunpack.c.l.b16 %v8666
        %v8796 = vunpack.c.l.b16 %v8667
        %v8797 = vunpack.c.l.b16 %v8668
        %v8798 = vunpack.c.l.b16 %v8669
        %v8799 = vunpack.c.l.b16 %v8670
        %v8800 = vunpack.c.l.b16 %v8671
        %v8801 = vunpack.c.l.b16 %v8672
        %v8802 = vunpack.c.l.b16 %v8673
        %v8803 = vunpack.c.l.b16 %v8674
        %v8804 = vunpack.c.l.b16 %v8675
        %v8805 = vunpack.c.l.b16 %v8676
        %v8806 = vunpack.c.l.b16 %v8677
        %v8807 = vunpack.c.l.b16 %v8678
        %v8808 = vunpack.c.l.b16 %v8679
        %v8809 = vunpack.c.l.b16 %v8680
        %v8810 = vunpack.c.l.b16 %v8681
        %v8811 = vunpack.c.l.b16 %v8682
        %v8812 = vunpack.c.l.b16 %v8683
        %v8813 = vunpack.c.l.b16 %v8684
        %v8814 = vunpack.c.l.b16 %v8685
        %v8815 = vunpack.c.l.b16 %v8686
        %v8816 = vunpack.c.l.b16 %v8687
        %v8817 = vunpack.c.l.b16 %v8688
        %v8818 = vunpack.c.l.b16 %v8689
        %v8819 = vunpack.c.l.b16 %v8690
        %v8820 = vunpack.c.l.b16 %v8691
        %v8821 = vunpack.c.l.b16 %v8692
        %v8822 = vunpack.c.l.b16 %v8693
        %v8823 = vunpack.c.l.b16 %v8694
        %v8824 = vunpack.c.l.b16 %v8695
        %v8825 = vunpack.c.l.b16 %v8696
        %v8826 = vunpack.c.l.b16 %v8697
        %v8827 = vunpack.c.l.b16 %v8698
        %v8828 = vunpack.c.l.b16 %v8699
        %v8829 = vunpack.c.l.b16 %v8700
        %v8830 = vunpack.c.l.b16 %v8701
        %v8831 = vunpack.c.l.b16 %v8702
        %v8832 = vunpack.c.l.b16 %v8703
        %v8833 = vunpack.c.l.b16 %v8704
        %v8834 = vunpack.c.l.b16 %v8705
        %v8835 = vunpack.c.l.b16 %v8706
        %v8836 = vunpack.c.l.b16 %v8707
        %v8837 = vunpack.c.l.b16 %v8708
        %v8838 = vunpack.c.l.b16 %v8709
        %v8839 = vunpack.c.l.b16 %v8710
        %v8840 = vunpack.c.l.b16 %v8711
        %v8841 = vunpack.c.l.b16 %v8712
        %v8842 = vunpack.c.l.b16 %v8713
        %v8843 = vunpack.c.l.b16 %v8714
        %v8844 = vunpack.c.l.b16 %v8715
        %v8845 = vunpack.c.l.b16 %v8716
        %v8846 = vunpack.c.l.b16 %v8717
        %v8847 = vunpack.c.l.b16 %v8718
        %v8848 = vunpack.c.l.b16 %v8719
        %v8849 = vunpack.c.l.b16 %v8720
        %v8850 = vunpack.c.l.b16 %v8721
        %v8851 = vunpack.c.l.b16 %v8722
        %v8852 = vpack.c.b16 %v8789, %v8788
        %v8853 = vpack.c.b16 %v8791, %v8790
        %v8854 = vpack.c.b16 %v8793, %v8792
        %v8855 = vpack.c.b16 %v8795, %v8794
        %v8856 = vpack.c.b16 %v8797, %v8796
        %v8857 = vpack.c.b16 %v8799, %v8798
        %v8858 = vpack.c.b16 %v8801, %v8800
        %v8859 = vpack.c.b16 %v8803, %v8802
        %v8860 = vpack.c.b16 %v8805, %v8804
        %v8861 = vpack.c.b16 %v8807, %v8806
        %v8862 = vpack.c.b16 %v8809, %v8808
        %v8863 = vpack.c.b16 %v8811, %v8810
        %v8864 = vpack.c.b16 %v8813, %v8812
        %v8865 = vpack.c.b16 %v8815, %v8814
        %v8866 = vpack.c.b16 %v8817, %v8816
        %v8867 = vpack.c.b16 %v8819, %v8818
        %v8868 = vpack.c.b16 %v8821, %v8820
        %v8869 = vpack.c.b16 %v8823, %v8822
        %v8870 = vpack.c.b16 %v8825, %v8824
        %v8871 = vpack.c.b16 %v8827, %v8826
        %v8872 = vpack.c.b16 %v8829, %v8828
        %v8873 = vpack.c.b16 %v8831, %v8830
        %v8874 = vpack.c.b16 %v8833, %v8832
        %v8875 = vpack.c.b16 %v8835, %v8834
        %v8876 = vpack.c.b16 %v8837, %v8836
        %v8877 = vpack.c.b16 %v8839, %v8838
        %v8878 = vpack.c.b16 %v8841, %v8840
        %v8879 = vpack.c.b16 %v8843, %v8842
        %v8880 = vpack.c.b16 %v8845, %v8844
        %v8881 = vpack.c.b16 %v8847, %v8846
        %v8882 = vpack.c.b16 %v8849, %v8848
        %v8883 = vpack.c.b16 %v8851, %v8850
        %8916 = vmatprep.subr.bf16.mxu0 0
        %8917 = vmatpush1.bf16.msra.mxu0 %v8852
        %8918 = vmatprep.subr.bf16.mxu0 0
        %8919 = vmatpush1.bf16.msra.mxu0 %v8853
        %8920 = vmatprep.subr.bf16.mxu0 0
        %8921 = vmatpush1.bf16.msra.mxu0 %v8854
        %8922 = vmatprep.subr.bf16.mxu0 0
        %8923 = vmatpush1.bf16.msra.mxu0 %v8855
        %8924 = vmatprep.subr.bf16.mxu0 0
        %8925 = vmatpush1.bf16.msra.mxu0 %v8856
        %8926 = vmatprep.subr.bf16.mxu0 0
        %8927 = vmatpush1.bf16.msra.mxu0 %v8857
        %8928 = vmatprep.subr.bf16.mxu0 0
        %8929 = vmatpush1.bf16.msra.mxu0 %v8858
        %8930 = vmatprep.subr.bf16.mxu0 0
        %8931 = vmatpush1.bf16.msra.mxu0 %v8859
        %8932 = vmatprep.subr.bf16.mxu0 0
        %8933 = vmatpush1.bf16.msra.mxu0 %v8860
        %8934 = vmatprep.subr.bf16.mxu0 0
        %8935 = vmatpush1.bf16.msra.mxu0 %v8861
        %8936 = vmatprep.subr.bf16.mxu0 0
        %8937 = vmatpush1.bf16.msra.mxu0 %v8862
        %8938 = vmatprep.subr.bf16.mxu0 0
        %8939 = vmatpush1.bf16.msra.mxu0 %v8863
        %8940 = vmatprep.subr.bf16.mxu0 0
        %8941 = vmatpush1.bf16.msra.mxu0 %v8864
        %8942 = vmatprep.subr.bf16.mxu0 0
        %8943 = vmatpush1.bf16.msra.mxu0 %v8865
        %8944 = vmatprep.subr.bf16.mxu0 0
        %8945 = vmatpush1.bf16.msra.mxu0 %v8866
        %8946 = vmatprep.subr.bf16.mxu0 0
        %8947 = vmatpush1.bf16.msra.mxu0 %v8867
        %8948 = vmatprep.mubr.bf16.mxu0 %v8656
        %8949 = vmatmul.mubr.bf16.gmra.mrb[0].mxu0 %v8655
        %v8950 = vpop.f32.mrb[0].mxu0
        %v8951 = vadd.f32 %v8723, %v8950
        %v8952 = vpop.f32.mrb[0].mxu0
        %v8953 = vpop.f32.mrb[0].mxu0
        %v8954 = vpop.f32.mrb[0].mxu0
        %8955 = vdwg.mxu0
        %8956 = vmatprep.subr.bf16.mxu0 0
        %8957 = vmatpush1.bf16.msra.mxu0 %v8868
        %8958 = vmatprep.subr.bf16.mxu0 0
        %8959 = vmatpush1.bf16.msra.mxu0 %v8869
        %8960 = vmatprep.subr.bf16.mxu0 0
        %8961 = vmatpush1.bf16.msra.mxu0 %v8870
        %8962 = vmatprep.subr.bf16.mxu0 0
        %8963 = vmatpush1.bf16.msra.mxu0 %v8871
        %8964 = vmatprep.subr.bf16.mxu0 0
        %8965 = vmatpush1.bf16.msra.mxu0 %v8872
        %8966 = vmatprep.subr.bf16.mxu0 0
        %8967 = vmatpush1.bf16.msra.mxu0 %v8873
        %8968 = vmatprep.subr.bf16.mxu0 0
        %8969 = vmatpush1.bf16.msra.mxu0 %v8874
        %8970 = vmatprep.subr.bf16.mxu0 0
        %8971 = vmatpush1.bf16.msra.mxu0 %v8875
        %8972 = vmatprep.subr.bf16.mxu0 0
        %8973 = vmatpush1.bf16.msra.mxu0 %v8876
        %8974 = vmatprep.subr.bf16.mxu0 0
        %8975 = vmatpush1.bf16.msra.mxu0 %v8877
        %8976 = vmatprep.subr.bf16.mxu0 0
        %8977 = vmatpush1.bf16.msra.mxu0 %v8878
        %8978 = vmatprep.subr.bf16.mxu0 0
        %8979 = vmatpush1.bf16.msra.mxu0 %v8879
        %8980 = vmatprep.subr.bf16.mxu0 0
        %8981 = vmatpush1.bf16.msra.mxu0 %v8880
        %8982 = vmatprep.subr.bf16.mxu0 0
        %8983 = vmatpush1.bf16.msra.mxu0 %v8881
        %8984 = vmatprep.subr.bf16.mxu0 0
        %8985 = vmatpush1.bf16.msra.mxu0 %v8882
        %8986 = vmatprep.subr.bf16.mxu0 0
        %8987 = vmatpush1.bf16.msra.mxu0 %v8883
        %8988 = vmatprep.mubr.bf16.mxu0 %v8658
        %8989 = vmatmul.mubr.bf16.gmra.mrb[0].mxu0 %v8657
        %v8990 = vpop.f32.mrb[0].mxu0
        %v8991 = vadd.f32 %v8951, %v8990
        %v8992 = vpop.f32.mrb[0].mxu0
        %v8993 = vpop.f32.mrb[0].mxu0
        %v8994 = vpop.f32.mrb[0].mxu0
        %8995 = vdwg.mxu0
        %8996 = vst [vmem:[%s422] sm:$0x1] %v8991
        %s8997 = sand.u32 %s271, 1
        %s8998 = scalar_lea.sflag [#allocation11], %s8997
        %s8999 = sand.u32 %s271, 1
        %s9000 = scalar_lea.vmem [#allocation15], %s8999
        // Predicated region
        $region77: #{santafe_cnn_forward.1} parent=63 // pred_check
          %p9001 = pneg %p281
        $region78: #{santafe_cnn_forward.1} parent=63 // pred_check_branch
          %9003 = sbr.rel (%p9001) target = $region80
        $region79: #{santafe_cnn_forward.1} parent=63 // pred_region
          %s9005 = ssub.s32 16, 16
          %9006 = vsyncadd %s8998, %s9005
          %s9007 = smul.addr %s27, 16
          %s9008 = scalar_lea.hbm %s11, %s9007
          %s9010 = sshll.u32 %s9000, 4
          %s9011 = int_to_ptr.vmem [resolvable:$true] %s9010
          %9013 = dma.vmem_to_hbm [thread:$0]  %s9011, 16, %s9008, %s8998
        $region80: #{santafe_cnn_forward.1} parent=63 // pred_fallthru
          _
      $region64: #{santafe_cnn_forward.1} parent=5 // pred_fallthru
        _
      %p9014 = scmp.le.s32.totalorder 2, %s22
      // Predicated region
      $region81: #{santafe_cnn_forward.1} parent=5 // pred_check
        %p9015 = pneg %p9014
      $region82: #{santafe_cnn_forward.1} parent=5 // pred_check_branch
        %9017 = sbr.rel (%p9015) target = $region84
      $region83: #{santafe_cnn_forward.1} parent=5 // pred_region
        %s9018 = ssub.s32 %s22, 2
        // Predicated region
        $region85: #{santafe_cnn_forward.1} parent=83 // pred_check
          %p9019 = pneg %p287
        $region86: #{santafe_cnn_forward.1} parent=83 // pred_check_branch
          %9021 = sbr.rel (%p9019) target = $region88
        $region87: #{santafe_cnn_forward.1} parent=83 // pred_region
          %s9022 = sand.u32 %s272, 1
          %s9023 = scalar_lea.sflag [#allocation11], %s9022
          %s9024 = sand.u32 %s272, 1
          %s9025 = scalar_lea.vmem [#allocation15], %s9024
          %9026 = dma.done %s9023, 16
        $region88: #{santafe_cnn_forward.1} parent=83 // pred_fallthru
          _
      $region84: #{santafe_cnn_forward.1} parent=5 // pred_fallthru
        _
    $region6: #{santafe_cnn_forward.1} parent=1 // loop_footer
      %s26 = sadd.s32 1, %s22
    $region7: #{santafe_cnn_forward.1} parent=1 // loop_footer_branch
      %21 = sbr.rel target = $region3
    $region8: #{santafe_cnn_forward.1} parent=1 // loop_exit
      _
    %9027 = vsyncpa [#allocation10], 1
    %s9028 = scalar_lea.sflag [#allocation10], 1
    %9029 = vsyncpa %s9028, 1
    %9030 = vsyncpa [#allocation13], 1
    %9031 = vsyncpa [#allocation11], 1
    %s9032 = scalar_lea.sflag [#allocation11], 1
    %9033 = vsyncpa %s9032, 1

</llo_original>
